<compile_context>
chip_gen: v7x
topology: tpu7x:2x2x1
jax: 0.10.0
libtpu: 0.0.40
codegen_flags: <defaults>
</compile_context>

<pallas_src>
import functools

import numpy as np

import jax
import jax.numpy as jnp
from jax import lax
from jax.experimental import pallas as pl
from jax.experimental.pallas import tpu as pltpu

EPS = 1e-5
LEAK = 0.2


# ---------------------------------------------------------------------------
# Kernel helpers
# ---------------------------------------------------------------------------
def _full_spec(shape):
    """Whole-array block for a grid=(1,) call."""
    return pl.BlockSpec(shape, lambda i: (0,) * len(shape))


def _conv_taps(x_ref, w_ref, taps, rows):
    """4x4/stride-2 conv as 4 accumulating MXU dots on the space-to-depth layout.

    x_ref : (rows + guard, 4*Cin) f32   flattened s2d input (+ zero guard rows)
    w_ref : (4, 4*Cin, Cout)      bf16  per-tap weights
    taps  : static row shifts (0, 1, Ws, Ws+1)
    returns (rows, Cout) f32
    """
    acc = None
    for t, shift in enumerate(taps):
        lhs = x_ref[pl.ds(shift, rows), :].astype(jnp.bfloat16)   # bf16 MXU operands
        part = jnp.dot(lhs, w_ref[t], preferred_element_type=jnp.float32)
        acc = part if acc is None else acc + part
    return acc


def _bn_train(y, mask, gamma, beta, inv_count):
    """Train-mode BatchNorm with one-pass (masked) statistics.  y: (rows, C) f32."""
    yv = y * mask                                    # zero out the junk (margin) rows
    s1 = jnp.sum(yv, axis=0, keepdims=True)
    s2 = jnp.sum(yv * y, axis=0, keepdims=True)
    mu = s1 * inv_count
    var = s2 * inv_count - mu * mu                   # biased variance
    return (y - mu) * lax.rsqrt(var + EPS) * gamma + beta


def _down_block_kernel(*refs, taps, rows, inv_count, use_bn):
    """Fused Conv4x4/s2 (+ BatchNorm) + LeakyReLU(0.2)."""
    if use_bn:
        x_ref, w_ref, mask_ref, g_ref, b_ref, o_ref = refs
    else:
        x_ref, w_ref, o_ref = refs
    y = _conv_taps(x_ref, w_ref, taps, rows)
    if use_bn:
        y = _bn_train(y, mask_ref[...], g_ref[...], b_ref[...], inv_count)
    o_ref[...] = jnp.maximum(y, LEAK * y)            # LeakyReLU(0.2) as a single max


def _final_block_kernel(x_ref, w_ref, mask_ref, g_ref, b_ref,
                        w4_ref, sel_ref, b4_ref, o_ref, *, taps, rows, inv_count):
    """Fused Conv3 + BN + LeakyReLU + final Conv2d(256,1,4,s2,p0) (full 4x4 contraction)."""
    y = _conv_taps(x_ref, w_ref, taps, rows)                         # (rows, 256) f32
    y = _bn_train(y, mask_ref[...], g_ref[...], b_ref[...], inv_count)
    y = jnp.maximum(y, LEAK * y)
    # Final conv: per-row weights (zero on junk rows), then per-sample reduction via a
    # selector matmul + lane reduce.
    t = y * w4_ref[...]                                              # (rows, 256) f32
    per_n = jnp.dot(sel_ref[...], t, preferred_element_type=jnp.float32)   # (N, 256)
    score = jnp.sum(per_n, axis=1, keepdims=True) + b4_ref[...]      # (N, 1)
    o_ref[...] = jnp.broadcast_to(score, o_ref.shape)                # lane-dense (N,128) store


# ---------------------------------------------------------------------------
# Wrapper-side layout glue (pure layout, 1x traffic - no im2col inflation)
# ---------------------------------------------------------------------------
def _space_to_depth_rows(x_nhwc):
    """Zero-pad by 1, 2x2 space-to-depth, flatten to rows, append guard rows for the taps."""
    N, H, W, C = x_nhwc.shape
    xp = jnp.pad(x_nhwc, ((0, 0), (1, 1), (1, 1), (0, 0)))
    Hs, Ws = (H + 2) // 2, (W + 2) // 2
    xs = xp.reshape(N, Hs, 2, Ws, 2, C).transpose(0, 1, 3, 2, 4, 5)
    xflat = xs.reshape(N * Hs * Ws, 4 * C)
    xflat = jnp.pad(xflat, ((0, Ws + 1), (0, 0)))     # zero guard rows for shifted tap reads
    return xflat, N, Hs, Ws


def _tap_weights(w):
    """(4,4,Cin,Cout) HWIO -> (4, 4*Cin, Cout): 2x2 taps matching the s2d channel order."""
    kh, kw, cin, cout = w.shape
    assert kh == 4 and kw == 4
    return (w.reshape(2, 2, 2, 2, cin, cout)          # (dy, py, dx, px, ci, co)
             .transpose(0, 2, 1, 3, 4, 5)             # (dy, dx, py, px, ci, co)
             .reshape(4, 4 * cin, cout))


def _valid_row_mask(N, Hs, Ws):
    """1.0 on rows that correspond to real conv outputs, 0.0 on the s2d margin rows (static)."""
    r = np.arange(N * Hs * Ws)
    ok = ((r % Ws) < (Ws - 1)) & (((r // Ws) % Hs) < (Hs - 1))
    return jnp.asarray(ok.astype(np.float32).reshape(-1, 1))


# ---------------------------------------------------------------------------
# Stage wrappers
# ---------------------------------------------------------------------------
def down_block(x_nhwc, w, gamma=None, beta=None, *, use_bn):
    """Conv2d(Cin,Cout,4,stride=2,padding=1,bias=False) [+ BN] + LeakyReLU(0.2)."""
    xflat, N, Hs, Ws = _space_to_depth_rows(x_nhwc)
    Ho, Wo = Hs - 1, Ws - 1
    rows = N * Hs * Ws
    cout = w.shape[-1]
    taps = (0, 1, Ws, Ws + 1)

    w2 = _tap_weights(w).astype(jnp.bfloat16)
    inputs = [xflat.astype(jnp.float32), w2]
    specs = [_full_spec(inputs[0].shape), _full_spec(w2.shape)]
    if use_bn:
        mask = _valid_row_mask(N, Hs, Ws)
        g = gamma.reshape(1, cout).astype(jnp.float32)
        b = beta.reshape(1, cout).astype(jnp.float32)
        inputs += [mask, g, b]
        specs += [_full_spec(mask.shape), _full_spec(g.shape), _full_spec(b.shape)]

    kernel = functools.partial(_down_block_kernel, taps=taps, rows=rows,
                               inv_count=1.0 / (N * Ho * Wo), use_bn=use_bn)
    yfull = pl.pallas_call(
        kernel,
        out_shape=jax.ShapeDtypeStruct((rows, cout), jnp.float32),
        grid=(1,),
        in_specs=specs,
        out_specs=_full_spec((rows, cout)),
        compiler_params=pltpu.CompilerParams(dimension_semantics=("arbitrary",)),
    )(*inputs)
    # Drop the s2d margin rows -> dense (N, Ho, Wo, Cout)
    return yfull.reshape(N, Hs, Ws, cout)[:, :Ho, :Wo, :]


def final_block(x_nhwc, w3, gamma3, beta3, w4, b4):
    """Conv3(+BN+LeakyReLU) fused with the final Conv2d(256,1,4,stride=2,padding=0)."""
    xflat, N, Hs, Ws = _space_to_depth_rows(x_nhwc)
    Ho, Wo = Hs - 1, Ws - 1                  # 4, 4
    rows = N * Hs * Ws                       # N * 25
    c3 = w3.shape[-1]                        # 256
    taps = (0, 1, Ws, Ws + 1)

    w2 = _tap_weights(w3).astype(jnp.bfloat16)
    mask = _valid_row_mask(N, Hs, Ws)
    g = gamma3.reshape(1, c3).astype(jnp.float32)
    b = beta3.reshape(1, c3).astype(jnp.float32)

    # Final 4x4 conv on a 4x4 map == full contraction: fold its weights per row (zero on the
    # s2d margin rows), tiled over the batch, plus a per-sample selector matrix.
    w4_rows = jnp.pad(w4[:, :, :, 0], ((0, Hs - Ho), (0, Ws - Wo), (0, 0)))   # (Hs, Ws, c3)
    w4_big = jnp.tile(w4_rows.reshape(Hs * Ws, c3), (N, 1)).astype(jnp.float32)
    sel = jnp.asarray(np.repeat(np.eye(N, dtype=np.float32), Hs * Ws, axis=1))  # (N, rows)
    b4_ = b4.reshape(1, 1).astype(jnp.float32)

    kernel = functools.partial(_final_block_kernel, taps=taps, rows=rows,
                               inv_count=1.0 / (N * Ho * Wo))
    out = pl.pallas_call(
        kernel,
        out_shape=jax.ShapeDtypeStruct((N, 128), jnp.float32),   # lane-dense final store
        grid=(1,),
        in_specs=[_full_spec(xflat.shape), _full_spec(w2.shape), _full_spec(mask.shape),
                  _full_spec(g.shape), _full_spec(b.shape), _full_spec(w4_big.shape),
                  _full_spec(sel.shape), _full_spec(b4_.shape)],
        out_specs=_full_spec((N, 128)),
        compiler_params=pltpu.CompilerParams(dimension_semantics=("arbitrary",)),
    )(xflat.astype(jnp.float32), w2, mask, g, b, w4_big, sel, b4_)
    return out[:, :1].reshape(N, 1, 1, 1)


# ---------------------------------------------------------------------------
# Model
# ---------------------------------------------------------------------------
def make_params(key, nf=64):
    """Synthetic parameters following init_weights_of_model ('normal', gain 0.02)."""
    ks = jax.random.split(key, 6)

    def cw(k, cin, cout):                     # conv weight, HWIO
        return 0.02 * jax.random.normal(k, (4, 4, cin, cout), jnp.float32)

    return {
        "w1": cw(ks[0], 3, nf),
        "w2": cw(ks[1], nf, nf * 2),
        "g2": 1.0 + 0.02 * jax.random.normal(ks[2], (nf * 2,), jnp.float32),
        "b2": jnp.zeros((nf * 2,), jnp.float32),
        "w3": cw(ks[3], nf * 2, nf * 4),
        "g3": 1.0 + 0.02 * jax.random.normal(ks[4], (nf * 4,), jnp.float32),
        "b3": jnp.zeros((nf * 4,), jnp.float32),
        "w4": cw(ks[5], nf * 4, 1),
        "b4": jnp.zeros((1,), jnp.float32),
    }


def discriminator32_forward(img_nchw, P):
    x = jnp.transpose(img_nchw, (0, 2, 3, 1)).astype(jnp.float32)        # NCHW -> NHWC
    h = down_block(x, P["w1"], use_bn=False)                             # 32 -> 16,  64 ch
    h = down_block(h, P["w2"], P["g2"], P["b2"], use_bn=True)            # 16 -> 8,  128 ch
    out = final_block(h, P["w3"], P["g3"], P["b3"], P["w4"], P["b4"])    # 8 -> 4 -> 1x1x1
    return out                                                           # (N, 1, 1, 1)


# ---------------------------------------------------------------------------
# Pure-JAX reference (f32, highest precision) for a correctness self-check
# ---------------------------------------------------------------------------
def _reference_forward(img_nchw, P):
    x = jnp.transpose(img_nchw, (0, 2, 3, 1)).astype(jnp.float32)

    def conv(x, w, pad):
        return lax.conv_general_dilated(
            x, w, (2, 2), [(pad, pad), (pad, pad)],
            dimension_numbers=("NHWC", "HWIO", "NHWC"),
            precision=lax.Precision.HIGHEST)

    def bn(x, g, b):
        mu = jnp.mean(x, axis=(0, 1, 2), keepdims=True)
        var = jnp.mean((x - mu) ** 2, axis=(0, 1, 2), keepdims=True)
        return (x - mu) * lax.rsqrt(var + EPS) * g + b

    lrelu = lambda v: jnp.maximum(v, LEAK * v)
    h = lrelu(conv(x, P["w1"], 1))
    h = lrelu(bn(conv(h, P["w2"], 1), P["g2"], P["b2"]))
    h = lrelu(bn(conv(h, P["w3"], 1), P["g3"], P["b3"]))
    h = conv(h, P["w4"], 0) + P["b4"]
    return jnp.transpose(h, (0, 3, 1, 2))


if __name__ == "__main__":
    key = jax.random.PRNGKey(0)
    kx, kp = jax.random.split(key)
    img = jax.random.normal(kx, (2, 3, 32, 32), jnp.float32)   # N x C x H x W (32x32 RGB)
    P = make_params(kp)

    fwd = jax.jit(discriminator32_forward)
    y = fwd(img, P)
    jax.block_until_ready(y)

    assert y.shape == (2, 1, 1, 1), y.shape
    assert y.dtype == jnp.float32
    assert bool(jnp.all(jnp.isfinite(y)))

    # Correctness self-check (loose tolerance covers the bf16 MXU operands in the kernel path).
    y_ref = jax.jit(_reference_forward)(img, P)
    np.testing.assert_allclose(np.asarray(y), np.asarray(y_ref), rtol=1e-1, atol=1e-1)

    print("KERNEL_OK")
</pallas_src>

<mosaic_0001>
module attributes {stable_mosaic.version = 11 : i64} {
  func.func @_down_block_kernel(%arg0: i32, %arg1: memref<596x12xf32, #tpu.memory_space<vmem>>, %arg2: memref<4x12x64xbf16, #tpu.memory_space<vmem>>, %arg3: memref<578x64xf32, #tpu.memory_space<vmem>>) attributes {dimension_semantics = [#tpu.dimension_semantics<arbitrary>], iteration_bounds = array<i64: 1>, scalar_prefetch = 0 : i64, scratch_operands = 0 : i64, tpu.core_type = #tpu.core_type<tc>, window_params = [{pipeline_mode = #tpu.pipeline_mode<synchronous>, transform_indices = @transform_0, window_bounds = array<i64: 596, 12>}, {pipeline_mode = #tpu.pipeline_mode<synchronous>, transform_indices = @transform_1, window_bounds = array<i64: 4, 12, 64>}, {pipeline_mode = #tpu.pipeline_mode<synchronous>, transform_indices = @transform_2, window_bounds = array<i64: 578, 64>}]} {
    %c0 = arith.constant 0 : index
    %c0_0 = arith.constant 0 : index
    %0 = vector.load %arg1[%c0, %c0_0] : memref<596x12xf32, #tpu.memory_space<vmem>>, vector<578x12xf32>
    %1 = arith.truncf %0 : vector<578x12xf32> to vector<578x12xbf16>
    %c0_1 = arith.constant 0 : index
    %c0_2 = arith.constant 0 : index
    %c0_3 = arith.constant 0 : index
    %2 = vector.load %arg2[%c0_1, %c0_2, %c0_3] : memref<4x12x64xbf16, #tpu.memory_space<vmem>>, vector<1x12x64xbf16>
    %3 = vector.shape_cast %2 : vector<1x12x64xbf16> to vector<12x64xbf16>
    %cst = arith.constant dense<0.000000e+00> : vector<578x64xf32>
    %4 = tpu.matmul %1, %3, %cst {dimension_numbers = #tpu.dot_dimension_numbers<[1], [0], [0], [1], [0, 0, 1, 1], [], []>} : vector<578x12xbf16>, vector<12x64xbf16>, vector<578x64xf32> -> vector<578x64xf32>
    %c1 = arith.constant 1 : index
    %c0_4 = arith.constant 0 : index
    %5 = vector.load %arg1[%c1, %c0_4] : memref<596x12xf32, #tpu.memory_space<vmem>>, vector<578x12xf32>
    %6 = arith.truncf %5 : vector<578x12xf32> to vector<578x12xbf16>
    %c1_5 = arith.constant 1 : index
    %c0_6 = arith.constant 0 : index
    %c0_7 = arith.constant 0 : index
    %7 = vector.load %arg2[%c1_5, %c0_6, %c0_7] : memref<4x12x64xbf16, #tpu.memory_space<vmem>>, vector<1x12x64xbf16>
    %8 = vector.shape_cast %7 : vector<1x12x64xbf16> to vector<12x64xbf16>
    %cst_8 = arith.constant dense<0.000000e+00> : vector<578x64xf32>
    %9 = tpu.matmul %6, %8, %cst_8 {dimension_numbers = #tpu.dot_dimension_numbers<[1], [0], [0], [1], [0, 0, 1, 1], [], []>} : vector<578x12xbf16>, vector<12x64xbf16>, vector<578x64xf32> -> vector<578x64xf32>
    %10 = arith.addf %4, %9 : vector<578x64xf32>
    %c17 = arith.constant 17 : index
    %c0_9 = arith.constant 0 : index
    %11 = vector.load %arg1[%c17, %c0_9] : memref<596x12xf32, #tpu.memory_space<vmem>>, vector<578x12xf32>
    %12 = arith.truncf %11 : vector<578x12xf32> to vector<578x12xbf16>
    %c2 = arith.constant 2 : index
    %c0_10 = arith.constant 0 : index
    %c0_11 = arith.constant 0 : index
    %13 = vector.load %arg2[%c2, %c0_10, %c0_11] : memref<4x12x64xbf16, #tpu.memory_space<vmem>>, vector<1x12x64xbf16>
    %14 = vector.shape_cast %13 : vector<1x12x64xbf16> to vector<12x64xbf16>
    %cst_12 = arith.constant dense<0.000000e+00> : vector<578x64xf32>
    %15 = tpu.matmul %12, %14, %cst_12 {dimension_numbers = #tpu.dot_dimension_numbers<[1], [0], [0], [1], [0, 0, 1, 1], [], []>} : vector<578x12xbf16>, vector<12x64xbf16>, vector<578x64xf32> -> vector<578x64xf32>
    %16 = arith.addf %10, %15 : vector<578x64xf32>
    %c18 = arith.constant 18 : index
    %c0_13 = arith.constant 0 : index
    %17 = vector.load %arg1[%c18, %c0_13] : memref<596x12xf32, #tpu.memory_space<vmem>>, vector<578x12xf32>
    %18 = arith.truncf %17 : vector<578x12xf32> to vector<578x12xbf16>
    %c3 = arith.constant 3 : index
    %c0_14 = arith.constant 0 : index
    %c0_15 = arith.constant 0 : index
    %19 = vector.load %arg2[%c3, %c0_14, %c0_15] : memref<4x12x64xbf16, #tpu.memory_space<vmem>>, vector<1x12x64xbf16>
    %20 = vector.shape_cast %19 : vector<1x12x64xbf16> to vector<12x64xbf16>
    %cst_16 = arith.constant dense<0.000000e+00> : vector<578x64xf32>
    %21 = tpu.matmul %18, %20, %cst_16 {dimension_numbers = #tpu.dot_dimension_numbers<[1], [0], [0], [1], [0, 0, 1, 1], [], []>} : vector<578x12xbf16>, vector<12x64xbf16>, vector<578x64xf32> -> vector<578x64xf32>
    %22 = arith.addf %16, %21 : vector<578x64xf32>
    %cst_17 = arith.constant 2.000000e-01 : f32
    %23 = vector.broadcast %cst_17 : f32 to vector<578x64xf32>
    %24 = arith.mulf %23, %22 : vector<578x64xf32>
    %25 = arith.maximumf %22, %24 : vector<578x64xf32>
    %c0_18 = arith.constant 0 : index
    %c0_19 = arith.constant 0 : index
    %26 = vector.load %arg3[%c0_18, %c0_19] : memref<578x64xf32, #tpu.memory_space<vmem>>, vector<578x64xf32>
    tpu.vector_store %arg3[%c0_18, %c0_19], %25 {strides = array<i32>} : memref<578x64xf32, #tpu.memory_space<vmem>>, vector<578x64xf32>,
    return
  }
  func.func @transform_0(%arg0: i32) -> (i32, i32) {
    %c0_i32 = arith.constant 0 : i32
    %c0_i32_0 = arith.constant 0 : i32
    %c0_i32_1 = arith.constant 0 : i32
    return %c0_i32, %c0_i32_0 : i32, i32
  }
  func.func @transform_1(%arg0: i32) -> (i32, i32, i32) {
    %c0_i32 = arith.constant 0 : i32
    %c0_i32_0 = arith.constant 0 : i32
    %c0_i32_1 = arith.constant 0 : i32
    %c0_i32_2 = arith.constant 0 : i32
    return %c0_i32, %c0_i32_0, %c0_i32_1 : i32, i32, i32
  }
  func.func @transform_2(%arg0: i32) -> (i32, i32) {
    %c0_i32 = arith.constant 0 : i32
    %c0_i32_0 = arith.constant 0 : i32
    %c0_i32_1 = arith.constant 0 : i32
    return %c0_i32, %c0_i32_0 : i32, i32
  }
}

module attributes {stable_mosaic.version = 11 : i64} {
  func.func @_down_block_kernel(%arg0: i32, %arg1: memref<172x256xf32, #tpu.memory_space<vmem>>, %arg2: memref<4x256x128xbf16, #tpu.memory_space<vmem>>, %arg3: memref<162x1xf32, #tpu.memory_space<vmem>>, %arg4: memref<1x128xf32, #tpu.memory_space<vmem>>, %arg5: memref<1x128xf32, #tpu.memory_space<vmem>>, %arg6: memref<162x128xf32, #tpu.memory_space<vmem>>) attributes {dimension_semantics = [#tpu.dimension_semantics<arbitrary>], iteration_bounds = array<i64: 1>, scalar_prefetch = 0 : i64, scratch_operands = 0 : i64, tpu.core_type = #tpu.core_type<tc>, window_params = [{pipeline_mode = #tpu.pipeline_mode<synchronous>, transform_indices = @transform_0, window_bounds = array<i64: 172, 256>}, {pipeline_mode = #tpu.pipeline_mode<synchronous>, transform_indices = @transform_1, window_bounds = array<i64: 4, 256, 128>}, {pipeline_mode = #tpu.pipeline_mode<synchronous>, transform_indices = @transform_2, window_bounds = array<i64: 162, 1>}, {pipeline_mode = #tpu.pipeline_mode<synchronous>, transform_indices = @transform_3, window_bounds = array<i64: 1, 128>}, {pipeline_mode = #tpu.pipeline_mode<synchronous>, transform_indices = @transform_4, window_bounds = array<i64: 1, 128>}, {pipeline_mode = #tpu.pipeline_mode<synchronous>, transform_indices = @transform_5, window_bounds = array<i64: 162, 128>}]} {
    %c0 = arith.constant 0 : index
    %c0_0 = arith.constant 0 : index
    %0 = vector.load %arg1[%c0, %c0_0] : memref<172x256xf32, #tpu.memory_space<vmem>>, vector<162x256xf32>
    %1 = arith.truncf %0 : vector<162x256xf32> to vector<162x256xbf16>
    %c0_1 = arith.constant 0 : index
    %c0_2 = arith.constant 0 : index
    %c0_3 = arith.constant 0 : index
    %2 = vector.load %arg2[%c0_1, %c0_2, %c0_3] : memref<4x256x128xbf16, #tpu.memory_space<vmem>>, vector<1x256x128xbf16>
    %3 = vector.shape_cast %2 : vector<1x256x128xbf16> to vector<256x128xbf16>
    %cst = arith.constant dense<0.000000e+00> : vector<162x128xf32>
    %4 = tpu.matmul %1, %3, %cst {dimension_numbers = #tpu.dot_dimension_numbers<[1], [0], [0], [1], [0, 0, 1, 1], [], []>} : vector<162x256xbf16>, vector<256x128xbf16>, vector<162x128xf32> -> vector<162x128xf32>
    %c1 = arith.constant 1 : index
    %c0_4 = arith.constant 0 : index
    %5 = vector.load %arg1[%c1, %c0_4] : memref<172x256xf32, #tpu.memory_space<vmem>>, vector<162x256xf32>
    %6 = arith.truncf %5 : vector<162x256xf32> to vector<162x256xbf16>
    %c1_5 = arith.constant 1 : index
    %c0_6 = arith.constant 0 : index
    %c0_7 = arith.constant 0 : index
    %7 = vector.load %arg2[%c1_5, %c0_6, %c0_7] : memref<4x256x128xbf16, #tpu.memory_space<vmem>>, vector<1x256x128xbf16>
    %8 = vector.shape_cast %7 : vector<1x256x128xbf16> to vector<256x128xbf16>
    %cst_8 = arith.constant dense<0.000000e+00> : vector<162x128xf32>
    %9 = tpu.matmul %6, %8, %cst_8 {dimension_numbers = #tpu.dot_dimension_numbers<[1], [0], [0], [1], [0, 0, 1, 1], [], []>} : vector<162x256xbf16>, vector<256x128xbf16>, vector<162x128xf32> -> vector<162x128xf32>
    %10 = arith.addf %4, %9 : vector<162x128xf32>
    %c9 = arith.constant 9 : index
    %c0_9 = arith.constant 0 : index
    %11 = vector.load %arg1[%c9, %c0_9] : memref<172x256xf32, #tpu.memory_space<vmem>>, vector<162x256xf32>
    %12 = arith.truncf %11 : vector<162x256xf32> to vector<162x256xbf16>
    %c2 = arith.constant 2 : index
    %c0_10 = arith.constant 0 : index
    %c0_11 = arith.constant 0 : index
    %13 = vector.load %arg2[%c2, %c0_10, %c0_11] : memref<4x256x128xbf16, #tpu.memory_space<vmem>>, vector<1x256x128xbf16>
    %14 = vector.shape_cast %13 : vector<1x256x128xbf16> to vector<256x128xbf16>
    %cst_12 = arith.constant dense<0.000000e+00> : vector<162x128xf32>
    %15 = tpu.matmul %12, %14, %cst_12 {dimension_numbers = #tpu.dot_dimension_numbers<[1], [0], [0], [1], [0, 0, 1, 1], [], []>} : vector<162x256xbf16>, vector<256x128xbf16>, vector<162x128xf32> -> vector<162x128xf32>
    %16 = arith.addf %10, %15 : vector<162x128xf32>
    %c10 = arith.constant 10 : index
    %c0_13 = arith.constant 0 : index
    %17 = vector.load %arg1[%c10, %c0_13] : memref<172x256xf32, #tpu.memory_space<vmem>>, vector<162x256xf32>
    %18 = arith.truncf %17 : vector<162x256xf32> to vector<162x256xbf16>
    %c3 = arith.constant 3 : index
    %c0_14 = arith.constant 0 : index
    %c0_15 = arith.constant 0 : index
    %19 = vector.load %arg2[%c3, %c0_14, %c0_15] : memref<4x256x128xbf16, #tpu.memory_space<vmem>>, vector<1x256x128xbf16>
    %20 = vector.shape_cast %19 : vector<1x256x128xbf16> to vector<256x128xbf16>
    %cst_16 = arith.constant dense<0.000000e+00> : vector<162x128xf32>
    %21 = tpu.matmul %18, %20, %cst_16 {dimension_numbers = #tpu.dot_dimension_numbers<[1], [0], [0], [1], [0, 0, 1, 1], [], []>} : vector<162x256xbf16>, vector<256x128xbf16>, vector<162x128xf32> -> vector<162x128xf32>
    %22 = arith.addf %16, %21 : vector<162x128xf32>
    %c0_17 = arith.constant 0 : index
    %c0_18 = arith.constant 0 : index
    %23 = vector.load %arg3[%c0_17, %c0_18] : memref<162x1xf32, #tpu.memory_space<vmem>>, vector<162x1xf32>
    %c0_19 = arith.constant 0 : index
    %c0_20 = arith.constant 0 : index
    %24 = vector.load %arg4[%c0_19, %c0_20] : memref<1x128xf32, #tpu.memory_space<vmem>>, vector<1x128xf32>
    %c0_21 = arith.constant 0 : index
    %c0_22 = arith.constant 0 : index
    %25 = vector.load %arg5[%c0_21, %c0_22] : memref<1x128xf32, #tpu.memory_space<vmem>>, vector<1x128xf32>
    %26 = vector.broadcast %23 : vector<162x1xf32> to vector<162x128xf32>
    %27 = arith.mulf %22, %26 : vector<162x128xf32>
    %cst_23 = arith.constant dense<0.000000e+00> : vector<128xf32>
    %28 = vector.multi_reduction <add>, %27, %cst_23 [0] : vector<162x128xf32> to vector<128xf32>
    %29 = vector.shape_cast %28 : vector<128xf32> to vector<1x128xf32>
    %30 = arith.mulf %27, %22 : vector<162x128xf32>
    %cst_24 = arith.constant dense<0.000000e+00> : vector<128xf32>
    %31 = vector.multi_reduction <add>, %30, %cst_24 [0] : vector<162x128xf32> to vector<128xf32>
    %32 = vector.shape_cast %31 : vector<128xf32> to vector<1x128xf32>
    %cst_25 = arith.constant 7.812500e-03 : f32
    %33 = vector.broadcast %cst_25 : f32 to vector<1x128xf32>
    %34 = arith.mulf %29, %33 : vector<1x128xf32>
    %cst_26 = arith.constant 7.812500e-03 : f32
    %35 = vector.broadcast %cst_26 : f32 to vector<1x128xf32>
    %36 = arith.mulf %32, %35 : vector<1x128xf32>
    %37 = arith.mulf %34, %34 : vector<1x128xf32>
    %38 = arith.subf %36, %37 : vector<1x128xf32>
    %39 = vector.broadcast %34 : vector<1x128xf32> to vector<162x128xf32>
    %40 = arith.subf %22, %39 : vector<162x128xf32>
    %cst_27 = arith.constant 9.99999974E-6 : f32
    %41 = vector.broadcast %cst_27 : f32 to vector<1x128xf32>
    %42 = arith.addf %38, %41 : vector<1x128xf32>
    %43 = math.rsqrt %42 : vector<1x128xf32>
    %44 = vector.broadcast %43 : vector<1x128xf32> to vector<162x128xf32>
    %45 = arith.mulf %40, %44 : vector<162x128xf32>
    %46 = vector.broadcast %24 : vector<1x128xf32> to vector<162x128xf32>
    %47 = arith.mulf %45, %46 : vector<162x128xf32>
    %48 = vector.broadcast %25 : vector<1x128xf32> to vector<162x128xf32>
    %49 = arith.addf %47, %48 : vector<162x128xf32>
    %cst_28 = arith.constant 2.000000e-01 : f32
    %50 = vector.broadcast %cst_28 : f32 to vector<162x128xf32>
    %51 = arith.mulf %50, %49 : vector<162x128xf32>
    %52 = arith.maximumf %49, %51 : vector<162x128xf32>
    %c0_29 = arith.constant 0 : index
    %c0_30 = arith.constant 0 : index
    %53 = vector.load %arg6[%c0_29, %c0_30] : memref<162x128xf32, #tpu.memory_space<vmem>>, vector<162x128xf32>
    tpu.vector_store %arg6[%c0_29, %c0_30], %52 {strides = array<i32>} : memref<162x128xf32, #tpu.memory_space<vmem>>, vector<162x128xf32>,
    return
  }
  func.func @transform_0(%arg0: i32) -> (i32, i32) {
    %c0_i32 = arith.constant 0 : i32
    %c0_i32_0 = arith.constant 0 : i32
    %c0_i32_1 = arith.constant 0 : i32
    return %c0_i32, %c0_i32_0 : i32, i32
  }
  func.func @transform_1(%arg0: i32) -> (i32, i32, i32) {
    %c0_i32 = arith.constant 0 : i32
    %c0_i32_0 = arith.constant 0 : i32
    %c0_i32_1 = arith.constant 0 : i32
    %c0_i32_2 = arith.constant 0 : i32
    return %c0_i32, %c0_i32_0, %c0_i32_1 : i32, i32, i32
  }
  func.func @transform_2(%arg0: i32) -> (i32, i32) {
    %c0_i32 = arith.constant 0 : i32
    %c0_i32_0 = arith.constant 0 : i32
    %c0_i32_1 = arith.constant 0 : i32
    return %c0_i32, %c0_i32_0 : i32, i32
  }
  func.func @transform_3(%arg0: i32) -> (i32, i32) {
    %c0_i32 = arith.constant 0 : i32
    %c0_i32_0 = arith.constant 0 : i32
    %c0_i32_1 = arith.constant 0 : i32
    return %c0_i32, %c0_i32_0 : i32, i32
  }
  func.func @transform_4(%arg0: i32) -> (i32, i32) {
    %c0_i32 = arith.constant 0 : i32
    %c0_i32_0 = arith.constant 0 : i32
    %c0_i32_1 = arith.constant 0 : i32
    return %c0_i32, %c0_i32_0 : i32, i32
  }
  func.func @transform_5(%arg0: i32) -> (i32, i32) {
    %c0_i32 = arith.constant 0 : i32
    %c0_i32_0 = arith.constant 0 : i32
    %c0_i32_1 = arith.constant 0 : i32
    return %c0_i32, %c0_i32_0 : i32, i32
  }
}

module attributes {stable_mosaic.version = 11 : i64} {
  func.func @_final_block_kernel(%arg0: i32, %arg1: memref<56x512xf32, #tpu.memory_space<vmem>>, %arg2: memref<4x512x256xbf16, #tpu.memory_space<vmem>>, %arg3: memref<50x1xf32, #tpu.memory_space<vmem>>, %arg4: memref<1x256xf32, #tpu.memory_space<vmem>>, %arg5: memref<1x256xf32, #tpu.memory_space<vmem>>, %arg6: memref<50x256xf32, #tpu.memory_space<vmem>>, %arg7: memref<2x50xf32, #tpu.memory_space<vmem>>, %arg8: memref<1x1xf32, #tpu.memory_space<vmem>>, %arg9: memref<2x128xf32, #tpu.memory_space<vmem>>) attributes {dimension_semantics = [#tpu.dimension_semantics<arbitrary>], iteration_bounds = array<i64: 1>, scalar_prefetch = 0 : i64, scratch_operands = 0 : i64, tpu.core_type = #tpu.core_type<tc>, window_params = [{pipeline_mode = #tpu.pipeline_mode<synchronous>, transform_indices = @transform_0, window_bounds = array<i64: 56, 512>}, {pipeline_mode = #tpu.pipeline_mode<synchronous>, transform_indices = @transform_1, window_bounds = array<i64: 4, 512, 256>}, {pipeline_mode = #tpu.pipeline_mode<synchronous>, transform_indices = @transform_2, window_bounds = array<i64: 50, 1>}, {pipeline_mode = #tpu.pipeline_mode<synchronous>, transform_indices = @transform_3, window_bounds = array<i64: 1, 256>}, {pipeline_mode = #tpu.pipeline_mode<synchronous>, transform_indices = @transform_4, window_bounds = array<i64: 1, 256>}, {pipeline_mode = #tpu.pipeline_mode<synchronous>, transform_indices = @transform_5, window_bounds = array<i64: 50, 256>}, {pipeline_mode = #tpu.pipeline_mode<synchronous>, transform_indices = @transform_6, window_bounds = array<i64: 2, 50>}, {pipeline_mode = #tpu.pipeline_mode<synchronous>, transform_indices = @transform_7, window_bounds = array<i64: 1, 1>}, {pipeline_mode = #tpu.pipeline_mode<synchronous>, transform_indices = @transform_8, window_bounds = array<i64: 2, 128>}]} {
    %c0 = arith.constant 0 : index
    %c0_0 = arith.constant 0 : index
    %0 = vector.load %arg1[%c0, %c0_0] : memref<56x512xf32, #tpu.memory_space<vmem>>, vector<50x512xf32>
    %1 = arith.truncf %0 : vector<50x512xf32> to vector<50x512xbf16>
    %c0_1 = arith.constant 0 : index
    %c0_2 = arith.constant 0 : index
    %c0_3 = arith.constant 0 : index
    %2 = vector.load %arg2[%c0_1, %c0_2, %c0_3] : memref<4x512x256xbf16, #tpu.memory_space<vmem>>, vector<1x512x256xbf16>
    %3 = vector.shape_cast %2 : vector<1x512x256xbf16> to vector<512x256xbf16>
    %cst = arith.constant dense<0.000000e+00> : vector<50x256xf32>
    %4 = tpu.matmul %1, %3, %cst {dimension_numbers = #tpu.dot_dimension_numbers<[1], [0], [0], [1], [0, 0, 1, 1], [], []>} : vector<50x512xbf16>, vector<512x256xbf16>, vector<50x256xf32> -> vector<50x256xf32>
    %c1 = arith.constant 1 : index
    %c0_4 = arith.constant 0 : index
    %5 = vector.load %arg1[%c1, %c0_4] : memref<56x512xf32, #tpu.memory_space<vmem>>, vector<50x512xf32>
    %6 = arith.truncf %5 : vector<50x512xf32> to vector<50x512xbf16>
    %c1_5 = arith.constant 1 : index
    %c0_6 = arith.constant 0 : index
    %c0_7 = arith.constant 0 : index
    %7 = vector.load %arg2[%c1_5, %c0_6, %c0_7] : memref<4x512x256xbf16, #tpu.memory_space<vmem>>, vector<1x512x256xbf16>
    %8 = vector.shape_cast %7 : vector<1x512x256xbf16> to vector<512x256xbf16>
    %cst_8 = arith.constant dense<0.000000e+00> : vector<50x256xf32>
    %9 = tpu.matmul %6, %8, %cst_8 {dimension_numbers = #tpu.dot_dimension_numbers<[1], [0], [0], [1], [0, 0, 1, 1], [], []>} : vector<50x512xbf16>, vector<512x256xbf16>, vector<50x256xf32> -> vector<50x256xf32>
    %10 = arith.addf %4, %9 : vector<50x256xf32>
    %c5 = arith.constant 5 : index
    %c0_9 = arith.constant 0 : index
    %11 = vector.load %arg1[%c5, %c0_9] : memref<56x512xf32, #tpu.memory_space<vmem>>, vector<50x512xf32>
    %12 = arith.truncf %11 : vector<50x512xf32> to vector<50x512xbf16>
    %c2 = arith.constant 2 : index
    %c0_10 = arith.constant 0 : index
    %c0_11 = arith.constant 0 : index
    %13 = vector.load %arg2[%c2, %c0_10, %c0_11] : memref<4x512x256xbf16, #tpu.memory_space<vmem>>, vector<1x512x256xbf16>
    %14 = vector.shape_cast %13 : vector<1x512x256xbf16> to vector<512x256xbf16>
    %cst_12 = arith.constant dense<0.000000e+00> : vector<50x256xf32>
    %15 = tpu.matmul %12, %14, %cst_12 {dimension_numbers = #tpu.dot_dimension_numbers<[1], [0], [0], [1], [0, 0, 1, 1], [], []>} : vector<50x512xbf16>, vector<512x256xbf16>, vector<50x256xf32> -> vector<50x256xf32>
    %16 = arith.addf %10, %15 : vector<50x256xf32>
    %c6 = arith.constant 6 : index
    %c0_13 = arith.constant 0 : index
    %17 = vector.load %arg1[%c6, %c0_13] : memref<56x512xf32, #tpu.memory_space<vmem>>, vector<50x512xf32>
    %18 = arith.truncf %17 : vector<50x512xf32> to vector<50x512xbf16>
    %c3 = arith.constant 3 : index
    %c0_14 = arith.constant 0 : index
    %c0_15 = arith.constant 0 : index
    %19 = vector.load %arg2[%c3, %c0_14, %c0_15] : memref<4x512x256xbf16, #tpu.memory_space<vmem>>, vector<1x512x256xbf16>
    %20 = vector.shape_cast %19 : vector<1x512x256xbf16> to vector<512x256xbf16>
    %cst_16 = arith.constant dense<0.000000e+00> : vector<50x256xf32>
    %21 = tpu.matmul %18, %20, %cst_16 {dimension_numbers = #tpu.dot_dimension_numbers<[1], [0], [0], [1], [0, 0, 1, 1], [], []>} : vector<50x512xbf16>, vector<512x256xbf16>, vector<50x256xf32> -> vector<50x256xf32>
    %22 = arith.addf %16, %21 : vector<50x256xf32>
    %c0_17 = arith.constant 0 : index
    %c0_18 = arith.constant 0 : index
    %23 = vector.load %arg3[%c0_17, %c0_18] : memref<50x1xf32, #tpu.memory_space<vmem>>, vector<50x1xf32>
    %c0_19 = arith.constant 0 : index
    %c0_20 = arith.constant 0 : index
    %24 = vector.load %arg4[%c0_19, %c0_20] : memref<1x256xf32, #tpu.memory_space<vmem>>, vector<1x256xf32>
    %c0_21 = arith.constant 0 : index
    %c0_22 = arith.constant 0 : index
    %25 = vector.load %arg5[%c0_21, %c0_22] : memref<1x256xf32, #tpu.memory_space<vmem>>, vector<1x256xf32>
    %26 = vector.broadcast %23 : vector<50x1xf32> to vector<50x256xf32>
    %27 = arith.mulf %22, %26 : vector<50x256xf32>
    %cst_23 = arith.constant dense<0.000000e+00> : vector<256xf32>
    %28 = vector.multi_reduction <add>, %27, %cst_23 [0] : vector<50x256xf32> to vector<256xf32>
    %29 = vector.shape_cast %28 : vector<256xf32> to vector<1x256xf32>
    %30 = arith.mulf %27, %22 : vector<50x256xf32>
    %cst_24 = arith.constant dense<0.000000e+00> : vector<256xf32>
    %31 = vector.multi_reduction <add>, %30, %cst_24 [0] : vector<50x256xf32> to vector<256xf32>
    %32 = vector.shape_cast %31 : vector<256xf32> to vector<1x256xf32>
    %cst_25 = arith.constant 3.125000e-02 : f32
    %33 = vector.broadcast %cst_25 : f32 to vector<1x256xf32>
    %34 = arith.mulf %29, %33 : vector<1x256xf32>
    %cst_26 = arith.constant 3.125000e-02 : f32
    %35 = vector.broadcast %cst_26 : f32 to vector<1x256xf32>
    %36 = arith.mulf %32, %35 : vector<1x256xf32>
    %37 = arith.mulf %34, %34 : vector<1x256xf32>
    %38 = arith.subf %36, %37 : vector<1x256xf32>
    %39 = vector.broadcast %34 : vector<1x256xf32> to vector<50x256xf32>
    %40 = arith.subf %22, %39 : vector<50x256xf32>
    %cst_27 = arith.constant 9.99999974E-6 : f32
    %41 = vector.broadcast %cst_27 : f32 to vector<1x256xf32>
    %42 = arith.addf %38, %41 : vector<1x256xf32>
    %43 = math.rsqrt %42 : vector<1x256xf32>
    %44 = vector.broadcast %43 : vector<1x256xf32> to vector<50x256xf32>
    %45 = arith.mulf %40, %44 : vector<50x256xf32>
    %46 = vector.broadcast %24 : vector<1x256xf32> to vector<50x256xf32>
    %47 = arith.mulf %45, %46 : vector<50x256xf32>
    %48 = vector.broadcast %25 : vector<1x256xf32> to vector<50x256xf32>
    %49 = arith.addf %47, %48 : vector<50x256xf32>
    %cst_28 = arith.constant 2.000000e-01 : f32
    %50 = vector.broadcast %cst_28 : f32 to vector<50x256xf32>
    %51 = arith.mulf %50, %49 : vector<50x256xf32>
    %52 = arith.maximumf %49, %51 : vector<50x256xf32>
    %c0_29 = arith.constant 0 : index
    %c0_30 = arith.constant 0 : index
    %53 = vector.load %arg6[%c0_29, %c0_30] : memref<50x256xf32, #tpu.memory_space<vmem>>, vector<50x256xf32>
    %54 = arith.mulf %52, %53 : vector<50x256xf32>
    %c0_31 = arith.constant 0 : index
    %c0_32 = arith.constant 0 : index
    %55 = vector.load %arg7[%c0_31, %c0_32] : memref<2x50xf32, #tpu.memory_space<vmem>>, vector<2x50xf32>
    %cst_33 = arith.constant dense<0.000000e+00> : vector<2x256xf32>
    %56 = tpu.matmul %55, %54, %cst_33 {dimension_numbers = #tpu.dot_dimension_numbers<[1], [0], [0], [1], [0, 0, 1, 1], [], []>} : vector<2x50xf32>, vector<50x256xf32>, vector<2x256xf32> -> vector<2x256xf32>
    %cst_34 = arith.constant dense<0.000000e+00> : vector<2xf32>
    %57 = vector.multi_reduction <add>, %56, %cst_34 [1] : vector<2x256xf32> to vector<2xf32>
    %58 = vector.shape_cast %57 : vector<2xf32> to vector<2x1xf32>
    %c0_35 = arith.constant 0 : index
    %c0_36 = arith.constant 0 : index
    %59 = vector.load %arg8[%c0_35, %c0_36] : memref<1x1xf32, #tpu.memory_space<vmem>>, vector<1x1xf32>
    %60 = vector.broadcast %59 : vector<1x1xf32> to vector<2x1xf32>
    %61 = arith.addf %58, %60 : vector<2x1xf32>
    %62 = vector.shape_cast %61 : vector<2x1xf32> to vector<2x1xf32>
    %63 = vector.broadcast %62 : vector<2x1xf32> to vector<2x128xf32>
    %c0_37 = arith.constant 0 : index
    %c0_38 = arith.constant 0 : index
    %64 = vector.load %arg9[%c0_37, %c0_38] : memref<2x128xf32, #tpu.memory_space<vmem>>, vector<2x128xf32>
    tpu.vector_store %arg9[%c0_37, %c0_38], %63 {strides = array<i32>} : memref<2x128xf32, #tpu.memory_space<vmem>>, vector<2x128xf32>,
    return
  }
  func.func @transform_0(%arg0: i32) -> (i32, i32) {
    %c0_i32 = arith.constant 0 : i32
    %c0_i32_0 = arith.constant 0 : i32
    %c0_i32_1 = arith.constant 0 : i32
    return %c0_i32, %c0_i32_0 : i32, i32
  }
  func.func @transform_1(%arg0: i32) -> (i32, i32, i32) {
    %c0_i32 = arith.constant 0 : i32
    %c0_i32_0 = arith.constant 0 : i32
    %c0_i32_1 = arith.constant 0 : i32
    %c0_i32_2 = arith.constant 0 : i32
    return %c0_i32, %c0_i32_0, %c0_i32_1 : i32, i32, i32
  }
  func.func @transform_2(%arg0: i32) -> (i32, i32) {
    %c0_i32 = arith.constant 0 : i32
    %c0_i32_0 = arith.constant 0 : i32
    %c0_i32_1 = arith.constant 0 : i32
    return %c0_i32, %c0_i32_0 : i32, i32
  }
  func.func @transform_3(%arg0: i32) -> (i32, i32) {
    %c0_i32 = arith.constant 0 : i32
    %c0_i32_0 = arith.constant 0 : i32
    %c0_i32_1 = arith.constant 0 : i32
    return %c0_i32, %c0_i32_0 : i32, i32
  }
  func.func @transform_4(%arg0: i32) -> (i32, i32) {
    %c0_i32 = arith.constant 0 : i32
    %c0_i32_0 = arith.constant 0 : i32
    %c0_i32_1 = arith.constant 0 : i32
    return %c0_i32, %c0_i32_0 : i32, i32
  }
  func.func @transform_5(%arg0: i32) -> (i32, i32) {
    %c0_i32 = arith.constant 0 : i32
    %c0_i32_0 = arith.constant 0 : i32
    %c0_i32_1 = arith.constant 0 : i32
    return %c0_i32, %c0_i32_0 : i32, i32
  }
  func.func @transform_6(%arg0: i32) -> (i32, i32) {
    %c0_i32 = arith.constant 0 : i32
    %c0_i32_0 = arith.constant 0 : i32
    %c0_i32_1 = arith.constant 0 : i32
    return %c0_i32, %c0_i32_0 : i32, i32
  }
  func.func @transform_7(%arg0: i32) -> (i32, i32) {
    %c0_i32 = arith.constant 0 : i32
    %c0_i32_0 = arith.constant 0 : i32
    %c0_i32_1 = arith.constant 0 : i32
    return %c0_i32, %c0_i32_0 : i32, i32
  }
  func.func @transform_8(%arg0: i32) -> (i32, i32) {
    %c0_i32 = arith.constant 0 : i32
    %c0_i32_0 = arith.constant 0 : i32
    %c0_i32_1 = arith.constant 0 : i32
    return %c0_i32, %c0_i32_0 : i32, i32
  }
}

</mosaic_0001>

<llo_original>
// kernel: discriminator32_forward.3
$region0: #{discriminator32_forward.3}
  #allocation0 [shape = 'u32[]', space=smem, size = 0x4, offset = 0x4, fixed_abs, tag = 'smem constant byte address 0x4 - core index']
  #allocation1 [shape = 'u32[144,128]{1,0:T(1,128)}', space=vmem, size = 0x12000, scoped, tag = 'internal scratch']
  %s0 = inlined_call_operand.vmem [shape: f32[596,12], index: 0, kind: input, shape index: {}]
  %s1 = inlined_call_operand.vmem [shape: bf16[4,12,64], index: 1, kind: input, shape index: {}]
  %s2 = inlined_call_operand.vmem [shape: f32[578,64], index: 2, kind: output, shape index: {}]
  %s3 = sld [smem:[#allocation0]]
  $region18: #{discriminator32_forward.3} parent=0
    _
  %s5 = ssub.s32 1, %s3
  %s6 = scalar_select 0, %s5, %s3
  // Predicated region
  $region2: #{discriminator32_forward.3} parent=0 // pred_check
    _
  $region3: #{discriminator32_forward.3} parent=0 // pred_check_branch
    %8 = sbr.rel (0) target = $region5
  $region4: #{discriminator32_forward.3} parent=0 // pred_region
    _
  $region5: #{discriminator32_forward.3} parent=0 // pred_fallthru
    _
  // Predicated region
  $region6: #{discriminator32_forward.3} parent=0 // pred_check
    _
  $region7: #{discriminator32_forward.3} parent=0 // pred_check_branch
    %10 = sbr.rel (0) target = $region9
  $region8: #{discriminator32_forward.3} parent=0 // pred_region
    _
  $region9: #{discriminator32_forward.3} parent=0 // pred_fallthru
    _
  %v12 = vld [vmem:[%s0] sm:$0xff]
  %v13 = vld [vmem:[%s0 + $0x8] sm:$0xff]
  %v14 = vld [vmem:[%s0 + $0x10] sm:$0xff]
  %v15 = vld [vmem:[%s0 + $0x18] sm:$0xff]
  %v16 = vld [vmem:[%s0 + $0x20] sm:$0xff]
  %v17 = vld [vmem:[%s0 + $0x28] sm:$0xff]
  %v18 = vld [vmem:[%s0 + $0x30] sm:$0xff]
  %v19 = vld [vmem:[%s0 + $0x38] sm:$0xff]
  %v20 = vld [vmem:[%s0 + $0x40] sm:$0xff]
  %v21 = vld [vmem:[%s0 + $0x48] sm:$0xff]
  %v22 = vld [vmem:[%s0 + $0x50] sm:$0xff]
  %v23 = vld [vmem:[%s0 + $0x58] sm:$0xff]
  %v24 = vld [vmem:[%s0 + $0x60] sm:$0xff]
  %v25 = vld [vmem:[%s0 + $0x68] sm:$0xff]
  %v26 = vld [vmem:[%s0 + $0x70] sm:$0xff]
  %v27 = vld [vmem:[%s0 + $0x78] sm:$0xff]
  %v28 = vld [vmem:[%s0 + $0x80] sm:$0xff]
  %v29 = vld [vmem:[%s0 + $0x88] sm:$0xff]
  %v30 = vld [vmem:[%s0 + $0x90] sm:$0xff]
  %v31 = vld [vmem:[%s0 + $0x98] sm:$0xff]
  %v32 = vld [vmem:[%s0 + $0xa0] sm:$0xff]
  %v33 = vld [vmem:[%s0 + $0xa8] sm:$0xff]
  %v34 = vld [vmem:[%s0 + $0xb0] sm:$0xff]
  %v35 = vld [vmem:[%s0 + $0xb8] sm:$0xff]
  %v36 = vld [vmem:[%s0 + $0xc0] sm:$0xff]
  %v37 = vld [vmem:[%s0 + $0xc8] sm:$0xff]
  %v38 = vld [vmem:[%s0 + $0xd0] sm:$0xff]
  %v39 = vld [vmem:[%s0 + $0xd8] sm:$0xff]
  %v40 = vld [vmem:[%s0 + $0xe0] sm:$0xff]
  %v41 = vld [vmem:[%s0 + $0xe8] sm:$0xff]
  %v42 = vld [vmem:[%s0 + $0xf0] sm:$0xff]
  %v43 = vld [vmem:[%s0 + $0xf8] sm:$0xff]
  %v44 = vld [vmem:[%s0 + $0x100] sm:$0xff]
  %v45 = vld [vmem:[%s0 + $0x108] sm:$0xff]
  %v46 = vld [vmem:[%s0 + $0x110] sm:$0xff]
  %v47 = vld [vmem:[%s0 + $0x118] sm:$0xff]
  %v48 = vld [vmem:[%s0 + $0x120] sm:$0xff]
  %v49 = vld [vmem:[%s0 + $0x128] sm:$0xff]
  %v50 = vld [vmem:[%s0 + $0x130] sm:$0xff]
  %v51 = vld [vmem:[%s0 + $0x138] sm:$0xff]
  %v52 = vld [vmem:[%s0 + $0x140] sm:$0xff]
  %v53 = vld [vmem:[%s0 + $0x148] sm:$0xff]
  %v54 = vld [vmem:[%s0 + $0x150] sm:$0xff]
  %v55 = vld [vmem:[%s0 + $0x158] sm:$0xff]
  %v56 = vld [vmem:[%s0 + $0x160] sm:$0xff]
  %v57 = vld [vmem:[%s0 + $0x168] sm:$0xff]
  %v58 = vld [vmem:[%s0 + $0x170] sm:$0xff]
  %v59 = vld [vmem:[%s0 + $0x178] sm:$0xff]
  %v60 = vld [vmem:[%s0 + $0x180] sm:$0xff]
  %v61 = vld [vmem:[%s0 + $0x188] sm:$0xff]
  %v62 = vld [vmem:[%s0 + $0x190] sm:$0xff]
  %v63 = vld [vmem:[%s0 + $0x198] sm:$0xff]
  %v64 = vld [vmem:[%s0 + $0x1a0] sm:$0xff]
  %v65 = vld [vmem:[%s0 + $0x1a8] sm:$0xff]
  %v66 = vld [vmem:[%s0 + $0x1b0] sm:$0xff]
  %v67 = vld [vmem:[%s0 + $0x1b8] sm:$0xff]
  %v68 = vld [vmem:[%s0 + $0x1c0] sm:$0xff]
  %v69 = vld [vmem:[%s0 + $0x1c8] sm:$0xff]
  %v70 = vld [vmem:[%s0 + $0x1d0] sm:$0xff]
  %v71 = vld [vmem:[%s0 + $0x1d8] sm:$0xff]
  %v72 = vld [vmem:[%s0 + $0x1e0] sm:$0xff]
  %v73 = vld [vmem:[%s0 + $0x1e8] sm:$0xff]
  %v74 = vld [vmem:[%s0 + $0x1f0] sm:$0xff]
  %v75 = vld [vmem:[%s0 + $0x1f8] sm:$0xff]
  %v76 = vld [vmem:[%s0 + $0x200] sm:$0xff]
  %v77 = vld [vmem:[%s0 + $0x208] sm:$0xff]
  %v78 = vld [vmem:[%s0 + $0x210] sm:$0xff]
  %v79 = vld [vmem:[%s0 + $0x218] sm:$0xff]
  %v80 = vld [vmem:[%s0 + $0x220] sm:$0xff]
  %v81 = vld [vmem:[%s0 + $0x228] sm:$0xff]
  %v82 = vld [vmem:[%s0 + $0x230] sm:$0xff]
  %v83 = vld [vmem:[%s0 + $0x238] sm:$0xff]
  %v84 = vld [vmem:[%s0 + $0x240] sm:$0x3]
  %v85 = vpack.c.bf16 %v13, %v12
  %v86 = vpack.c.bf16 %v15, %v14
  %v87 = vpack.c.bf16 %v17, %v16
  %v88 = vpack.c.bf16 %v19, %v18
  %v89 = vpack.c.bf16 %v21, %v20
  %v90 = vpack.c.bf16 %v23, %v22
  %v91 = vpack.c.bf16 %v25, %v24
  %v92 = vpack.c.bf16 %v27, %v26
  %v93 = vpack.c.bf16 %v29, %v28
  %v94 = vpack.c.bf16 %v31, %v30
  %v95 = vpack.c.bf16 %v33, %v32
  %v96 = vpack.c.bf16 %v35, %v34
  %v97 = vpack.c.bf16 %v37, %v36
  %v98 = vpack.c.bf16 %v39, %v38
  %v99 = vpack.c.bf16 %v41, %v40
  %v100 = vpack.c.bf16 %v43, %v42
  %v101 = vpack.c.bf16 %v45, %v44
  %v102 = vpack.c.bf16 %v47, %v46
  %v103 = vpack.c.bf16 %v49, %v48
  %v104 = vpack.c.bf16 %v51, %v50
  %v105 = vpack.c.bf16 %v53, %v52
  %v106 = vpack.c.bf16 %v55, %v54
  %v107 = vpack.c.bf16 %v57, %v56
  %v108 = vpack.c.bf16 %v59, %v58
  %v109 = vpack.c.bf16 %v61, %v60
  %v110 = vpack.c.bf16 %v63, %v62
  %v111 = vpack.c.bf16 %v65, %v64
  %v112 = vpack.c.bf16 %v67, %v66
  %v113 = vpack.c.bf16 %v69, %v68
  %v114 = vpack.c.bf16 %v71, %v70
  %v115 = vpack.c.bf16 %v73, %v72
  %v116 = vpack.c.bf16 %v75, %v74
  %v117 = vpack.c.bf16 %v77, %v76
  %v118 = vpack.c.bf16 %v79, %v78
  %v119 = vpack.c.bf16 %v81, %v80
  %v120 = vpack.c.bf16 %v83, %v82
  %v121 = vpack.c.bf16 %v84, %v84
  %v122 = vld [vmem:[%s1] sm:$0xf]
  %v123 = vld [vmem:[%s1 + $0x4] sm:$0x3]
  %v124 = vld [vmem:[%s0 + $0x1] sm:$0xff]
  %v125 = vld [vmem:[%s0 + $0x9] sm:$0xff]
  %v126 = vld [vmem:[%s0 + $0x11] sm:$0xff]
  %v127 = vld [vmem:[%s0 + $0x19] sm:$0xff]
  %v128 = vld [vmem:[%s0 + $0x21] sm:$0xff]
  %v129 = vld [vmem:[%s0 + $0x29] sm:$0xff]
  %v130 = vld [vmem:[%s0 + $0x31] sm:$0xff]
  %v131 = vld [vmem:[%s0 + $0x39] sm:$0xff]
  %v132 = vld [vmem:[%s0 + $0x41] sm:$0xff]
  %v133 = vld [vmem:[%s0 + $0x49] sm:$0xff]
  %v134 = vld [vmem:[%s0 + $0x51] sm:$0xff]
  %v135 = vld [vmem:[%s0 + $0x59] sm:$0xff]
  %v136 = vld [vmem:[%s0 + $0x61] sm:$0xff]
  %v137 = vld [vmem:[%s0 + $0x69] sm:$0xff]
  %v138 = vld [vmem:[%s0 + $0x71] sm:$0xff]
  %v139 = vld [vmem:[%s0 + $0x79] sm:$0xff]
  %v140 = vld [vmem:[%s0 + $0x81] sm:$0xff]
  %v141 = vld [vmem:[%s0 + $0x89] sm:$0xff]
  %v142 = vld [vmem:[%s0 + $0x91] sm:$0xff]
  %v143 = vld [vmem:[%s0 + $0x99] sm:$0xff]
  %v144 = vld [vmem:[%s0 + $0xa1] sm:$0xff]
  %v145 = vld [vmem:[%s0 + $0xa9] sm:$0xff]
  %v146 = vld [vmem:[%s0 + $0xb1] sm:$0xff]
  %v147 = vld [vmem:[%s0 + $0xb9] sm:$0xff]
  %v148 = vld [vmem:[%s0 + $0xc1] sm:$0xff]
  %v149 = vld [vmem:[%s0 + $0xc9] sm:$0xff]
  %v150 = vld [vmem:[%s0 + $0xd1] sm:$0xff]
  %v151 = vld [vmem:[%s0 + $0xd9] sm:$0xff]
  %v152 = vld [vmem:[%s0 + $0xe1] sm:$0xff]
  %v153 = vld [vmem:[%s0 + $0xe9] sm:$0xff]
  %v154 = vld [vmem:[%s0 + $0xf1] sm:$0xff]
  %v155 = vld [vmem:[%s0 + $0xf9] sm:$0xff]
  %v156 = vld [vmem:[%s0 + $0x101] sm:$0xff]
  %v157 = vld [vmem:[%s0 + $0x109] sm:$0xff]
  %v158 = vld [vmem:[%s0 + $0x111] sm:$0xff]
  %v159 = vld [vmem:[%s0 + $0x119] sm:$0xff]
  %v160 = vld [vmem:[%s0 + $0x121] sm:$0xff]
  %v161 = vld [vmem:[%s0 + $0x129] sm:$0xff]
  %v162 = vld [vmem:[%s0 + $0x131] sm:$0xff]
  %v163 = vld [vmem:[%s0 + $0x139] sm:$0xff]
  %v164 = vld [vmem:[%s0 + $0x141] sm:$0xff]
  %v165 = vld [vmem:[%s0 + $0x149] sm:$0xff]
  %v166 = vld [vmem:[%s0 + $0x151] sm:$0xff]
  %v167 = vld [vmem:[%s0 + $0x159] sm:$0xff]
  %v168 = vld [vmem:[%s0 + $0x161] sm:$0xff]
  %v169 = vld [vmem:[%s0 + $0x169] sm:$0xff]
  %v170 = vld [vmem:[%s0 + $0x171] sm:$0xff]
  %v171 = vld [vmem:[%s0 + $0x179] sm:$0xff]
  %v172 = vld [vmem:[%s0 + $0x181] sm:$0xff]
  %v173 = vld [vmem:[%s0 + $0x189] sm:$0xff]
  %v174 = vld [vmem:[%s0 + $0x191] sm:$0xff]
  %v175 = vld [vmem:[%s0 + $0x199] sm:$0xff]
  %v176 = vld [vmem:[%s0 + $0x1a1] sm:$0xff]
  %v177 = vld [vmem:[%s0 + $0x1a9] sm:$0xff]
  %v178 = vld [vmem:[%s0 + $0x1b1] sm:$0xff]
  %v179 = vld [vmem:[%s0 + $0x1b9] sm:$0xff]
  %v180 = vld [vmem:[%s0 + $0x1c1] sm:$0xff]
  %v181 = vld [vmem:[%s0 + $0x1c9] sm:$0xff]
  %v182 = vld [vmem:[%s0 + $0x1d1] sm:$0xff]
  %v183 = vld [vmem:[%s0 + $0x1d9] sm:$0xff]
  %v184 = vld [vmem:[%s0 + $0x1e1] sm:$0xff]
  %v185 = vld [vmem:[%s0 + $0x1e9] sm:$0xff]
  %v186 = vld [vmem:[%s0 + $0x1f1] sm:$0xff]
  %v187 = vld [vmem:[%s0 + $0x1f9] sm:$0xff]
  %v188 = vld [vmem:[%s0 + $0x201] sm:$0xff]
  %v189 = vld [vmem:[%s0 + $0x209] sm:$0xff]
  %v190 = vld [vmem:[%s0 + $0x211] sm:$0xff]
  %v191 = vld [vmem:[%s0 + $0x219] sm:$0xff]
  %v192 = vld [vmem:[%s0 + $0x221] sm:$0xff]
  %v193 = vld [vmem:[%s0 + $0x229] sm:$0xff]
  %v194 = vld [vmem:[%s0 + $0x231] sm:$0xff]
  %v195 = vld [vmem:[%s0 + $0x239] sm:$0xff]
  %v196 = vld [vmem:[%s0 + $0x241] sm:$0x3]
  %v197 = vpack.c.bf16 %v125, %v124
  %v198 = vpack.c.bf16 %v127, %v126
  %v199 = vpack.c.bf16 %v129, %v128
  %v200 = vpack.c.bf16 %v131, %v130
  %v201 = vpack.c.bf16 %v133, %v132
  %v202 = vpack.c.bf16 %v135, %v134
  %v203 = vpack.c.bf16 %v137, %v136
  %v204 = vpack.c.bf16 %v139, %v138
  %v205 = vpack.c.bf16 %v141, %v140
  %v206 = vpack.c.bf16 %v143, %v142
  %v207 = vpack.c.bf16 %v145, %v144
  %v208 = vpack.c.bf16 %v147, %v146
  %v209 = vpack.c.bf16 %v149, %v148
  %v210 = vpack.c.bf16 %v151, %v150
  %v211 = vpack.c.bf16 %v153, %v152
  %v212 = vpack.c.bf16 %v155, %v154
  %v213 = vpack.c.bf16 %v157, %v156
  %v214 = vpack.c.bf16 %v159, %v158
  %v215 = vpack.c.bf16 %v161, %v160
  %v216 = vpack.c.bf16 %v163, %v162
  %v217 = vpack.c.bf16 %v165, %v164
  %v218 = vpack.c.bf16 %v167, %v166
  %v219 = vpack.c.bf16 %v169, %v168
  %v220 = vpack.c.bf16 %v171, %v170
  %v221 = vpack.c.bf16 %v173, %v172
  %v222 = vpack.c.bf16 %v175, %v174
  %v223 = vpack.c.bf16 %v177, %v176
  %v224 = vpack.c.bf16 %v179, %v178
  %v225 = vpack.c.bf16 %v181, %v180
  %v226 = vpack.c.bf16 %v183, %v182
  %v227 = vpack.c.bf16 %v185, %v184
  %v228 = vpack.c.bf16 %v187, %v186
  %v229 = vpack.c.bf16 %v189, %v188
  %v230 = vpack.c.bf16 %v191, %v190
  %v231 = vpack.c.bf16 %v193, %v192
  %v232 = vpack.c.bf16 %v195, %v194
  %v233 = vpack.c.bf16 %v196, %v196
  %s234 = scalar_lea.vmem %s1, 8
  %v235 = vld [vmem:[%s234] sm:$0xf]
  %v236 = vld [vmem:[%s234 + $0x4] sm:$0x3]
  %v239 = vunpack.c.l.b16 %v235
  %v240 = vunpack.c.l.b16 %v236
  %v241 = vpack.c.b16 %v240, %v239
  %vm242 = vcmask 97280
  %v244 = vsel %vm242, %v197, 0
  %v247 = vsel %vm242, %v198, 0
  %v250 = vsel %vm242, %v199, 0
  %v253 = vsel %vm242, %v200, 0
  %v256 = vsel %vm242, %v201, 0
  %v259 = vsel %vm242, %v202, 0
  %v262 = vsel %vm242, %v203, 0
  %v265 = vsel %vm242, %v204, 0
  %v268 = vsel %vm242, %v205, 0
  %v271 = vsel %vm242, %v206, 0
  %v274 = vsel %vm242, %v207, 0
  %v277 = vsel %vm242, %v208, 0
  %v280 = vsel %vm242, %v209, 0
  %v283 = vsel %vm242, %v210, 0
  %v286 = vsel %vm242, %v211, 0
  %v289 = vsel %vm242, %v212, 0
  %v292 = vsel %vm242, %v213, 0
  %v295 = vsel %vm242, %v214, 0
  %v298 = vsel %vm242, %v215, 0
  %v301 = vsel %vm242, %v216, 0
  %v304 = vsel %vm242, %v217, 0
  %v307 = vsel %vm242, %v218, 0
  %v310 = vsel %vm242, %v219, 0
  %v313 = vsel %vm242, %v220, 0
  %v316 = vsel %vm242, %v221, 0
  %v319 = vsel %vm242, %v222, 0
  %v322 = vsel %vm242, %v223, 0
  %v325 = vsel %vm242, %v224, 0
  %v328 = vsel %vm242, %v225, 0
  %v331 = vsel %vm242, %v226, 0
  %v334 = vsel %vm242, %v227, 0
  %v337 = vsel %vm242, %v228, 0
  %v340 = vsel %vm242, %v229, 0
  %v343 = vsel %vm242, %v230, 0
  %v346 = vsel %vm242, %v231, 0
  %v349 = vsel %vm242, %v232, 0
  %v352 = vsel %vm242, %v233, 0
  %vm354 = vcmask 1045504
  %v356 = vsel %vm354, %v241, 0
  %358 = vmatprep.subr.bf16.mxu0 0
  %359 = vmatpush1.bf16.msra.mxu0 %v356
  %360 = vmatprep.subr.bf16.mxu0 0
  %361 = vmatpush1.bf16.msra.mxu0 0
  %362 = vmatprep.subr.bf16.mxu0 0
  %363 = vmatpush1.bf16.msra.mxu0 0
  %364 = vmatprep.subr.bf16.mxu0 0
  %365 = vmatpush1.bf16.msra.mxu0 0
  %366 = vmatprep.subr.bf16.mxu0 0
  %367 = vmatpush1.bf16.msra.mxu0 0
  %368 = vmatprep.subr.bf16.mxu0 0
  %369 = vmatpush1.bf16.msra.mxu0 0
  %370 = vmatprep.subr.bf16.mxu0 0
  %371 = vmatpush1.bf16.msra.mxu0 0
  %372 = vmatprep.subr.bf16.mxu0 0
  %373 = vmatpush1.bf16.msra.mxu0 0
  %374 = vmatprep.subr.bf16.mxu0 0
  %375 = vmatpush1.bf16.msra.mxu0 0
  %376 = vmatprep.subr.bf16.mxu0 0
  %377 = vmatpush1.bf16.msra.mxu0 0
  %378 = vmatprep.subr.bf16.mxu0 0
  %379 = vmatpush1.bf16.msra.mxu0 0
  %380 = vmatprep.subr.bf16.mxu0 0
  %381 = vmatpush1.bf16.msra.mxu0 0
  %382 = vmatprep.subr.bf16.mxu0 0
  %383 = vmatpush1.bf16.msra.mxu0 0
  %384 = vmatprep.subr.bf16.mxu0 0
  %385 = vmatpush1.bf16.msra.mxu0 0
  %386 = vmatprep.subr.bf16.mxu0 0
  %387 = vmatpush1.bf16.msra.mxu0 0
  %388 = vmatprep.subr.bf16.mxu0 0
  %389 = vmatpush1.bf16.msra.mxu0 0
  %390 = vmatprep.mubr.bf16.mxu0 0
  %391 = vmatmul.mubr.bf16.gmra.mrb[0].mxu0 %v244
  %v392 = vpop.f32.mrb[0].mxu0
  %v393 = vadd.f32 0.0, %v392
  %v394 = vpop.f32.mrb[0].mxu0
  %v395 = vpop.f32.mrb[0].mxu0
  %v396 = vadd.f32 0.0, %v395
  %v397 = vpop.f32.mrb[0].mxu0
  %398 = vmatprep.mubr.bf16.mxu0 0
  %399 = vmatmul.mubr.bf16.gmra.mrb[0].mxu0 %v247
  %v400 = vpop.f32.mrb[0].mxu0
  %v401 = vadd.f32 0.0, %v400
  %v402 = vpop.f32.mrb[0].mxu0
  %v403 = vpop.f32.mrb[0].mxu0
  %v404 = vadd.f32 0.0, %v403
  %v405 = vpop.f32.mrb[0].mxu0
  %406 = vmatprep.mubr.bf16.mxu0 0
  %407 = vmatmul.mubr.bf16.gmra.mrb[0].mxu0 %v250
  %v408 = vpop.f32.mrb[0].mxu0
  %v409 = vadd.f32 0.0, %v408
  %v410 = vpop.f32.mrb[0].mxu0
  %v411 = vpop.f32.mrb[0].mxu0
  %v412 = vadd.f32 0.0, %v411
  %v413 = vpop.f32.mrb[0].mxu0
  %414 = vmatprep.mubr.bf16.mxu0 0
  %415 = vmatmul.mubr.bf16.gmra.mrb[0].mxu0 %v253
  %v416 = vpop.f32.mrb[0].mxu0
  %v417 = vadd.f32 0.0, %v416
  %v418 = vpop.f32.mrb[0].mxu0
  %v419 = vpop.f32.mrb[0].mxu0
  %v420 = vadd.f32 0.0, %v419
  %v421 = vpop.f32.mrb[0].mxu0
  %422 = vmatprep.mubr.bf16.mxu0 0
  %423 = vmatmul.mubr.bf16.gmra.mrb[0].mxu0 %v256
  %v424 = vpop.f32.mrb[0].mxu0
  %v425 = vadd.f32 0.0, %v424
  %v426 = vpop.f32.mrb[0].mxu0
  %v427 = vpop.f32.mrb[0].mxu0
  %v428 = vadd.f32 0.0, %v427
  %v429 = vpop.f32.mrb[0].mxu0
  %430 = vmatprep.mubr.bf16.mxu0 0
  %431 = vmatmul.mubr.bf16.gmra.mrb[0].mxu0 %v259
  %v432 = vpop.f32.mrb[0].mxu0
  %v433 = vadd.f32 0.0, %v432
  %v434 = vpop.f32.mrb[0].mxu0
  %v435 = vpop.f32.mrb[0].mxu0
  %v436 = vadd.f32 0.0, %v435
  %v437 = vpop.f32.mrb[0].mxu0
  %438 = vmatprep.mubr.bf16.mxu0 0
  %439 = vmatmul.mubr.bf16.gmra.mrb[0].mxu0 %v262
  %v440 = vpop.f32.mrb[0].mxu0
  %v441 = vadd.f32 0.0, %v440
  %v442 = vpop.f32.mrb[0].mxu0
  %v443 = vpop.f32.mrb[0].mxu0
  %v444 = vadd.f32 0.0, %v443
  %v445 = vpop.f32.mrb[0].mxu0
  %446 = vmatprep.mubr.bf16.mxu0 0
  %447 = vmatmul.mubr.bf16.gmra.mrb[0].mxu0 %v265
  %v448 = vpop.f32.mrb[0].mxu0
  %v449 = vadd.f32 0.0, %v448
  %v450 = vpop.f32.mrb[0].mxu0
  %v451 = vpop.f32.mrb[0].mxu0
  %v452 = vadd.f32 0.0, %v451
  %v453 = vpop.f32.mrb[0].mxu0
  %454 = vmatprep.mubr.bf16.mxu0 0
  %455 = vmatmul.mubr.bf16.gmra.mrb[0].mxu0 %v268
  %v456 = vpop.f32.mrb[0].mxu0
  %v457 = vadd.f32 0.0, %v456
  %v458 = vpop.f32.mrb[0].mxu0
  %v459 = vpop.f32.mrb[0].mxu0
  %v460 = vadd.f32 0.0, %v459
  %v461 = vpop.f32.mrb[0].mxu0
  %462 = vmatprep.mubr.bf16.mxu0 0
  %463 = vmatmul.mubr.bf16.gmra.mrb[0].mxu0 %v271
  %v464 = vpop.f32.mrb[0].mxu0
  %v465 = vadd.f32 0.0, %v464
  %v466 = vpop.f32.mrb[0].mxu0
  %v467 = vpop.f32.mrb[0].mxu0
  %v468 = vadd.f32 0.0, %v467
  %v469 = vpop.f32.mrb[0].mxu0
  %470 = vmatprep.mubr.bf16.mxu0 0
  %471 = vmatmul.mubr.bf16.gmra.mrb[0].mxu0 %v274
  %v472 = vpop.f32.mrb[0].mxu0
  %v473 = vadd.f32 0.0, %v472
  %v474 = vpop.f32.mrb[0].mxu0
  %v475 = vpop.f32.mrb[0].mxu0
  %v476 = vadd.f32 0.0, %v475
  %v477 = vpop.f32.mrb[0].mxu0
  %478 = vmatprep.mubr.bf16.mxu0 0
  %479 = vmatmul.mubr.bf16.gmra.mrb[0].mxu0 %v277
  %v480 = vpop.f32.mrb[0].mxu0
  %v481 = vadd.f32 0.0, %v480
  %v482 = vpop.f32.mrb[0].mxu0
  %v483 = vpop.f32.mrb[0].mxu0
  %v484 = vadd.f32 0.0, %v483
  %v485 = vpop.f32.mrb[0].mxu0
  %486 = vmatprep.mubr.bf16.mxu0 0
  %487 = vmatmul.mubr.bf16.gmra.mrb[0].mxu0 %v280
  %v488 = vpop.f32.mrb[0].mxu0
  %v489 = vadd.f32 0.0, %v488
  %v490 = vpop.f32.mrb[0].mxu0
  %v491 = vpop.f32.mrb[0].mxu0
  %v492 = vadd.f32 0.0, %v491
  %v493 = vpop.f32.mrb[0].mxu0
  %494 = vmatprep.mubr.bf16.mxu0 0
  %495 = vmatmul.mubr.bf16.gmra.mrb[0].mxu0 %v283
  %v496 = vpop.f32.mrb[0].mxu0
  %v497 = vadd.f32 0.0, %v496
  %v498 = vpop.f32.mrb[0].mxu0
  %v499 = vpop.f32.mrb[0].mxu0
  %v500 = vadd.f32 0.0, %v499
  %v501 = vpop.f32.mrb[0].mxu0
  %502 = vmatprep.mubr.bf16.mxu0 0
  %503 = vmatmul.mubr.bf16.gmra.mrb[0].mxu0 %v286
  %v504 = vpop.f32.mrb[0].mxu0
  %v505 = vadd.f32 0.0, %v504
  %v506 = vpop.f32.mrb[0].mxu0
  %v507 = vpop.f32.mrb[0].mxu0
  %v508 = vadd.f32 0.0, %v507
  %v509 = vpop.f32.mrb[0].mxu0
  %510 = vmatprep.mubr.bf16.mxu0 0
  %511 = vmatmul.mubr.bf16.gmra.mrb[0].mxu0 %v289
  %v512 = vpop.f32.mrb[0].mxu0
  %v513 = vadd.f32 0.0, %v512
  %v514 = vpop.f32.mrb[0].mxu0
  %v515 = vpop.f32.mrb[0].mxu0
  %v516 = vadd.f32 0.0, %v515
  %v517 = vpop.f32.mrb[0].mxu0
  %518 = vmatprep.mubr.bf16.mxu0 0
  %519 = vmatmul.mubr.bf16.gmra.mrb[0].mxu0 %v292
  %v520 = vpop.f32.mrb[0].mxu0
  %v521 = vadd.f32 0.0, %v520
  %v522 = vpop.f32.mrb[0].mxu0
  %v523 = vpop.f32.mrb[0].mxu0
  %v524 = vadd.f32 0.0, %v523
  %v525 = vpop.f32.mrb[0].mxu0
  %526 = vmatprep.mubr.bf16.mxu0 0
  %527 = vmatmul.mubr.bf16.gmra.mrb[0].mxu0 %v295
  %v528 = vpop.f32.mrb[0].mxu0
  %v529 = vadd.f32 0.0, %v528
  %v530 = vpop.f32.mrb[0].mxu0
  %v531 = vpop.f32.mrb[0].mxu0
  %v532 = vadd.f32 0.0, %v531
  %v533 = vpop.f32.mrb[0].mxu0
  %534 = vmatprep.mubr.bf16.mxu0 0
  %535 = vmatmul.mubr.bf16.gmra.mrb[0].mxu0 %v298
  %v536 = vpop.f32.mrb[0].mxu0
  %v537 = vadd.f32 0.0, %v536
  %v538 = vpop.f32.mrb[0].mxu0
  %v539 = vpop.f32.mrb[0].mxu0
  %v540 = vadd.f32 0.0, %v539
  %v541 = vpop.f32.mrb[0].mxu0
  %542 = vmatprep.mubr.bf16.mxu0 0
  %543 = vmatmul.mubr.bf16.gmra.mrb[0].mxu0 %v301
  %v544 = vpop.f32.mrb[0].mxu0
  %v545 = vadd.f32 0.0, %v544
  %v546 = vpop.f32.mrb[0].mxu0
  %v547 = vpop.f32.mrb[0].mxu0
  %v548 = vadd.f32 0.0, %v547
  %v549 = vpop.f32.mrb[0].mxu0
  %550 = vmatprep.mubr.bf16.mxu0 0
  %551 = vmatmul.mubr.bf16.gmra.mrb[0].mxu0 %v304
  %v552 = vpop.f32.mrb[0].mxu0
  %v553 = vadd.f32 0.0, %v552
  %v554 = vpop.f32.mrb[0].mxu0
  %v555 = vpop.f32.mrb[0].mxu0
  %v556 = vadd.f32 0.0, %v555
  %v557 = vpop.f32.mrb[0].mxu0
  %558 = vmatprep.mubr.bf16.mxu0 0
  %559 = vmatmul.mubr.bf16.gmra.mrb[0].mxu0 %v307
  %v560 = vpop.f32.mrb[0].mxu0
  %v561 = vadd.f32 0.0, %v560
  %v562 = vpop.f32.mrb[0].mxu0
  %v563 = vpop.f32.mrb[0].mxu0
  %v564 = vadd.f32 0.0, %v563
  %v565 = vpop.f32.mrb[0].mxu0
  %566 = vmatprep.mubr.bf16.mxu0 0
  %567 = vmatmul.mubr.bf16.gmra.mrb[0].mxu0 %v310
  %v568 = vpop.f32.mrb[0].mxu0
  %v569 = vadd.f32 0.0, %v568
  %v570 = vpop.f32.mrb[0].mxu0
  %v571 = vpop.f32.mrb[0].mxu0
  %v572 = vadd.f32 0.0, %v571
  %v573 = vpop.f32.mrb[0].mxu0
  %574 = vmatprep.mubr.bf16.mxu0 0
  %575 = vmatmul.mubr.bf16.gmra.mrb[0].mxu0 %v313
  %v576 = vpop.f32.mrb[0].mxu0
  %v577 = vadd.f32 0.0, %v576
  %v578 = vpop.f32.mrb[0].mxu0
  %v579 = vpop.f32.mrb[0].mxu0
  %v580 = vadd.f32 0.0, %v579
  %v581 = vpop.f32.mrb[0].mxu0
  %582 = vmatprep.mubr.bf16.mxu0 0
  %583 = vmatmul.mubr.bf16.gmra.mrb[0].mxu0 %v316
  %v584 = vpop.f32.mrb[0].mxu0
  %v585 = vadd.f32 0.0, %v584
  %v586 = vpop.f32.mrb[0].mxu0
  %v587 = vpop.f32.mrb[0].mxu0
  %v588 = vadd.f32 0.0, %v587
  %v589 = vpop.f32.mrb[0].mxu0
  %590 = vmatprep.mubr.bf16.mxu0 0
  %591 = vmatmul.mubr.bf16.gmra.mrb[0].mxu0 %v319
  %v592 = vpop.f32.mrb[0].mxu0
  %v593 = vadd.f32 0.0, %v592
  %v594 = vpop.f32.mrb[0].mxu0
  %v595 = vpop.f32.mrb[0].mxu0
  %v596 = vadd.f32 0.0, %v595
  %v597 = vpop.f32.mrb[0].mxu0
  %598 = vmatprep.mubr.bf16.mxu0 0
  %599 = vmatmul.mubr.bf16.gmra.mrb[0].mxu0 %v322
  %v600 = vpop.f32.mrb[0].mxu0
  %v601 = vadd.f32 0.0, %v600
  %v602 = vpop.f32.mrb[0].mxu0
  %v603 = vpop.f32.mrb[0].mxu0
  %v604 = vadd.f32 0.0, %v603
  %v605 = vpop.f32.mrb[0].mxu0
  %606 = vmatprep.mubr.bf16.mxu0 0
  %607 = vmatmul.mubr.bf16.gmra.mrb[0].mxu0 %v325
  %v608 = vpop.f32.mrb[0].mxu0
  %v609 = vadd.f32 0.0, %v608
  %v610 = vpop.f32.mrb[0].mxu0
  %v611 = vpop.f32.mrb[0].mxu0
  %v612 = vadd.f32 0.0, %v611
  %v613 = vpop.f32.mrb[0].mxu0
  %614 = vmatprep.mubr.bf16.mxu0 0
  %615 = vmatmul.mubr.bf16.gmra.mrb[0].mxu0 %v328
  %v616 = vpop.f32.mrb[0].mxu0
  %v617 = vadd.f32 0.0, %v616
  %v618 = vpop.f32.mrb[0].mxu0
  %v619 = vpop.f32.mrb[0].mxu0
  %v620 = vadd.f32 0.0, %v619
  %v621 = vpop.f32.mrb[0].mxu0
  %622 = vmatprep.mubr.bf16.mxu0 0
  %623 = vmatmul.mubr.bf16.gmra.mrb[0].mxu0 %v331
  %v624 = vpop.f32.mrb[0].mxu0
  %v625 = vadd.f32 0.0, %v624
  %v626 = vpop.f32.mrb[0].mxu0
  %v627 = vpop.f32.mrb[0].mxu0
  %v628 = vadd.f32 0.0, %v627
  %v629 = vpop.f32.mrb[0].mxu0
  %630 = vmatprep.mubr.bf16.mxu0 0
  %631 = vmatmul.mubr.bf16.gmra.mrb[0].mxu0 %v334
  %v632 = vpop.f32.mrb[0].mxu0
  %v633 = vadd.f32 0.0, %v632
  %v634 = vpop.f32.mrb[0].mxu0
  %v635 = vpop.f32.mrb[0].mxu0
  %v636 = vadd.f32 0.0, %v635
  %v637 = vpop.f32.mrb[0].mxu0
  %638 = vmatprep.mubr.bf16.mxu0 0
  %639 = vmatmul.mubr.bf16.gmra.mrb[0].mxu0 %v337
  %v640 = vpop.f32.mrb[0].mxu0
  %v641 = vadd.f32 0.0, %v640
  %v642 = vpop.f32.mrb[0].mxu0
  %v643 = vpop.f32.mrb[0].mxu0
  %v644 = vadd.f32 0.0, %v643
  %v645 = vpop.f32.mrb[0].mxu0
  %646 = vmatprep.mubr.bf16.mxu0 0
  %647 = vmatmul.mubr.bf16.gmra.mrb[0].mxu0 %v340
  %v648 = vpop.f32.mrb[0].mxu0
  %v649 = vadd.f32 0.0, %v648
  %v650 = vpop.f32.mrb[0].mxu0
  %v651 = vpop.f32.mrb[0].mxu0
  %v652 = vadd.f32 0.0, %v651
  %v653 = vpop.f32.mrb[0].mxu0
  %654 = vmatprep.mubr.bf16.mxu0 0
  %655 = vmatmul.mubr.bf16.gmra.mrb[0].mxu0 %v343
  %v656 = vpop.f32.mrb[0].mxu0
  %v657 = vadd.f32 0.0, %v656
  %v658 = vpop.f32.mrb[0].mxu0
  %v659 = vpop.f32.mrb[0].mxu0
  %v660 = vadd.f32 0.0, %v659
  %v661 = vpop.f32.mrb[0].mxu0
  %662 = vmatprep.mubr.bf16.mxu0 0
  %663 = vmatmul.mubr.bf16.gmra.mrb[0].mxu0 %v346
  %v664 = vpop.f32.mrb[0].mxu0
  %v665 = vadd.f32 0.0, %v664
  %v666 = vpop.f32.mrb[0].mxu0
  %v667 = vpop.f32.mrb[0].mxu0
  %v668 = vadd.f32 0.0, %v667
  %v669 = vpop.f32.mrb[0].mxu0
  %670 = vmatprep.mubr.bf16.mxu0 0
  %671 = vmatmul.mubr.bf16.gmra.mrb[0].mxu0 %v349
  %v672 = vpop.f32.mrb[0].mxu0
  %v673 = vadd.f32 0.0, %v672
  %v674 = vpop.f32.mrb[0].mxu0
  %v675 = vpop.f32.mrb[0].mxu0
  %v676 = vadd.f32 0.0, %v675
  %v677 = vpop.f32.mrb[0].mxu0
  %678 = vmatprep.mubr.bf16.mxu0 0
  %679 = vmatmul.mubr.bf16.gmra.mrb[0].mxu0 %v352
  %v680 = vpop.f32.mrb[0].mxu0
  %v681 = vadd.f32 0.0, %v680
  %v682 = vpop.f32.mrb[0].mxu0
  %v683 = vpop.f32.mrb[0].mxu0
  %v684 = vpop.f32.mrb[0].mxu0
  %685 = vdwg.mxu0
  %v688 = vunpack.c.l.b16 %v122
  %v689 = vunpack.c.l.b16 %v123
  %v690 = vpack.c.b16 %v689, %v688
  %v692 = vsel %vm242, %v85, 0
  %v695 = vsel %vm242, %v86, 0
  %v698 = vsel %vm242, %v87, 0
  %v701 = vsel %vm242, %v88, 0
  %v704 = vsel %vm242, %v89, 0
  %v707 = vsel %vm242, %v90, 0
  %v710 = vsel %vm242, %v91, 0
  %v713 = vsel %vm242, %v92, 0
  %v716 = vsel %vm242, %v93, 0
  %v719 = vsel %vm242, %v94, 0
  %v722 = vsel %vm242, %v95, 0
  %v725 = vsel %vm242, %v96, 0
  %v728 = vsel %vm242, %v97, 0
  %v731 = vsel %vm242, %v98, 0
  %v734 = vsel %vm242, %v99, 0
  %v737 = vsel %vm242, %v100, 0
  %v740 = vsel %vm242, %v101, 0
  %v743 = vsel %vm242, %v102, 0
  %v746 = vsel %vm242, %v103, 0
  %v749 = vsel %vm242, %v104, 0
  %v752 = vsel %vm242, %v105, 0
  %v755 = vsel %vm242, %v106, 0
  %v758 = vsel %vm242, %v107, 0
  %v761 = vsel %vm242, %v108, 0
  %v764 = vsel %vm242, %v109, 0
  %v767 = vsel %vm242, %v110, 0
  %v770 = vsel %vm242, %v111, 0
  %v773 = vsel %vm242, %v112, 0
  %v776 = vsel %vm242, %v113, 0
  %v779 = vsel %vm242, %v114, 0
  %v782 = vsel %vm242, %v115, 0
  %v785 = vsel %vm242, %v116, 0
  %v788 = vsel %vm242, %v117, 0
  %v791 = vsel %vm242, %v118, 0
  %v794 = vsel %vm242, %v119, 0
  %v797 = vsel %vm242, %v120, 0
  %v800 = vsel %vm242, %v121, 0
  %v803 = vsel %vm354, %v690, 0
  %805 = vmatprep.subr.bf16.mxu0 0
  %806 = vmatpush1.bf16.msra.mxu0 %v803
  %807 = vmatprep.subr.bf16.mxu0 0
  %808 = vmatpush1.bf16.msra.mxu0 0
  %809 = vmatprep.subr.bf16.mxu0 0
  %810 = vmatpush1.bf16.msra.mxu0 0
  %811 = vmatprep.subr.bf16.mxu0 0
  %812 = vmatpush1.bf16.msra.mxu0 0
  %813 = vmatprep.subr.bf16.mxu0 0
  %814 = vmatpush1.bf16.msra.mxu0 0
  %815 = vmatprep.subr.bf16.mxu0 0
  %816 = vmatpush1.bf16.msra.mxu0 0
  %817 = vmatprep.subr.bf16.mxu0 0
  %818 = vmatpush1.bf16.msra.mxu0 0
  %819 = vmatprep.subr.bf16.mxu0 0
  %820 = vmatpush1.bf16.msra.mxu0 0
  %821 = vmatprep.subr.bf16.mxu0 0
  %822 = vmatpush1.bf16.msra.mxu0 0
  %823 = vmatprep.subr.bf16.mxu0 0
  %824 = vmatpush1.bf16.msra.mxu0 0
  %825 = vmatprep.subr.bf16.mxu0 0
  %826 = vmatpush1.bf16.msra.mxu0 0
  %827 = vmatprep.subr.bf16.mxu0 0
  %828 = vmatpush1.bf16.msra.mxu0 0
  %829 = vmatprep.subr.bf16.mxu0 0
  %830 = vmatpush1.bf16.msra.mxu0 0
  %831 = vmatprep.subr.bf16.mxu0 0
  %832 = vmatpush1.bf16.msra.mxu0 0
  %833 = vmatprep.subr.bf16.mxu0 0
  %834 = vmatpush1.bf16.msra.mxu0 0
  %835 = vmatprep.subr.bf16.mxu0 0
  %836 = vmatpush1.bf16.msra.mxu0 0
  %837 = vmatprep.mubr.bf16.mxu0 0
  %838 = vmatmul.mubr.bf16.gmra.mrb[0].mxu0 %v692
  %v839 = vpop.f32.mrb[0].mxu0
  %v840 = vadd.f32 %v393, %v839
  %v841 = vpop.f32.mrb[0].mxu0
  %v842 = vpop.f32.mrb[0].mxu0
  %v843 = vadd.f32 %v396, %v842
  %v844 = vpop.f32.mrb[0].mxu0
  %845 = vmatprep.mubr.bf16.mxu0 0
  %846 = vmatmul.mubr.bf16.gmra.mrb[0].mxu0 %v695
  %v847 = vpop.f32.mrb[0].mxu0
  %v848 = vadd.f32 %v401, %v847
  %v849 = vpop.f32.mrb[0].mxu0
  %v850 = vpop.f32.mrb[0].mxu0
  %v851 = vadd.f32 %v404, %v850
  %v852 = vpop.f32.mrb[0].mxu0
  %853 = vmatprep.mubr.bf16.mxu0 0
  %854 = vmatmul.mubr.bf16.gmra.mrb[0].mxu0 %v698
  %v855 = vpop.f32.mrb[0].mxu0
  %v856 = vadd.f32 %v409, %v855
  %v857 = vpop.f32.mrb[0].mxu0
  %v858 = vpop.f32.mrb[0].mxu0
  %v859 = vadd.f32 %v412, %v858
  %v860 = vpop.f32.mrb[0].mxu0
  %861 = vmatprep.mubr.bf16.mxu0 0
  %862 = vmatmul.mubr.bf16.gmra.mrb[0].mxu0 %v701
  %v863 = vpop.f32.mrb[0].mxu0
  %v864 = vadd.f32 %v417, %v863
  %v865 = vpop.f32.mrb[0].mxu0
  %v866 = vpop.f32.mrb[0].mxu0
  %v867 = vadd.f32 %v420, %v866
  %v868 = vpop.f32.mrb[0].mxu0
  %869 = vmatprep.mubr.bf16.mxu0 0
  %870 = vmatmul.mubr.bf16.gmra.mrb[0].mxu0 %v704
  %v871 = vpop.f32.mrb[0].mxu0
  %v872 = vadd.f32 %v425, %v871
  %v873 = vpop.f32.mrb[0].mxu0
  %v874 = vpop.f32.mrb[0].mxu0
  %v875 = vadd.f32 %v428, %v874
  %v876 = vpop.f32.mrb[0].mxu0
  %877 = vmatprep.mubr.bf16.mxu0 0
  %878 = vmatmul.mubr.bf16.gmra.mrb[0].mxu0 %v707
  %v879 = vpop.f32.mrb[0].mxu0
  %v880 = vadd.f32 %v433, %v879
  %v881 = vpop.f32.mrb[0].mxu0
  %v882 = vpop.f32.mrb[0].mxu0
  %v883 = vadd.f32 %v436, %v882
  %v884 = vpop.f32.mrb[0].mxu0
  %885 = vmatprep.mubr.bf16.mxu0 0
  %886 = vmatmul.mubr.bf16.gmra.mrb[0].mxu0 %v710
  %v887 = vpop.f32.mrb[0].mxu0
  %v888 = vadd.f32 %v441, %v887
  %v889 = vpop.f32.mrb[0].mxu0
  %v890 = vpop.f32.mrb[0].mxu0
  %v891 = vadd.f32 %v444, %v890
  %v892 = vpop.f32.mrb[0].mxu0
  %893 = vmatprep.mubr.bf16.mxu0 0
  %894 = vmatmul.mubr.bf16.gmra.mrb[0].mxu0 %v713
  %v895 = vpop.f32.mrb[0].mxu0
  %v896 = vadd.f32 %v449, %v895
  %v897 = vpop.f32.mrb[0].mxu0
  %v898 = vpop.f32.mrb[0].mxu0
  %v899 = vadd.f32 %v452, %v898
  %v900 = vpop.f32.mrb[0].mxu0
  %901 = vmatprep.mubr.bf16.mxu0 0
  %902 = vmatmul.mubr.bf16.gmra.mrb[0].mxu0 %v716
  %v903 = vpop.f32.mrb[0].mxu0
  %v904 = vadd.f32 %v457, %v903
  %v905 = vpop.f32.mrb[0].mxu0
  %v906 = vpop.f32.mrb[0].mxu0
  %v907 = vadd.f32 %v460, %v906
  %v908 = vpop.f32.mrb[0].mxu0
  %909 = vmatprep.mubr.bf16.mxu0 0
  %910 = vmatmul.mubr.bf16.gmra.mrb[0].mxu0 %v719
  %v911 = vpop.f32.mrb[0].mxu0
  %v912 = vadd.f32 %v465, %v911
  %v913 = vpop.f32.mrb[0].mxu0
  %v914 = vpop.f32.mrb[0].mxu0
  %v915 = vadd.f32 %v468, %v914
  %v916 = vpop.f32.mrb[0].mxu0
  %917 = vmatprep.mubr.bf16.mxu0 0
  %918 = vmatmul.mubr.bf16.gmra.mrb[0].mxu0 %v722
  %v919 = vpop.f32.mrb[0].mxu0
  %v920 = vadd.f32 %v473, %v919
  %v921 = vpop.f32.mrb[0].mxu0
  %v922 = vpop.f32.mrb[0].mxu0
  %v923 = vadd.f32 %v476, %v922
  %v924 = vpop.f32.mrb[0].mxu0
  %925 = vmatprep.mubr.bf16.mxu0 0
  %926 = vmatmul.mubr.bf16.gmra.mrb[0].mxu0 %v725
  %v927 = vpop.f32.mrb[0].mxu0
  %v928 = vadd.f32 %v481, %v927
  %v929 = vpop.f32.mrb[0].mxu0
  %v930 = vpop.f32.mrb[0].mxu0
  %v931 = vadd.f32 %v484, %v930
  %v932 = vpop.f32.mrb[0].mxu0
  %933 = vmatprep.mubr.bf16.mxu0 0
  %934 = vmatmul.mubr.bf16.gmra.mrb[0].mxu0 %v728
  %v935 = vpop.f32.mrb[0].mxu0
  %v936 = vadd.f32 %v489, %v935
  %v937 = vpop.f32.mrb[0].mxu0
  %v938 = vpop.f32.mrb[0].mxu0
  %v939 = vadd.f32 %v492, %v938
  %v940 = vpop.f32.mrb[0].mxu0
  %941 = vmatprep.mubr.bf16.mxu0 0
  %942 = vmatmul.mubr.bf16.gmra.mrb[0].mxu0 %v731
  %v943 = vpop.f32.mrb[0].mxu0
  %v944 = vadd.f32 %v497, %v943
  %v945 = vpop.f32.mrb[0].mxu0
  %v946 = vpop.f32.mrb[0].mxu0
  %v947 = vadd.f32 %v500, %v946
  %v948 = vpop.f32.mrb[0].mxu0
  %949 = vmatprep.mubr.bf16.mxu0 0
  %950 = vmatmul.mubr.bf16.gmra.mrb[0].mxu0 %v734
  %v951 = vpop.f32.mrb[0].mxu0
  %v952 = vadd.f32 %v505, %v951
  %v953 = vpop.f32.mrb[0].mxu0
  %v954 = vpop.f32.mrb[0].mxu0
  %v955 = vadd.f32 %v508, %v954
  %v956 = vpop.f32.mrb[0].mxu0
  %957 = vmatprep.mubr.bf16.mxu0 0
  %958 = vmatmul.mubr.bf16.gmra.mrb[0].mxu0 %v737
  %v959 = vpop.f32.mrb[0].mxu0
  %v960 = vadd.f32 %v513, %v959
  %v961 = vpop.f32.mrb[0].mxu0
  %v962 = vpop.f32.mrb[0].mxu0
  %v963 = vadd.f32 %v516, %v962
  %v964 = vpop.f32.mrb[0].mxu0
  %965 = vmatprep.mubr.bf16.mxu0 0
  %966 = vmatmul.mubr.bf16.gmra.mrb[0].mxu0 %v740
  %v967 = vpop.f32.mrb[0].mxu0
  %v968 = vadd.f32 %v521, %v967
  %v969 = vpop.f32.mrb[0].mxu0
  %v970 = vpop.f32.mrb[0].mxu0
  %v971 = vadd.f32 %v524, %v970
  %v972 = vpop.f32.mrb[0].mxu0
  %973 = vmatprep.mubr.bf16.mxu0 0
  %974 = vmatmul.mubr.bf16.gmra.mrb[0].mxu0 %v743
  %v975 = vpop.f32.mrb[0].mxu0
  %v976 = vadd.f32 %v529, %v975
  %v977 = vpop.f32.mrb[0].mxu0
  %v978 = vpop.f32.mrb[0].mxu0
  %v979 = vadd.f32 %v532, %v978
  %v980 = vpop.f32.mrb[0].mxu0
  %981 = vmatprep.mubr.bf16.mxu0 0
  %982 = vmatmul.mubr.bf16.gmra.mrb[0].mxu0 %v746
  %v983 = vpop.f32.mrb[0].mxu0
  %v984 = vadd.f32 %v537, %v983
  %v985 = vpop.f32.mrb[0].mxu0
  %v986 = vpop.f32.mrb[0].mxu0
  %v987 = vadd.f32 %v540, %v986
  %v988 = vpop.f32.mrb[0].mxu0
  %989 = vmatprep.mubr.bf16.mxu0 0
  %990 = vmatmul.mubr.bf16.gmra.mrb[0].mxu0 %v749
  %v991 = vpop.f32.mrb[0].mxu0
  %v992 = vadd.f32 %v545, %v991
  %v993 = vpop.f32.mrb[0].mxu0
  %v994 = vpop.f32.mrb[0].mxu0
  %v995 = vadd.f32 %v548, %v994
  %v996 = vpop.f32.mrb[0].mxu0
  %997 = vmatprep.mubr.bf16.mxu0 0
  %998 = vmatmul.mubr.bf16.gmra.mrb[0].mxu0 %v752
  %v999 = vpop.f32.mrb[0].mxu0
  %v1000 = vadd.f32 %v553, %v999
  %v1001 = vpop.f32.mrb[0].mxu0
  %v1002 = vpop.f32.mrb[0].mxu0
  %v1003 = vadd.f32 %v556, %v1002
  %v1004 = vpop.f32.mrb[0].mxu0
  %1005 = vmatprep.mubr.bf16.mxu0 0
  %1006 = vmatmul.mubr.bf16.gmra.mrb[0].mxu0 %v755
  %v1007 = vpop.f32.mrb[0].mxu0
  %v1008 = vadd.f32 %v561, %v1007
  %v1009 = vpop.f32.mrb[0].mxu0
  %v1010 = vpop.f32.mrb[0].mxu0
  %v1011 = vadd.f32 %v564, %v1010
  %v1012 = vpop.f32.mrb[0].mxu0
  %1013 = vmatprep.mubr.bf16.mxu0 0
  %1014 = vmatmul.mubr.bf16.gmra.mrb[0].mxu0 %v758
  %v1015 = vpop.f32.mrb[0].mxu0
  %v1016 = vadd.f32 %v569, %v1015
  %v1017 = vpop.f32.mrb[0].mxu0
  %v1018 = vpop.f32.mrb[0].mxu0
  %v1019 = vadd.f32 %v572, %v1018
  %v1020 = vpop.f32.mrb[0].mxu0
  %1021 = vmatprep.mubr.bf16.mxu0 0
  %1022 = vmatmul.mubr.bf16.gmra.mrb[0].mxu0 %v761
  %v1023 = vpop.f32.mrb[0].mxu0
  %v1024 = vadd.f32 %v577, %v1023
  %v1025 = vpop.f32.mrb[0].mxu0
  %v1026 = vpop.f32.mrb[0].mxu0
  %v1027 = vadd.f32 %v580, %v1026
  %v1028 = vpop.f32.mrb[0].mxu0
  %1029 = vmatprep.mubr.bf16.mxu0 0
  %1030 = vmatmul.mubr.bf16.gmra.mrb[0].mxu0 %v764
  %v1031 = vpop.f32.mrb[0].mxu0
  %v1032 = vadd.f32 %v585, %v1031
  %v1033 = vpop.f32.mrb[0].mxu0
  %v1034 = vpop.f32.mrb[0].mxu0
  %v1035 = vadd.f32 %v588, %v1034
  %v1036 = vpop.f32.mrb[0].mxu0
  %1037 = vmatprep.mubr.bf16.mxu0 0
  %1038 = vmatmul.mubr.bf16.gmra.mrb[0].mxu0 %v767
  %v1039 = vpop.f32.mrb[0].mxu0
  %v1040 = vadd.f32 %v593, %v1039
  %v1041 = vpop.f32.mrb[0].mxu0
  %v1042 = vpop.f32.mrb[0].mxu0
  %v1043 = vadd.f32 %v596, %v1042
  %v1044 = vpop.f32.mrb[0].mxu0
  %1045 = vmatprep.mubr.bf16.mxu0 0
  %1046 = vmatmul.mubr.bf16.gmra.mrb[0].mxu0 %v770
  %v1047 = vpop.f32.mrb[0].mxu0
  %v1048 = vadd.f32 %v601, %v1047
  %v1049 = vpop.f32.mrb[0].mxu0
  %v1050 = vpop.f32.mrb[0].mxu0
  %v1051 = vadd.f32 %v604, %v1050
  %v1052 = vpop.f32.mrb[0].mxu0
  %1053 = vmatprep.mubr.bf16.mxu0 0
  %1054 = vmatmul.mubr.bf16.gmra.mrb[0].mxu0 %v773
  %v1055 = vpop.f32.mrb[0].mxu0
  %v1056 = vadd.f32 %v609, %v1055
  %v1057 = vpop.f32.mrb[0].mxu0
  %v1058 = vpop.f32.mrb[0].mxu0
  %v1059 = vadd.f32 %v612, %v1058
  %v1060 = vpop.f32.mrb[0].mxu0
  %1061 = vmatprep.mubr.bf16.mxu0 0
  %1062 = vmatmul.mubr.bf16.gmra.mrb[0].mxu0 %v776
  %v1063 = vpop.f32.mrb[0].mxu0
  %v1064 = vadd.f32 %v617, %v1063
  %v1065 = vpop.f32.mrb[0].mxu0
  %v1066 = vpop.f32.mrb[0].mxu0
  %v1067 = vadd.f32 %v620, %v1066
  %v1068 = vpop.f32.mrb[0].mxu0
  %1069 = vmatprep.mubr.bf16.mxu0 0
  %1070 = vmatmul.mubr.bf16.gmra.mrb[0].mxu0 %v779
  %v1071 = vpop.f32.mrb[0].mxu0
  %v1072 = vadd.f32 %v625, %v1071
  %v1073 = vpop.f32.mrb[0].mxu0
  %v1074 = vpop.f32.mrb[0].mxu0
  %v1075 = vadd.f32 %v628, %v1074
  %v1076 = vpop.f32.mrb[0].mxu0
  %1077 = vmatprep.mubr.bf16.mxu0 0
  %1078 = vmatmul.mubr.bf16.gmra.mrb[0].mxu0 %v782
  %v1079 = vpop.f32.mrb[0].mxu0
  %v1080 = vadd.f32 %v633, %v1079
  %v1081 = vpop.f32.mrb[0].mxu0
  %v1082 = vpop.f32.mrb[0].mxu0
  %v1083 = vadd.f32 %v636, %v1082
  %v1084 = vpop.f32.mrb[0].mxu0
  %1085 = vmatprep.mubr.bf16.mxu0 0
  %1086 = vmatmul.mubr.bf16.gmra.mrb[0].mxu0 %v785
  %v1087 = vpop.f32.mrb[0].mxu0
  %v1088 = vadd.f32 %v641, %v1087
  %v1089 = vpop.f32.mrb[0].mxu0
  %v1090 = vpop.f32.mrb[0].mxu0
  %v1091 = vadd.f32 %v644, %v1090
  %v1092 = vpop.f32.mrb[0].mxu0
  %1093 = vmatprep.mubr.bf16.mxu0 0
  %1094 = vmatmul.mubr.bf16.gmra.mrb[0].mxu0 %v788
  %v1095 = vpop.f32.mrb[0].mxu0
  %v1096 = vadd.f32 %v649, %v1095
  %v1097 = vpop.f32.mrb[0].mxu0
  %v1098 = vpop.f32.mrb[0].mxu0
  %v1099 = vadd.f32 %v652, %v1098
  %v1100 = vpop.f32.mrb[0].mxu0
  %1101 = vmatprep.mubr.bf16.mxu0 0
  %1102 = vmatmul.mubr.bf16.gmra.mrb[0].mxu0 %v791
  %v1103 = vpop.f32.mrb[0].mxu0
  %v1104 = vadd.f32 %v657, %v1103
  %v1105 = vpop.f32.mrb[0].mxu0
  %v1106 = vpop.f32.mrb[0].mxu0
  %v1107 = vadd.f32 %v660, %v1106
  %v1108 = vpop.f32.mrb[0].mxu0
  %1109 = vmatprep.mubr.bf16.mxu0 0
  %1110 = vmatmul.mubr.bf16.gmra.mrb[0].mxu0 %v794
  %v1111 = vpop.f32.mrb[0].mxu0
  %v1112 = vadd.f32 %v665, %v1111
  %v1113 = vpop.f32.mrb[0].mxu0
  %v1114 = vpop.f32.mrb[0].mxu0
  %v1115 = vadd.f32 %v668, %v1114
  %v1116 = vpop.f32.mrb[0].mxu0
  %1117 = vmatprep.mubr.bf16.mxu0 0
  %1118 = vmatmul.mubr.bf16.gmra.mrb[0].mxu0 %v797
  %v1119 = vpop.f32.mrb[0].mxu0
  %v1120 = vadd.f32 %v673, %v1119
  %v1121 = vpop.f32.mrb[0].mxu0
  %v1122 = vpop.f32.mrb[0].mxu0
  %v1123 = vadd.f32 %v676, %v1122
  %v1124 = vpop.f32.mrb[0].mxu0
  %1125 = vmatprep.mubr.bf16.mxu0 0
  %1126 = vmatmul.mubr.bf16.gmra.mrb[0].mxu0 %v800
  %v1127 = vpop.f32.mrb[0].mxu0
  %v1128 = vadd.f32 %v681, %v1127
  %v1129 = vpop.f32.mrb[0].mxu0
  %v1130 = vpop.f32.mrb[0].mxu0
  %v1131 = vpop.f32.mrb[0].mxu0
  %1132 = vdwg.mxu0
  %v1133 = vld [vmem:[%s0 + $0x11] sm:$0xff]
  %v1134 = vld [vmem:[%s0 + $0x19] sm:$0xff]
  %v1135 = vld [vmem:[%s0 + $0x21] sm:$0xff]
  %v1136 = vld [vmem:[%s0 + $0x29] sm:$0xff]
  %v1137 = vld [vmem:[%s0 + $0x31] sm:$0xff]
  %v1138 = vld [vmem:[%s0 + $0x39] sm:$0xff]
  %v1139 = vld [vmem:[%s0 + $0x41] sm:$0xff]
  %v1140 = vld [vmem:[%s0 + $0x49] sm:$0xff]
  %v1141 = vld [vmem:[%s0 + $0x51] sm:$0xff]
  %v1142 = vld [vmem:[%s0 + $0x59] sm:$0xff]
  %v1143 = vld [vmem:[%s0 + $0x61] sm:$0xff]
  %v1144 = vld [vmem:[%s0 + $0x69] sm:$0xff]
  %v1145 = vld [vmem:[%s0 + $0x71] sm:$0xff]
  %v1146 = vld [vmem:[%s0 + $0x79] sm:$0xff]
  %v1147 = vld [vmem:[%s0 + $0x81] sm:$0xff]
  %v1148 = vld [vmem:[%s0 + $0x89] sm:$0xff]
  %v1149 = vld [vmem:[%s0 + $0x91] sm:$0xff]
  %v1150 = vld [vmem:[%s0 + $0x99] sm:$0xff]
  %v1151 = vld [vmem:[%s0 + $0xa1] sm:$0xff]
  %v1152 = vld [vmem:[%s0 + $0xa9] sm:$0xff]
  %v1153 = vld [vmem:[%s0 + $0xb1] sm:$0xff]
  %v1154 = vld [vmem:[%s0 + $0xb9] sm:$0xff]
  %v1155 = vld [vmem:[%s0 + $0xc1] sm:$0xff]
  %v1156 = vld [vmem:[%s0 + $0xc9] sm:$0xff]
  %v1157 = vld [vmem:[%s0 + $0xd1] sm:$0xff]
  %v1158 = vld [vmem:[%s0 + $0xd9] sm:$0xff]
  %v1159 = vld [vmem:[%s0 + $0xe1] sm:$0xff]
  %v1160 = vld [vmem:[%s0 + $0xe9] sm:$0xff]
  %v1161 = vld [vmem:[%s0 + $0xf1] sm:$0xff]
  %v1162 = vld [vmem:[%s0 + $0xf9] sm:$0xff]
  %v1163 = vld [vmem:[%s0 + $0x101] sm:$0xff]
  %v1164 = vld [vmem:[%s0 + $0x109] sm:$0xff]
  %v1165 = vld [vmem:[%s0 + $0x111] sm:$0xff]
  %v1166 = vld [vmem:[%s0 + $0x119] sm:$0xff]
  %v1167 = vld [vmem:[%s0 + $0x121] sm:$0xff]
  %v1168 = vld [vmem:[%s0 + $0x129] sm:$0xff]
  %v1169 = vld [vmem:[%s0 + $0x131] sm:$0xff]
  %v1170 = vld [vmem:[%s0 + $0x139] sm:$0xff]
  %v1171 = vld [vmem:[%s0 + $0x141] sm:$0xff]
  %v1172 = vld [vmem:[%s0 + $0x149] sm:$0xff]
  %v1173 = vld [vmem:[%s0 + $0x151] sm:$0xff]
  %v1174 = vld [vmem:[%s0 + $0x159] sm:$0xff]
  %v1175 = vld [vmem:[%s0 + $0x161] sm:$0xff]
  %v1176 = vld [vmem:[%s0 + $0x169] sm:$0xff]
  %v1177 = vld [vmem:[%s0 + $0x171] sm:$0xff]
  %v1178 = vld [vmem:[%s0 + $0x179] sm:$0xff]
  %v1179 = vld [vmem:[%s0 + $0x181] sm:$0xff]
  %v1180 = vld [vmem:[%s0 + $0x189] sm:$0xff]
  %v1181 = vld [vmem:[%s0 + $0x191] sm:$0xff]
  %v1182 = vld [vmem:[%s0 + $0x199] sm:$0xff]
  %v1183 = vld [vmem:[%s0 + $0x1a1] sm:$0xff]
  %v1184 = vld [vmem:[%s0 + $0x1a9] sm:$0xff]
  %v1185 = vld [vmem:[%s0 + $0x1b1] sm:$0xff]
  %v1186 = vld [vmem:[%s0 + $0x1b9] sm:$0xff]
  %v1187 = vld [vmem:[%s0 + $0x1c1] sm:$0xff]
  %v1188 = vld [vmem:[%s0 + $0x1c9] sm:$0xff]
  %v1189 = vld [vmem:[%s0 + $0x1d1] sm:$0xff]
  %v1190 = vld [vmem:[%s0 + $0x1d9] sm:$0xff]
  %v1191 = vld [vmem:[%s0 + $0x1e1] sm:$0xff]
  %v1192 = vld [vmem:[%s0 + $0x1e9] sm:$0xff]
  %v1193 = vld [vmem:[%s0 + $0x1f1] sm:$0xff]
  %v1194 = vld [vmem:[%s0 + $0x1f9] sm:$0xff]
  %v1195 = vld [vmem:[%s0 + $0x201] sm:$0xff]
  %v1196 = vld [vmem:[%s0 + $0x209] sm:$0xff]
  %v1197 = vld [vmem:[%s0 + $0x211] sm:$0xff]
  %v1198 = vld [vmem:[%s0 + $0x219] sm:$0xff]
  %v1199 = vld [vmem:[%s0 + $0x221] sm:$0xff]
  %v1200 = vld [vmem:[%s0 + $0x229] sm:$0xff]
  %v1201 = vld [vmem:[%s0 + $0x231] sm:$0xff]
  %v1202 = vld [vmem:[%s0 + $0x239] sm:$0xff]
  %v1203 = vld [vmem:[%s0 + $0x241] sm:$0xff]
  %v1204 = vld [vmem:[%s0 + $0x249] sm:$0xff]
  %v1205 = vld [vmem:[%s0 + $0x251] sm:$0x3]
  %v1206 = vpack.c.bf16 %v1134, %v1133
  %v1207 = vpack.c.bf16 %v1136, %v1135
  %v1208 = vpack.c.bf16 %v1138, %v1137
  %v1209 = vpack.c.bf16 %v1140, %v1139
  %v1210 = vpack.c.bf16 %v1142, %v1141
  %v1211 = vpack.c.bf16 %v1144, %v1143
  %v1212 = vpack.c.bf16 %v1146, %v1145
  %v1213 = vpack.c.bf16 %v1148, %v1147
  %v1214 = vpack.c.bf16 %v1150, %v1149
  %v1215 = vpack.c.bf16 %v1152, %v1151
  %v1216 = vpack.c.bf16 %v1154, %v1153
  %v1217 = vpack.c.bf16 %v1156, %v1155
  %v1218 = vpack.c.bf16 %v1158, %v1157
  %v1219 = vpack.c.bf16 %v1160, %v1159
  %v1220 = vpack.c.bf16 %v1162, %v1161
  %v1221 = vpack.c.bf16 %v1164, %v1163
  %v1222 = vpack.c.bf16 %v1166, %v1165
  %v1223 = vpack.c.bf16 %v1168, %v1167
  %v1224 = vpack.c.bf16 %v1170, %v1169
  %v1225 = vpack.c.bf16 %v1172, %v1171
  %v1226 = vpack.c.bf16 %v1174, %v1173
  %v1227 = vpack.c.bf16 %v1176, %v1175
  %v1228 = vpack.c.bf16 %v1178, %v1177
  %v1229 = vpack.c.bf16 %v1180, %v1179
  %v1230 = vpack.c.bf16 %v1182, %v1181
  %v1231 = vpack.c.bf16 %v1184, %v1183
  %v1232 = vpack.c.bf16 %v1186, %v1185
  %v1233 = vpack.c.bf16 %v1188, %v1187
  %v1234 = vpack.c.bf16 %v1190, %v1189
  %v1235 = vpack.c.bf16 %v1192, %v1191
  %v1236 = vpack.c.bf16 %v1194, %v1193
  %v1237 = vpack.c.bf16 %v1196, %v1195
  %v1238 = vpack.c.bf16 %v1198, %v1197
  %v1239 = vpack.c.bf16 %v1200, %v1199
  %v1240 = vpack.c.bf16 %v1202, %v1201
  %v1241 = vpack.c.bf16 %v1204, %v1203
  %v1242 = vpack.c.bf16 %v1205, %v1205
  %s1243 = scalar_lea.vmem %s1, 16
  %v1244 = vld [vmem:[%s1243] sm:$0xf]
  %v1245 = vld [vmem:[%s1243 + $0x4] sm:$0x3]
  %v1248 = vunpack.c.l.b16 %v1244
  %v1249 = vunpack.c.l.b16 %v1245
  %v1250 = vpack.c.b16 %v1249, %v1248
  %v1252 = vsel %vm242, %v1206, 0
  %v1255 = vsel %vm242, %v1207, 0
  %v1258 = vsel %vm242, %v1208, 0
  %v1261 = vsel %vm242, %v1209, 0
  %v1264 = vsel %vm242, %v1210, 0
  %v1267 = vsel %vm242, %v1211, 0
  %v1270 = vsel %vm242, %v1212, 0
  %v1273 = vsel %vm242, %v1213, 0
  %v1276 = vsel %vm242, %v1214, 0
  %v1279 = vsel %vm242, %v1215, 0
  %v1282 = vsel %vm242, %v1216, 0
  %v1285 = vsel %vm242, %v1217, 0
  %v1288 = vsel %vm242, %v1218, 0
  %v1291 = vsel %vm242, %v1219, 0
  %v1294 = vsel %vm242, %v1220, 0
  %v1297 = vsel %vm242, %v1221, 0
  %v1300 = vsel %vm242, %v1222, 0
  %v1303 = vsel %vm242, %v1223, 0
  %v1306 = vsel %vm242, %v1224, 0
  %v1309 = vsel %vm242, %v1225, 0
  %v1312 = vsel %vm242, %v1226, 0
  %v1315 = vsel %vm242, %v1227, 0
  %v1318 = vsel %vm242, %v1228, 0
  %v1321 = vsel %vm242, %v1229, 0
  %v1324 = vsel %vm242, %v1230, 0
  %v1327 = vsel %vm242, %v1231, 0
  %v1330 = vsel %vm242, %v1232, 0
  %v1333 = vsel %vm242, %v1233, 0
  %v1336 = vsel %vm242, %v1234, 0
  %v1339 = vsel %vm242, %v1235, 0
  %v1342 = vsel %vm242, %v1236, 0
  %v1345 = vsel %vm242, %v1237, 0
  %v1348 = vsel %vm242, %v1238, 0
  %v1351 = vsel %vm242, %v1239, 0
  %v1354 = vsel %vm242, %v1240, 0
  %v1357 = vsel %vm242, %v1241, 0
  %v1360 = vsel %vm242, %v1242, 0
  %v1363 = vsel %vm354, %v1250, 0
  %1365 = vmatprep.subr.bf16.mxu0 0
  %1366 = vmatpush1.bf16.msra.mxu0 %v1363
  %1367 = vmatprep.subr.bf16.mxu0 0
  %1368 = vmatpush1.bf16.msra.mxu0 0
  %1369 = vmatprep.subr.bf16.mxu0 0
  %1370 = vmatpush1.bf16.msra.mxu0 0
  %1371 = vmatprep.subr.bf16.mxu0 0
  %1372 = vmatpush1.bf16.msra.mxu0 0
  %1373 = vmatprep.subr.bf16.mxu0 0
  %1374 = vmatpush1.bf16.msra.mxu0 0
  %1375 = vmatprep.subr.bf16.mxu0 0
  %1376 = vmatpush1.bf16.msra.mxu0 0
  %1377 = vmatprep.subr.bf16.mxu0 0
  %1378 = vmatpush1.bf16.msra.mxu0 0
  %1379 = vmatprep.subr.bf16.mxu0 0
  %1380 = vmatpush1.bf16.msra.mxu0 0
  %1381 = vmatprep.subr.bf16.mxu0 0
  %1382 = vmatpush1.bf16.msra.mxu0 0
  %1383 = vmatprep.subr.bf16.mxu0 0
  %1384 = vmatpush1.bf16.msra.mxu0 0
  %1385 = vmatprep.subr.bf16.mxu0 0
  %1386 = vmatpush1.bf16.msra.mxu0 0
  %1387 = vmatprep.subr.bf16.mxu0 0
  %1388 = vmatpush1.bf16.msra.mxu0 0
  %1389 = vmatprep.subr.bf16.mxu0 0
  %1390 = vmatpush1.bf16.msra.mxu0 0
  %1391 = vmatprep.subr.bf16.mxu0 0
  %1392 = vmatpush1.bf16.msra.mxu0 0
  %1393 = vmatprep.subr.bf16.mxu0 0
  %1394 = vmatpush1.bf16.msra.mxu0 0
  %1395 = vmatprep.subr.bf16.mxu0 0
  %1396 = vmatpush1.bf16.msra.mxu0 0
  %1397 = vmatprep.mubr.bf16.mxu0 0
  %1398 = vmatmul.mubr.bf16.gmra.mrb[0].mxu0 %v1252
  %v1399 = vpop.f32.mrb[0].mxu0
  %v1400 = vadd.f32 0.0, %v1399
  %v1401 = vpop.f32.mrb[0].mxu0
  %v1402 = vpop.f32.mrb[0].mxu0
  %v1403 = vadd.f32 0.0, %v1402
  %v1404 = vpop.f32.mrb[0].mxu0
  %1405 = vmatprep.mubr.bf16.mxu0 0
  %1406 = vmatmul.mubr.bf16.gmra.mrb[0].mxu0 %v1255
  %v1407 = vpop.f32.mrb[0].mxu0
  %v1408 = vadd.f32 0.0, %v1407
  %v1409 = vpop.f32.mrb[0].mxu0
  %v1410 = vpop.f32.mrb[0].mxu0
  %v1411 = vadd.f32 0.0, %v1410
  %v1412 = vpop.f32.mrb[0].mxu0
  %1413 = vmatprep.mubr.bf16.mxu0 0
  %1414 = vmatmul.mubr.bf16.gmra.mrb[0].mxu0 %v1258
  %v1415 = vpop.f32.mrb[0].mxu0
  %v1416 = vadd.f32 0.0, %v1415
  %v1417 = vpop.f32.mrb[0].mxu0
  %v1418 = vpop.f32.mrb[0].mxu0
  %v1419 = vadd.f32 0.0, %v1418
  %v1420 = vpop.f32.mrb[0].mxu0
  %1421 = vmatprep.mubr.bf16.mxu0 0
  %1422 = vmatmul.mubr.bf16.gmra.mrb[0].mxu0 %v1261
  %v1423 = vpop.f32.mrb[0].mxu0
  %v1424 = vadd.f32 0.0, %v1423
  %v1425 = vpop.f32.mrb[0].mxu0
  %v1426 = vpop.f32.mrb[0].mxu0
  %v1427 = vadd.f32 0.0, %v1426
  %v1428 = vpop.f32.mrb[0].mxu0
  %1429 = vmatprep.mubr.bf16.mxu0 0
  %1430 = vmatmul.mubr.bf16.gmra.mrb[0].mxu0 %v1264
  %v1431 = vpop.f32.mrb[0].mxu0
  %v1432 = vadd.f32 0.0, %v1431
  %v1433 = vpop.f32.mrb[0].mxu0
  %v1434 = vpop.f32.mrb[0].mxu0
  %v1435 = vadd.f32 0.0, %v1434
  %v1436 = vpop.f32.mrb[0].mxu0
  %1437 = vmatprep.mubr.bf16.mxu0 0
  %1438 = vmatmul.mubr.bf16.gmra.mrb[0].mxu0 %v1267
  %v1439 = vpop.f32.mrb[0].mxu0
  %v1440 = vadd.f32 0.0, %v1439
  %v1441 = vpop.f32.mrb[0].mxu0
  %v1442 = vpop.f32.mrb[0].mxu0
  %v1443 = vadd.f32 0.0, %v1442
  %v1444 = vpop.f32.mrb[0].mxu0
  %1445 = vmatprep.mubr.bf16.mxu0 0
  %1446 = vmatmul.mubr.bf16.gmra.mrb[0].mxu0 %v1270
  %v1447 = vpop.f32.mrb[0].mxu0
  %v1448 = vadd.f32 0.0, %v1447
  %v1449 = vpop.f32.mrb[0].mxu0
  %v1450 = vpop.f32.mrb[0].mxu0
  %v1451 = vadd.f32 0.0, %v1450
  %v1452 = vpop.f32.mrb[0].mxu0
  %1453 = vmatprep.mubr.bf16.mxu0 0
  %1454 = vmatmul.mubr.bf16.gmra.mrb[0].mxu0 %v1273
  %v1455 = vpop.f32.mrb[0].mxu0
  %v1456 = vadd.f32 0.0, %v1455
  %v1457 = vpop.f32.mrb[0].mxu0
  %v1458 = vpop.f32.mrb[0].mxu0
  %v1459 = vadd.f32 0.0, %v1458
  %v1460 = vpop.f32.mrb[0].mxu0
  %1461 = vmatprep.mubr.bf16.mxu0 0
  %1462 = vmatmul.mubr.bf16.gmra.mrb[0].mxu0 %v1276
  %v1463 = vpop.f32.mrb[0].mxu0
  %v1464 = vadd.f32 0.0, %v1463
  %v1465 = vpop.f32.mrb[0].mxu0
  %v1466 = vpop.f32.mrb[0].mxu0
  %v1467 = vadd.f32 0.0, %v1466
  %v1468 = vpop.f32.mrb[0].mxu0
  %1469 = vmatprep.mubr.bf16.mxu0 0
  %1470 = vmatmul.mubr.bf16.gmra.mrb[0].mxu0 %v1279
  %v1471 = vpop.f32.mrb[0].mxu0
  %v1472 = vadd.f32 0.0, %v1471
  %v1473 = vpop.f32.mrb[0].mxu0
  %v1474 = vpop.f32.mrb[0].mxu0
  %v1475 = vadd.f32 0.0, %v1474
  %v1476 = vpop.f32.mrb[0].mxu0
  %1477 = vmatprep.mubr.bf16.mxu0 0
  %1478 = vmatmul.mubr.bf16.gmra.mrb[0].mxu0 %v1282
  %v1479 = vpop.f32.mrb[0].mxu0
  %v1480 = vadd.f32 0.0, %v1479
  %v1481 = vpop.f32.mrb[0].mxu0
  %v1482 = vpop.f32.mrb[0].mxu0
  %v1483 = vadd.f32 0.0, %v1482
  %v1484 = vpop.f32.mrb[0].mxu0
  %1485 = vmatprep.mubr.bf16.mxu0 0
  %1486 = vmatmul.mubr.bf16.gmra.mrb[0].mxu0 %v1285
  %v1487 = vpop.f32.mrb[0].mxu0
  %v1488 = vadd.f32 0.0, %v1487
  %v1489 = vpop.f32.mrb[0].mxu0
  %v1490 = vpop.f32.mrb[0].mxu0
  %v1491 = vadd.f32 0.0, %v1490
  %v1492 = vpop.f32.mrb[0].mxu0
  %1493 = vmatprep.mubr.bf16.mxu0 0
  %1494 = vmatmul.mubr.bf16.gmra.mrb[0].mxu0 %v1288
  %v1495 = vpop.f32.mrb[0].mxu0
  %v1496 = vadd.f32 0.0, %v1495
  %v1497 = vpop.f32.mrb[0].mxu0
  %v1498 = vpop.f32.mrb[0].mxu0
  %v1499 = vadd.f32 0.0, %v1498
  %v1500 = vpop.f32.mrb[0].mxu0
  %1501 = vmatprep.mubr.bf16.mxu0 0
  %1502 = vmatmul.mubr.bf16.gmra.mrb[0].mxu0 %v1291
  %v1503 = vpop.f32.mrb[0].mxu0
  %v1504 = vadd.f32 0.0, %v1503
  %v1505 = vpop.f32.mrb[0].mxu0
  %v1506 = vpop.f32.mrb[0].mxu0
  %v1507 = vadd.f32 0.0, %v1506
  %v1508 = vpop.f32.mrb[0].mxu0
  %1509 = vmatprep.mubr.bf16.mxu0 0
  %1510 = vmatmul.mubr.bf16.gmra.mrb[0].mxu0 %v1294
  %v1511 = vpop.f32.mrb[0].mxu0
  %v1512 = vadd.f32 0.0, %v1511
  %v1513 = vpop.f32.mrb[0].mxu0
  %v1514 = vpop.f32.mrb[0].mxu0
  %v1515 = vadd.f32 0.0, %v1514
  %v1516 = vpop.f32.mrb[0].mxu0
  %1517 = vmatprep.mubr.bf16.mxu0 0
  %1518 = vmatmul.mubr.bf16.gmra.mrb[0].mxu0 %v1297
  %v1519 = vpop.f32.mrb[0].mxu0
  %v1520 = vadd.f32 0.0, %v1519
  %v1521 = vpop.f32.mrb[0].mxu0
  %v1522 = vpop.f32.mrb[0].mxu0
  %v1523 = vadd.f32 0.0, %v1522
  %v1524 = vpop.f32.mrb[0].mxu0
  %1525 = vmatprep.mubr.bf16.mxu0 0
  %1526 = vmatmul.mubr.bf16.gmra.mrb[0].mxu0 %v1300
  %v1527 = vpop.f32.mrb[0].mxu0
  %v1528 = vadd.f32 0.0, %v1527
  %v1529 = vpop.f32.mrb[0].mxu0
  %v1530 = vpop.f32.mrb[0].mxu0
  %v1531 = vadd.f32 0.0, %v1530
  %v1532 = vpop.f32.mrb[0].mxu0
  %1533 = vmatprep.mubr.bf16.mxu0 0
  %1534 = vmatmul.mubr.bf16.gmra.mrb[0].mxu0 %v1303
  %v1535 = vpop.f32.mrb[0].mxu0
  %v1536 = vadd.f32 0.0, %v1535
  %v1537 = vpop.f32.mrb[0].mxu0
  %v1538 = vpop.f32.mrb[0].mxu0
  %v1539 = vadd.f32 0.0, %v1538
  %v1540 = vpop.f32.mrb[0].mxu0
  %1541 = vmatprep.mubr.bf16.mxu0 0
  %1542 = vmatmul.mubr.bf16.gmra.mrb[0].mxu0 %v1306
  %v1543 = vpop.f32.mrb[0].mxu0
  %v1544 = vadd.f32 0.0, %v1543
  %v1545 = vpop.f32.mrb[0].mxu0
  %v1546 = vpop.f32.mrb[0].mxu0
  %v1547 = vadd.f32 0.0, %v1546
  %v1548 = vpop.f32.mrb[0].mxu0
  %1549 = vmatprep.mubr.bf16.mxu0 0
  %1550 = vmatmul.mubr.bf16.gmra.mrb[0].mxu0 %v1309
  %v1551 = vpop.f32.mrb[0].mxu0
  %v1552 = vadd.f32 0.0, %v1551
  %v1553 = vpop.f32.mrb[0].mxu0
  %v1554 = vpop.f32.mrb[0].mxu0
  %v1555 = vadd.f32 0.0, %v1554
  %v1556 = vpop.f32.mrb[0].mxu0
  %1557 = vmatprep.mubr.bf16.mxu0 0
  %1558 = vmatmul.mubr.bf16.gmra.mrb[0].mxu0 %v1312
  %v1559 = vpop.f32.mrb[0].mxu0
  %v1560 = vadd.f32 0.0, %v1559
  %v1561 = vpop.f32.mrb[0].mxu0
  %v1562 = vpop.f32.mrb[0].mxu0
  %v1563 = vadd.f32 0.0, %v1562
  %v1564 = vpop.f32.mrb[0].mxu0
  %1565 = vmatprep.mubr.bf16.mxu0 0
  %1566 = vmatmul.mubr.bf16.gmra.mrb[0].mxu0 %v1315
  %v1567 = vpop.f32.mrb[0].mxu0
  %v1568 = vadd.f32 0.0, %v1567
  %v1569 = vpop.f32.mrb[0].mxu0
  %v1570 = vpop.f32.mrb[0].mxu0
  %v1571 = vadd.f32 0.0, %v1570
  %v1572 = vpop.f32.mrb[0].mxu0
  %1573 = vmatprep.mubr.bf16.mxu0 0
  %1574 = vmatmul.mubr.bf16.gmra.mrb[0].mxu0 %v1318
  %v1575 = vpop.f32.mrb[0].mxu0
  %v1576 = vadd.f32 0.0, %v1575
  %v1577 = vpop.f32.mrb[0].mxu0
  %v1578 = vpop.f32.mrb[0].mxu0
  %v1579 = vadd.f32 0.0, %v1578
  %v1580 = vpop.f32.mrb[0].mxu0
  %1581 = vmatprep.mubr.bf16.mxu0 0
  %1582 = vmatmul.mubr.bf16.gmra.mrb[0].mxu0 %v1321
  %v1583 = vpop.f32.mrb[0].mxu0
  %v1584 = vadd.f32 0.0, %v1583
  %v1585 = vpop.f32.mrb[0].mxu0
  %v1586 = vpop.f32.mrb[0].mxu0
  %v1587 = vadd.f32 0.0, %v1586
  %v1588 = vpop.f32.mrb[0].mxu0
  %1589 = vmatprep.mubr.bf16.mxu0 0
  %1590 = vmatmul.mubr.bf16.gmra.mrb[0].mxu0 %v1324
  %v1591 = vpop.f32.mrb[0].mxu0
  %v1592 = vadd.f32 0.0, %v1591
  %v1593 = vpop.f32.mrb[0].mxu0
  %v1594 = vpop.f32.mrb[0].mxu0
  %v1595 = vadd.f32 0.0, %v1594
  %v1596 = vpop.f32.mrb[0].mxu0
  %1597 = vmatprep.mubr.bf16.mxu0 0
  %1598 = vmatmul.mubr.bf16.gmra.mrb[0].mxu0 %v1327
  %v1599 = vpop.f32.mrb[0].mxu0
  %v1600 = vadd.f32 0.0, %v1599
  %v1601 = vpop.f32.mrb[0].mxu0
  %v1602 = vpop.f32.mrb[0].mxu0
  %v1603 = vadd.f32 0.0, %v1602
  %v1604 = vpop.f32.mrb[0].mxu0
  %1605 = vmatprep.mubr.bf16.mxu0 0
  %1606 = vmatmul.mubr.bf16.gmra.mrb[0].mxu0 %v1330
  %v1607 = vpop.f32.mrb[0].mxu0
  %v1608 = vadd.f32 0.0, %v1607
  %v1609 = vpop.f32.mrb[0].mxu0
  %v1610 = vpop.f32.mrb[0].mxu0
  %v1611 = vadd.f32 0.0, %v1610
  %v1612 = vpop.f32.mrb[0].mxu0
  %1613 = vmatprep.mubr.bf16.mxu0 0
  %1614 = vmatmul.mubr.bf16.gmra.mrb[0].mxu0 %v1333
  %v1615 = vpop.f32.mrb[0].mxu0
  %v1616 = vadd.f32 0.0, %v1615
  %v1617 = vpop.f32.mrb[0].mxu0
  %v1618 = vpop.f32.mrb[0].mxu0
  %v1619 = vadd.f32 0.0, %v1618
  %v1620 = vpop.f32.mrb[0].mxu0
  %1621 = vmatprep.mubr.bf16.mxu0 0
  %1622 = vmatmul.mubr.bf16.gmra.mrb[0].mxu0 %v1336
  %v1623 = vpop.f32.mrb[0].mxu0
  %v1624 = vadd.f32 0.0, %v1623
  %v1625 = vpop.f32.mrb[0].mxu0
  %v1626 = vpop.f32.mrb[0].mxu0
  %v1627 = vadd.f32 0.0, %v1626
  %v1628 = vpop.f32.mrb[0].mxu0
  %1629 = vmatprep.mubr.bf16.mxu0 0
  %1630 = vmatmul.mubr.bf16.gmra.mrb[0].mxu0 %v1339
  %v1631 = vpop.f32.mrb[0].mxu0
  %v1632 = vadd.f32 0.0, %v1631
  %v1633 = vpop.f32.mrb[0].mxu0
  %v1634 = vpop.f32.mrb[0].mxu0
  %v1635 = vadd.f32 0.0, %v1634
  %v1636 = vpop.f32.mrb[0].mxu0
  %1637 = vmatprep.mubr.bf16.mxu0 0
  %1638 = vmatmul.mubr.bf16.gmra.mrb[0].mxu0 %v1342
  %v1639 = vpop.f32.mrb[0].mxu0
  %v1640 = vadd.f32 0.0, %v1639
  %v1641 = vpop.f32.mrb[0].mxu0
  %v1642 = vpop.f32.mrb[0].mxu0
  %v1643 = vadd.f32 0.0, %v1642
  %v1644 = vpop.f32.mrb[0].mxu0
  %1645 = vmatprep.mubr.bf16.mxu0 0
  %1646 = vmatmul.mubr.bf16.gmra.mrb[0].mxu0 %v1345
  %v1647 = vpop.f32.mrb[0].mxu0
  %v1648 = vadd.f32 0.0, %v1647
  %v1649 = vpop.f32.mrb[0].mxu0
  %v1650 = vpop.f32.mrb[0].mxu0
  %v1651 = vadd.f32 0.0, %v1650
  %v1652 = vpop.f32.mrb[0].mxu0
  %1653 = vmatprep.mubr.bf16.mxu0 0
  %1654 = vmatmul.mubr.bf16.gmra.mrb[0].mxu0 %v1348
  %v1655 = vpop.f32.mrb[0].mxu0
  %v1656 = vadd.f32 0.0, %v1655
  %v1657 = vpop.f32.mrb[0].mxu0
  %v1658 = vpop.f32.mrb[0].mxu0
  %v1659 = vadd.f32 0.0, %v1658
  %v1660 = vpop.f32.mrb[0].mxu0
  %1661 = vmatprep.mubr.bf16.mxu0 0
  %1662 = vmatmul.mubr.bf16.gmra.mrb[0].mxu0 %v1351
  %v1663 = vpop.f32.mrb[0].mxu0
  %v1664 = vadd.f32 0.0, %v1663
  %v1665 = vpop.f32.mrb[0].mxu0
  %v1666 = vpop.f32.mrb[0].mxu0
  %v1667 = vadd.f32 0.0, %v1666
  %v1668 = vpop.f32.mrb[0].mxu0
  %1669 = vmatprep.mubr.bf16.mxu0 0
  %1670 = vmatmul.mubr.bf16.gmra.mrb[0].mxu0 %v1354
  %v1671 = vpop.f32.mrb[0].mxu0
  %v1672 = vadd.f32 0.0, %v1671
  %v1673 = vpop.f32.mrb[0].mxu0
  %v1674 = vpop.f32.mrb[0].mxu0
  %v1675 = vadd.f32 0.0, %v1674
  %v1676 = vpop.f32.mrb[0].mxu0
  %1677 = vmatprep.mubr.bf16.mxu0 0
  %1678 = vmatmul.mubr.bf16.gmra.mrb[0].mxu0 %v1357
  %v1679 = vpop.f32.mrb[0].mxu0
  %v1680 = vadd.f32 0.0, %v1679
  %v1681 = vpop.f32.mrb[0].mxu0
  %v1682 = vpop.f32.mrb[0].mxu0
  %v1683 = vadd.f32 0.0, %v1682
  %v1684 = vpop.f32.mrb[0].mxu0
  %1685 = vmatprep.mubr.bf16.mxu0 0
  %1686 = vmatmul.mubr.bf16.gmra.mrb[0].mxu0 %v1360
  %v1687 = vpop.f32.mrb[0].mxu0
  %v1688 = vadd.f32 0.0, %v1687
  %v1689 = vpop.f32.mrb[0].mxu0
  %v1690 = vpop.f32.mrb[0].mxu0
  %v1691 = vpop.f32.mrb[0].mxu0
  %1692 = vdwg.mxu0
  %v1693 = vadd.f32 %v840, %v1400
  %v1694 = vadd.f32 %v843, %v1403
  %v1695 = vadd.f32 %v848, %v1408
  %v1696 = vadd.f32 %v851, %v1411
  %v1697 = vadd.f32 %v856, %v1416
  %v1698 = vadd.f32 %v859, %v1419
  %v1699 = vadd.f32 %v864, %v1424
  %v1700 = vadd.f32 %v867, %v1427
  %v1701 = vadd.f32 %v872, %v1432
  %v1702 = vadd.f32 %v875, %v1435
  %v1703 = vadd.f32 %v880, %v1440
  %v1704 = vadd.f32 %v883, %v1443
  %v1705 = vadd.f32 %v888, %v1448
  %v1706 = vadd.f32 %v891, %v1451
  %v1707 = vadd.f32 %v896, %v1456
  %v1708 = vadd.f32 %v899, %v1459
  %v1709 = vadd.f32 %v904, %v1464
  %v1710 = vadd.f32 %v907, %v1467
  %v1711 = vadd.f32 %v912, %v1472
  %v1712 = vadd.f32 %v915, %v1475
  %v1713 = vadd.f32 %v920, %v1480
  %v1714 = vadd.f32 %v923, %v1483
  %v1715 = vadd.f32 %v928, %v1488
  %v1716 = vadd.f32 %v931, %v1491
  %v1717 = vadd.f32 %v936, %v1496
  %v1718 = vadd.f32 %v939, %v1499
  %v1719 = vadd.f32 %v944, %v1504
  %v1720 = vadd.f32 %v947, %v1507
  %v1721 = vadd.f32 %v952, %v1512
  %v1722 = vadd.f32 %v955, %v1515
  %v1723 = vadd.f32 %v960, %v1520
  %v1724 = vadd.f32 %v963, %v1523
  %v1725 = vadd.f32 %v968, %v1528
  %v1726 = vadd.f32 %v971, %v1531
  %v1727 = vadd.f32 %v976, %v1536
  %v1728 = vadd.f32 %v979, %v1539
  %v1729 = vadd.f32 %v984, %v1544
  %v1730 = vadd.f32 %v987, %v1547
  %v1731 = vadd.f32 %v992, %v1552
  %v1732 = vadd.f32 %v995, %v1555
  %v1733 = vadd.f32 %v1000, %v1560
  %v1734 = vadd.f32 %v1003, %v1563
  %v1735 = vadd.f32 %v1008, %v1568
  %v1736 = vadd.f32 %v1011, %v1571
  %v1737 = vadd.f32 %v1016, %v1576
  %v1738 = vadd.f32 %v1019, %v1579
  %v1739 = vadd.f32 %v1024, %v1584
  %v1740 = vadd.f32 %v1027, %v1587
  %v1741 = vadd.f32 %v1032, %v1592
  %v1742 = vadd.f32 %v1035, %v1595
  %v1743 = vadd.f32 %v1040, %v1600
  %v1744 = vadd.f32 %v1043, %v1603
  %v1745 = vadd.f32 %v1048, %v1608
  %v1746 = vadd.f32 %v1051, %v1611
  %v1747 = vadd.f32 %v1056, %v1616
  %v1748 = vadd.f32 %v1059, %v1619
  %v1749 = vadd.f32 %v1064, %v1624
  %v1750 = vadd.f32 %v1067, %v1627
  %v1751 = vadd.f32 %v1072, %v1632
  %v1752 = vadd.f32 %v1075, %v1635
  %v1753 = vadd.f32 %v1080, %v1640
  %v1754 = vadd.f32 %v1083, %v1643
  %v1755 = vadd.f32 %v1088, %v1648
  %v1756 = vadd.f32 %v1091, %v1651
  %v1757 = vadd.f32 %v1096, %v1656
  %v1758 = vadd.f32 %v1099, %v1659
  %v1759 = vadd.f32 %v1104, %v1664
  %v1760 = vadd.f32 %v1107, %v1667
  %v1761 = vadd.f32 %v1112, %v1672
  %v1762 = vadd.f32 %v1115, %v1675
  %v1763 = vadd.f32 %v1120, %v1680
  %v1764 = vadd.f32 %v1123, %v1683
  %v1765 = vadd.f32 %v1128, %v1688
  %v1766 = vld [vmem:[%s0 + $0x12] sm:$0xff]
  %v1767 = vld [vmem:[%s0 + $0x1a] sm:$0xff]
  %v1768 = vld [vmem:[%s0 + $0x22] sm:$0xff]
  %v1769 = vld [vmem:[%s0 + $0x2a] sm:$0xff]
  %v1770 = vld [vmem:[%s0 + $0x32] sm:$0xff]
  %v1771 = vld [vmem:[%s0 + $0x3a] sm:$0xff]
  %v1772 = vld [vmem:[%s0 + $0x42] sm:$0xff]
  %v1773 = vld [vmem:[%s0 + $0x4a] sm:$0xff]
  %v1774 = vld [vmem:[%s0 + $0x52] sm:$0xff]
  %v1775 = vld [vmem:[%s0 + $0x5a] sm:$0xff]
  %v1776 = vld [vmem:[%s0 + $0x62] sm:$0xff]
  %v1777 = vld [vmem:[%s0 + $0x6a] sm:$0xff]
  %v1778 = vld [vmem:[%s0 + $0x72] sm:$0xff]
  %v1779 = vld [vmem:[%s0 + $0x7a] sm:$0xff]
  %v1780 = vld [vmem:[%s0 + $0x82] sm:$0xff]
  %v1781 = vld [vmem:[%s0 + $0x8a] sm:$0xff]
  %v1782 = vld [vmem:[%s0 + $0x92] sm:$0xff]
  %v1783 = vld [vmem:[%s0 + $0x9a] sm:$0xff]
  %v1784 = vld [vmem:[%s0 + $0xa2] sm:$0xff]
  %v1785 = vld [vmem:[%s0 + $0xaa] sm:$0xff]
  %v1786 = vld [vmem:[%s0 + $0xb2] sm:$0xff]
  %v1787 = vld [vmem:[%s0 + $0xba] sm:$0xff]
  %v1788 = vld [vmem:[%s0 + $0xc2] sm:$0xff]
  %v1789 = vld [vmem:[%s0 + $0xca] sm:$0xff]
  %v1790 = vld [vmem:[%s0 + $0xd2] sm:$0xff]
  %v1791 = vld [vmem:[%s0 + $0xda] sm:$0xff]
  %v1792 = vld [vmem:[%s0 + $0xe2] sm:$0xff]
  %v1793 = vld [vmem:[%s0 + $0xea] sm:$0xff]
  %v1794 = vld [vmem:[%s0 + $0xf2] sm:$0xff]
  %v1795 = vld [vmem:[%s0 + $0xfa] sm:$0xff]
  %v1796 = vld [vmem:[%s0 + $0x102] sm:$0xff]
  %v1797 = vld [vmem:[%s0 + $0x10a] sm:$0xff]
  %v1798 = vld [vmem:[%s0 + $0x112] sm:$0xff]
  %v1799 = vld [vmem:[%s0 + $0x11a] sm:$0xff]
  %v1800 = vld [vmem:[%s0 + $0x122] sm:$0xff]
  %v1801 = vld [vmem:[%s0 + $0x12a] sm:$0xff]
  %v1802 = vld [vmem:[%s0 + $0x132] sm:$0xff]
  %v1803 = vld [vmem:[%s0 + $0x13a] sm:$0xff]
  %v1804 = vld [vmem:[%s0 + $0x142] sm:$0xff]
  %v1805 = vld [vmem:[%s0 + $0x14a] sm:$0xff]
  %v1806 = vld [vmem:[%s0 + $0x152] sm:$0xff]
  %v1807 = vld [vmem:[%s0 + $0x15a] sm:$0xff]
  %v1808 = vld [vmem:[%s0 + $0x162] sm:$0xff]
  %v1809 = vld [vmem:[%s0 + $0x16a] sm:$0xff]
  %v1810 = vld [vmem:[%s0 + $0x172] sm:$0xff]
  %v1811 = vld [vmem:[%s0 + $0x17a] sm:$0xff]
  %v1812 = vld [vmem:[%s0 + $0x182] sm:$0xff]
  %v1813 = vld [vmem:[%s0 + $0x18a] sm:$0xff]
  %v1814 = vld [vmem:[%s0 + $0x192] sm:$0xff]
  %v1815 = vld [vmem:[%s0 + $0x19a] sm:$0xff]
  %v1816 = vld [vmem:[%s0 + $0x1a2] sm:$0xff]
  %v1817 = vld [vmem:[%s0 + $0x1aa] sm:$0xff]
  %v1818 = vld [vmem:[%s0 + $0x1b2] sm:$0xff]
  %v1819 = vld [vmem:[%s0 + $0x1ba] sm:$0xff]
  %v1820 = vld [vmem:[%s0 + $0x1c2] sm:$0xff]
  %v1821 = vld [vmem:[%s0 + $0x1ca] sm:$0xff]
  %v1822 = vld [vmem:[%s0 + $0x1d2] sm:$0xff]
  %v1823 = vld [vmem:[%s0 + $0x1da] sm:$0xff]
  %v1824 = vld [vmem:[%s0 + $0x1e2] sm:$0xff]
  %v1825 = vld [vmem:[%s0 + $0x1ea] sm:$0xff]
  %v1826 = vld [vmem:[%s0 + $0x1f2] sm:$0xff]
  %v1827 = vld [vmem:[%s0 + $0x1fa] sm:$0xff]
  %v1828 = vld [vmem:[%s0 + $0x202] sm:$0xff]
  %v1829 = vld [vmem:[%s0 + $0x20a] sm:$0xff]
  %v1830 = vld [vmem:[%s0 + $0x212] sm:$0xff]
  %v1831 = vld [vmem:[%s0 + $0x21a] sm:$0xff]
  %v1832 = vld [vmem:[%s0 + $0x222] sm:$0xff]
  %v1833 = vld [vmem:[%s0 + $0x22a] sm:$0xff]
  %v1834 = vld [vmem:[%s0 + $0x232] sm:$0xff]
  %v1835 = vld [vmem:[%s0 + $0x23a] sm:$0xff]
  %v1836 = vld [vmem:[%s0 + $0x242] sm:$0xff]
  %v1837 = vld [vmem:[%s0 + $0x24a] sm:$0xff]
  %v1838 = vld [vmem:[%s0 + $0x252] sm:$0x3]
  %v1839 = vpack.c.bf16 %v1767, %v1766
  %v1840 = vpack.c.bf16 %v1769, %v1768
  %v1841 = vpack.c.bf16 %v1771, %v1770
  %v1842 = vpack.c.bf16 %v1773, %v1772
  %v1843 = vpack.c.bf16 %v1775, %v1774
  %v1844 = vpack.c.bf16 %v1777, %v1776
  %v1845 = vpack.c.bf16 %v1779, %v1778
  %v1846 = vpack.c.bf16 %v1781, %v1780
  %v1847 = vpack.c.bf16 %v1783, %v1782
  %v1848 = vpack.c.bf16 %v1785, %v1784
  %v1849 = vpack.c.bf16 %v1787, %v1786
  %v1850 = vpack.c.bf16 %v1789, %v1788
  %v1851 = vpack.c.bf16 %v1791, %v1790
  %v1852 = vpack.c.bf16 %v1793, %v1792
  %v1853 = vpack.c.bf16 %v1795, %v1794
  %v1854 = vpack.c.bf16 %v1797, %v1796
  %v1855 = vpack.c.bf16 %v1799, %v1798
  %v1856 = vpack.c.bf16 %v1801, %v1800
  %v1857 = vpack.c.bf16 %v1803, %v1802
  %v1858 = vpack.c.bf16 %v1805, %v1804
  %v1859 = vpack.c.bf16 %v1807, %v1806
  %v1860 = vpack.c.bf16 %v1809, %v1808
  %v1861 = vpack.c.bf16 %v1811, %v1810
  %v1862 = vpack.c.bf16 %v1813, %v1812
  %v1863 = vpack.c.bf16 %v1815, %v1814
  %v1864 = vpack.c.bf16 %v1817, %v1816
  %v1865 = vpack.c.bf16 %v1819, %v1818
  %v1866 = vpack.c.bf16 %v1821, %v1820
  %v1867 = vpack.c.bf16 %v1823, %v1822
  %v1868 = vpack.c.bf16 %v1825, %v1824
  %v1869 = vpack.c.bf16 %v1827, %v1826
  %v1870 = vpack.c.bf16 %v1829, %v1828
  %v1871 = vpack.c.bf16 %v1831, %v1830
  %v1872 = vpack.c.bf16 %v1833, %v1832
  %v1873 = vpack.c.bf16 %v1835, %v1834
  %v1874 = vpack.c.bf16 %v1837, %v1836
  %v1875 = vpack.c.bf16 %v1838, %v1838
  %s1876 = scalar_lea.vmem %s1, 24
  %v1877 = vld [vmem:[%s1876] sm:$0xf]
  %v1878 = vld [vmem:[%s1876 + $0x4] sm:$0x3]
  %v1881 = vunpack.c.l.b16 %v1877
  %v1882 = vunpack.c.l.b16 %v1878
  %v1883 = vpack.c.b16 %v1882, %v1881
  %v1885 = vsel %vm242, %v1839, 0
  %v1888 = vsel %vm242, %v1840, 0
  %v1891 = vsel %vm242, %v1841, 0
  %v1894 = vsel %vm242, %v1842, 0
  %v1897 = vsel %vm242, %v1843, 0
  %v1900 = vsel %vm242, %v1844, 0
  %v1903 = vsel %vm242, %v1845, 0
  %v1906 = vsel %vm242, %v1846, 0
  %v1909 = vsel %vm242, %v1847, 0
  %v1912 = vsel %vm242, %v1848, 0
  %v1915 = vsel %vm242, %v1849, 0
  %v1918 = vsel %vm242, %v1850, 0
  %v1921 = vsel %vm242, %v1851, 0
  %v1924 = vsel %vm242, %v1852, 0
  %v1927 = vsel %vm242, %v1853, 0
  %v1930 = vsel %vm242, %v1854, 0
  %v1933 = vsel %vm242, %v1855, 0
  %v1936 = vsel %vm242, %v1856, 0
  %v1939 = vsel %vm242, %v1857, 0
  %v1942 = vsel %vm242, %v1858, 0
  %v1945 = vsel %vm242, %v1859, 0
  %v1948 = vsel %vm242, %v1860, 0
  %v1951 = vsel %vm242, %v1861, 0
  %v1954 = vsel %vm242, %v1862, 0
  %v1957 = vsel %vm242, %v1863, 0
  %v1960 = vsel %vm242, %v1864, 0
  %v1963 = vsel %vm242, %v1865, 0
  %v1966 = vsel %vm242, %v1866, 0
  %v1969 = vsel %vm242, %v1867, 0
  %v1972 = vsel %vm242, %v1868, 0
  %v1975 = vsel %vm242, %v1869, 0
  %v1978 = vsel %vm242, %v1870, 0
  %v1981 = vsel %vm242, %v1871, 0
  %v1984 = vsel %vm242, %v1872, 0
  %v1987 = vsel %vm242, %v1873, 0
  %v1990 = vsel %vm242, %v1874, 0
  %v1993 = vsel %vm242, %v1875, 0
  %v1996 = vsel %vm354, %v1883, 0
  %1998 = vmatprep.subr.bf16.mxu0 0
  %1999 = vmatpush1.bf16.msra.mxu0 %v1996
  %2000 = vmatprep.subr.bf16.mxu0 0
  %2001 = vmatpush1.bf16.msra.mxu0 0
  %2002 = vmatprep.subr.bf16.mxu0 0
  %2003 = vmatpush1.bf16.msra.mxu0 0
  %2004 = vmatprep.subr.bf16.mxu0 0
  %2005 = vmatpush1.bf16.msra.mxu0 0
  %2006 = vmatprep.subr.bf16.mxu0 0
  %2007 = vmatpush1.bf16.msra.mxu0 0
  %2008 = vmatprep.subr.bf16.mxu0 0
  %2009 = vmatpush1.bf16.msra.mxu0 0
  %2010 = vmatprep.subr.bf16.mxu0 0
  %2011 = vmatpush1.bf16.msra.mxu0 0
  %2012 = vmatprep.subr.bf16.mxu0 0
  %2013 = vmatpush1.bf16.msra.mxu0 0
  %2014 = vmatprep.subr.bf16.mxu0 0
  %2015 = vmatpush1.bf16.msra.mxu0 0
  %2016 = vmatprep.subr.bf16.mxu0 0
  %2017 = vmatpush1.bf16.msra.mxu0 0
  %2018 = vmatprep.subr.bf16.mxu0 0
  %2019 = vmatpush1.bf16.msra.mxu0 0
  %2020 = vmatprep.subr.bf16.mxu0 0
  %2021 = vmatpush1.bf16.msra.mxu0 0
  %2022 = vmatprep.subr.bf16.mxu0 0
  %2023 = vmatpush1.bf16.msra.mxu0 0
  %2024 = vmatprep.subr.bf16.mxu0 0
  %2025 = vmatpush1.bf16.msra.mxu0 0
  %2026 = vmatprep.subr.bf16.mxu0 0
  %2027 = vmatpush1.bf16.msra.mxu0 0
  %2028 = vmatprep.subr.bf16.mxu0 0
  %2029 = vmatpush1.bf16.msra.mxu0 0
  %2030 = vmatprep.mubr.bf16.mxu0 0
  %2031 = vmatmul.mubr.bf16.gmra.mrb[0].mxu0 %v1885
  %v2032 = vpop.f32.mrb[0].mxu0
  %v2033 = vadd.f32 0.0, %v2032
  %v2034 = vpop.f32.mrb[0].mxu0
  %v2035 = vpop.f32.mrb[0].mxu0
  %v2036 = vadd.f32 0.0, %v2035
  %v2037 = vpop.f32.mrb[0].mxu0
  %2038 = vmatprep.mubr.bf16.mxu0 0
  %2039 = vmatmul.mubr.bf16.gmra.mrb[0].mxu0 %v1888
  %v2040 = vpop.f32.mrb[0].mxu0
  %v2041 = vadd.f32 0.0, %v2040
  %v2042 = vpop.f32.mrb[0].mxu0
  %v2043 = vpop.f32.mrb[0].mxu0
  %v2044 = vadd.f32 0.0, %v2043
  %v2045 = vpop.f32.mrb[0].mxu0
  %2046 = vmatprep.mubr.bf16.mxu0 0
  %2047 = vmatmul.mubr.bf16.gmra.mrb[0].mxu0 %v1891
  %v2048 = vpop.f32.mrb[0].mxu0
  %v2049 = vadd.f32 0.0, %v2048
  %v2050 = vpop.f32.mrb[0].mxu0
  %v2051 = vpop.f32.mrb[0].mxu0
  %v2052 = vadd.f32 0.0, %v2051
  %v2053 = vpop.f32.mrb[0].mxu0
  %2054 = vmatprep.mubr.bf16.mxu0 0
  %2055 = vmatmul.mubr.bf16.gmra.mrb[0].mxu0 %v1894
  %v2056 = vpop.f32.mrb[0].mxu0
  %v2057 = vadd.f32 0.0, %v2056
  %v2058 = vpop.f32.mrb[0].mxu0
  %v2059 = vpop.f32.mrb[0].mxu0
  %v2060 = vadd.f32 0.0, %v2059
  %v2061 = vpop.f32.mrb[0].mxu0
  %2062 = vmatprep.mubr.bf16.mxu0 0
  %2063 = vmatmul.mubr.bf16.gmra.mrb[0].mxu0 %v1897
  %v2064 = vpop.f32.mrb[0].mxu0
  %v2065 = vadd.f32 0.0, %v2064
  %v2066 = vpop.f32.mrb[0].mxu0
  %v2067 = vpop.f32.mrb[0].mxu0
  %v2068 = vadd.f32 0.0, %v2067
  %v2069 = vpop.f32.mrb[0].mxu0
  %2070 = vmatprep.mubr.bf16.mxu0 0
  %2071 = vmatmul.mubr.bf16.gmra.mrb[0].mxu0 %v1900
  %v2072 = vpop.f32.mrb[0].mxu0
  %v2073 = vadd.f32 0.0, %v2072
  %v2074 = vpop.f32.mrb[0].mxu0
  %v2075 = vpop.f32.mrb[0].mxu0
  %v2076 = vadd.f32 0.0, %v2075
  %v2077 = vpop.f32.mrb[0].mxu0
  %2078 = vmatprep.mubr.bf16.mxu0 0
  %2079 = vmatmul.mubr.bf16.gmra.mrb[0].mxu0 %v1903
  %v2080 = vpop.f32.mrb[0].mxu0
  %v2081 = vadd.f32 0.0, %v2080
  %v2082 = vpop.f32.mrb[0].mxu0
  %v2083 = vpop.f32.mrb[0].mxu0
  %v2084 = vadd.f32 0.0, %v2083
  %v2085 = vpop.f32.mrb[0].mxu0
  %2086 = vmatprep.mubr.bf16.mxu0 0
  %2087 = vmatmul.mubr.bf16.gmra.mrb[0].mxu0 %v1906
  %v2088 = vpop.f32.mrb[0].mxu0
  %v2089 = vadd.f32 0.0, %v2088
  %v2090 = vpop.f32.mrb[0].mxu0
  %v2091 = vpop.f32.mrb[0].mxu0
  %v2092 = vadd.f32 0.0, %v2091
  %v2093 = vpop.f32.mrb[0].mxu0
  %2094 = vmatprep.mubr.bf16.mxu0 0
  %2095 = vmatmul.mubr.bf16.gmra.mrb[0].mxu0 %v1909
  %v2096 = vpop.f32.mrb[0].mxu0
  %v2097 = vadd.f32 0.0, %v2096
  %v2098 = vpop.f32.mrb[0].mxu0
  %v2099 = vpop.f32.mrb[0].mxu0
  %v2100 = vadd.f32 0.0, %v2099
  %v2101 = vpop.f32.mrb[0].mxu0
  %2102 = vmatprep.mubr.bf16.mxu0 0
  %2103 = vmatmul.mubr.bf16.gmra.mrb[0].mxu0 %v1912
  %v2104 = vpop.f32.mrb[0].mxu0
  %v2105 = vadd.f32 0.0, %v2104
  %v2106 = vpop.f32.mrb[0].mxu0
  %v2107 = vpop.f32.mrb[0].mxu0
  %v2108 = vadd.f32 0.0, %v2107
  %v2109 = vpop.f32.mrb[0].mxu0
  %2110 = vmatprep.mubr.bf16.mxu0 0
  %2111 = vmatmul.mubr.bf16.gmra.mrb[0].mxu0 %v1915
  %v2112 = vpop.f32.mrb[0].mxu0
  %v2113 = vadd.f32 0.0, %v2112
  %v2114 = vpop.f32.mrb[0].mxu0
  %v2115 = vpop.f32.mrb[0].mxu0
  %v2116 = vadd.f32 0.0, %v2115
  %v2117 = vpop.f32.mrb[0].mxu0
  %2118 = vmatprep.mubr.bf16.mxu0 0
  %2119 = vmatmul.mubr.bf16.gmra.mrb[0].mxu0 %v1918
  %v2120 = vpop.f32.mrb[0].mxu0
  %v2121 = vadd.f32 0.0, %v2120
  %v2122 = vpop.f32.mrb[0].mxu0
  %v2123 = vpop.f32.mrb[0].mxu0
  %v2124 = vadd.f32 0.0, %v2123
  %v2125 = vpop.f32.mrb[0].mxu0
  %2126 = vmatprep.mubr.bf16.mxu0 0
  %2127 = vmatmul.mubr.bf16.gmra.mrb[0].mxu0 %v1921
  %v2128 = vpop.f32.mrb[0].mxu0
  %v2129 = vadd.f32 0.0, %v2128
  %v2130 = vpop.f32.mrb[0].mxu0
  %v2131 = vpop.f32.mrb[0].mxu0
  %v2132 = vadd.f32 0.0, %v2131
  %v2133 = vpop.f32.mrb[0].mxu0
  %2134 = vmatprep.mubr.bf16.mxu0 0
  %2135 = vmatmul.mubr.bf16.gmra.mrb[0].mxu0 %v1924
  %v2136 = vpop.f32.mrb[0].mxu0
  %v2137 = vadd.f32 0.0, %v2136
  %v2138 = vpop.f32.mrb[0].mxu0
  %v2139 = vpop.f32.mrb[0].mxu0
  %v2140 = vadd.f32 0.0, %v2139
  %v2141 = vpop.f32.mrb[0].mxu0
  %2142 = vmatprep.mubr.bf16.mxu0 0
  %2143 = vmatmul.mubr.bf16.gmra.mrb[0].mxu0 %v1927
  %v2144 = vpop.f32.mrb[0].mxu0
  %v2145 = vadd.f32 0.0, %v2144
  %v2146 = vpop.f32.mrb[0].mxu0
  %v2147 = vpop.f32.mrb[0].mxu0
  %v2148 = vadd.f32 0.0, %v2147
  %v2149 = vpop.f32.mrb[0].mxu0
  %2150 = vmatprep.mubr.bf16.mxu0 0
  %2151 = vmatmul.mubr.bf16.gmra.mrb[0].mxu0 %v1930
  %v2152 = vpop.f32.mrb[0].mxu0
  %v2153 = vadd.f32 0.0, %v2152
  %v2154 = vpop.f32.mrb[0].mxu0
  %v2155 = vpop.f32.mrb[0].mxu0
  %v2156 = vadd.f32 0.0, %v2155
  %v2157 = vpop.f32.mrb[0].mxu0
  %2158 = vmatprep.mubr.bf16.mxu0 0
  %2159 = vmatmul.mubr.bf16.gmra.mrb[0].mxu0 %v1933
  %v2160 = vpop.f32.mrb[0].mxu0
  %v2161 = vadd.f32 0.0, %v2160
  %v2162 = vpop.f32.mrb[0].mxu0
  %v2163 = vpop.f32.mrb[0].mxu0
  %v2164 = vadd.f32 0.0, %v2163
  %v2165 = vpop.f32.mrb[0].mxu0
  %2166 = vmatprep.mubr.bf16.mxu0 0
  %2167 = vmatmul.mubr.bf16.gmra.mrb[0].mxu0 %v1936
  %v2168 = vpop.f32.mrb[0].mxu0
  %v2169 = vadd.f32 0.0, %v2168
  %v2170 = vpop.f32.mrb[0].mxu0
  %v2171 = vpop.f32.mrb[0].mxu0
  %v2172 = vadd.f32 0.0, %v2171
  %v2173 = vpop.f32.mrb[0].mxu0
  %2174 = vmatprep.mubr.bf16.mxu0 0
  %2175 = vmatmul.mubr.bf16.gmra.mrb[0].mxu0 %v1939
  %v2176 = vpop.f32.mrb[0].mxu0
  %v2177 = vadd.f32 0.0, %v2176
  %v2178 = vpop.f32.mrb[0].mxu0
  %v2179 = vpop.f32.mrb[0].mxu0
  %v2180 = vadd.f32 0.0, %v2179
  %v2181 = vpop.f32.mrb[0].mxu0
  %2182 = vmatprep.mubr.bf16.mxu0 0
  %2183 = vmatmul.mubr.bf16.gmra.mrb[0].mxu0 %v1942
  %v2184 = vpop.f32.mrb[0].mxu0
  %v2185 = vadd.f32 0.0, %v2184
  %v2186 = vpop.f32.mrb[0].mxu0
  %v2187 = vpop.f32.mrb[0].mxu0
  %v2188 = vadd.f32 0.0, %v2187
  %v2189 = vpop.f32.mrb[0].mxu0
  %2190 = vmatprep.mubr.bf16.mxu0 0
  %2191 = vmatmul.mubr.bf16.gmra.mrb[0].mxu0 %v1945
  %v2192 = vpop.f32.mrb[0].mxu0
  %v2193 = vadd.f32 0.0, %v2192
  %v2194 = vpop.f32.mrb[0].mxu0
  %v2195 = vpop.f32.mrb[0].mxu0
  %v2196 = vadd.f32 0.0, %v2195
  %v2197 = vpop.f32.mrb[0].mxu0
  %2198 = vmatprep.mubr.bf16.mxu0 0
  %2199 = vmatmul.mubr.bf16.gmra.mrb[0].mxu0 %v1948
  %v2200 = vpop.f32.mrb[0].mxu0
  %v2201 = vadd.f32 0.0, %v2200
  %v2202 = vpop.f32.mrb[0].mxu0
  %v2203 = vpop.f32.mrb[0].mxu0
  %v2204 = vadd.f32 0.0, %v2203
  %v2205 = vpop.f32.mrb[0].mxu0
  %2206 = vmatprep.mubr.bf16.mxu0 0
  %2207 = vmatmul.mubr.bf16.gmra.mrb[0].mxu0 %v1951
  %v2208 = vpop.f32.mrb[0].mxu0
  %v2209 = vadd.f32 0.0, %v2208
  %v2210 = vpop.f32.mrb[0].mxu0
  %v2211 = vpop.f32.mrb[0].mxu0
  %v2212 = vadd.f32 0.0, %v2211
  %v2213 = vpop.f32.mrb[0].mxu0
  %2214 = vmatprep.mubr.bf16.mxu0 0
  %2215 = vmatmul.mubr.bf16.gmra.mrb[0].mxu0 %v1954
  %v2216 = vpop.f32.mrb[0].mxu0
  %v2217 = vadd.f32 0.0, %v2216
  %v2218 = vpop.f32.mrb[0].mxu0
  %v2219 = vpop.f32.mrb[0].mxu0
  %v2220 = vadd.f32 0.0, %v2219
  %v2221 = vpop.f32.mrb[0].mxu0
  %2222 = vmatprep.mubr.bf16.mxu0 0
  %2223 = vmatmul.mubr.bf16.gmra.mrb[0].mxu0 %v1957
  %v2224 = vpop.f32.mrb[0].mxu0
  %v2225 = vadd.f32 0.0, %v2224
  %v2226 = vpop.f32.mrb[0].mxu0
  %v2227 = vpop.f32.mrb[0].mxu0
  %v2228 = vadd.f32 0.0, %v2227
  %v2229 = vpop.f32.mrb[0].mxu0
  %2230 = vmatprep.mubr.bf16.mxu0 0
  %2231 = vmatmul.mubr.bf16.gmra.mrb[0].mxu0 %v1960
  %v2232 = vpop.f32.mrb[0].mxu0
  %v2233 = vadd.f32 0.0, %v2232
  %v2234 = vpop.f32.mrb[0].mxu0
  %v2235 = vpop.f32.mrb[0].mxu0
  %v2236 = vadd.f32 0.0, %v2235
  %v2237 = vpop.f32.mrb[0].mxu0
  %2238 = vmatprep.mubr.bf16.mxu0 0
  %2239 = vmatmul.mubr.bf16.gmra.mrb[0].mxu0 %v1963
  %v2240 = vpop.f32.mrb[0].mxu0
  %v2241 = vadd.f32 0.0, %v2240
  %v2242 = vpop.f32.mrb[0].mxu0
  %v2243 = vpop.f32.mrb[0].mxu0
  %v2244 = vadd.f32 0.0, %v2243
  %v2245 = vpop.f32.mrb[0].mxu0
  %2246 = vmatprep.mubr.bf16.mxu0 0
  %2247 = vmatmul.mubr.bf16.gmra.mrb[0].mxu0 %v1966
  %v2248 = vpop.f32.mrb[0].mxu0
  %v2249 = vadd.f32 0.0, %v2248
  %v2250 = vpop.f32.mrb[0].mxu0
  %v2251 = vpop.f32.mrb[0].mxu0
  %v2252 = vadd.f32 0.0, %v2251
  %v2253 = vpop.f32.mrb[0].mxu0
  %2254 = vmatprep.mubr.bf16.mxu0 0
  %2255 = vmatmul.mubr.bf16.gmra.mrb[0].mxu0 %v1969
  %v2256 = vpop.f32.mrb[0].mxu0
  %v2257 = vadd.f32 0.0, %v2256
  %v2258 = vpop.f32.mrb[0].mxu0
  %v2259 = vpop.f32.mrb[0].mxu0
  %v2260 = vadd.f32 0.0, %v2259
  %v2261 = vpop.f32.mrb[0].mxu0
  %2262 = vmatprep.mubr.bf16.mxu0 0
  %2263 = vmatmul.mubr.bf16.gmra.mrb[0].mxu0 %v1972
  %v2264 = vpop.f32.mrb[0].mxu0
  %v2265 = vadd.f32 0.0, %v2264
  %v2266 = vpop.f32.mrb[0].mxu0
  %v2267 = vpop.f32.mrb[0].mxu0
  %v2268 = vadd.f32 0.0, %v2267
  %v2269 = vpop.f32.mrb[0].mxu0
  %2270 = vmatprep.mubr.bf16.mxu0 0
  %2271 = vmatmul.mubr.bf16.gmra.mrb[0].mxu0 %v1975
  %v2272 = vpop.f32.mrb[0].mxu0
  %v2273 = vadd.f32 0.0, %v2272
  %v2274 = vpop.f32.mrb[0].mxu0
  %v2275 = vpop.f32.mrb[0].mxu0
  %v2276 = vadd.f32 0.0, %v2275
  %v2277 = vpop.f32.mrb[0].mxu0
  %2278 = vmatprep.mubr.bf16.mxu0 0
  %2279 = vmatmul.mubr.bf16.gmra.mrb[0].mxu0 %v1978
  %v2280 = vpop.f32.mrb[0].mxu0
  %v2281 = vadd.f32 0.0, %v2280
  %v2282 = vpop.f32.mrb[0].mxu0
  %v2283 = vpop.f32.mrb[0].mxu0
  %v2284 = vadd.f32 0.0, %v2283
  %v2285 = vpop.f32.mrb[0].mxu0
  %2286 = vmatprep.mubr.bf16.mxu0 0
  %2287 = vmatmul.mubr.bf16.gmra.mrb[0].mxu0 %v1981
  %v2288 = vpop.f32.mrb[0].mxu0
  %v2289 = vadd.f32 0.0, %v2288
  %v2290 = vpop.f32.mrb[0].mxu0
  %v2291 = vpop.f32.mrb[0].mxu0
  %v2292 = vadd.f32 0.0, %v2291
  %v2293 = vpop.f32.mrb[0].mxu0
  %2294 = vmatprep.mubr.bf16.mxu0 0
  %2295 = vmatmul.mubr.bf16.gmra.mrb[0].mxu0 %v1984
  %v2296 = vpop.f32.mrb[0].mxu0
  %v2297 = vadd.f32 0.0, %v2296
  %v2298 = vpop.f32.mrb[0].mxu0
  %v2299 = vpop.f32.mrb[0].mxu0
  %v2300 = vadd.f32 0.0, %v2299
  %v2301 = vpop.f32.mrb[0].mxu0
  %2302 = vmatprep.mubr.bf16.mxu0 0
  %2303 = vmatmul.mubr.bf16.gmra.mrb[0].mxu0 %v1987
  %v2304 = vpop.f32.mrb[0].mxu0
  %v2305 = vadd.f32 0.0, %v2304
  %v2306 = vpop.f32.mrb[0].mxu0
  %v2307 = vpop.f32.mrb[0].mxu0
  %v2308 = vadd.f32 0.0, %v2307
  %v2309 = vpop.f32.mrb[0].mxu0
  %2310 = vmatprep.mubr.bf16.mxu0 0
  %2311 = vmatmul.mubr.bf16.gmra.mrb[0].mxu0 %v1990
  %v2312 = vpop.f32.mrb[0].mxu0
  %v2313 = vadd.f32 0.0, %v2312
  %v2314 = vpop.f32.mrb[0].mxu0
  %v2315 = vpop.f32.mrb[0].mxu0
  %v2316 = vadd.f32 0.0, %v2315
  %v2317 = vpop.f32.mrb[0].mxu0
  %2318 = vmatprep.mubr.bf16.mxu0 0
  %2319 = vmatmul.mubr.bf16.gmra.mrb[0].mxu0 %v1993
  %v2320 = vpop.f32.mrb[0].mxu0
  %v2321 = vadd.f32 0.0, %v2320
  %v2322 = vpop.f32.mrb[0].mxu0
  %v2323 = vpop.f32.mrb[0].mxu0
  %v2324 = vpop.f32.mrb[0].mxu0
  %2325 = vdwg.mxu0
  %v2326 = vadd.f32 %v1693, %v2033
  %v2327 = vadd.f32 %v1694, %v2036
  %v2328 = vadd.f32 %v1695, %v2041
  %v2329 = vadd.f32 %v1696, %v2044
  %v2330 = vadd.f32 %v1697, %v2049
  %v2331 = vadd.f32 %v1698, %v2052
  %v2332 = vadd.f32 %v1699, %v2057
  %v2333 = vadd.f32 %v1700, %v2060
  %v2334 = vadd.f32 %v1701, %v2065
  %v2335 = vadd.f32 %v1702, %v2068
  %v2336 = vadd.f32 %v1703, %v2073
  %v2337 = vadd.f32 %v1704, %v2076
  %v2338 = vadd.f32 %v1705, %v2081
  %v2339 = vadd.f32 %v1706, %v2084
  %v2340 = vadd.f32 %v1707, %v2089
  %v2341 = vadd.f32 %v1708, %v2092
  %v2342 = vadd.f32 %v1709, %v2097
  %v2343 = vadd.f32 %v1710, %v2100
  %v2344 = vadd.f32 %v1711, %v2105
  %v2345 = vadd.f32 %v1712, %v2108
  %v2346 = vadd.f32 %v1713, %v2113
  %v2347 = vadd.f32 %v1714, %v2116
  %v2348 = vadd.f32 %v1715, %v2121
  %v2349 = vadd.f32 %v1716, %v2124
  %v2350 = vadd.f32 %v1717, %v2129
  %v2351 = vadd.f32 %v1718, %v2132
  %v2352 = vadd.f32 %v1719, %v2137
  %v2353 = vadd.f32 %v1720, %v2140
  %v2354 = vadd.f32 %v1721, %v2145
  %v2355 = vadd.f32 %v1722, %v2148
  %v2356 = vadd.f32 %v1723, %v2153
  %v2357 = vadd.f32 %v1724, %v2156
  %v2358 = vadd.f32 %v1725, %v2161
  %v2359 = vadd.f32 %v1726, %v2164
  %v2360 = vadd.f32 %v1727, %v2169
  %v2361 = vadd.f32 %v1728, %v2172
  %v2362 = vadd.f32 %v1729, %v2177
  %v2363 = vadd.f32 %v1730, %v2180
  %v2364 = vadd.f32 %v1731, %v2185
  %v2365 = vadd.f32 %v1732, %v2188
  %v2366 = vadd.f32 %v1733, %v2193
  %v2367 = vadd.f32 %v1734, %v2196
  %v2368 = vadd.f32 %v1735, %v2201
  %v2369 = vadd.f32 %v1736, %v2204
  %v2370 = vadd.f32 %v1737, %v2209
  %v2371 = vadd.f32 %v1738, %v2212
  %v2372 = vadd.f32 %v1739, %v2217
  %v2373 = vadd.f32 %v1740, %v2220
  %v2374 = vadd.f32 %v1741, %v2225
  %v2375 = vadd.f32 %v1742, %v2228
  %v2376 = vadd.f32 %v1743, %v2233
  %v2377 = vadd.f32 %v1744, %v2236
  %v2378 = vadd.f32 %v1745, %v2241
  %v2379 = vadd.f32 %v1746, %v2244
  %v2380 = vadd.f32 %v1747, %v2249
  %v2381 = vadd.f32 %v1748, %v2252
  %v2382 = vadd.f32 %v1749, %v2257
  %v2383 = vadd.f32 %v1750, %v2260
  %v2384 = vadd.f32 %v1751, %v2265
  %v2385 = vadd.f32 %v1752, %v2268
  %v2386 = vadd.f32 %v1753, %v2273
  %v2387 = vadd.f32 %v1754, %v2276
  %v2388 = vadd.f32 %v1755, %v2281
  %v2389 = vadd.f32 %v1756, %v2284
  %v2390 = vadd.f32 %v1757, %v2289
  %v2391 = vadd.f32 %v1758, %v2292
  %v2392 = vadd.f32 %v1759, %v2297
  %v2393 = vadd.f32 %v1760, %v2300
  %v2394 = vadd.f32 %v1761, %v2305
  %v2395 = vadd.f32 %v1762, %v2308
  %v2396 = vadd.f32 %v1763, %v2313
  %v2397 = vadd.f32 %v1764, %v2316
  %v2398 = vadd.f32 %v1765, %v2321
  %v2399 = vmul.f32 %v2326, 0.2
  %v2400 = vmul.f32 %v2327, 0.2
  %v2401 = vmul.f32 %v2328, 0.2
  %v2402 = vmul.f32 %v2329, 0.2
  %v2403 = vmul.f32 %v2330, 0.2
  %v2404 = vmul.f32 %v2331, 0.2
  %v2405 = vmul.f32 %v2332, 0.2
  %v2406 = vmul.f32 %v2333, 0.2
  %v2407 = vmul.f32 %v2334, 0.2
  %v2408 = vmul.f32 %v2335, 0.2
  %v2409 = vmul.f32 %v2336, 0.2
  %v2410 = vmul.f32 %v2337, 0.2
  %v2411 = vmul.f32 %v2338, 0.2
  %v2412 = vmul.f32 %v2339, 0.2
  %v2413 = vmul.f32 %v2340, 0.2
  %v2414 = vmul.f32 %v2341, 0.2
  %v2415 = vmul.f32 %v2342, 0.2
  %v2416 = vmul.f32 %v2343, 0.2
  %v2417 = vmul.f32 %v2344, 0.2
  %v2418 = vmul.f32 %v2345, 0.2
  %v2419 = vmul.f32 %v2346, 0.2
  %v2420 = vmul.f32 %v2347, 0.2
  %v2421 = vmul.f32 %v2348, 0.2
  %v2422 = vmul.f32 %v2349, 0.2
  %v2423 = vmul.f32 %v2350, 0.2
  %v2424 = vmul.f32 %v2351, 0.2
  %v2425 = vmul.f32 %v2352, 0.2
  %v2426 = vmul.f32 %v2353, 0.2
  %v2427 = vmul.f32 %v2354, 0.2
  %v2428 = vmul.f32 %v2355, 0.2
  %v2429 = vmul.f32 %v2356, 0.2
  %v2430 = vmul.f32 %v2357, 0.2
  %v2431 = vmul.f32 %v2358, 0.2
  %v2432 = vmul.f32 %v2359, 0.2
  %v2433 = vmul.f32 %v2360, 0.2
  %v2434 = vmul.f32 %v2361, 0.2
  %v2435 = vmul.f32 %v2362, 0.2
  %v2436 = vmul.f32 %v2363, 0.2
  %v2437 = vmul.f32 %v2364, 0.2
  %v2438 = vmul.f32 %v2365, 0.2
  %v2439 = vmul.f32 %v2366, 0.2
  %v2440 = vmul.f32 %v2367, 0.2
  %v2441 = vmul.f32 %v2368, 0.2
  %v2442 = vmul.f32 %v2369, 0.2
  %v2443 = vmul.f32 %v2370, 0.2
  %v2444 = vmul.f32 %v2371, 0.2
  %v2445 = vmul.f32 %v2372, 0.2
  %v2446 = vmul.f32 %v2373, 0.2
  %v2447 = vmul.f32 %v2374, 0.2
  %v2448 = vmul.f32 %v2375, 0.2
  %v2449 = vmul.f32 %v2376, 0.2
  %v2450 = vmul.f32 %v2377, 0.2
  %v2451 = vmul.f32 %v2378, 0.2
  %v2452 = vmul.f32 %v2379, 0.2
  %v2453 = vmul.f32 %v2380, 0.2
  %v2454 = vmul.f32 %v2381, 0.2
  %v2455 = vmul.f32 %v2382, 0.2
  %v2456 = vmul.f32 %v2383, 0.2
  %v2457 = vmul.f32 %v2384, 0.2
  %v2458 = vmul.f32 %v2385, 0.2
  %v2459 = vmul.f32 %v2386, 0.2
  %v2460 = vmul.f32 %v2387, 0.2
  %v2461 = vmul.f32 %v2388, 0.2
  %v2462 = vmul.f32 %v2389, 0.2
  %v2463 = vmul.f32 %v2390, 0.2
  %v2464 = vmul.f32 %v2391, 0.2
  %v2465 = vmul.f32 %v2392, 0.2
  %v2466 = vmul.f32 %v2393, 0.2
  %v2467 = vmul.f32 %v2394, 0.2
  %v2468 = vmul.f32 %v2395, 0.2
  %v2469 = vmul.f32 %v2396, 0.2
  %v2470 = vmul.f32 %v2397, 0.2
  %v2471 = vmul.f32 %v2398, 0.2
  %v2472 = vmax.f32 %v2326, %v2399
  %v2473 = vmax.f32 %v2327, %v2400
  %v2474 = vmax.f32 %v2328, %v2401
  %v2475 = vmax.f32 %v2329, %v2402
  %v2476 = vmax.f32 %v2330, %v2403
  %v2477 = vmax.f32 %v2331, %v2404
  %v2478 = vmax.f32 %v2332, %v2405
  %v2479 = vmax.f32 %v2333, %v2406
  %v2480 = vmax.f32 %v2334, %v2407
  %v2481 = vmax.f32 %v2335, %v2408
  %v2482 = vmax.f32 %v2336, %v2409
  %v2483 = vmax.f32 %v2337, %v2410
  %v2484 = vmax.f32 %v2338, %v2411
  %v2485 = vmax.f32 %v2339, %v2412
  %v2486 = vmax.f32 %v2340, %v2413
  %v2487 = vmax.f32 %v2341, %v2414
  %v2488 = vmax.f32 %v2342, %v2415
  %v2489 = vmax.f32 %v2343, %v2416
  %v2490 = vmax.f32 %v2344, %v2417
  %v2491 = vmax.f32 %v2345, %v2418
  %v2492 = vmax.f32 %v2346, %v2419
  %v2493 = vmax.f32 %v2347, %v2420
  %v2494 = vmax.f32 %v2348, %v2421
  %v2495 = vmax.f32 %v2349, %v2422
  %v2496 = vmax.f32 %v2350, %v2423
  %v2497 = vmax.f32 %v2351, %v2424
  %v2498 = vmax.f32 %v2352, %v2425
  %v2499 = vmax.f32 %v2353, %v2426
  %v2500 = vmax.f32 %v2354, %v2427
  %v2501 = vmax.f32 %v2355, %v2428
  %v2502 = vmax.f32 %v2356, %v2429
  %v2503 = vmax.f32 %v2357, %v2430
  %v2504 = vmax.f32 %v2358, %v2431
  %v2505 = vmax.f32 %v2359, %v2432
  %v2506 = vmax.f32 %v2360, %v2433
  %v2507 = vmax.f32 %v2361, %v2434
  %v2508 = vmax.f32 %v2362, %v2435
  %v2509 = vmax.f32 %v2363, %v2436
  %v2510 = vmax.f32 %v2364, %v2437
  %v2511 = vmax.f32 %v2365, %v2438
  %v2512 = vmax.f32 %v2366, %v2439
  %v2513 = vmax.f32 %v2367, %v2440
  %v2514 = vmax.f32 %v2368, %v2441
  %v2515 = vmax.f32 %v2369, %v2442
  %v2516 = vmax.f32 %v2370, %v2443
  %v2517 = vmax.f32 %v2371, %v2444
  %v2518 = vmax.f32 %v2372, %v2445
  %v2519 = vmax.f32 %v2373, %v2446
  %v2520 = vmax.f32 %v2374, %v2447
  %v2521 = vmax.f32 %v2375, %v2448
  %v2522 = vmax.f32 %v2376, %v2449
  %v2523 = vmax.f32 %v2377, %v2450
  %v2524 = vmax.f32 %v2378, %v2451
  %v2525 = vmax.f32 %v2379, %v2452
  %v2526 = vmax.f32 %v2380, %v2453
  %v2527 = vmax.f32 %v2381, %v2454
  %v2528 = vmax.f32 %v2382, %v2455
  %v2529 = vmax.f32 %v2383, %v2456
  %v2530 = vmax.f32 %v2384, %v2457
  %v2531 = vmax.f32 %v2385, %v2458
  %v2532 = vmax.f32 %v2386, %v2459
  %v2533 = vmax.f32 %v2387, %v2460
  %v2534 = vmax.f32 %v2388, %v2461
  %v2535 = vmax.f32 %v2389, %v2462
  %v2536 = vmax.f32 %v2390, %v2463
  %v2537 = vmax.f32 %v2391, %v2464
  %v2538 = vmax.f32 %v2392, %v2465
  %v2539 = vmax.f32 %v2393, %v2466
  %v2540 = vmax.f32 %v2394, %v2467
  %v2541 = vmax.f32 %v2395, %v2468
  %v2542 = vmax.f32 %v2396, %v2469
  %v2543 = vmax.f32 %v2397, %v2470
  %v2544 = vmax.f32 %v2398, %v2471
  %vm2545 = vcmask 523264
  %2546 = vst.msk [vmem:[%s2] sm:$0xff] %vm2545, %v2472
  %2547 = vst.msk [vmem:[%s2 + $0x8] sm:$0xff] %vm2545, %v2473
  %2548 = vst.msk [vmem:[%s2 + $0x10] sm:$0xff] %vm2545, %v2474
  %2549 = vst.msk [vmem:[%s2 + $0x18] sm:$0xff] %vm2545, %v2475
  %2550 = vst.msk [vmem:[%s2 + $0x20] sm:$0xff] %vm2545, %v2476
  %2551 = vst.msk [vmem:[%s2 + $0x28] sm:$0xff] %vm2545, %v2477
  %2552 = vst.msk [vmem:[%s2 + $0x30] sm:$0xff] %vm2545, %v2478
  %2553 = vst.msk [vmem:[%s2 + $0x38] sm:$0xff] %vm2545, %v2479
  %2554 = vst.msk [vmem:[%s2 + $0x40] sm:$0xff] %vm2545, %v2480
  %2555 = vst.msk [vmem:[%s2 + $0x48] sm:$0xff] %vm2545, %v2481
  %2556 = vst.msk [vmem:[%s2 + $0x50] sm:$0xff] %vm2545, %v2482
  %2557 = vst.msk [vmem:[%s2 + $0x58] sm:$0xff] %vm2545, %v2483
  %2558 = vst.msk [vmem:[%s2 + $0x60] sm:$0xff] %vm2545, %v2484
  %2559 = vst.msk [vmem:[%s2 + $0x68] sm:$0xff] %vm2545, %v2485
  %2560 = vst.msk [vmem:[%s2 + $0x70] sm:$0xff] %vm2545, %v2486
  %2561 = vst.msk [vmem:[%s2 + $0x78] sm:$0xff] %vm2545, %v2487
  %2562 = vst.msk [vmem:[%s2 + $0x80] sm:$0xff] %vm2545, %v2488
  %2563 = vst.msk [vmem:[%s2 + $0x88] sm:$0xff] %vm2545, %v2489
  %2564 = vst.msk [vmem:[%s2 + $0x90] sm:$0xff] %vm2545, %v2490
  %2565 = vst.msk [vmem:[%s2 + $0x98] sm:$0xff] %vm2545, %v2491
  %2566 = vst.msk [vmem:[%s2 + $0xa0] sm:$0xff] %vm2545, %v2492
  %2567 = vst.msk [vmem:[%s2 + $0xa8] sm:$0xff] %vm2545, %v2493
  %2568 = vst.msk [vmem:[%s2 + $0xb0] sm:$0xff] %vm2545, %v2494
  %2569 = vst.msk [vmem:[%s2 + $0xb8] sm:$0xff] %vm2545, %v2495
  %2570 = vst.msk [vmem:[%s2 + $0xc0] sm:$0xff] %vm2545, %v2496
  %2571 = vst.msk [vmem:[%s2 + $0xc8] sm:$0xff] %vm2545, %v2497
  %2572 = vst.msk [vmem:[%s2 + $0xd0] sm:$0xff] %vm2545, %v2498
  %2573 = vst.msk [vmem:[%s2 + $0xd8] sm:$0xff] %vm2545, %v2499
  %2574 = vst.msk [vmem:[%s2 + $0xe0] sm:$0xff] %vm2545, %v2500
  %2575 = vst.msk [vmem:[%s2 + $0xe8] sm:$0xff] %vm2545, %v2501
  %2576 = vst.msk [vmem:[%s2 + $0xf0] sm:$0xff] %vm2545, %v2502
  %2577 = vst.msk [vmem:[%s2 + $0xf8] sm:$0xff] %vm2545, %v2503
  %2578 = vst.msk [vmem:[%s2 + $0x100] sm:$0xff] %vm2545, %v2504
  %2579 = vst.msk [vmem:[%s2 + $0x108] sm:$0xff] %vm2545, %v2505
  %2580 = vst.msk [vmem:[%s2 + $0x110] sm:$0xff] %vm2545, %v2506
  %2581 = vst.msk [vmem:[%s2 + $0x118] sm:$0xff] %vm2545, %v2507
  %2582 = vst.msk [vmem:[%s2 + $0x120] sm:$0xff] %vm2545, %v2508
  %2583 = vst.msk [vmem:[%s2 + $0x128] sm:$0xff] %vm2545, %v2509
  %2584 = vst.msk [vmem:[%s2 + $0x130] sm:$0xff] %vm2545, %v2510
  %2585 = vst.msk [vmem:[%s2 + $0x138] sm:$0xff] %vm2545, %v2511
  %2586 = vst.msk [vmem:[%s2 + $0x140] sm:$0xff] %vm2545, %v2512
  %2587 = vst.msk [vmem:[%s2 + $0x148] sm:$0xff] %vm2545, %v2513
  %2588 = vst.msk [vmem:[%s2 + $0x150] sm:$0xff] %vm2545, %v2514
  %2589 = vst.msk [vmem:[%s2 + $0x158] sm:$0xff] %vm2545, %v2515
  %2590 = vst.msk [vmem:[%s2 + $0x160] sm:$0xff] %vm2545, %v2516
  %2591 = vst.msk [vmem:[%s2 + $0x168] sm:$0xff] %vm2545, %v2517
  %2592 = vst.msk [vmem:[%s2 + $0x170] sm:$0xff] %vm2545, %v2518
  %2593 = vst.msk [vmem:[%s2 + $0x178] sm:$0xff] %vm2545, %v2519
  %2594 = vst.msk [vmem:[%s2 + $0x180] sm:$0xff] %vm2545, %v2520
  %2595 = vst.msk [vmem:[%s2 + $0x188] sm:$0xff] %vm2545, %v2521
  %2596 = vst.msk [vmem:[%s2 + $0x190] sm:$0xff] %vm2545, %v2522
  %2597 = vst.msk [vmem:[%s2 + $0x198] sm:$0xff] %vm2545, %v2523
  %2598 = vst.msk [vmem:[%s2 + $0x1a0] sm:$0xff] %vm2545, %v2524
  %2599 = vst.msk [vmem:[%s2 + $0x1a8] sm:$0xff] %vm2545, %v2525
  %2600 = vst.msk [vmem:[%s2 + $0x1b0] sm:$0xff] %vm2545, %v2526
  %2601 = vst.msk [vmem:[%s2 + $0x1b8] sm:$0xff] %vm2545, %v2527
  %2602 = vst.msk [vmem:[%s2 + $0x1c0] sm:$0xff] %vm2545, %v2528
  %2603 = vst.msk [vmem:[%s2 + $0x1c8] sm:$0xff] %vm2545, %v2529
  %2604 = vst.msk [vmem:[%s2 + $0x1d0] sm:$0xff] %vm2545, %v2530
  %2605 = vst.msk [vmem:[%s2 + $0x1d8] sm:$0xff] %vm2545, %v2531
  %2606 = vst.msk [vmem:[%s2 + $0x1e0] sm:$0xff] %vm2545, %v2532
  %2607 = vst.msk [vmem:[%s2 + $0x1e8] sm:$0xff] %vm2545, %v2533
  %2608 = vst.msk [vmem:[%s2 + $0x1f0] sm:$0xff] %vm2545, %v2534
  %2609 = vst.msk [vmem:[%s2 + $0x1f8] sm:$0xff] %vm2545, %v2535
  %2610 = vst.msk [vmem:[%s2 + $0x200] sm:$0xff] %vm2545, %v2536
  %2611 = vst.msk [vmem:[%s2 + $0x208] sm:$0xff] %vm2545, %v2537
  %2612 = vst.msk [vmem:[%s2 + $0x210] sm:$0xff] %vm2545, %v2538
  %2613 = vst.msk [vmem:[%s2 + $0x218] sm:$0xff] %vm2545, %v2539
  %2614 = vst.msk [vmem:[%s2 + $0x220] sm:$0xff] %vm2545, %v2540
  %2615 = vst.msk [vmem:[%s2 + $0x228] sm:$0xff] %vm2545, %v2541
  %2616 = vst.msk [vmem:[%s2 + $0x230] sm:$0xff] %vm2545, %v2542
  %2617 = vst.msk [vmem:[%s2 + $0x238] sm:$0xff] %vm2545, %v2543
  %vm2618 = vcmask 517120
  %2619 = vst.msk [vmem:[%s2 + $0x240] sm:$0x3] %vm2618, %v2544
  // Predicated region
  $region10: #{discriminator32_forward.3} parent=0 // pred_check
    _
  $region11: #{discriminator32_forward.3} parent=0 // pred_check_branch
    %2621 = sbr.rel (0) target = $region13
  $region12: #{discriminator32_forward.3} parent=0 // pred_region
    _
  $region13: #{discriminator32_forward.3} parent=0 // pred_fallthru
    _
  // Predicated region
  $region14: #{discriminator32_forward.3} parent=0 // pred_check
    _
  $region15: #{discriminator32_forward.3} parent=0 // pred_check_branch
    %2623 = sbr.rel (0) target = $region17
  $region16: #{discriminator32_forward.3} parent=0 // pred_region
    _
  $region17: #{discriminator32_forward.3} parent=0 // pred_fallthru
    _

// kernel: tile.7
$region0: #{tile.7}
  %s0 = inlined_call_operand.vmem [shape: f32[2,25,256], index: 0, kind: input, shape index: {}]
  %s1 = inlined_call_operand.vmem [shape: f32[50,256], index: 1, kind: output, shape index: {}]
  %v2 = vld [vmem:[%s0] sm:$0xff]
  %3 = vst [vmem:[%s1] sm:$0xff] %v2
  %s4 = scalar_lea.vmem %s0, 8
  %v5 = vld [vmem:[%s4] sm:$0xff]
  %s6 = scalar_lea.vmem %s1, 8
  %7 = vst [vmem:[%s6] sm:$0xff] %v5
  %s8 = scalar_lea.vmem %s0, 16
  %v9 = vld [vmem:[%s8] sm:$0xff]
  %s10 = scalar_lea.vmem %s1, 16
  %11 = vst [vmem:[%s10] sm:$0xff] %v9
  %s12 = scalar_lea.vmem %s0, 24
  %v13 = vld [vmem:[%s12] sm:$0xff]
  %s14 = scalar_lea.vmem %s1, 24
  %15 = vst [vmem:[%s14] sm:$0xff] %v13
  %s16 = scalar_lea.vmem %s0, 32
  %v17 = vld [vmem:[%s16] sm:$0xff]
  %s18 = scalar_lea.vmem %s1, 32
  %19 = vst [vmem:[%s18] sm:$0xff] %v17
  %s20 = scalar_lea.vmem %s0, 40
  %v21 = vld [vmem:[%s20] sm:$0xff]
  %s22 = scalar_lea.vmem %s1, 40
  %23 = vst [vmem:[%s22] sm:$0xff] %v21
  %s24 = scalar_lea.vmem %s0, 48
  %v25 = vld [vmem:[%s24] ss:$8 sm:$0x7]
  %s26 = scalar_lea.vmem %s1, 48
  %27 = vst [vmem:[%s26] ss:$8 sm:$0x3] %v25
  %s28 = scalar_lea.vmem %s1, 47
  %29 = vst [vmem:[%s28] sm:$0x4] %v25
  %s30 = scalar_lea.vmem %s0, 65
  %v31 = vld [vmem:[%s30] sm:$0xff]
  %s32 = scalar_lea.vmem %s1, 50
  %33 = vst [vmem:[%s32] sm:$0x3f] %v31
  %s34 = scalar_lea.vmem %s1, 106
  %35 = vst [vmem:[%s34] ss:$-7 sm:$0xc0] %v31
  %s36 = scalar_lea.vmem %s0, 73
  %v37 = vld [vmem:[%s36] sm:$0xff]
  %s38 = scalar_lea.vmem %s1, 58
  %39 = vst [vmem:[%s38] sm:$0x3f] %v37
  %s40 = scalar_lea.vmem %s1, 114
  %41 = vst [vmem:[%s40] ss:$-7 sm:$0xc0] %v37
  %s42 = scalar_lea.vmem %s0, 81
  %v43 = vld [vmem:[%s42] sm:$0xff]
  %s44 = scalar_lea.vmem %s1, 66
  %45 = vst [vmem:[%s44] sm:$0x3f] %v43
  %s46 = scalar_lea.vmem %s1, 122
  %47 = vst [vmem:[%s46] ss:$-7 sm:$0xc0] %v43
  %s48 = scalar_lea.vmem %s0, 89
  %v49 = vld [vmem:[%s48] sm:$0xff]
  %s50 = scalar_lea.vmem %s1, 74
  %51 = vst [vmem:[%s50] sm:$0x3f] %v49
  %s52 = scalar_lea.vmem %s1, 130
  %53 = vst [vmem:[%s52] ss:$-7 sm:$0xc0] %v49
  %s54 = scalar_lea.vmem %s0, 97
  %v55 = vld [vmem:[%s54] sm:$0xff]
  %s56 = scalar_lea.vmem %s1, 82
  %57 = vst [vmem:[%s56] sm:$0x3f] %v55
  %s58 = scalar_lea.vmem %s1, 138
  %59 = vst [vmem:[%s58] ss:$-7 sm:$0xc0] %v55
  %s60 = scalar_lea.vmem %s0, 105
  %v61 = vld [vmem:[%s60] sm:$0xff]
  %s62 = scalar_lea.vmem %s1, 90
  %63 = vst [vmem:[%s62] sm:$0x3f] %v61
  %s64 = scalar_lea.vmem %s1, 146
  %65 = vst [vmem:[%s64] ss:$-7 sm:$0xc0] %v61
  %s66 = scalar_lea.vmem %s0, 120
  %v67 = vld [vmem:[%s66] sm:$0x1]
  %s68 = scalar_lea.vmem %s1, 105
  %69 = vst [vmem:[%s68] sm:$0x1] %v67

// kernel: discriminator32_forward.4
$region0: #{discriminator32_forward.4}
  #allocation0 [shape = 'u32[]', space=smem, size = 0x4, offset = 0x4, fixed_abs, tag = 'smem constant byte address 0x4 - core index']
  #allocation1 [shape = 'u32[144,128]{1,0:T(1,128)}', space=vmem, size = 0x12000, scoped, tag = 'internal scratch']
  %s0 = inlined_call_operand.vmem [shape: f32[172,256], index: 0, kind: input, shape index: {}]
  %s1 = inlined_call_operand.vmem [shape: bf16[4,256,128], index: 1, kind: input, shape index: {}]
  %s2 = inlined_call_operand.vmem [shape: f32[162,1], index: 2, kind: input, shape index: {}]
  %s3 = inlined_call_operand.vmem [shape: f32[1,128], index: 3, kind: input, shape index: {}]
  %s4 = inlined_call_operand.vmem [shape: f32[1,128], index: 4, kind: input, shape index: {}]
  %s5 = inlined_call_operand.vmem [shape: f32[162,128], index: 5, kind: output, shape index: {}]
  %s6 = sld [smem:[#allocation0]]
  $region30: #{discriminator32_forward.4} parent=0
    _
  %s8 = ssub.s32 1, %s6
  %s9 = scalar_select 0, %s8, %s6
  // Predicated region
  $region2: #{discriminator32_forward.4} parent=0 // pred_check
    _
  $region3: #{discriminator32_forward.4} parent=0 // pred_check_branch
    %11 = sbr.rel (0) target = $region5
  $region4: #{discriminator32_forward.4} parent=0 // pred_region
    _
  $region5: #{discriminator32_forward.4} parent=0 // pred_fallthru
    _
  // Predicated region
  $region6: #{discriminator32_forward.4} parent=0 // pred_check
    _
  $region7: #{discriminator32_forward.4} parent=0 // pred_check_branch
    %13 = sbr.rel (0) target = $region9
  $region8: #{discriminator32_forward.4} parent=0 // pred_region
    _
  $region9: #{discriminator32_forward.4} parent=0 // pred_fallthru
    _
  // Predicated region
  $region10: #{discriminator32_forward.4} parent=0 // pred_check
    _
  $region11: #{discriminator32_forward.4} parent=0 // pred_check_branch
    %15 = sbr.rel (0) target = $region13
  $region12: #{discriminator32_forward.4} parent=0 // pred_region
    _
  $region13: #{discriminator32_forward.4} parent=0 // pred_fallthru
    _
  // Predicated region
  $region14: #{discriminator32_forward.4} parent=0 // pred_check
    _
  $region15: #{discriminator32_forward.4} parent=0 // pred_check_branch
    %17 = sbr.rel (0) target = $region17
  $region16: #{discriminator32_forward.4} parent=0 // pred_region
    _
  $region17: #{discriminator32_forward.4} parent=0 // pred_fallthru
    _
  // Predicated region
  $region18: #{discriminator32_forward.4} parent=0 // pred_check
    _
  $region19: #{discriminator32_forward.4} parent=0 // pred_check_branch
    %19 = sbr.rel (0) target = $region21
  $region20: #{discriminator32_forward.4} parent=0 // pred_region
    _
  $region21: #{discriminator32_forward.4} parent=0 // pred_fallthru
    _
  %v21 = vld [vmem:[%s0] sm:$0xff]
  %v22 = vld [vmem:[%s0 + $0x8] sm:$0xff]
  %v23 = vld [vmem:[%s0 + $0x10] sm:$0xff]
  %v24 = vld [vmem:[%s0 + $0x18] sm:$0xff]
  %v25 = vld [vmem:[%s0 + $0x20] sm:$0xff]
  %v26 = vld [vmem:[%s0 + $0x28] sm:$0xff]
  %v27 = vld [vmem:[%s0 + $0x30] sm:$0xff]
  %v28 = vld [vmem:[%s0 + $0x38] sm:$0xff]
  %v29 = vld [vmem:[%s0 + $0x40] sm:$0xff]
  %v30 = vld [vmem:[%s0 + $0x48] sm:$0xff]
  %v31 = vld [vmem:[%s0 + $0x50] sm:$0xff]
  %v32 = vld [vmem:[%s0 + $0x58] sm:$0xff]
  %v33 = vld [vmem:[%s0 + $0x60] sm:$0xff]
  %v34 = vld [vmem:[%s0 + $0x68] sm:$0xff]
  %v35 = vld [vmem:[%s0 + $0x70] sm:$0xff]
  %v36 = vld [vmem:[%s0 + $0x78] sm:$0xff]
  %v37 = vld [vmem:[%s0 + $0x80] sm:$0xff]
  %v38 = vld [vmem:[%s0 + $0x88] sm:$0xff]
  %v39 = vld [vmem:[%s0 + $0x90] sm:$0xff]
  %v40 = vld [vmem:[%s0 + $0x98] sm:$0xff]
  %v41 = vld [vmem:[%s0 + $0xa0] sm:$0xff]
  %v42 = vld [vmem:[%s0 + $0xa8] sm:$0xff]
  %v43 = vld [vmem:[%s0 + $0xb0] sm:$0xff]
  %v44 = vld [vmem:[%s0 + $0xb8] sm:$0xff]
  %v45 = vld [vmem:[%s0 + $0xc0] sm:$0xff]
  %v46 = vld [vmem:[%s0 + $0xc8] sm:$0xff]
  %v47 = vld [vmem:[%s0 + $0xd0] sm:$0xff]
  %v48 = vld [vmem:[%s0 + $0xd8] sm:$0xff]
  %v49 = vld [vmem:[%s0 + $0xe0] sm:$0xff]
  %v50 = vld [vmem:[%s0 + $0xe8] sm:$0xff]
  %v51 = vld [vmem:[%s0 + $0xf0] sm:$0xff]
  %v52 = vld [vmem:[%s0 + $0xf8] sm:$0xff]
  %v53 = vld [vmem:[%s0 + $0x100] sm:$0xff]
  %v54 = vld [vmem:[%s0 + $0x108] sm:$0xff]
  %v55 = vld [vmem:[%s0 + $0x110] sm:$0xff]
  %v56 = vld [vmem:[%s0 + $0x118] sm:$0xff]
  %v57 = vld [vmem:[%s0 + $0x120] sm:$0xff]
  %v58 = vld [vmem:[%s0 + $0x128] sm:$0xff]
  %v59 = vld [vmem:[%s0 + $0x130] sm:$0xff]
  %v60 = vld [vmem:[%s0 + $0x138] sm:$0xff]
  %v61 = vld [vmem:[%s0 + $0x140] sm:$0x3]
  %v62 = vld [vmem:[%s0 + $0x148] sm:$0x3]
  %v63 = vpack.c.bf16 %v23, %v21
  %v64 = vpack.c.bf16 %v24, %v22
  %v65 = vpack.c.bf16 %v27, %v25
  %v66 = vpack.c.bf16 %v28, %v26
  %v67 = vpack.c.bf16 %v31, %v29
  %v68 = vpack.c.bf16 %v32, %v30
  %v69 = vpack.c.bf16 %v35, %v33
  %v70 = vpack.c.bf16 %v36, %v34
  %v71 = vpack.c.bf16 %v39, %v37
  %v72 = vpack.c.bf16 %v40, %v38
  %v73 = vpack.c.bf16 %v43, %v41
  %v74 = vpack.c.bf16 %v44, %v42
  %v75 = vpack.c.bf16 %v47, %v45
  %v76 = vpack.c.bf16 %v48, %v46
  %v77 = vpack.c.bf16 %v51, %v49
  %v78 = vpack.c.bf16 %v52, %v50
  %v79 = vpack.c.bf16 %v55, %v53
  %v80 = vpack.c.bf16 %v56, %v54
  %v81 = vpack.c.bf16 %v59, %v57
  %v82 = vpack.c.bf16 %v60, %v58
  %v83 = vpack.c.bf16 %v61, %v61
  %v84 = vpack.c.bf16 %v62, %v62
  %v85 = vld [vmem:[%s1] sm:$0xf]
  %v86 = vld [vmem:[%s1 + $0x4] sm:$0xf]
  %v87 = vld [vmem:[%s1 + $0x8] sm:$0xf]
  %v88 = vld [vmem:[%s1 + $0xc] sm:$0xf]
  %v89 = vld [vmem:[%s1 + $0x10] sm:$0xf]
  %v90 = vld [vmem:[%s1 + $0x14] sm:$0xf]
  %v91 = vld [vmem:[%s1 + $0x18] sm:$0xf]
  %v92 = vld [vmem:[%s1 + $0x1c] sm:$0xf]
  %v93 = vld [vmem:[%s1 + $0x20] sm:$0xf]
  %v94 = vld [vmem:[%s1 + $0x24] sm:$0xf]
  %v95 = vld [vmem:[%s1 + $0x28] sm:$0xf]
  %v96 = vld [vmem:[%s1 + $0x2c] sm:$0xf]
  %v97 = vld [vmem:[%s1 + $0x30] sm:$0xf]
  %v98 = vld [vmem:[%s1 + $0x34] sm:$0xf]
  %v99 = vld [vmem:[%s1 + $0x38] sm:$0xf]
  %v100 = vld [vmem:[%s1 + $0x3c] sm:$0xf]
  %v101 = vld [vmem:[%s1 + $0x40] sm:$0xf]
  %v102 = vld [vmem:[%s1 + $0x44] sm:$0xf]
  %v103 = vld [vmem:[%s1 + $0x48] sm:$0xf]
  %v104 = vld [vmem:[%s1 + $0x4c] sm:$0xf]
  %v105 = vld [vmem:[%s1 + $0x50] sm:$0xf]
  %v106 = vld [vmem:[%s1 + $0x54] sm:$0xf]
  %v107 = vld [vmem:[%s1 + $0x58] sm:$0xf]
  %v108 = vld [vmem:[%s1 + $0x5c] sm:$0xf]
  %v109 = vld [vmem:[%s1 + $0x60] sm:$0xf]
  %v110 = vld [vmem:[%s1 + $0x64] sm:$0xf]
  %v111 = vld [vmem:[%s1 + $0x68] sm:$0xf]
  %v112 = vld [vmem:[%s1 + $0x6c] sm:$0xf]
  %v113 = vld [vmem:[%s1 + $0x70] sm:$0xf]
  %v114 = vld [vmem:[%s1 + $0x74] sm:$0xf]
  %v115 = vld [vmem:[%s1 + $0x78] sm:$0xf]
  %v116 = vld [vmem:[%s1 + $0x7c] sm:$0xf]
  %v117 = vld [vmem:[%s0] sm:$0xfe]
  %v118 = vld [vmem:[%s0 + $0x8] sm:$0xfe]
  %v119 = vld [vmem:[%s0 + $0x140] sm:$0x7]
  %v120 = vld [vmem:[%s0 + $0x148] sm:$0x7]
  %v121 = vpack.c.bf16 %v23, %v117
  %v122 = vpack.c.bf16 %v24, %v118
  %v123 = vpack.c.bf16 %v119, %v119
  %v124 = vpack.c.bf16 %v120, %v120
  %s125 = scalar_lea.vmem %s1, 128
  %v126 = vld [vmem:[%s125] sm:$0xf]
  %v127 = vld [vmem:[%s125 + $0x4] sm:$0xf]
  %v128 = vld [vmem:[%s125 + $0x8] sm:$0xf]
  %v129 = vld [vmem:[%s125 + $0xc] sm:$0xf]
  %v130 = vld [vmem:[%s125 + $0x10] sm:$0xf]
  %v131 = vld [vmem:[%s125 + $0x14] sm:$0xf]
  %v132 = vld [vmem:[%s125 + $0x18] sm:$0xf]
  %v133 = vld [vmem:[%s125 + $0x1c] sm:$0xf]
  %v134 = vld [vmem:[%s125 + $0x20] sm:$0xf]
  %v135 = vld [vmem:[%s125 + $0x24] sm:$0xf]
  %v136 = vld [vmem:[%s125 + $0x28] sm:$0xf]
  %v137 = vld [vmem:[%s125 + $0x2c] sm:$0xf]
  %v138 = vld [vmem:[%s125 + $0x30] sm:$0xf]
  %v139 = vld [vmem:[%s125 + $0x34] sm:$0xf]
  %v140 = vld [vmem:[%s125 + $0x38] sm:$0xf]
  %v141 = vld [vmem:[%s125 + $0x3c] sm:$0xf]
  %v142 = vld [vmem:[%s125 + $0x40] sm:$0xf]
  %v143 = vld [vmem:[%s125 + $0x44] sm:$0xf]
  %v144 = vld [vmem:[%s125 + $0x48] sm:$0xf]
  %v145 = vld [vmem:[%s125 + $0x4c] sm:$0xf]
  %v146 = vld [vmem:[%s125 + $0x50] sm:$0xf]
  %v147 = vld [vmem:[%s125 + $0x54] sm:$0xf]
  %v148 = vld [vmem:[%s125 + $0x58] sm:$0xf]
  %v149 = vld [vmem:[%s125 + $0x5c] sm:$0xf]
  %v150 = vld [vmem:[%s125 + $0x60] sm:$0xf]
  %v151 = vld [vmem:[%s125 + $0x64] sm:$0xf]
  %v152 = vld [vmem:[%s125 + $0x68] sm:$0xf]
  %v153 = vld [vmem:[%s125 + $0x6c] sm:$0xf]
  %v154 = vld [vmem:[%s125 + $0x70] sm:$0xf]
  %v155 = vld [vmem:[%s125 + $0x74] sm:$0xf]
  %v156 = vld [vmem:[%s125 + $0x78] sm:$0xf]
  %v157 = vld [vmem:[%s125 + $0x7c] sm:$0xf]
  %vm158 = vsmask.f32 7424
  %v160 = vshrl.u32 %v121, 16
  %v162 = vshll.u32 %v121, 16
  %v164 = vrot.slane %v162, 1
  %v165 = vor.u32 %v160, %v164
  %v167 = vshll.u32 %v65, 16
  %v169 = vrot.slane %v167, 1
  %v170 = vsel %vm158, %v165, %v169
  %v172 = vshrl.u32 %v122, 16
  %v174 = vshll.u32 %v122, 16
  %v176 = vrot.slane %v174, 1
  %v177 = vor.u32 %v172, %v176
  %v179 = vshll.u32 %v66, 16
  %v181 = vrot.slane %v179, 1
  %v182 = vsel %vm158, %v177, %v181
  %v183 = vshrl.u32 %v65, 16
  %v185 = vor.u32 %v183, %v169
  %v187 = vshll.u32 %v67, 16
  %v189 = vrot.slane %v187, 1
  %v190 = vsel %vm158, %v185, %v189
  %v191 = vshrl.u32 %v66, 16
  %v193 = vor.u32 %v191, %v181
  %v195 = vshll.u32 %v68, 16
  %v197 = vrot.slane %v195, 1
  %v198 = vsel %vm158, %v193, %v197
  %v199 = vshrl.u32 %v67, 16
  %v201 = vor.u32 %v199, %v189
  %v203 = vshll.u32 %v69, 16
  %v205 = vrot.slane %v203, 1
  %v206 = vsel %vm158, %v201, %v205
  %v207 = vshrl.u32 %v68, 16
  %v209 = vor.u32 %v207, %v197
  %v211 = vshll.u32 %v70, 16
  %v213 = vrot.slane %v211, 1
  %v214 = vsel %vm158, %v209, %v213
  %v215 = vshrl.u32 %v69, 16
  %v217 = vor.u32 %v215, %v205
  %v219 = vshll.u32 %v71, 16
  %v221 = vrot.slane %v219, 1
  %v222 = vsel %vm158, %v217, %v221
  %v223 = vshrl.u32 %v70, 16
  %v225 = vor.u32 %v223, %v213
  %v227 = vshll.u32 %v72, 16
  %v229 = vrot.slane %v227, 1
  %v230 = vsel %vm158, %v225, %v229
  %v231 = vshrl.u32 %v71, 16
  %v233 = vor.u32 %v231, %v221
  %v235 = vshll.u32 %v73, 16
  %v237 = vrot.slane %v235, 1
  %v238 = vsel %vm158, %v233, %v237
  %v239 = vshrl.u32 %v72, 16
  %v241 = vor.u32 %v239, %v229
  %v243 = vshll.u32 %v74, 16
  %v245 = vrot.slane %v243, 1
  %v246 = vsel %vm158, %v241, %v245
  %v247 = vshrl.u32 %v73, 16
  %v249 = vor.u32 %v247, %v237
  %v251 = vshll.u32 %v75, 16
  %v253 = vrot.slane %v251, 1
  %v254 = vsel %vm158, %v249, %v253
  %v255 = vshrl.u32 %v74, 16
  %v257 = vor.u32 %v255, %v245
  %v259 = vshll.u32 %v76, 16
  %v261 = vrot.slane %v259, 1
  %v262 = vsel %vm158, %v257, %v261
  %v263 = vshrl.u32 %v75, 16
  %v265 = vor.u32 %v263, %v253
  %v267 = vshll.u32 %v77, 16
  %v269 = vrot.slane %v267, 1
  %v270 = vsel %vm158, %v265, %v269
  %v271 = vshrl.u32 %v76, 16
  %v273 = vor.u32 %v271, %v261
  %v275 = vshll.u32 %v78, 16
  %v277 = vrot.slane %v275, 1
  %v278 = vsel %vm158, %v273, %v277
  %v279 = vshrl.u32 %v77, 16
  %v281 = vor.u32 %v279, %v269
  %v283 = vshll.u32 %v79, 16
  %v285 = vrot.slane %v283, 1
  %v286 = vsel %vm158, %v281, %v285
  %v287 = vshrl.u32 %v78, 16
  %v289 = vor.u32 %v287, %v277
  %v291 = vshll.u32 %v80, 16
  %v293 = vrot.slane %v291, 1
  %v294 = vsel %vm158, %v289, %v293
  %v295 = vshrl.u32 %v79, 16
  %v297 = vor.u32 %v295, %v285
  %v299 = vshll.u32 %v81, 16
  %v301 = vrot.slane %v299, 1
  %v302 = vsel %vm158, %v297, %v301
  %v303 = vshrl.u32 %v80, 16
  %v305 = vor.u32 %v303, %v293
  %v307 = vshll.u32 %v82, 16
  %v309 = vrot.slane %v307, 1
  %v310 = vsel %vm158, %v305, %v309
  %v311 = vshrl.u32 %v81, 16
  %v313 = vor.u32 %v311, %v301
  %v315 = vshll.u32 %v123, 16
  %v317 = vrot.slane %v315, 1
  %v318 = vsel %vm158, %v313, %v317
  %v319 = vshrl.u32 %v82, 16
  %v321 = vor.u32 %v319, %v309
  %v323 = vshll.u32 %v124, 16
  %v325 = vrot.slane %v323, 1
  %v326 = vsel %vm158, %v321, %v325
  %v327 = vshrl.u32 %v123, 16
  %v329 = vor.u32 %v327, %v317
  %v330 = vshrl.u32 %v124, 16
  %v332 = vor.u32 %v330, %v325
  %v387 = vunpack.c.l.b16 %v126
  %v388 = vunpack.c.l.b16 %v127
  %v389 = vunpack.c.l.b16 %v128
  %v390 = vunpack.c.l.b16 %v129
  %v391 = vunpack.c.l.b16 %v130
  %v392 = vunpack.c.l.b16 %v131
  %v393 = vunpack.c.l.b16 %v132
  %v394 = vunpack.c.l.b16 %v133
  %v395 = vunpack.c.l.b16 %v134
  %v396 = vunpack.c.l.b16 %v135
  %v397 = vunpack.c.l.b16 %v136
  %v398 = vunpack.c.l.b16 %v137
  %v399 = vunpack.c.l.b16 %v138
  %v400 = vunpack.c.l.b16 %v139
  %v401 = vunpack.c.l.b16 %v140
  %v402 = vunpack.c.l.b16 %v141
  %v403 = vunpack.c.l.b16 %v142
  %v404 = vunpack.c.l.b16 %v143
  %v405 = vunpack.c.l.b16 %v144
  %v406 = vunpack.c.l.b16 %v145
  %v407 = vunpack.c.l.b16 %v146
  %v408 = vunpack.c.l.b16 %v147
  %v409 = vunpack.c.l.b16 %v148
  %v410 = vunpack.c.l.b16 %v149
  %v411 = vunpack.c.l.b16 %v150
  %v412 = vunpack.c.l.b16 %v151
  %v413 = vunpack.c.l.b16 %v152
  %v414 = vunpack.c.l.b16 %v153
  %v415 = vunpack.c.l.b16 %v154
  %v416 = vunpack.c.l.b16 %v155
  %v417 = vunpack.c.l.b16 %v156
  %v418 = vunpack.c.l.b16 %v157
  %v419 = vpack.c.b16 %v388, %v387
  %v420 = vpack.c.b16 %v390, %v389
  %v421 = vpack.c.b16 %v392, %v391
  %v422 = vpack.c.b16 %v394, %v393
  %v423 = vpack.c.b16 %v396, %v395
  %v424 = vpack.c.b16 %v398, %v397
  %v425 = vpack.c.b16 %v400, %v399
  %v426 = vpack.c.b16 %v402, %v401
  %v427 = vpack.c.b16 %v404, %v403
  %v428 = vpack.c.b16 %v406, %v405
  %v429 = vpack.c.b16 %v408, %v407
  %v430 = vpack.c.b16 %v410, %v409
  %v431 = vpack.c.b16 %v412, %v411
  %v432 = vpack.c.b16 %v414, %v413
  %v433 = vpack.c.b16 %v416, %v415
  %v434 = vpack.c.b16 %v418, %v417
  %451 = vmatprep.subr.bf16.mxu0 0
  %452 = vmatpush1.bf16.msra.mxu0 %v419
  %453 = vmatprep.subr.bf16.mxu0 0
  %454 = vmatpush1.bf16.msra.mxu0 %v420
  %455 = vmatprep.subr.bf16.mxu0 0
  %456 = vmatpush1.bf16.msra.mxu0 %v421
  %457 = vmatprep.subr.bf16.mxu0 0
  %458 = vmatpush1.bf16.msra.mxu0 %v422
  %459 = vmatprep.subr.bf16.mxu0 0
  %460 = vmatpush1.bf16.msra.mxu0 %v423
  %461 = vmatprep.subr.bf16.mxu0 0
  %462 = vmatpush1.bf16.msra.mxu0 %v424
  %463 = vmatprep.subr.bf16.mxu0 0
  %464 = vmatpush1.bf16.msra.mxu0 %v425
  %465 = vmatprep.subr.bf16.mxu0 0
  %466 = vmatpush1.bf16.msra.mxu0 %v426
  %467 = vmatprep.subr.bf16.mxu0 0
  %468 = vmatpush1.bf16.msra.mxu0 %v427
  %469 = vmatprep.subr.bf16.mxu0 0
  %470 = vmatpush1.bf16.msra.mxu0 %v428
  %471 = vmatprep.subr.bf16.mxu0 0
  %472 = vmatpush1.bf16.msra.mxu0 %v429
  %473 = vmatprep.subr.bf16.mxu0 0
  %474 = vmatpush1.bf16.msra.mxu0 %v430
  %475 = vmatprep.subr.bf16.mxu0 0
  %476 = vmatpush1.bf16.msra.mxu0 %v431
  %477 = vmatprep.subr.bf16.mxu0 0
  %478 = vmatpush1.bf16.msra.mxu0 %v432
  %479 = vmatprep.subr.bf16.mxu0 0
  %480 = vmatpush1.bf16.msra.mxu0 %v433
  %481 = vmatprep.subr.bf16.mxu0 0
  %482 = vmatpush1.bf16.msra.mxu0 %v434
  %483 = vmatprep.mubr.bf16.mxu0 %v182
  %484 = vmatmul.mubr.bf16.gmra.mrb[0].mxu0 %v170
  %v485 = vpop.f32.mrb[0].mxu0
  %v486 = vadd.f32 0.0, %v485
  %v487 = vpop.f32.mrb[0].mxu0
  %v488 = vpop.f32.mrb[0].mxu0
  %v489 = vadd.f32 0.0, %v488
  %v490 = vpop.f32.mrb[0].mxu0
  %491 = vmatprep.mubr.bf16.mxu0 %v198
  %492 = vmatmul.mubr.bf16.gmra.mrb[0].mxu0 %v190
  %v493 = vpop.f32.mrb[0].mxu0
  %v494 = vadd.f32 0.0, %v493
  %v495 = vpop.f32.mrb[0].mxu0
  %v496 = vpop.f32.mrb[0].mxu0
  %v497 = vadd.f32 0.0, %v496
  %v498 = vpop.f32.mrb[0].mxu0
  %499 = vmatprep.mubr.bf16.mxu0 %v214
  %500 = vmatmul.mubr.bf16.gmra.mrb[0].mxu0 %v206
  %v501 = vpop.f32.mrb[0].mxu0
  %v502 = vadd.f32 0.0, %v501
  %v503 = vpop.f32.mrb[0].mxu0
  %v504 = vpop.f32.mrb[0].mxu0
  %v505 = vadd.f32 0.0, %v504
  %v506 = vpop.f32.mrb[0].mxu0
  %507 = vmatprep.mubr.bf16.mxu0 %v230
  %508 = vmatmul.mubr.bf16.gmra.mrb[0].mxu0 %v222
  %v509 = vpop.f32.mrb[0].mxu0
  %v510 = vadd.f32 0.0, %v509
  %v511 = vpop.f32.mrb[0].mxu0
  %v512 = vpop.f32.mrb[0].mxu0
  %v513 = vadd.f32 0.0, %v512
  %v514 = vpop.f32.mrb[0].mxu0
  %515 = vmatprep.mubr.bf16.mxu0 %v246
  %516 = vmatmul.mubr.bf16.gmra.mrb[0].mxu0 %v238
  %v517 = vpop.f32.mrb[0].mxu0
  %v518 = vadd.f32 0.0, %v517
  %v519 = vpop.f32.mrb[0].mxu0
  %v520 = vpop.f32.mrb[0].mxu0
  %v521 = vadd.f32 0.0, %v520
  %v522 = vpop.f32.mrb[0].mxu0
  %523 = vmatprep.mubr.bf16.mxu0 %v262
  %524 = vmatmul.mubr.bf16.gmra.mrb[0].mxu0 %v254
  %v525 = vpop.f32.mrb[0].mxu0
  %v526 = vadd.f32 0.0, %v525
  %v527 = vpop.f32.mrb[0].mxu0
  %v528 = vpop.f32.mrb[0].mxu0
  %v529 = vadd.f32 0.0, %v528
  %v530 = vpop.f32.mrb[0].mxu0
  %531 = vmatprep.mubr.bf16.mxu0 %v278
  %532 = vmatmul.mubr.bf16.gmra.mrb[0].mxu0 %v270
  %v533 = vpop.f32.mrb[0].mxu0
  %v534 = vadd.f32 0.0, %v533
  %v535 = vpop.f32.mrb[0].mxu0
  %v536 = vpop.f32.mrb[0].mxu0
  %v537 = vadd.f32 0.0, %v536
  %v538 = vpop.f32.mrb[0].mxu0
  %539 = vmatprep.mubr.bf16.mxu0 %v294
  %540 = vmatmul.mubr.bf16.gmra.mrb[0].mxu0 %v286
  %v541 = vpop.f32.mrb[0].mxu0
  %v542 = vadd.f32 0.0, %v541
  %v543 = vpop.f32.mrb[0].mxu0
  %v544 = vpop.f32.mrb[0].mxu0
  %v545 = vadd.f32 0.0, %v544
  %v546 = vpop.f32.mrb[0].mxu0
  %547 = vmatprep.mubr.bf16.mxu0 %v310
  %548 = vmatmul.mubr.bf16.gmra.mrb[0].mxu0 %v302
  %v549 = vpop.f32.mrb[0].mxu0
  %v550 = vadd.f32 0.0, %v549
  %v551 = vpop.f32.mrb[0].mxu0
  %v552 = vpop.f32.mrb[0].mxu0
  %v553 = vadd.f32 0.0, %v552
  %v554 = vpop.f32.mrb[0].mxu0
  %555 = vmatprep.mubr.bf16.mxu0 %v326
  %556 = vmatmul.mubr.bf16.gmra.mrb[0].mxu0 %v318
  %v557 = vpop.f32.mrb[0].mxu0
  %v558 = vadd.f32 0.0, %v557
  %v559 = vpop.f32.mrb[0].mxu0
  %v560 = vpop.f32.mrb[0].mxu0
  %v561 = vadd.f32 0.0, %v560
  %v562 = vpop.f32.mrb[0].mxu0
  %563 = vmatprep.mubr.bf16.mxu0 %v332
  %564 = vmatmul.mubr.bf16.gmra.mrb[0].mxu0 %v329
  %v565 = vpop.f32.mrb[0].mxu0
  %v566 = vadd.f32 0.0, %v565
  %v567 = vpop.f32.mrb[0].mxu0
  %v568 = vpop.f32.mrb[0].mxu0
  %v569 = vpop.f32.mrb[0].mxu0
  %570 = vdwg.mxu0
  %v603 = vunpack.c.l.b16 %v85
  %v604 = vunpack.c.l.b16 %v86
  %v605 = vunpack.c.l.b16 %v87
  %v606 = vunpack.c.l.b16 %v88
  %v607 = vunpack.c.l.b16 %v89
  %v608 = vunpack.c.l.b16 %v90
  %v609 = vunpack.c.l.b16 %v91
  %v610 = vunpack.c.l.b16 %v92
  %v611 = vunpack.c.l.b16 %v93
  %v612 = vunpack.c.l.b16 %v94
  %v613 = vunpack.c.l.b16 %v95
  %v614 = vunpack.c.l.b16 %v96
  %v615 = vunpack.c.l.b16 %v97
  %v616 = vunpack.c.l.b16 %v98
  %v617 = vunpack.c.l.b16 %v99
  %v618 = vunpack.c.l.b16 %v100
  %v619 = vunpack.c.l.b16 %v101
  %v620 = vunpack.c.l.b16 %v102
  %v621 = vunpack.c.l.b16 %v103
  %v622 = vunpack.c.l.b16 %v104
  %v623 = vunpack.c.l.b16 %v105
  %v624 = vunpack.c.l.b16 %v106
  %v625 = vunpack.c.l.b16 %v107
  %v626 = vunpack.c.l.b16 %v108
  %v627 = vunpack.c.l.b16 %v109
  %v628 = vunpack.c.l.b16 %v110
  %v629 = vunpack.c.l.b16 %v111
  %v630 = vunpack.c.l.b16 %v112
  %v631 = vunpack.c.l.b16 %v113
  %v632 = vunpack.c.l.b16 %v114
  %v633 = vunpack.c.l.b16 %v115
  %v634 = vunpack.c.l.b16 %v116
  %v635 = vpack.c.b16 %v604, %v603
  %v636 = vpack.c.b16 %v606, %v605
  %v637 = vpack.c.b16 %v608, %v607
  %v638 = vpack.c.b16 %v610, %v609
  %v639 = vpack.c.b16 %v612, %v611
  %v640 = vpack.c.b16 %v614, %v613
  %v641 = vpack.c.b16 %v616, %v615
  %v642 = vpack.c.b16 %v618, %v617
  %v643 = vpack.c.b16 %v620, %v619
  %v644 = vpack.c.b16 %v622, %v621
  %v645 = vpack.c.b16 %v624, %v623
  %v646 = vpack.c.b16 %v626, %v625
  %v647 = vpack.c.b16 %v628, %v627
  %v648 = vpack.c.b16 %v630, %v629
  %v649 = vpack.c.b16 %v632, %v631
  %v650 = vpack.c.b16 %v634, %v633
  %667 = vmatprep.subr.bf16.mxu0 0
  %668 = vmatpush1.bf16.msra.mxu0 %v635
  %669 = vmatprep.subr.bf16.mxu0 0
  %670 = vmatpush1.bf16.msra.mxu0 %v636
  %671 = vmatprep.subr.bf16.mxu0 0
  %672 = vmatpush1.bf16.msra.mxu0 %v637
  %673 = vmatprep.subr.bf16.mxu0 0
  %674 = vmatpush1.bf16.msra.mxu0 %v638
  %675 = vmatprep.subr.bf16.mxu0 0
  %676 = vmatpush1.bf16.msra.mxu0 %v639
  %677 = vmatprep.subr.bf16.mxu0 0
  %678 = vmatpush1.bf16.msra.mxu0 %v640
  %679 = vmatprep.subr.bf16.mxu0 0
  %680 = vmatpush1.bf16.msra.mxu0 %v641
  %681 = vmatprep.subr.bf16.mxu0 0
  %682 = vmatpush1.bf16.msra.mxu0 %v642
  %683 = vmatprep.subr.bf16.mxu0 0
  %684 = vmatpush1.bf16.msra.mxu0 %v643
  %685 = vmatprep.subr.bf16.mxu0 0
  %686 = vmatpush1.bf16.msra.mxu0 %v644
  %687 = vmatprep.subr.bf16.mxu0 0
  %688 = vmatpush1.bf16.msra.mxu0 %v645
  %689 = vmatprep.subr.bf16.mxu0 0
  %690 = vmatpush1.bf16.msra.mxu0 %v646
  %691 = vmatprep.subr.bf16.mxu0 0
  %692 = vmatpush1.bf16.msra.mxu0 %v647
  %693 = vmatprep.subr.bf16.mxu0 0
  %694 = vmatpush1.bf16.msra.mxu0 %v648
  %695 = vmatprep.subr.bf16.mxu0 0
  %696 = vmatpush1.bf16.msra.mxu0 %v649
  %697 = vmatprep.subr.bf16.mxu0 0
  %698 = vmatpush1.bf16.msra.mxu0 %v650
  %699 = vmatprep.mubr.bf16.mxu0 %v64
  %700 = vmatmul.mubr.bf16.gmra.mrb[0].mxu0 %v63
  %v701 = vpop.f32.mrb[0].mxu0
  %v702 = vadd.f32 %v486, %v701
  %v703 = vpop.f32.mrb[0].mxu0
  %v704 = vpop.f32.mrb[0].mxu0
  %v705 = vadd.f32 %v489, %v704
  %v706 = vpop.f32.mrb[0].mxu0
  %707 = vmatprep.mubr.bf16.mxu0 %v66
  %708 = vmatmul.mubr.bf16.gmra.mrb[0].mxu0 %v65
  %v709 = vpop.f32.mrb[0].mxu0
  %v710 = vadd.f32 %v494, %v709
  %v711 = vpop.f32.mrb[0].mxu0
  %v712 = vpop.f32.mrb[0].mxu0
  %v713 = vadd.f32 %v497, %v712
  %v714 = vpop.f32.mrb[0].mxu0
  %715 = vmatprep.mubr.bf16.mxu0 %v68
  %716 = vmatmul.mubr.bf16.gmra.mrb[0].mxu0 %v67
  %v717 = vpop.f32.mrb[0].mxu0
  %v718 = vadd.f32 %v502, %v717
  %v719 = vpop.f32.mrb[0].mxu0
  %v720 = vpop.f32.mrb[0].mxu0
  %v721 = vadd.f32 %v505, %v720
  %v722 = vpop.f32.mrb[0].mxu0
  %723 = vmatprep.mubr.bf16.mxu0 %v70
  %724 = vmatmul.mubr.bf16.gmra.mrb[0].mxu0 %v69
  %v725 = vpop.f32.mrb[0].mxu0
  %v726 = vadd.f32 %v510, %v725
  %v727 = vpop.f32.mrb[0].mxu0
  %v728 = vpop.f32.mrb[0].mxu0
  %v729 = vadd.f32 %v513, %v728
  %v730 = vpop.f32.mrb[0].mxu0
  %731 = vmatprep.mubr.bf16.mxu0 %v72
  %732 = vmatmul.mubr.bf16.gmra.mrb[0].mxu0 %v71
  %v733 = vpop.f32.mrb[0].mxu0
  %v734 = vadd.f32 %v518, %v733
  %v735 = vpop.f32.mrb[0].mxu0
  %v736 = vpop.f32.mrb[0].mxu0
  %v737 = vadd.f32 %v521, %v736
  %v738 = vpop.f32.mrb[0].mxu0
  %739 = vmatprep.mubr.bf16.mxu0 %v74
  %740 = vmatmul.mubr.bf16.gmra.mrb[0].mxu0 %v73
  %v741 = vpop.f32.mrb[0].mxu0
  %v742 = vadd.f32 %v526, %v741
  %v743 = vpop.f32.mrb[0].mxu0
  %v744 = vpop.f32.mrb[0].mxu0
  %v745 = vadd.f32 %v529, %v744
  %v746 = vpop.f32.mrb[0].mxu0
  %747 = vmatprep.mubr.bf16.mxu0 %v76
  %748 = vmatmul.mubr.bf16.gmra.mrb[0].mxu0 %v75
  %v749 = vpop.f32.mrb[0].mxu0
  %v750 = vadd.f32 %v534, %v749
  %v751 = vpop.f32.mrb[0].mxu0
  %v752 = vpop.f32.mrb[0].mxu0
  %v753 = vadd.f32 %v537, %v752
  %v754 = vpop.f32.mrb[0].mxu0
  %755 = vmatprep.mubr.bf16.mxu0 %v78
  %756 = vmatmul.mubr.bf16.gmra.mrb[0].mxu0 %v77
  %v757 = vpop.f32.mrb[0].mxu0
  %v758 = vadd.f32 %v542, %v757
  %v759 = vpop.f32.mrb[0].mxu0
  %v760 = vpop.f32.mrb[0].mxu0
  %v761 = vadd.f32 %v545, %v760
  %v762 = vpop.f32.mrb[0].mxu0
  %763 = vmatprep.mubr.bf16.mxu0 %v80
  %764 = vmatmul.mubr.bf16.gmra.mrb[0].mxu0 %v79
  %v765 = vpop.f32.mrb[0].mxu0
  %v766 = vadd.f32 %v550, %v765
  %v767 = vpop.f32.mrb[0].mxu0
  %v768 = vpop.f32.mrb[0].mxu0
  %v769 = vadd.f32 %v553, %v768
  %v770 = vpop.f32.mrb[0].mxu0
  %771 = vmatprep.mubr.bf16.mxu0 %v82
  %772 = vmatmul.mubr.bf16.gmra.mrb[0].mxu0 %v81
  %v773 = vpop.f32.mrb[0].mxu0
  %v774 = vadd.f32 %v558, %v773
  %v775 = vpop.f32.mrb[0].mxu0
  %v776 = vpop.f32.mrb[0].mxu0
  %v777 = vadd.f32 %v561, %v776
  %v778 = vpop.f32.mrb[0].mxu0
  %779 = vmatprep.mubr.bf16.mxu0 %v84
  %780 = vmatmul.mubr.bf16.gmra.mrb[0].mxu0 %v83
  %v781 = vpop.f32.mrb[0].mxu0
  %v782 = vadd.f32 %v566, %v781
  %v783 = vpop.f32.mrb[0].mxu0
  %v784 = vpop.f32.mrb[0].mxu0
  %v785 = vpop.f32.mrb[0].mxu0
  %786 = vdwg.mxu0
  %v787 = vld [vmem:[%s0 + $0x10] sm:$0xfe]
  %v788 = vld [vmem:[%s0 + $0x18] sm:$0xfe]
  %v789 = vld [vmem:[%s0 + $0x20] sm:$0xff]
  %v790 = vld [vmem:[%s0 + $0x28] sm:$0xff]
  %v791 = vld [vmem:[%s0 + $0x30] sm:$0xff]
  %v792 = vld [vmem:[%s0 + $0x38] sm:$0xff]
  %v793 = vld [vmem:[%s0 + $0x40] sm:$0xff]
  %v794 = vld [vmem:[%s0 + $0x48] sm:$0xff]
  %v795 = vld [vmem:[%s0 + $0x50] sm:$0xff]
  %v796 = vld [vmem:[%s0 + $0x58] sm:$0xff]
  %v797 = vld [vmem:[%s0 + $0x60] sm:$0xff]
  %v798 = vld [vmem:[%s0 + $0x68] sm:$0xff]
  %v799 = vld [vmem:[%s0 + $0x70] sm:$0xff]
  %v800 = vld [vmem:[%s0 + $0x78] sm:$0xff]
  %v801 = vld [vmem:[%s0 + $0x80] sm:$0xff]
  %v802 = vld [vmem:[%s0 + $0x88] sm:$0xff]
  %v803 = vld [vmem:[%s0 + $0x90] sm:$0xff]
  %v804 = vld [vmem:[%s0 + $0x98] sm:$0xff]
  %v805 = vld [vmem:[%s0 + $0xa0] sm:$0xff]
  %v806 = vld [vmem:[%s0 + $0xa8] sm:$0xff]
  %v807 = vld [vmem:[%s0 + $0xb0] sm:$0xff]
  %v808 = vld [vmem:[%s0 + $0xb8] sm:$0xff]
  %v809 = vld [vmem:[%s0 + $0xc0] sm:$0xff]
  %v810 = vld [vmem:[%s0 + $0xc8] sm:$0xff]
  %v811 = vld [vmem:[%s0 + $0xd0] sm:$0xff]
  %v812 = vld [vmem:[%s0 + $0xd8] sm:$0xff]
  %v813 = vld [vmem:[%s0 + $0xe0] sm:$0xff]
  %v814 = vld [vmem:[%s0 + $0xe8] sm:$0xff]
  %v815 = vld [vmem:[%s0 + $0xf0] sm:$0xff]
  %v816 = vld [vmem:[%s0 + $0xf8] sm:$0xff]
  %v817 = vld [vmem:[%s0 + $0x100] sm:$0xff]
  %v818 = vld [vmem:[%s0 + $0x108] sm:$0xff]
  %v819 = vld [vmem:[%s0 + $0x110] sm:$0xff]
  %v820 = vld [vmem:[%s0 + $0x118] sm:$0xff]
  %v821 = vld [vmem:[%s0 + $0x120] sm:$0xff]
  %v822 = vld [vmem:[%s0 + $0x128] sm:$0xff]
  %v823 = vld [vmem:[%s0 + $0x130] sm:$0xff]
  %v824 = vld [vmem:[%s0 + $0x138] sm:$0xff]
  %v825 = vld [vmem:[%s0 + $0x140] sm:$0xff]
  %v826 = vld [vmem:[%s0 + $0x148] sm:$0xff]
  %v827 = vld [vmem:[%s0 + $0x150] sm:$0x7]
  %v828 = vld [vmem:[%s0 + $0x158] sm:$0x7]
  %v829 = vpack.c.bf16 %v789, %v787
  %v830 = vpack.c.bf16 %v790, %v788
  %v831 = vpack.c.bf16 %v793, %v791
  %v832 = vpack.c.bf16 %v794, %v792
  %v833 = vpack.c.bf16 %v797, %v795
  %v834 = vpack.c.bf16 %v798, %v796
  %v835 = vpack.c.bf16 %v801, %v799
  %v836 = vpack.c.bf16 %v802, %v800
  %v837 = vpack.c.bf16 %v805, %v803
  %v838 = vpack.c.bf16 %v806, %v804
  %v839 = vpack.c.bf16 %v809, %v807
  %v840 = vpack.c.bf16 %v810, %v808
  %v841 = vpack.c.bf16 %v813, %v811
  %v842 = vpack.c.bf16 %v814, %v812
  %v843 = vpack.c.bf16 %v817, %v815
  %v844 = vpack.c.bf16 %v818, %v816
  %v845 = vpack.c.bf16 %v821, %v819
  %v846 = vpack.c.bf16 %v822, %v820
  %v847 = vpack.c.bf16 %v825, %v823
  %v848 = vpack.c.bf16 %v826, %v824
  %v849 = vpack.c.bf16 %v827, %v827
  %v850 = vpack.c.bf16 %v828, %v828
  %s851 = scalar_lea.vmem %s1, 256
  %v852 = vld [vmem:[%s851] sm:$0xf]
  %v853 = vld [vmem:[%s851 + $0x4] sm:$0xf]
  %v854 = vld [vmem:[%s851 + $0x8] sm:$0xf]
  %v855 = vld [vmem:[%s851 + $0xc] sm:$0xf]
  %v856 = vld [vmem:[%s851 + $0x10] sm:$0xf]
  %v857 = vld [vmem:[%s851 + $0x14] sm:$0xf]
  %v858 = vld [vmem:[%s851 + $0x18] sm:$0xf]
  %v859 = vld [vmem:[%s851 + $0x1c] sm:$0xf]
  %v860 = vld [vmem:[%s851 + $0x20] sm:$0xf]
  %v861 = vld [vmem:[%s851 + $0x24] sm:$0xf]
  %v862 = vld [vmem:[%s851 + $0x28] sm:$0xf]
  %v863 = vld [vmem:[%s851 + $0x2c] sm:$0xf]
  %v864 = vld [vmem:[%s851 + $0x30] sm:$0xf]
  %v865 = vld [vmem:[%s851 + $0x34] sm:$0xf]
  %v866 = vld [vmem:[%s851 + $0x38] sm:$0xf]
  %v867 = vld [vmem:[%s851 + $0x3c] sm:$0xf]
  %v868 = vld [vmem:[%s851 + $0x40] sm:$0xf]
  %v869 = vld [vmem:[%s851 + $0x44] sm:$0xf]
  %v870 = vld [vmem:[%s851 + $0x48] sm:$0xf]
  %v871 = vld [vmem:[%s851 + $0x4c] sm:$0xf]
  %v872 = vld [vmem:[%s851 + $0x50] sm:$0xf]
  %v873 = vld [vmem:[%s851 + $0x54] sm:$0xf]
  %v874 = vld [vmem:[%s851 + $0x58] sm:$0xf]
  %v875 = vld [vmem:[%s851 + $0x5c] sm:$0xf]
  %v876 = vld [vmem:[%s851 + $0x60] sm:$0xf]
  %v877 = vld [vmem:[%s851 + $0x64] sm:$0xf]
  %v878 = vld [vmem:[%s851 + $0x68] sm:$0xf]
  %v879 = vld [vmem:[%s851 + $0x6c] sm:$0xf]
  %v880 = vld [vmem:[%s851 + $0x70] sm:$0xf]
  %v881 = vld [vmem:[%s851 + $0x74] sm:$0xf]
  %v882 = vld [vmem:[%s851 + $0x78] sm:$0xf]
  %v883 = vld [vmem:[%s851 + $0x7c] sm:$0xf]
  %v885 = vshrl.u32 %v829, 16
  %v887 = vshll.u32 %v829, 16
  %v889 = vrot.slane %v887, 1
  %v890 = vor.u32 %v885, %v889
  %v892 = vshll.u32 %v831, 16
  %v894 = vrot.slane %v892, 1
  %v895 = vsel %vm158, %v890, %v894
  %v897 = vshrl.u32 %v830, 16
  %v899 = vshll.u32 %v830, 16
  %v901 = vrot.slane %v899, 1
  %v902 = vor.u32 %v897, %v901
  %v904 = vshll.u32 %v832, 16
  %v906 = vrot.slane %v904, 1
  %v907 = vsel %vm158, %v902, %v906
  %v908 = vshrl.u32 %v831, 16
  %v910 = vor.u32 %v908, %v894
  %v912 = vshll.u32 %v833, 16
  %v914 = vrot.slane %v912, 1
  %v915 = vsel %vm158, %v910, %v914
  %v916 = vshrl.u32 %v832, 16
  %v918 = vor.u32 %v916, %v906
  %v920 = vshll.u32 %v834, 16
  %v922 = vrot.slane %v920, 1
  %v923 = vsel %vm158, %v918, %v922
  %v924 = vshrl.u32 %v833, 16
  %v926 = vor.u32 %v924, %v914
  %v928 = vshll.u32 %v835, 16
  %v930 = vrot.slane %v928, 1
  %v931 = vsel %vm158, %v926, %v930
  %v932 = vshrl.u32 %v834, 16
  %v934 = vor.u32 %v932, %v922
  %v936 = vshll.u32 %v836, 16
  %v938 = vrot.slane %v936, 1
  %v939 = vsel %vm158, %v934, %v938
  %v940 = vshrl.u32 %v835, 16
  %v942 = vor.u32 %v940, %v930
  %v944 = vshll.u32 %v837, 16
  %v946 = vrot.slane %v944, 1
  %v947 = vsel %vm158, %v942, %v946
  %v948 = vshrl.u32 %v836, 16
  %v950 = vor.u32 %v948, %v938
  %v952 = vshll.u32 %v838, 16
  %v954 = vrot.slane %v952, 1
  %v955 = vsel %vm158, %v950, %v954
  %v956 = vshrl.u32 %v837, 16
  %v958 = vor.u32 %v956, %v946
  %v960 = vshll.u32 %v839, 16
  %v962 = vrot.slane %v960, 1
  %v963 = vsel %vm158, %v958, %v962
  %v964 = vshrl.u32 %v838, 16
  %v966 = vor.u32 %v964, %v954
  %v968 = vshll.u32 %v840, 16
  %v970 = vrot.slane %v968, 1
  %v971 = vsel %vm158, %v966, %v970
  %v972 = vshrl.u32 %v839, 16
  %v974 = vor.u32 %v972, %v962
  %v976 = vshll.u32 %v841, 16
  %v978 = vrot.slane %v976, 1
  %v979 = vsel %vm158, %v974, %v978
  %v980 = vshrl.u32 %v840, 16
  %v982 = vor.u32 %v980, %v970
  %v984 = vshll.u32 %v842, 16
  %v986 = vrot.slane %v984, 1
  %v987 = vsel %vm158, %v982, %v986
  %v988 = vshrl.u32 %v841, 16
  %v990 = vor.u32 %v988, %v978
  %v992 = vshll.u32 %v843, 16
  %v994 = vrot.slane %v992, 1
  %v995 = vsel %vm158, %v990, %v994
  %v996 = vshrl.u32 %v842, 16
  %v998 = vor.u32 %v996, %v986
  %v1000 = vshll.u32 %v844, 16
  %v1002 = vrot.slane %v1000, 1
  %v1003 = vsel %vm158, %v998, %v1002
  %v1004 = vshrl.u32 %v843, 16
  %v1006 = vor.u32 %v1004, %v994
  %v1008 = vshll.u32 %v845, 16
  %v1010 = vrot.slane %v1008, 1
  %v1011 = vsel %vm158, %v1006, %v1010
  %v1012 = vshrl.u32 %v844, 16
  %v1014 = vor.u32 %v1012, %v1002
  %v1016 = vshll.u32 %v846, 16
  %v1018 = vrot.slane %v1016, 1
  %v1019 = vsel %vm158, %v1014, %v1018
  %v1020 = vshrl.u32 %v845, 16
  %v1022 = vor.u32 %v1020, %v1010
  %v1024 = vshll.u32 %v847, 16
  %v1026 = vrot.slane %v1024, 1
  %v1027 = vsel %vm158, %v1022, %v1026
  %v1028 = vshrl.u32 %v846, 16
  %v1030 = vor.u32 %v1028, %v1018
  %v1032 = vshll.u32 %v848, 16
  %v1034 = vrot.slane %v1032, 1
  %v1035 = vsel %vm158, %v1030, %v1034
  %v1036 = vshrl.u32 %v847, 16
  %v1038 = vor.u32 %v1036, %v1026
  %v1040 = vshll.u32 %v849, 16
  %v1042 = vrot.slane %v1040, 1
  %v1043 = vsel %vm158, %v1038, %v1042
  %v1044 = vshrl.u32 %v848, 16
  %v1046 = vor.u32 %v1044, %v1034
  %v1048 = vshll.u32 %v850, 16
  %v1050 = vrot.slane %v1048, 1
  %v1051 = vsel %vm158, %v1046, %v1050
  %v1052 = vshrl.u32 %v849, 16
  %v1054 = vor.u32 %v1052, %v1042
  %v1055 = vshrl.u32 %v850, 16
  %v1057 = vor.u32 %v1055, %v1050
  %v1112 = vunpack.c.l.b16 %v852
  %v1113 = vunpack.c.l.b16 %v853
  %v1114 = vunpack.c.l.b16 %v854
  %v1115 = vunpack.c.l.b16 %v855
  %v1116 = vunpack.c.l.b16 %v856
  %v1117 = vunpack.c.l.b16 %v857
  %v1118 = vunpack.c.l.b16 %v858
  %v1119 = vunpack.c.l.b16 %v859
  %v1120 = vunpack.c.l.b16 %v860
  %v1121 = vunpack.c.l.b16 %v861
  %v1122 = vunpack.c.l.b16 %v862
  %v1123 = vunpack.c.l.b16 %v863
  %v1124 = vunpack.c.l.b16 %v864
  %v1125 = vunpack.c.l.b16 %v865
  %v1126 = vunpack.c.l.b16 %v866
  %v1127 = vunpack.c.l.b16 %v867
  %v1128 = vunpack.c.l.b16 %v868
  %v1129 = vunpack.c.l.b16 %v869
  %v1130 = vunpack.c.l.b16 %v870
  %v1131 = vunpack.c.l.b16 %v871
  %v1132 = vunpack.c.l.b16 %v872
  %v1133 = vunpack.c.l.b16 %v873
  %v1134 = vunpack.c.l.b16 %v874
  %v1135 = vunpack.c.l.b16 %v875
  %v1136 = vunpack.c.l.b16 %v876
  %v1137 = vunpack.c.l.b16 %v877
  %v1138 = vunpack.c.l.b16 %v878
  %v1139 = vunpack.c.l.b16 %v879
  %v1140 = vunpack.c.l.b16 %v880
  %v1141 = vunpack.c.l.b16 %v881
  %v1142 = vunpack.c.l.b16 %v882
  %v1143 = vunpack.c.l.b16 %v883
  %v1144 = vpack.c.b16 %v1113, %v1112
  %v1145 = vpack.c.b16 %v1115, %v1114
  %v1146 = vpack.c.b16 %v1117, %v1116
  %v1147 = vpack.c.b16 %v1119, %v1118
  %v1148 = vpack.c.b16 %v1121, %v1120
  %v1149 = vpack.c.b16 %v1123, %v1122
  %v1150 = vpack.c.b16 %v1125, %v1124
  %v1151 = vpack.c.b16 %v1127, %v1126
  %v1152 = vpack.c.b16 %v1129, %v1128
  %v1153 = vpack.c.b16 %v1131, %v1130
  %v1154 = vpack.c.b16 %v1133, %v1132
  %v1155 = vpack.c.b16 %v1135, %v1134
  %v1156 = vpack.c.b16 %v1137, %v1136
  %v1157 = vpack.c.b16 %v1139, %v1138
  %v1158 = vpack.c.b16 %v1141, %v1140
  %v1159 = vpack.c.b16 %v1143, %v1142
  %1176 = vmatprep.subr.bf16.mxu0 0
  %1177 = vmatpush1.bf16.msra.mxu0 %v1144
  %1178 = vmatprep.subr.bf16.mxu0 0
  %1179 = vmatpush1.bf16.msra.mxu0 %v1145
  %1180 = vmatprep.subr.bf16.mxu0 0
  %1181 = vmatpush1.bf16.msra.mxu0 %v1146
  %1182 = vmatprep.subr.bf16.mxu0 0
  %1183 = vmatpush1.bf16.msra.mxu0 %v1147
  %1184 = vmatprep.subr.bf16.mxu0 0
  %1185 = vmatpush1.bf16.msra.mxu0 %v1148
  %1186 = vmatprep.subr.bf16.mxu0 0
  %1187 = vmatpush1.bf16.msra.mxu0 %v1149
  %1188 = vmatprep.subr.bf16.mxu0 0
  %1189 = vmatpush1.bf16.msra.mxu0 %v1150
  %1190 = vmatprep.subr.bf16.mxu0 0
  %1191 = vmatpush1.bf16.msra.mxu0 %v1151
  %1192 = vmatprep.subr.bf16.mxu0 0
  %1193 = vmatpush1.bf16.msra.mxu0 %v1152
  %1194 = vmatprep.subr.bf16.mxu0 0
  %1195 = vmatpush1.bf16.msra.mxu0 %v1153
  %1196 = vmatprep.subr.bf16.mxu0 0
  %1197 = vmatpush1.bf16.msra.mxu0 %v1154
  %1198 = vmatprep.subr.bf16.mxu0 0
  %1199 = vmatpush1.bf16.msra.mxu0 %v1155
  %1200 = vmatprep.subr.bf16.mxu0 0
  %1201 = vmatpush1.bf16.msra.mxu0 %v1156
  %1202 = vmatprep.subr.bf16.mxu0 0
  %1203 = vmatpush1.bf16.msra.mxu0 %v1157
  %1204 = vmatprep.subr.bf16.mxu0 0
  %1205 = vmatpush1.bf16.msra.mxu0 %v1158
  %1206 = vmatprep.subr.bf16.mxu0 0
  %1207 = vmatpush1.bf16.msra.mxu0 %v1159
  %1208 = vmatprep.mubr.bf16.mxu0 %v907
  %1209 = vmatmul.mubr.bf16.gmra.mrb[0].mxu0 %v895
  %v1210 = vpop.f32.mrb[0].mxu0
  %v1211 = vadd.f32 0.0, %v1210
  %v1212 = vpop.f32.mrb[0].mxu0
  %v1213 = vpop.f32.mrb[0].mxu0
  %v1214 = vadd.f32 0.0, %v1213
  %v1215 = vpop.f32.mrb[0].mxu0
  %1216 = vmatprep.mubr.bf16.mxu0 %v923
  %1217 = vmatmul.mubr.bf16.gmra.mrb[0].mxu0 %v915
  %v1218 = vpop.f32.mrb[0].mxu0
  %v1219 = vadd.f32 0.0, %v1218
  %v1220 = vpop.f32.mrb[0].mxu0
  %v1221 = vpop.f32.mrb[0].mxu0
  %v1222 = vadd.f32 0.0, %v1221
  %v1223 = vpop.f32.mrb[0].mxu0
  %1224 = vmatprep.mubr.bf16.mxu0 %v939
  %1225 = vmatmul.mubr.bf16.gmra.mrb[0].mxu0 %v931
  %v1226 = vpop.f32.mrb[0].mxu0
  %v1227 = vadd.f32 0.0, %v1226
  %v1228 = vpop.f32.mrb[0].mxu0
  %v1229 = vpop.f32.mrb[0].mxu0
  %v1230 = vadd.f32 0.0, %v1229
  %v1231 = vpop.f32.mrb[0].mxu0
  %1232 = vmatprep.mubr.bf16.mxu0 %v955
  %1233 = vmatmul.mubr.bf16.gmra.mrb[0].mxu0 %v947
  %v1234 = vpop.f32.mrb[0].mxu0
  %v1235 = vadd.f32 0.0, %v1234
  %v1236 = vpop.f32.mrb[0].mxu0
  %v1237 = vpop.f32.mrb[0].mxu0
  %v1238 = vadd.f32 0.0, %v1237
  %v1239 = vpop.f32.mrb[0].mxu0
  %1240 = vmatprep.mubr.bf16.mxu0 %v971
  %1241 = vmatmul.mubr.bf16.gmra.mrb[0].mxu0 %v963
  %v1242 = vpop.f32.mrb[0].mxu0
  %v1243 = vadd.f32 0.0, %v1242
  %v1244 = vpop.f32.mrb[0].mxu0
  %v1245 = vpop.f32.mrb[0].mxu0
  %v1246 = vadd.f32 0.0, %v1245
  %v1247 = vpop.f32.mrb[0].mxu0
  %1248 = vmatprep.mubr.bf16.mxu0 %v987
  %1249 = vmatmul.mubr.bf16.gmra.mrb[0].mxu0 %v979
  %v1250 = vpop.f32.mrb[0].mxu0
  %v1251 = vadd.f32 0.0, %v1250
  %v1252 = vpop.f32.mrb[0].mxu0
  %v1253 = vpop.f32.mrb[0].mxu0
  %v1254 = vadd.f32 0.0, %v1253
  %v1255 = vpop.f32.mrb[0].mxu0
  %1256 = vmatprep.mubr.bf16.mxu0 %v1003
  %1257 = vmatmul.mubr.bf16.gmra.mrb[0].mxu0 %v995
  %v1258 = vpop.f32.mrb[0].mxu0
  %v1259 = vadd.f32 0.0, %v1258
  %v1260 = vpop.f32.mrb[0].mxu0
  %v1261 = vpop.f32.mrb[0].mxu0
  %v1262 = vadd.f32 0.0, %v1261
  %v1263 = vpop.f32.mrb[0].mxu0
  %1264 = vmatprep.mubr.bf16.mxu0 %v1019
  %1265 = vmatmul.mubr.bf16.gmra.mrb[0].mxu0 %v1011
  %v1266 = vpop.f32.mrb[0].mxu0
  %v1267 = vadd.f32 0.0, %v1266
  %v1268 = vpop.f32.mrb[0].mxu0
  %v1269 = vpop.f32.mrb[0].mxu0
  %v1270 = vadd.f32 0.0, %v1269
  %v1271 = vpop.f32.mrb[0].mxu0
  %1272 = vmatprep.mubr.bf16.mxu0 %v1035
  %1273 = vmatmul.mubr.bf16.gmra.mrb[0].mxu0 %v1027
  %v1274 = vpop.f32.mrb[0].mxu0
  %v1275 = vadd.f32 0.0, %v1274
  %v1276 = vpop.f32.mrb[0].mxu0
  %v1277 = vpop.f32.mrb[0].mxu0
  %v1278 = vadd.f32 0.0, %v1277
  %v1279 = vpop.f32.mrb[0].mxu0
  %1280 = vmatprep.mubr.bf16.mxu0 %v1051
  %1281 = vmatmul.mubr.bf16.gmra.mrb[0].mxu0 %v1043
  %v1282 = vpop.f32.mrb[0].mxu0
  %v1283 = vadd.f32 0.0, %v1282
  %v1284 = vpop.f32.mrb[0].mxu0
  %v1285 = vpop.f32.mrb[0].mxu0
  %v1286 = vadd.f32 0.0, %v1285
  %v1287 = vpop.f32.mrb[0].mxu0
  %1288 = vmatprep.mubr.bf16.mxu0 %v1057
  %1289 = vmatmul.mubr.bf16.gmra.mrb[0].mxu0 %v1054
  %v1290 = vpop.f32.mrb[0].mxu0
  %v1291 = vadd.f32 0.0, %v1290
  %v1292 = vpop.f32.mrb[0].mxu0
  %v1293 = vpop.f32.mrb[0].mxu0
  %v1294 = vpop.f32.mrb[0].mxu0
  %1295 = vdwg.mxu0
  %v1296 = vadd.f32 %v702, %v1211
  %v1297 = vadd.f32 %v705, %v1214
  %v1298 = vadd.f32 %v710, %v1219
  %v1299 = vadd.f32 %v713, %v1222
  %v1300 = vadd.f32 %v718, %v1227
  %v1301 = vadd.f32 %v721, %v1230
  %v1302 = vadd.f32 %v726, %v1235
  %v1303 = vadd.f32 %v729, %v1238
  %v1304 = vadd.f32 %v734, %v1243
  %v1305 = vadd.f32 %v737, %v1246
  %v1306 = vadd.f32 %v742, %v1251
  %v1307 = vadd.f32 %v745, %v1254
  %v1308 = vadd.f32 %v750, %v1259
  %v1309 = vadd.f32 %v753, %v1262
  %v1310 = vadd.f32 %v758, %v1267
  %v1311 = vadd.f32 %v761, %v1270
  %v1312 = vadd.f32 %v766, %v1275
  %v1313 = vadd.f32 %v769, %v1278
  %v1314 = vadd.f32 %v774, %v1283
  %v1315 = vadd.f32 %v777, %v1286
  %v1316 = vadd.f32 %v782, %v1291
  %v1317 = vld [vmem:[%s0 + $0x10] sm:$0xfc]
  %v1318 = vld [vmem:[%s0 + $0x18] sm:$0xfc]
  %v1319 = vld [vmem:[%s0 + $0x150] sm:$0xf]
  %v1320 = vld [vmem:[%s0 + $0x158] sm:$0xf]
  %v1321 = vpack.c.bf16 %v789, %v1317
  %v1322 = vpack.c.bf16 %v790, %v1318
  %v1323 = vpack.c.bf16 %v1319, %v1319
  %v1324 = vpack.c.bf16 %v1320, %v1320
  %s1325 = scalar_lea.vmem %s1, 384
  %v1326 = vld [vmem:[%s1325] sm:$0xf]
  %v1327 = vld [vmem:[%s1325 + $0x4] sm:$0xf]
  %v1328 = vld [vmem:[%s1325 + $0x8] sm:$0xf]
  %v1329 = vld [vmem:[%s1325 + $0xc] sm:$0xf]
  %v1330 = vld [vmem:[%s1325 + $0x10] sm:$0xf]
  %v1331 = vld [vmem:[%s1325 + $0x14] sm:$0xf]
  %v1332 = vld [vmem:[%s1325 + $0x18] sm:$0xf]
  %v1333 = vld [vmem:[%s1325 + $0x1c] sm:$0xf]
  %v1334 = vld [vmem:[%s1325 + $0x20] sm:$0xf]
  %v1335 = vld [vmem:[%s1325 + $0x24] sm:$0xf]
  %v1336 = vld [vmem:[%s1325 + $0x28] sm:$0xf]
  %v1337 = vld [vmem:[%s1325 + $0x2c] sm:$0xf]
  %v1338 = vld [vmem:[%s1325 + $0x30] sm:$0xf]
  %v1339 = vld [vmem:[%s1325 + $0x34] sm:$0xf]
  %v1340 = vld [vmem:[%s1325 + $0x38] sm:$0xf]
  %v1341 = vld [vmem:[%s1325 + $0x3c] sm:$0xf]
  %v1342 = vld [vmem:[%s1325 + $0x40] sm:$0xf]
  %v1343 = vld [vmem:[%s1325 + $0x44] sm:$0xf]
  %v1344 = vld [vmem:[%s1325 + $0x48] sm:$0xf]
  %v1345 = vld [vmem:[%s1325 + $0x4c] sm:$0xf]
  %v1346 = vld [vmem:[%s1325 + $0x50] sm:$0xf]
  %v1347 = vld [vmem:[%s1325 + $0x54] sm:$0xf]
  %v1348 = vld [vmem:[%s1325 + $0x58] sm:$0xf]
  %v1349 = vld [vmem:[%s1325 + $0x5c] sm:$0xf]
  %v1350 = vld [vmem:[%s1325 + $0x60] sm:$0xf]
  %v1351 = vld [vmem:[%s1325 + $0x64] sm:$0xf]
  %v1352 = vld [vmem:[%s1325 + $0x68] sm:$0xf]
  %v1353 = vld [vmem:[%s1325 + $0x6c] sm:$0xf]
  %v1354 = vld [vmem:[%s1325 + $0x70] sm:$0xf]
  %v1355 = vld [vmem:[%s1325 + $0x74] sm:$0xf]
  %v1356 = vld [vmem:[%s1325 + $0x78] sm:$0xf]
  %v1357 = vld [vmem:[%s1325 + $0x7c] sm:$0xf]
  %vm1380 = vcmask 1046528
  %v1381 = vrot.slane %v1321, 1
  %v1382 = vrot.slane %v831, 1
  %v1383 = vsel %vm1380, %v1381, %v1382
  %v1384 = vrot.slane %v1322, 1
  %v1385 = vrot.slane %v832, 1
  %v1386 = vsel %vm1380, %v1384, %v1385
  %v1387 = vrot.slane %v833, 1
  %v1388 = vsel %vm1380, %v1382, %v1387
  %v1389 = vrot.slane %v834, 1
  %v1390 = vsel %vm1380, %v1385, %v1389
  %v1391 = vrot.slane %v835, 1
  %v1392 = vsel %vm1380, %v1387, %v1391
  %v1393 = vrot.slane %v836, 1
  %v1394 = vsel %vm1380, %v1389, %v1393
  %v1395 = vrot.slane %v837, 1
  %v1396 = vsel %vm1380, %v1391, %v1395
  %v1397 = vrot.slane %v838, 1
  %v1398 = vsel %vm1380, %v1393, %v1397
  %v1399 = vrot.slane %v839, 1
  %v1400 = vsel %vm1380, %v1395, %v1399
  %v1401 = vrot.slane %v840, 1
  %v1402 = vsel %vm1380, %v1397, %v1401
  %v1403 = vrot.slane %v841, 1
  %v1404 = vsel %vm1380, %v1399, %v1403
  %v1405 = vrot.slane %v842, 1
  %v1406 = vsel %vm1380, %v1401, %v1405
  %v1407 = vrot.slane %v843, 1
  %v1408 = vsel %vm1380, %v1403, %v1407
  %v1409 = vrot.slane %v844, 1
  %v1410 = vsel %vm1380, %v1405, %v1409
  %v1411 = vrot.slane %v845, 1
  %v1412 = vsel %vm1380, %v1407, %v1411
  %v1413 = vrot.slane %v846, 1
  %v1414 = vsel %vm1380, %v1409, %v1413
  %v1415 = vrot.slane %v847, 1
  %v1416 = vsel %vm1380, %v1411, %v1415
  %v1417 = vrot.slane %v848, 1
  %v1418 = vsel %vm1380, %v1413, %v1417
  %v1419 = vrot.slane %v1323, 1
  %v1420 = vsel %vm1380, %v1415, %v1419
  %v1421 = vrot.slane %v1324, 1
  %v1422 = vsel %vm1380, %v1417, %v1421
  %v1477 = vunpack.c.l.b16 %v1326
  %v1478 = vunpack.c.l.b16 %v1327
  %v1479 = vunpack.c.l.b16 %v1328
  %v1480 = vunpack.c.l.b16 %v1329
  %v1481 = vunpack.c.l.b16 %v1330
  %v1482 = vunpack.c.l.b16 %v1331
  %v1483 = vunpack.c.l.b16 %v1332
  %v1484 = vunpack.c.l.b16 %v1333
  %v1485 = vunpack.c.l.b16 %v1334
  %v1486 = vunpack.c.l.b16 %v1335
  %v1487 = vunpack.c.l.b16 %v1336
  %v1488 = vunpack.c.l.b16 %v1337
  %v1489 = vunpack.c.l.b16 %v1338
  %v1490 = vunpack.c.l.b16 %v1339
  %v1491 = vunpack.c.l.b16 %v1340
  %v1492 = vunpack.c.l.b16 %v1341
  %v1493 = vunpack.c.l.b16 %v1342
  %v1494 = vunpack.c.l.b16 %v1343
  %v1495 = vunpack.c.l.b16 %v1344
  %v1496 = vunpack.c.l.b16 %v1345
  %v1497 = vunpack.c.l.b16 %v1346
  %v1498 = vunpack.c.l.b16 %v1347
  %v1499 = vunpack.c.l.b16 %v1348
  %v1500 = vunpack.c.l.b16 %v1349
  %v1501 = vunpack.c.l.b16 %v1350
  %v1502 = vunpack.c.l.b16 %v1351
  %v1503 = vunpack.c.l.b16 %v1352
  %v1504 = vunpack.c.l.b16 %v1353
  %v1505 = vunpack.c.l.b16 %v1354
  %v1506 = vunpack.c.l.b16 %v1355
  %v1507 = vunpack.c.l.b16 %v1356
  %v1508 = vunpack.c.l.b16 %v1357
  %v1509 = vpack.c.b16 %v1478, %v1477
  %v1510 = vpack.c.b16 %v1480, %v1479
  %v1511 = vpack.c.b16 %v1482, %v1481
  %v1512 = vpack.c.b16 %v1484, %v1483
  %v1513 = vpack.c.b16 %v1486, %v1485
  %v1514 = vpack.c.b16 %v1488, %v1487
  %v1515 = vpack.c.b16 %v1490, %v1489
  %v1516 = vpack.c.b16 %v1492, %v1491
  %v1517 = vpack.c.b16 %v1494, %v1493
  %v1518 = vpack.c.b16 %v1496, %v1495
  %v1519 = vpack.c.b16 %v1498, %v1497
  %v1520 = vpack.c.b16 %v1500, %v1499
  %v1521 = vpack.c.b16 %v1502, %v1501
  %v1522 = vpack.c.b16 %v1504, %v1503
  %v1523 = vpack.c.b16 %v1506, %v1505
  %v1524 = vpack.c.b16 %v1508, %v1507
  %1541 = vmatprep.subr.bf16.mxu0 0
  %1542 = vmatpush1.bf16.msra.mxu0 %v1509
  %1543 = vmatprep.subr.bf16.mxu0 0
  %1544 = vmatpush1.bf16.msra.mxu0 %v1510
  %1545 = vmatprep.subr.bf16.mxu0 0
  %1546 = vmatpush1.bf16.msra.mxu0 %v1511
  %1547 = vmatprep.subr.bf16.mxu0 0
  %1548 = vmatpush1.bf16.msra.mxu0 %v1512
  %1549 = vmatprep.subr.bf16.mxu0 0
  %1550 = vmatpush1.bf16.msra.mxu0 %v1513
  %1551 = vmatprep.subr.bf16.mxu0 0
  %1552 = vmatpush1.bf16.msra.mxu0 %v1514
  %1553 = vmatprep.subr.bf16.mxu0 0
  %1554 = vmatpush1.bf16.msra.mxu0 %v1515
  %1555 = vmatprep.subr.bf16.mxu0 0
  %1556 = vmatpush1.bf16.msra.mxu0 %v1516
  %1557 = vmatprep.subr.bf16.mxu0 0
  %1558 = vmatpush1.bf16.msra.mxu0 %v1517
  %1559 = vmatprep.subr.bf16.mxu0 0
  %1560 = vmatpush1.bf16.msra.mxu0 %v1518
  %1561 = vmatprep.subr.bf16.mxu0 0
  %1562 = vmatpush1.bf16.msra.mxu0 %v1519
  %1563 = vmatprep.subr.bf16.mxu0 0
  %1564 = vmatpush1.bf16.msra.mxu0 %v1520
  %1565 = vmatprep.subr.bf16.mxu0 0
  %1566 = vmatpush1.bf16.msra.mxu0 %v1521
  %1567 = vmatprep.subr.bf16.mxu0 0
  %1568 = vmatpush1.bf16.msra.mxu0 %v1522
  %1569 = vmatprep.subr.bf16.mxu0 0
  %1570 = vmatpush1.bf16.msra.mxu0 %v1523
  %1571 = vmatprep.subr.bf16.mxu0 0
  %1572 = vmatpush1.bf16.msra.mxu0 %v1524
  %1573 = vmatprep.mubr.bf16.mxu0 %v1386
  %1574 = vmatmul.mubr.bf16.gmra.mrb[0].mxu0 %v1383
  %v1575 = vpop.f32.mrb[0].mxu0
  %v1576 = vadd.f32 0.0, %v1575
  %v1577 = vpop.f32.mrb[0].mxu0
  %v1578 = vpop.f32.mrb[0].mxu0
  %v1579 = vadd.f32 0.0, %v1578
  %v1580 = vpop.f32.mrb[0].mxu0
  %1581 = vmatprep.mubr.bf16.mxu0 %v1390
  %1582 = vmatmul.mubr.bf16.gmra.mrb[0].mxu0 %v1388
  %v1583 = vpop.f32.mrb[0].mxu0
  %v1584 = vadd.f32 0.0, %v1583
  %v1585 = vpop.f32.mrb[0].mxu0
  %v1586 = vpop.f32.mrb[0].mxu0
  %v1587 = vadd.f32 0.0, %v1586
  %v1588 = vpop.f32.mrb[0].mxu0
  %1589 = vmatprep.mubr.bf16.mxu0 %v1394
  %1590 = vmatmul.mubr.bf16.gmra.mrb[0].mxu0 %v1392
  %v1591 = vpop.f32.mrb[0].mxu0
  %v1592 = vadd.f32 0.0, %v1591
  %v1593 = vpop.f32.mrb[0].mxu0
  %v1594 = vpop.f32.mrb[0].mxu0
  %v1595 = vadd.f32 0.0, %v1594
  %v1596 = vpop.f32.mrb[0].mxu0
  %1597 = vmatprep.mubr.bf16.mxu0 %v1398
  %1598 = vmatmul.mubr.bf16.gmra.mrb[0].mxu0 %v1396
  %v1599 = vpop.f32.mrb[0].mxu0
  %v1600 = vadd.f32 0.0, %v1599
  %v1601 = vpop.f32.mrb[0].mxu0
  %v1602 = vpop.f32.mrb[0].mxu0
  %v1603 = vadd.f32 0.0, %v1602
  %v1604 = vpop.f32.mrb[0].mxu0
  %1605 = vmatprep.mubr.bf16.mxu0 %v1402
  %1606 = vmatmul.mubr.bf16.gmra.mrb[0].mxu0 %v1400
  %v1607 = vpop.f32.mrb[0].mxu0
  %v1608 = vadd.f32 0.0, %v1607
  %v1609 = vpop.f32.mrb[0].mxu0
  %v1610 = vpop.f32.mrb[0].mxu0
  %v1611 = vadd.f32 0.0, %v1610
  %v1612 = vpop.f32.mrb[0].mxu0
  %1613 = vmatprep.mubr.bf16.mxu0 %v1406
  %1614 = vmatmul.mubr.bf16.gmra.mrb[0].mxu0 %v1404
  %v1615 = vpop.f32.mrb[0].mxu0
  %v1616 = vadd.f32 0.0, %v1615
  %v1617 = vpop.f32.mrb[0].mxu0
  %v1618 = vpop.f32.mrb[0].mxu0
  %v1619 = vadd.f32 0.0, %v1618
  %v1620 = vpop.f32.mrb[0].mxu0
  %1621 = vmatprep.mubr.bf16.mxu0 %v1410
  %1622 = vmatmul.mubr.bf16.gmra.mrb[0].mxu0 %v1408
  %v1623 = vpop.f32.mrb[0].mxu0
  %v1624 = vadd.f32 0.0, %v1623
  %v1625 = vpop.f32.mrb[0].mxu0
  %v1626 = vpop.f32.mrb[0].mxu0
  %v1627 = vadd.f32 0.0, %v1626
  %v1628 = vpop.f32.mrb[0].mxu0
  %1629 = vmatprep.mubr.bf16.mxu0 %v1414
  %1630 = vmatmul.mubr.bf16.gmra.mrb[0].mxu0 %v1412
  %v1631 = vpop.f32.mrb[0].mxu0
  %v1632 = vadd.f32 0.0, %v1631
  %v1633 = vpop.f32.mrb[0].mxu0
  %v1634 = vpop.f32.mrb[0].mxu0
  %v1635 = vadd.f32 0.0, %v1634
  %v1636 = vpop.f32.mrb[0].mxu0
  %1637 = vmatprep.mubr.bf16.mxu0 %v1418
  %1638 = vmatmul.mubr.bf16.gmra.mrb[0].mxu0 %v1416
  %v1639 = vpop.f32.mrb[0].mxu0
  %v1640 = vadd.f32 0.0, %v1639
  %v1641 = vpop.f32.mrb[0].mxu0
  %v1642 = vpop.f32.mrb[0].mxu0
  %v1643 = vadd.f32 0.0, %v1642
  %v1644 = vpop.f32.mrb[0].mxu0
  %1645 = vmatprep.mubr.bf16.mxu0 %v1422
  %1646 = vmatmul.mubr.bf16.gmra.mrb[0].mxu0 %v1420
  %v1647 = vpop.f32.mrb[0].mxu0
  %v1648 = vadd.f32 0.0, %v1647
  %v1649 = vpop.f32.mrb[0].mxu0
  %v1650 = vpop.f32.mrb[0].mxu0
  %v1651 = vadd.f32 0.0, %v1650
  %v1652 = vpop.f32.mrb[0].mxu0
  %1653 = vmatprep.mubr.bf16.mxu0 %v1421
  %1654 = vmatmul.mubr.bf16.gmra.mrb[0].mxu0 %v1419
  %v1655 = vpop.f32.mrb[0].mxu0
  %v1656 = vadd.f32 0.0, %v1655
  %v1657 = vpop.f32.mrb[0].mxu0
  %v1658 = vpop.f32.mrb[0].mxu0
  %v1659 = vpop.f32.mrb[0].mxu0
  %1660 = vdwg.mxu0
  %v1661 = vadd.f32 %v1296, %v1576
  %v1662 = vadd.f32 %v1297, %v1579
  %v1663 = vadd.f32 %v1298, %v1584
  %v1664 = vadd.f32 %v1299, %v1587
  %v1665 = vadd.f32 %v1300, %v1592
  %v1666 = vadd.f32 %v1301, %v1595
  %v1667 = vadd.f32 %v1302, %v1600
  %v1668 = vadd.f32 %v1303, %v1603
  %v1669 = vadd.f32 %v1304, %v1608
  %v1670 = vadd.f32 %v1305, %v1611
  %v1671 = vadd.f32 %v1306, %v1616
  %v1672 = vadd.f32 %v1307, %v1619
  %v1673 = vadd.f32 %v1308, %v1624
  %v1674 = vadd.f32 %v1309, %v1627
  %v1675 = vadd.f32 %v1310, %v1632
  %v1676 = vadd.f32 %v1311, %v1635
  %v1677 = vadd.f32 %v1312, %v1640
  %v1678 = vadd.f32 %v1313, %v1643
  %v1679 = vadd.f32 %v1314, %v1648
  %v1680 = vadd.f32 %v1315, %v1651
  %v1681 = vadd.f32 %v1316, %v1656
  %v1682 = vld [vmem:[%s2] sm:$0xff]
  %v1683 = vld [vmem:[%s2 + $0x8] sm:$0xff]
  %v1684 = vld [vmem:[%s2 + $0x10] sm:$0xff]
  %v1685 = vld [vmem:[%s2 + $0x18] sm:$0xff]
  %v1686 = vld [vmem:[%s2 + $0x20] sm:$0xff]
  %v1687 = vld [vmem:[%s2 + $0x28] sm:$0xff]
  %v1688 = vld [vmem:[%s2 + $0x30] sm:$0xff]
  %v1689 = vld [vmem:[%s2 + $0x38] sm:$0xff]
  %v1690 = vld [vmem:[%s2 + $0x40] sm:$0xff]
  %v1691 = vld [vmem:[%s2 + $0x48] sm:$0xff]
  %v1692 = vld [vmem:[%s2 + $0x50] sm:$0xff]
  %v1693 = vld [vmem:[%s2 + $0x58] sm:$0xff]
  %v1694 = vld [vmem:[%s2 + $0x60] sm:$0xff]
  %v1695 = vld [vmem:[%s2 + $0x68] sm:$0xff]
  %v1696 = vld [vmem:[%s2 + $0x70] sm:$0xff]
  %v1697 = vld [vmem:[%s2 + $0x78] sm:$0xff]
  %v1698 = vld [vmem:[%s2 + $0x80] sm:$0xff]
  %v1699 = vld [vmem:[%s2 + $0x88] sm:$0xff]
  %v1700 = vld [vmem:[%s2 + $0x90] sm:$0xff]
  %v1701 = vld [vmem:[%s2 + $0x98] sm:$0xff]
  %v1702 = vld [vmem:[%s2 + $0xa0] sm:$0x3]
  %v1703 = vld [vmem:[%s3] sm:$0x1]
  %v1704 = vld [vmem:[%s4] sm:$0x1]
  %1706 = vset.pattern.permute.xlu0 0
  %1707 = vperm.xlu0 %1706, %v1682
  %v1708 = vpop.permute.xlu0 %1707
  %1711 = vset.pattern.permute.xlu0 0
  %1712 = vperm.xlu0 %1711, %v1683
  %v1713 = vpop.permute.xlu0 %1712
  %1716 = vset.pattern.permute.xlu0 0
  %1717 = vperm.xlu0 %1716, %v1684
  %v1718 = vpop.permute.xlu0 %1717
  %1721 = vset.pattern.permute.xlu0 0
  %1722 = vperm.xlu0 %1721, %v1685
  %v1723 = vpop.permute.xlu0 %1722
  %1726 = vset.pattern.permute.xlu0 0
  %1727 = vperm.xlu0 %1726, %v1686
  %v1728 = vpop.permute.xlu0 %1727
  %1731 = vset.pattern.permute.xlu0 0
  %1732 = vperm.xlu0 %1731, %v1687
  %v1733 = vpop.permute.xlu0 %1732
  %1736 = vset.pattern.permute.xlu0 0
  %1737 = vperm.xlu0 %1736, %v1688
  %v1738 = vpop.permute.xlu0 %1737
  %1741 = vset.pattern.permute.xlu0 0
  %1742 = vperm.xlu0 %1741, %v1689
  %v1743 = vpop.permute.xlu0 %1742
  %1746 = vset.pattern.permute.xlu0 0
  %1747 = vperm.xlu0 %1746, %v1690
  %v1748 = vpop.permute.xlu0 %1747
  %1751 = vset.pattern.permute.xlu0 0
  %1752 = vperm.xlu0 %1751, %v1691
  %v1753 = vpop.permute.xlu0 %1752
  %1756 = vset.pattern.permute.xlu0 0
  %1757 = vperm.xlu0 %1756, %v1692
  %v1758 = vpop.permute.xlu0 %1757
  %1761 = vset.pattern.permute.xlu0 0
  %1762 = vperm.xlu0 %1761, %v1693
  %v1763 = vpop.permute.xlu0 %1762
  %1766 = vset.pattern.permute.xlu0 0
  %1767 = vperm.xlu0 %1766, %v1694
  %v1768 = vpop.permute.xlu0 %1767
  %1771 = vset.pattern.permute.xlu0 0
  %1772 = vperm.xlu0 %1771, %v1695
  %v1773 = vpop.permute.xlu0 %1772
  %1776 = vset.pattern.permute.xlu0 0
  %1777 = vperm.xlu0 %1776, %v1696
  %v1778 = vpop.permute.xlu0 %1777
  %1781 = vset.pattern.permute.xlu0 0
  %1782 = vperm.xlu0 %1781, %v1697
  %v1783 = vpop.permute.xlu0 %1782
  %1786 = vset.pattern.permute.xlu0 0
  %1787 = vperm.xlu0 %1786, %v1698
  %v1788 = vpop.permute.xlu0 %1787
  %1791 = vset.pattern.permute.xlu0 0
  %1792 = vperm.xlu0 %1791, %v1699
  %v1793 = vpop.permute.xlu0 %1792
  %1796 = vset.pattern.permute.xlu0 0
  %1797 = vperm.xlu0 %1796, %v1700
  %v1798 = vpop.permute.xlu0 %1797
  %1801 = vset.pattern.permute.xlu0 0
  %1802 = vperm.xlu0 %1801, %v1701
  %v1803 = vpop.permute.xlu0 %1802
  %1806 = vset.pattern.permute.xlu0 0
  %1807 = vperm.xlu0 %1806, %v1702
  %v1808 = vpop.permute.xlu0 %1807
  %v1810 = vmul.f32 %v1661, %v1708
  %v1811 = vmul.f32 %v1662, %v1713
  %v1812 = vmul.f32 %v1663, %v1718
  %v1813 = vmul.f32 %v1664, %v1723
  %v1814 = vmul.f32 %v1665, %v1728
  %v1815 = vmul.f32 %v1666, %v1733
  %v1816 = vmul.f32 %v1667, %v1738
  %v1817 = vmul.f32 %v1668, %v1743
  %v1818 = vmul.f32 %v1669, %v1748
  %v1819 = vmul.f32 %v1670, %v1753
  %v1820 = vmul.f32 %v1671, %v1758
  %v1821 = vmul.f32 %v1672, %v1763
  %v1822 = vmul.f32 %v1673, %v1768
  %v1823 = vmul.f32 %v1674, %v1773
  %v1824 = vmul.f32 %v1675, %v1778
  %v1825 = vmul.f32 %v1676, %v1783
  %v1826 = vmul.f32 %v1677, %v1788
  %v1827 = vmul.f32 %v1678, %v1793
  %v1828 = vmul.f32 %v1679, %v1798
  %v1829 = vmul.f32 %v1680, %v1803
  %v1830 = vmul.f32 %v1681, %v1808
  %v1831 = vadd.f32 %v1810, %v1811
  %v1832 = vadd.f32 %v1831, %v1812
  %v1833 = vadd.f32 %v1832, %v1813
  %v1834 = vadd.f32 %v1833, %v1814
  %v1835 = vadd.f32 %v1834, %v1815
  %v1836 = vadd.f32 %v1835, %v1816
  %v1837 = vadd.f32 %v1836, %v1817
  %v1838 = vadd.f32 %v1837, %v1818
  %v1839 = vadd.f32 %v1838, %v1819
  %v1840 = vadd.f32 %v1839, %v1820
  %v1841 = vadd.f32 %v1840, %v1821
  %v1842 = vadd.f32 %v1841, %v1822
  %v1843 = vadd.f32 %v1842, %v1823
  %v1844 = vadd.f32 %v1843, %v1824
  %v1845 = vadd.f32 %v1844, %v1825
  %v1846 = vadd.f32 %v1845, %v1826
  %v1847 = vadd.f32 %v1846, %v1827
  %v1848 = vadd.f32 %v1847, %v1828
  %v1849 = vadd.f32 %v1848, %v1829
  %vm1850 = vcmask 1041408
  %v1851 = vsel %vm1850, %v1830, 0.0
  %v1852 = vadd.f32 %v1849, %v1851
  %v1853 = vrot.slane %v1852, 4
  %v1854 = vadd.f32 %v1852, %v1853
  %v1855 = vrot.slane %v1854, 2
  %v1856 = vadd.f32 %v1854, %v1855
  %v1857 = vrot.slane %v1856, 1
  %v1858 = vadd.f32 %v1856, %v1857
  %v1859 = vmul.f32 %v1810, %v1661
  %v1860 = vmul.f32 %v1811, %v1662
  %v1861 = vmul.f32 %v1812, %v1663
  %v1862 = vmul.f32 %v1813, %v1664
  %v1863 = vmul.f32 %v1814, %v1665
  %v1864 = vmul.f32 %v1815, %v1666
  %v1865 = vmul.f32 %v1816, %v1667
  %v1866 = vmul.f32 %v1817, %v1668
  %v1867 = vmul.f32 %v1818, %v1669
  %v1868 = vmul.f32 %v1819, %v1670
  %v1869 = vmul.f32 %v1820, %v1671
  %v1870 = vmul.f32 %v1821, %v1672
  %v1871 = vmul.f32 %v1822, %v1673
  %v1872 = vmul.f32 %v1823, %v1674
  %v1873 = vmul.f32 %v1824, %v1675
  %v1874 = vmul.f32 %v1825, %v1676
  %v1875 = vmul.f32 %v1826, %v1677
  %v1876 = vmul.f32 %v1827, %v1678
  %v1877 = vmul.f32 %v1828, %v1679
  %v1878 = vmul.f32 %v1829, %v1680
  %v1879 = vmul.f32 %v1830, %v1681
  %v1880 = vadd.f32 %v1859, %v1860
  %v1881 = vadd.f32 %v1880, %v1861
  %v1882 = vadd.f32 %v1881, %v1862
  %v1883 = vadd.f32 %v1882, %v1863
  %v1884 = vadd.f32 %v1883, %v1864
  %v1885 = vadd.f32 %v1884, %v1865
  %v1886 = vadd.f32 %v1885, %v1866
  %v1887 = vadd.f32 %v1886, %v1867
  %v1888 = vadd.f32 %v1887, %v1868
  %v1889 = vadd.f32 %v1888, %v1869
  %v1890 = vadd.f32 %v1889, %v1870
  %v1891 = vadd.f32 %v1890, %v1871
  %v1892 = vadd.f32 %v1891, %v1872
  %v1893 = vadd.f32 %v1892, %v1873
  %v1894 = vadd.f32 %v1893, %v1874
  %v1895 = vadd.f32 %v1894, %v1875
  %v1896 = vadd.f32 %v1895, %v1876
  %v1897 = vadd.f32 %v1896, %v1877
  %v1898 = vadd.f32 %v1897, %v1878
  %v1899 = vsel %vm1850, %v1879, 0.0
  %v1900 = vadd.f32 %v1898, %v1899
  %v1901 = vrot.slane %v1900, 4
  %v1902 = vadd.f32 %v1900, %v1901
  %v1903 = vrot.slane %v1902, 2
  %v1904 = vadd.f32 %v1902, %v1903
  %v1905 = vrot.slane %v1904, 1
  %v1906 = vadd.f32 %v1904, %v1905
  %v1907 = vmul.f32 %v1858, 0.0078125
  %v1908 = vmul.f32 %v1906, 0.0078125
  %v1909 = vmul.f32 %v1907, %v1907
  %v1910 = vsub.f32 %v1908, %v1909
  %v1911 = vsub.f32 %v1661, %v1907
  %v1912 = vsub.f32 %v1662, %v1907
  %v1913 = vsub.f32 %v1663, %v1907
  %v1914 = vsub.f32 %v1664, %v1907
  %v1915 = vsub.f32 %v1665, %v1907
  %v1916 = vsub.f32 %v1666, %v1907
  %v1917 = vsub.f32 %v1667, %v1907
  %v1918 = vsub.f32 %v1668, %v1907
  %v1919 = vsub.f32 %v1669, %v1907
  %v1920 = vsub.f32 %v1670, %v1907
  %v1921 = vsub.f32 %v1671, %v1907
  %v1922 = vsub.f32 %v1672, %v1907
  %v1923 = vsub.f32 %v1673, %v1907
  %v1924 = vsub.f32 %v1674, %v1907
  %v1925 = vsub.f32 %v1675, %v1907
  %v1926 = vsub.f32 %v1676, %v1907
  %v1927 = vsub.f32 %v1677, %v1907
  %v1928 = vsub.f32 %v1678, %v1907
  %v1929 = vsub.f32 %v1679, %v1907
  %v1930 = vsub.f32 %v1680, %v1907
  %v1931 = vsub.f32 %v1681, %v1907
  %v1932 = vadd.f32 %v1910, 1e-05
  %v1933 = vrsqrt.pop %v1932
  %v1934 = vmul.f32 %v1911, %v1933
  %v1935 = vmul.f32 %v1912, %v1933
  %v1936 = vmul.f32 %v1913, %v1933
  %v1937 = vmul.f32 %v1914, %v1933
  %v1938 = vmul.f32 %v1915, %v1933
  %v1939 = vmul.f32 %v1916, %v1933
  %v1940 = vmul.f32 %v1917, %v1933
  %v1941 = vmul.f32 %v1918, %v1933
  %v1942 = vmul.f32 %v1919, %v1933
  %v1943 = vmul.f32 %v1920, %v1933
  %v1944 = vmul.f32 %v1921, %v1933
  %v1945 = vmul.f32 %v1922, %v1933
  %v1946 = vmul.f32 %v1923, %v1933
  %v1947 = vmul.f32 %v1924, %v1933
  %v1948 = vmul.f32 %v1925, %v1933
  %v1949 = vmul.f32 %v1926, %v1933
  %v1950 = vmul.f32 %v1927, %v1933
  %v1951 = vmul.f32 %v1928, %v1933
  %v1952 = vmul.f32 %v1929, %v1933
  %v1953 = vmul.f32 %v1930, %v1933
  %v1954 = vmul.f32 %v1931, %v1933
  %v1956 = vlaneseq
  %v1957 = vshrl.u32 %v1956, 7
  %v1958 = vsub.s32 0, %v1957
  %v1959 = vrot.slane %v1703, %v1958
  %v1961 = vmul.f32 %v1934, %v1959
  %v1962 = vmul.f32 %v1935, %v1959
  %v1963 = vmul.f32 %v1936, %v1959
  %v1964 = vmul.f32 %v1937, %v1959
  %v1965 = vmul.f32 %v1938, %v1959
  %v1966 = vmul.f32 %v1939, %v1959
  %v1967 = vmul.f32 %v1940, %v1959
  %v1968 = vmul.f32 %v1941, %v1959
  %v1969 = vmul.f32 %v1942, %v1959
  %v1970 = vmul.f32 %v1943, %v1959
  %v1971 = vmul.f32 %v1944, %v1959
  %v1972 = vmul.f32 %v1945, %v1959
  %v1973 = vmul.f32 %v1946, %v1959
  %v1974 = vmul.f32 %v1947, %v1959
  %v1975 = vmul.f32 %v1948, %v1959
  %v1976 = vmul.f32 %v1949, %v1959
  %v1977 = vmul.f32 %v1950, %v1959
  %v1978 = vmul.f32 %v1951, %v1959
  %v1979 = vmul.f32 %v1952, %v1959
  %v1980 = vmul.f32 %v1953, %v1959
  %v1981 = vmul.f32 %v1954, %v1959
  %v1983 = vlaneseq
  %v1984 = vshrl.u32 %v1983, 7
  %v1985 = vsub.s32 0, %v1984
  %v1986 = vrot.slane %v1704, %v1985
  %v1988 = vadd.f32 %v1961, %v1986
  %v1989 = vadd.f32 %v1962, %v1986
  %v1990 = vadd.f32 %v1963, %v1986
  %v1991 = vadd.f32 %v1964, %v1986
  %v1992 = vadd.f32 %v1965, %v1986
  %v1993 = vadd.f32 %v1966, %v1986
  %v1994 = vadd.f32 %v1967, %v1986
  %v1995 = vadd.f32 %v1968, %v1986
  %v1996 = vadd.f32 %v1969, %v1986
  %v1997 = vadd.f32 %v1970, %v1986
  %v1998 = vadd.f32 %v1971, %v1986
  %v1999 = vadd.f32 %v1972, %v1986
  %v2000 = vadd.f32 %v1973, %v1986
  %v2001 = vadd.f32 %v1974, %v1986
  %v2002 = vadd.f32 %v1975, %v1986
  %v2003 = vadd.f32 %v1976, %v1986
  %v2004 = vadd.f32 %v1977, %v1986
  %v2005 = vadd.f32 %v1978, %v1986
  %v2006 = vadd.f32 %v1979, %v1986
  %v2007 = vadd.f32 %v1980, %v1986
  %v2008 = vadd.f32 %v1981, %v1986
  %v2009 = vmul.f32 %v1988, 0.2
  %v2010 = vmul.f32 %v1989, 0.2
  %v2011 = vmul.f32 %v1990, 0.2
  %v2012 = vmul.f32 %v1991, 0.2
  %v2013 = vmul.f32 %v1992, 0.2
  %v2014 = vmul.f32 %v1993, 0.2
  %v2015 = vmul.f32 %v1994, 0.2
  %v2016 = vmul.f32 %v1995, 0.2
  %v2017 = vmul.f32 %v1996, 0.2
  %v2018 = vmul.f32 %v1997, 0.2
  %v2019 = vmul.f32 %v1998, 0.2
  %v2020 = vmul.f32 %v1999, 0.2
  %v2021 = vmul.f32 %v2000, 0.2
  %v2022 = vmul.f32 %v2001, 0.2
  %v2023 = vmul.f32 %v2002, 0.2
  %v2024 = vmul.f32 %v2003, 0.2
  %v2025 = vmul.f32 %v2004, 0.2
  %v2026 = vmul.f32 %v2005, 0.2
  %v2027 = vmul.f32 %v2006, 0.2
  %v2028 = vmul.f32 %v2007, 0.2
  %v2029 = vmul.f32 %v2008, 0.2
  %v2030 = vmax.f32 %v1988, %v2009
  %v2031 = vmax.f32 %v1989, %v2010
  %v2032 = vmax.f32 %v1990, %v2011
  %v2033 = vmax.f32 %v1991, %v2012
  %v2034 = vmax.f32 %v1992, %v2013
  %v2035 = vmax.f32 %v1993, %v2014
  %v2036 = vmax.f32 %v1994, %v2015
  %v2037 = vmax.f32 %v1995, %v2016
  %v2038 = vmax.f32 %v1996, %v2017
  %v2039 = vmax.f32 %v1997, %v2018
  %v2040 = vmax.f32 %v1998, %v2019
  %v2041 = vmax.f32 %v1999, %v2020
  %v2042 = vmax.f32 %v2000, %v2021
  %v2043 = vmax.f32 %v2001, %v2022
  %v2044 = vmax.f32 %v2002, %v2023
  %v2045 = vmax.f32 %v2003, %v2024
  %v2046 = vmax.f32 %v2004, %v2025
  %v2047 = vmax.f32 %v2005, %v2026
  %v2048 = vmax.f32 %v2006, %v2027
  %v2049 = vmax.f32 %v2007, %v2028
  %v2050 = vmax.f32 %v2008, %v2029
  %2051 = vst [vmem:[%s5] sm:$0xff] %v2030
  %2052 = vst [vmem:[%s5 + $0x8] sm:$0xff] %v2031
  %2053 = vst [vmem:[%s5 + $0x10] sm:$0xff] %v2032
  %2054 = vst [vmem:[%s5 + $0x18] sm:$0xff] %v2033
  %2055 = vst [vmem:[%s5 + $0x20] sm:$0xff] %v2034
  %2056 = vst [vmem:[%s5 + $0x28] sm:$0xff] %v2035
  %2057 = vst [vmem:[%s5 + $0x30] sm:$0xff] %v2036
  %2058 = vst [vmem:[%s5 + $0x38] sm:$0xff] %v2037
  %2059 = vst [vmem:[%s5 + $0x40] sm:$0xff] %v2038
  %2060 = vst [vmem:[%s5 + $0x48] sm:$0xff] %v2039
  %2061 = vst [vmem:[%s5 + $0x50] sm:$0xff] %v2040
  %2062 = vst [vmem:[%s5 + $0x58] sm:$0xff] %v2041
  %2063 = vst [vmem:[%s5 + $0x60] sm:$0xff] %v2042
  %2064 = vst [vmem:[%s5 + $0x68] sm:$0xff] %v2043
  %2065 = vst [vmem:[%s5 + $0x70] sm:$0xff] %v2044
  %2066 = vst [vmem:[%s5 + $0x78] sm:$0xff] %v2045
  %2067 = vst [vmem:[%s5 + $0x80] sm:$0xff] %v2046
  %2068 = vst [vmem:[%s5 + $0x88] sm:$0xff] %v2047
  %2069 = vst [vmem:[%s5 + $0x90] sm:$0xff] %v2048
  %2070 = vst [vmem:[%s5 + $0x98] sm:$0xff] %v2049
  %2071 = vst [vmem:[%s5 + $0xa0] sm:$0x3] %v2050
  // Predicated region
  $region22: #{discriminator32_forward.4} parent=0 // pred_check
    _
  $region23: #{discriminator32_forward.4} parent=0 // pred_check_branch
    %2073 = sbr.rel (0) target = $region25
  $region24: #{discriminator32_forward.4} parent=0 // pred_region
    _
  $region25: #{discriminator32_forward.4} parent=0 // pred_fallthru
    _
  // Predicated region
  $region26: #{discriminator32_forward.4} parent=0 // pred_check
    _
  $region27: #{discriminator32_forward.4} parent=0 // pred_check_branch
    %2075 = sbr.rel (0) target = $region29
  $region28: #{discriminator32_forward.4} parent=0 // pred_region
    _
  $region29: #{discriminator32_forward.4} parent=0 // pred_fallthru
    _

// kernel: discriminator32_forward.5
$region0: #{discriminator32_forward.5}
  #allocation0 [shape = 'u32[]', space=smem, size = 0x4, offset = 0x4, fixed_abs, tag = 'smem constant byte address 0x4 - core index']
  #allocation1 [shape = 'u32[144,128]{1,0:T(1,128)}', space=vmem, size = 0x12000, scoped, tag = 'internal scratch']
  #allocation2 [shape = 'f32[1,1]{1,0:T(1,128)S(1)}', space=vmem, size = 0x200, scoped, tag = 'scoped memory for discriminator32_forward.5']
  %s0 = inlined_call_operand.vmem [shape: f32[56,512], index: 0, kind: input, shape index: {}]
  %s1 = inlined_call_operand.vmem [shape: bf16[4,512,256], index: 1, kind: input, shape index: {}]
  %s2 = inlined_call_operand.vmem [shape: f32[50,1], index: 2, kind: input, shape index: {}]
  %s3 = inlined_call_operand.vmem [shape: f32[1,256], index: 3, kind: input, shape index: {}]
  %s4 = inlined_call_operand.vmem [shape: f32[1,256], index: 4, kind: input, shape index: {}]
  %s5 = inlined_call_operand.vmem [shape: f32[50,256], index: 5, kind: input, shape index: {}]
  %s6 = inlined_call_operand.vmem [shape: f32[2,50], index: 6, kind: input, shape index: {}]
  %s7 = inlined_call_operand.<no memory space> [shape: f32[1,1], index: 7, kind: input, shape index: {}]
  %s8 = inlined_call_operand.vmem [shape: f32[2,128], index: 8, kind: output, shape index: {}]
  %s9 = sld [smem:[#allocation0]]
  $region42: #{discriminator32_forward.5} parent=0
    _
  %s11 = ssub.s32 1, %s9
  %s12 = scalar_select 0, %s11, %s9
  %v13 = vstv %s7
  %14 = vst [vmem:[#allocation2] sm:$0x1] %v13
  // Predicated region
  $region2: #{discriminator32_forward.5} parent=0 // pred_check
    _
  $region3: #{discriminator32_forward.5} parent=0 // pred_check_branch
    %16 = sbr.rel (0) target = $region5
  $region4: #{discriminator32_forward.5} parent=0 // pred_region
    _
  $region5: #{discriminator32_forward.5} parent=0 // pred_fallthru
    _
  // Predicated region
  $region6: #{discriminator32_forward.5} parent=0 // pred_check
    _
  $region7: #{discriminator32_forward.5} parent=0 // pred_check_branch
    %18 = sbr.rel (0) target = $region9
  $region8: #{discriminator32_forward.5} parent=0 // pred_region
    _
  $region9: #{discriminator32_forward.5} parent=0 // pred_fallthru
    _
  // Predicated region
  $region10: #{discriminator32_forward.5} parent=0 // pred_check
    _
  $region11: #{discriminator32_forward.5} parent=0 // pred_check_branch
    %20 = sbr.rel (0) target = $region13
  $region12: #{discriminator32_forward.5} parent=0 // pred_region
    _
  $region13: #{discriminator32_forward.5} parent=0 // pred_fallthru
    _
  // Predicated region
  $region14: #{discriminator32_forward.5} parent=0 // pred_check
    _
  $region15: #{discriminator32_forward.5} parent=0 // pred_check_branch
    %22 = sbr.rel (0) target = $region17
  $region16: #{discriminator32_forward.5} parent=0 // pred_region
    _
  $region17: #{discriminator32_forward.5} parent=0 // pred_fallthru
    _
  // Predicated region
  $region18: #{discriminator32_forward.5} parent=0 // pred_check
    _
  $region19: #{discriminator32_forward.5} parent=0 // pred_check_branch
    %24 = sbr.rel (0) target = $region21
  $region20: #{discriminator32_forward.5} parent=0 // pred_region
    _
  $region21: #{discriminator32_forward.5} parent=0 // pred_fallthru
    _
  // Predicated region
  $region22: #{discriminator32_forward.5} parent=0 // pred_check
    _
  $region23: #{discriminator32_forward.5} parent=0 // pred_check_branch
    %26 = sbr.rel (0) target = $region25
  $region24: #{discriminator32_forward.5} parent=0 // pred_region
    _
  $region25: #{discriminator32_forward.5} parent=0 // pred_fallthru
    _
  // Predicated region
  $region26: #{discriminator32_forward.5} parent=0 // pred_check
    _
  $region27: #{discriminator32_forward.5} parent=0 // pred_check_branch
    %28 = sbr.rel (0) target = $region29
  $region28: #{discriminator32_forward.5} parent=0 // pred_region
    _
  $region29: #{discriminator32_forward.5} parent=0 // pred_fallthru
    _
  // Predicated region
  $region30: #{discriminator32_forward.5} parent=0 // pred_check
    _
  $region31: #{discriminator32_forward.5} parent=0 // pred_check_branch
    %30 = sbr.rel (0) target = $region33
  $region32: #{discriminator32_forward.5} parent=0 // pred_region
    _
  $region33: #{discriminator32_forward.5} parent=0 // pred_fallthru
    _
  %v31 = vld [vmem:[%s0] sm:$0xff]
  %v32 = vld [vmem:[%s0 + $0x8] sm:$0xff]
  %v33 = vld [vmem:[%s0 + $0x10] sm:$0xff]
  %v34 = vld [vmem:[%s0 + $0x18] sm:$0xff]
  %v35 = vld [vmem:[%s0 + $0x20] sm:$0xff]
  %v36 = vld [vmem:[%s0 + $0x28] sm:$0xff]
  %v37 = vld [vmem:[%s0 + $0x30] sm:$0xff]
  %v38 = vld [vmem:[%s0 + $0x38] sm:$0xff]
  %v39 = vld [vmem:[%s0 + $0x40] sm:$0xff]
  %v40 = vld [vmem:[%s0 + $0x48] sm:$0xff]
  %v41 = vld [vmem:[%s0 + $0x50] sm:$0xff]
  %v42 = vld [vmem:[%s0 + $0x58] sm:$0xff]
  %v43 = vld [vmem:[%s0 + $0x60] sm:$0xff]
  %v44 = vld [vmem:[%s0 + $0x68] sm:$0xff]
  %v45 = vld [vmem:[%s0 + $0x70] sm:$0xff]
  %v46 = vld [vmem:[%s0 + $0x78] sm:$0xff]
  %v47 = vld [vmem:[%s0 + $0x80] sm:$0xff]
  %v48 = vld [vmem:[%s0 + $0x88] sm:$0xff]
  %v49 = vld [vmem:[%s0 + $0x90] sm:$0xff]
  %v50 = vld [vmem:[%s0 + $0x98] sm:$0xff]
  %v51 = vld [vmem:[%s0 + $0xa0] sm:$0xff]
  %v52 = vld [vmem:[%s0 + $0xa8] sm:$0xff]
  %v53 = vld [vmem:[%s0 + $0xb0] sm:$0xff]
  %v54 = vld [vmem:[%s0 + $0xb8] sm:$0xff]
  %v55 = vld [vmem:[%s0 + $0xc0] sm:$0x3]
  %v56 = vld [vmem:[%s0 + $0xc8] sm:$0x3]
  %v57 = vld [vmem:[%s0 + $0xd0] sm:$0x3]
  %v58 = vld [vmem:[%s0 + $0xd8] sm:$0x3]
  %v59 = vpack.c.bf16 %v35, %v31
  %v60 = vpack.c.bf16 %v36, %v32
  %v61 = vpack.c.bf16 %v37, %v33
  %v62 = vpack.c.bf16 %v38, %v34
  %v63 = vpack.c.bf16 %v43, %v39
  %v64 = vpack.c.bf16 %v44, %v40
  %v65 = vpack.c.bf16 %v45, %v41
  %v66 = vpack.c.bf16 %v46, %v42
  %v67 = vpack.c.bf16 %v51, %v47
  %v68 = vpack.c.bf16 %v52, %v48
  %v69 = vpack.c.bf16 %v53, %v49
  %v70 = vpack.c.bf16 %v54, %v50
  %v71 = vpack.c.bf16 %v55, %v55
  %v72 = vpack.c.bf16 %v56, %v56
  %v73 = vpack.c.bf16 %v57, %v57
  %v74 = vpack.c.bf16 %v58, %v58
  %v75 = vld [vmem:[%s1] sm:$0xff]
  %v76 = vld [vmem:[%s1 + $0x8] sm:$0xff]
  %v77 = vld [vmem:[%s1 + $0x10] sm:$0xff]
  %v78 = vld [vmem:[%s1 + $0x18] sm:$0xff]
  %v79 = vld [vmem:[%s1 + $0x20] sm:$0xff]
  %v80 = vld [vmem:[%s1 + $0x28] sm:$0xff]
  %v81 = vld [vmem:[%s1 + $0x30] sm:$0xff]
  %v82 = vld [vmem:[%s1 + $0x38] sm:$0xff]
  %v83 = vld [vmem:[%s1 + $0x40] sm:$0xff]
  %v84 = vld [vmem:[%s1 + $0x48] sm:$0xff]
  %v85 = vld [vmem:[%s1 + $0x50] sm:$0xff]
  %v86 = vld [vmem:[%s1 + $0x58] sm:$0xff]
  %v87 = vld [vmem:[%s1 + $0x60] sm:$0xff]
  %v88 = vld [vmem:[%s1 + $0x68] sm:$0xff]
  %v89 = vld [vmem:[%s1 + $0x70] sm:$0xff]
  %v90 = vld [vmem:[%s1 + $0x78] sm:$0xff]
  %v91 = vld [vmem:[%s1 + $0x80] sm:$0xff]
  %v92 = vld [vmem:[%s1 + $0x88] sm:$0xff]
  %v93 = vld [vmem:[%s1 + $0x90] sm:$0xff]
  %v94 = vld [vmem:[%s1 + $0x98] sm:$0xff]
  %v95 = vld [vmem:[%s1 + $0xa0] sm:$0xff]
  %v96 = vld [vmem:[%s1 + $0xa8] sm:$0xff]
  %v97 = vld [vmem:[%s1 + $0xb0] sm:$0xff]
  %v98 = vld [vmem:[%s1 + $0xb8] sm:$0xff]
  %v99 = vld [vmem:[%s1 + $0xc0] sm:$0xff]
  %v100 = vld [vmem:[%s1 + $0xc8] sm:$0xff]
  %v101 = vld [vmem:[%s1 + $0xd0] sm:$0xff]
  %v102 = vld [vmem:[%s1 + $0xd8] sm:$0xff]
  %v103 = vld [vmem:[%s1 + $0xe0] sm:$0xff]
  %v104 = vld [vmem:[%s1 + $0xe8] sm:$0xff]
  %v105 = vld [vmem:[%s1 + $0xf0] sm:$0xff]
  %v106 = vld [vmem:[%s1 + $0xf8] sm:$0xff]
  %v107 = vld [vmem:[%s1 + $0x100] sm:$0xff]
  %v108 = vld [vmem:[%s1 + $0x108] sm:$0xff]
  %v109 = vld [vmem:[%s1 + $0x110] sm:$0xff]
  %v110 = vld [vmem:[%s1 + $0x118] sm:$0xff]
  %v111 = vld [vmem:[%s1 + $0x120] sm:$0xff]
  %v112 = vld [vmem:[%s1 + $0x128] sm:$0xff]
  %v113 = vld [vmem:[%s1 + $0x130] sm:$0xff]
  %v114 = vld [vmem:[%s1 + $0x138] sm:$0xff]
  %v115 = vld [vmem:[%s1 + $0x140] sm:$0xff]
  %v116 = vld [vmem:[%s1 + $0x148] sm:$0xff]
  %v117 = vld [vmem:[%s1 + $0x150] sm:$0xff]
  %v118 = vld [vmem:[%s1 + $0x158] sm:$0xff]
  %v119 = vld [vmem:[%s1 + $0x160] sm:$0xff]
  %v120 = vld [vmem:[%s1 + $0x168] sm:$0xff]
  %v121 = vld [vmem:[%s1 + $0x170] sm:$0xff]
  %v122 = vld [vmem:[%s1 + $0x178] sm:$0xff]
  %v123 = vld [vmem:[%s1 + $0x180] sm:$0xff]
  %v124 = vld [vmem:[%s1 + $0x188] sm:$0xff]
  %v125 = vld [vmem:[%s1 + $0x190] sm:$0xff]
  %v126 = vld [vmem:[%s1 + $0x198] sm:$0xff]
  %v127 = vld [vmem:[%s1 + $0x1a0] sm:$0xff]
  %v128 = vld [vmem:[%s1 + $0x1a8] sm:$0xff]
  %v129 = vld [vmem:[%s1 + $0x1b0] sm:$0xff]
  %v130 = vld [vmem:[%s1 + $0x1b8] sm:$0xff]
  %v131 = vld [vmem:[%s1 + $0x1c0] sm:$0xff]
  %v132 = vld [vmem:[%s1 + $0x1c8] sm:$0xff]
  %v133 = vld [vmem:[%s1 + $0x1d0] sm:$0xff]
  %v134 = vld [vmem:[%s1 + $0x1d8] sm:$0xff]
  %v135 = vld [vmem:[%s1 + $0x1e0] sm:$0xff]
  %v136 = vld [vmem:[%s1 + $0x1e8] sm:$0xff]
  %v137 = vld [vmem:[%s1 + $0x1f0] sm:$0xff]
  %v138 = vld [vmem:[%s1 + $0x1f8] sm:$0xff]
  %v139 = vld [vmem:[%s0] sm:$0xfe]
  %v140 = vld [vmem:[%s0 + $0x8] sm:$0xfe]
  %v141 = vld [vmem:[%s0 + $0x10] sm:$0xfe]
  %v142 = vld [vmem:[%s0 + $0x18] sm:$0xfe]
  %v143 = vld [vmem:[%s0 + $0xc0] sm:$0x7]
  %v144 = vld [vmem:[%s0 + $0xc8] sm:$0x7]
  %v145 = vld [vmem:[%s0 + $0xd0] sm:$0x7]
  %v146 = vld [vmem:[%s0 + $0xd8] sm:$0x7]
  %v147 = vpack.c.bf16 %v35, %v139
  %v148 = vpack.c.bf16 %v36, %v140
  %v149 = vpack.c.bf16 %v37, %v141
  %v150 = vpack.c.bf16 %v38, %v142
  %v151 = vpack.c.bf16 %v143, %v143
  %v152 = vpack.c.bf16 %v144, %v144
  %v153 = vpack.c.bf16 %v145, %v145
  %v154 = vpack.c.bf16 %v146, %v146
  %s155 = scalar_lea.vmem %s1, 512
  %v156 = vld [vmem:[%s155] sm:$0xff]
  %v157 = vld [vmem:[%s155 + $0x8] sm:$0xff]
  %v158 = vld [vmem:[%s155 + $0x10] sm:$0xff]
  %v159 = vld [vmem:[%s155 + $0x18] sm:$0xff]
  %v160 = vld [vmem:[%s155 + $0x20] sm:$0xff]
  %v161 = vld [vmem:[%s155 + $0x28] sm:$0xff]
  %v162 = vld [vmem:[%s155 + $0x30] sm:$0xff]
  %v163 = vld [vmem:[%s155 + $0x38] sm:$0xff]
  %v164 = vld [vmem:[%s155 + $0x40] sm:$0xff]
  %v165 = vld [vmem:[%s155 + $0x48] sm:$0xff]
  %v166 = vld [vmem:[%s155 + $0x50] sm:$0xff]
  %v167 = vld [vmem:[%s155 + $0x58] sm:$0xff]
  %v168 = vld [vmem:[%s155 + $0x60] sm:$0xff]
  %v169 = vld [vmem:[%s155 + $0x68] sm:$0xff]
  %v170 = vld [vmem:[%s155 + $0x70] sm:$0xff]
  %v171 = vld [vmem:[%s155 + $0x78] sm:$0xff]
  %v172 = vld [vmem:[%s155 + $0x80] sm:$0xff]
  %v173 = vld [vmem:[%s155 + $0x88] sm:$0xff]
  %v174 = vld [vmem:[%s155 + $0x90] sm:$0xff]
  %v175 = vld [vmem:[%s155 + $0x98] sm:$0xff]
  %v176 = vld [vmem:[%s155 + $0xa0] sm:$0xff]
  %v177 = vld [vmem:[%s155 + $0xa8] sm:$0xff]
  %v178 = vld [vmem:[%s155 + $0xb0] sm:$0xff]
  %v179 = vld [vmem:[%s155 + $0xb8] sm:$0xff]
  %v180 = vld [vmem:[%s155 + $0xc0] sm:$0xff]
  %v181 = vld [vmem:[%s155 + $0xc8] sm:$0xff]
  %v182 = vld [vmem:[%s155 + $0xd0] sm:$0xff]
  %v183 = vld [vmem:[%s155 + $0xd8] sm:$0xff]
  %v184 = vld [vmem:[%s155 + $0xe0] sm:$0xff]
  %v185 = vld [vmem:[%s155 + $0xe8] sm:$0xff]
  %v186 = vld [vmem:[%s155 + $0xf0] sm:$0xff]
  %v187 = vld [vmem:[%s155 + $0xf8] sm:$0xff]
  %v188 = vld [vmem:[%s155 + $0x100] sm:$0xff]
  %v189 = vld [vmem:[%s155 + $0x108] sm:$0xff]
  %v190 = vld [vmem:[%s155 + $0x110] sm:$0xff]
  %v191 = vld [vmem:[%s155 + $0x118] sm:$0xff]
  %v192 = vld [vmem:[%s155 + $0x120] sm:$0xff]
  %v193 = vld [vmem:[%s155 + $0x128] sm:$0xff]
  %v194 = vld [vmem:[%s155 + $0x130] sm:$0xff]
  %v195 = vld [vmem:[%s155 + $0x138] sm:$0xff]
  %v196 = vld [vmem:[%s155 + $0x140] sm:$0xff]
  %v197 = vld [vmem:[%s155 + $0x148] sm:$0xff]
  %v198 = vld [vmem:[%s155 + $0x150] sm:$0xff]
  %v199 = vld [vmem:[%s155 + $0x158] sm:$0xff]
  %v200 = vld [vmem:[%s155 + $0x160] sm:$0xff]
  %v201 = vld [vmem:[%s155 + $0x168] sm:$0xff]
  %v202 = vld [vmem:[%s155 + $0x170] sm:$0xff]
  %v203 = vld [vmem:[%s155 + $0x178] sm:$0xff]
  %v204 = vld [vmem:[%s155 + $0x180] sm:$0xff]
  %v205 = vld [vmem:[%s155 + $0x188] sm:$0xff]
  %v206 = vld [vmem:[%s155 + $0x190] sm:$0xff]
  %v207 = vld [vmem:[%s155 + $0x198] sm:$0xff]
  %v208 = vld [vmem:[%s155 + $0x1a0] sm:$0xff]
  %v209 = vld [vmem:[%s155 + $0x1a8] sm:$0xff]
  %v210 = vld [vmem:[%s155 + $0x1b0] sm:$0xff]
  %v211 = vld [vmem:[%s155 + $0x1b8] sm:$0xff]
  %v212 = vld [vmem:[%s155 + $0x1c0] sm:$0xff]
  %v213 = vld [vmem:[%s155 + $0x1c8] sm:$0xff]
  %v214 = vld [vmem:[%s155 + $0x1d0] sm:$0xff]
  %v215 = vld [vmem:[%s155 + $0x1d8] sm:$0xff]
  %v216 = vld [vmem:[%s155 + $0x1e0] sm:$0xff]
  %v217 = vld [vmem:[%s155 + $0x1e8] sm:$0xff]
  %v218 = vld [vmem:[%s155 + $0x1f0] sm:$0xff]
  %v219 = vld [vmem:[%s155 + $0x1f8] sm:$0xff]
  %vm220 = vsmask.f32 7424
  %v222 = vshrl.u32 %v147, 16
  %v224 = vshll.u32 %v147, 16
  %v226 = vrot.slane %v224, 1
  %v227 = vor.u32 %v222, %v226
  %v229 = vshll.u32 %v63, 16
  %v231 = vrot.slane %v229, 1
  %v232 = vsel %vm220, %v227, %v231
  %v234 = vshrl.u32 %v148, 16
  %v236 = vshll.u32 %v148, 16
  %v238 = vrot.slane %v236, 1
  %v239 = vor.u32 %v234, %v238
  %v241 = vshll.u32 %v64, 16
  %v243 = vrot.slane %v241, 1
  %v244 = vsel %vm220, %v239, %v243
  %v246 = vshrl.u32 %v149, 16
  %v248 = vshll.u32 %v149, 16
  %v250 = vrot.slane %v248, 1
  %v251 = vor.u32 %v246, %v250
  %v253 = vshll.u32 %v65, 16
  %v255 = vrot.slane %v253, 1
  %v256 = vsel %vm220, %v251, %v255
  %v258 = vshrl.u32 %v150, 16
  %v260 = vshll.u32 %v150, 16
  %v262 = vrot.slane %v260, 1
  %v263 = vor.u32 %v258, %v262
  %v265 = vshll.u32 %v66, 16
  %v267 = vrot.slane %v265, 1
  %v268 = vsel %vm220, %v263, %v267
  %v269 = vshrl.u32 %v63, 16
  %v271 = vor.u32 %v269, %v231
  %v273 = vshll.u32 %v67, 16
  %v275 = vrot.slane %v273, 1
  %v276 = vsel %vm220, %v271, %v275
  %v277 = vshrl.u32 %v64, 16
  %v279 = vor.u32 %v277, %v243
  %v281 = vshll.u32 %v68, 16
  %v283 = vrot.slane %v281, 1
  %v284 = vsel %vm220, %v279, %v283
  %v285 = vshrl.u32 %v65, 16
  %v287 = vor.u32 %v285, %v255
  %v289 = vshll.u32 %v69, 16
  %v291 = vrot.slane %v289, 1
  %v292 = vsel %vm220, %v287, %v291
  %v293 = vshrl.u32 %v66, 16
  %v295 = vor.u32 %v293, %v267
  %v297 = vshll.u32 %v70, 16
  %v299 = vrot.slane %v297, 1
  %v300 = vsel %vm220, %v295, %v299
  %v301 = vshrl.u32 %v67, 16
  %v303 = vor.u32 %v301, %v275
  %v305 = vshll.u32 %v151, 16
  %v307 = vrot.slane %v305, 1
  %v308 = vsel %vm220, %v303, %v307
  %v309 = vshrl.u32 %v68, 16
  %v311 = vor.u32 %v309, %v283
  %v313 = vshll.u32 %v152, 16
  %v315 = vrot.slane %v313, 1
  %v316 = vsel %vm220, %v311, %v315
  %v317 = vshrl.u32 %v69, 16
  %v319 = vor.u32 %v317, %v291
  %v321 = vshll.u32 %v153, 16
  %v323 = vrot.slane %v321, 1
  %v324 = vsel %vm220, %v319, %v323
  %v325 = vshrl.u32 %v70, 16
  %v327 = vor.u32 %v325, %v299
  %v329 = vshll.u32 %v154, 16
  %v331 = vrot.slane %v329, 1
  %v332 = vsel %vm220, %v327, %v331
  %v333 = vshrl.u32 %v151, 16
  %v335 = vor.u32 %v333, %v307
  %v336 = vshrl.u32 %v152, 16
  %v338 = vor.u32 %v336, %v315
  %v339 = vshrl.u32 %v153, 16
  %v341 = vor.u32 %v339, %v323
  %v342 = vshrl.u32 %v154, 16
  %v344 = vor.u32 %v342, %v331
  %v425 = vunpack.c.l.b16 %v156
  %v426 = vunpack.c.h.b16 %v156
  %v427 = vunpack.c.l.b16 %v157
  %v428 = vunpack.c.h.b16 %v157
  %v429 = vunpack.c.l.b16 %v158
  %v430 = vunpack.c.h.b16 %v158
  %v431 = vunpack.c.l.b16 %v159
  %v432 = vunpack.c.h.b16 %v159
  %v433 = vunpack.c.l.b16 %v160
  %v434 = vunpack.c.h.b16 %v160
  %v435 = vunpack.c.l.b16 %v161
  %v436 = vunpack.c.h.b16 %v161
  %v437 = vunpack.c.l.b16 %v162
  %v438 = vunpack.c.h.b16 %v162
  %v439 = vunpack.c.l.b16 %v163
  %v440 = vunpack.c.h.b16 %v163
  %v441 = vunpack.c.l.b16 %v164
  %v442 = vunpack.c.h.b16 %v164
  %v443 = vunpack.c.l.b16 %v165
  %v444 = vunpack.c.h.b16 %v165
  %v445 = vunpack.c.l.b16 %v166
  %v446 = vunpack.c.h.b16 %v166
  %v447 = vunpack.c.l.b16 %v167
  %v448 = vunpack.c.h.b16 %v167
  %v449 = vunpack.c.l.b16 %v168
  %v450 = vunpack.c.h.b16 %v168
  %v451 = vunpack.c.l.b16 %v169
  %v452 = vunpack.c.h.b16 %v169
  %v453 = vunpack.c.l.b16 %v170
  %v454 = vunpack.c.h.b16 %v170
  %v455 = vunpack.c.l.b16 %v171
  %v456 = vunpack.c.h.b16 %v171
  %v457 = vunpack.c.l.b16 %v172
  %v458 = vunpack.c.h.b16 %v172
  %v459 = vunpack.c.l.b16 %v173
  %v460 = vunpack.c.h.b16 %v173
  %v461 = vunpack.c.l.b16 %v174
  %v462 = vunpack.c.h.b16 %v174
  %v463 = vunpack.c.l.b16 %v175
  %v464 = vunpack.c.h.b16 %v175
  %v465 = vunpack.c.l.b16 %v176
  %v466 = vunpack.c.h.b16 %v176
  %v467 = vunpack.c.l.b16 %v177
  %v468 = vunpack.c.h.b16 %v177
  %v469 = vunpack.c.l.b16 %v178
  %v470 = vunpack.c.h.b16 %v178
  %v471 = vunpack.c.l.b16 %v179
  %v472 = vunpack.c.h.b16 %v179
  %v473 = vunpack.c.l.b16 %v180
  %v474 = vunpack.c.h.b16 %v180
  %v475 = vunpack.c.l.b16 %v181
  %v476 = vunpack.c.h.b16 %v181
  %v477 = vunpack.c.l.b16 %v182
  %v478 = vunpack.c.h.b16 %v182
  %v479 = vunpack.c.l.b16 %v183
  %v480 = vunpack.c.h.b16 %v183
  %v481 = vunpack.c.l.b16 %v184
  %v482 = vunpack.c.h.b16 %v184
  %v483 = vunpack.c.l.b16 %v185
  %v484 = vunpack.c.h.b16 %v185
  %v485 = vunpack.c.l.b16 %v186
  %v486 = vunpack.c.h.b16 %v186
  %v487 = vunpack.c.l.b16 %v187
  %v488 = vunpack.c.h.b16 %v187
  %v489 = vunpack.c.l.b16 %v188
  %v490 = vunpack.c.h.b16 %v188
  %v491 = vunpack.c.l.b16 %v189
  %v492 = vunpack.c.h.b16 %v189
  %v493 = vunpack.c.l.b16 %v190
  %v494 = vunpack.c.h.b16 %v190
  %v495 = vunpack.c.l.b16 %v191
  %v496 = vunpack.c.h.b16 %v191
  %v497 = vunpack.c.l.b16 %v192
  %v498 = vunpack.c.h.b16 %v192
  %v499 = vunpack.c.l.b16 %v193
  %v500 = vunpack.c.h.b16 %v193
  %v501 = vunpack.c.l.b16 %v194
  %v502 = vunpack.c.h.b16 %v194
  %v503 = vunpack.c.l.b16 %v195
  %v504 = vunpack.c.h.b16 %v195
  %v505 = vunpack.c.l.b16 %v196
  %v506 = vunpack.c.h.b16 %v196
  %v507 = vunpack.c.l.b16 %v197
  %v508 = vunpack.c.h.b16 %v197
  %v509 = vunpack.c.l.b16 %v198
  %v510 = vunpack.c.h.b16 %v198
  %v511 = vunpack.c.l.b16 %v199
  %v512 = vunpack.c.h.b16 %v199
  %v513 = vunpack.c.l.b16 %v200
  %v514 = vunpack.c.h.b16 %v200
  %v515 = vunpack.c.l.b16 %v201
  %v516 = vunpack.c.h.b16 %v201
  %v517 = vunpack.c.l.b16 %v202
  %v518 = vunpack.c.h.b16 %v202
  %v519 = vunpack.c.l.b16 %v203
  %v520 = vunpack.c.h.b16 %v203
  %v521 = vunpack.c.l.b16 %v204
  %v522 = vunpack.c.h.b16 %v204
  %v523 = vunpack.c.l.b16 %v205
  %v524 = vunpack.c.h.b16 %v205
  %v525 = vunpack.c.l.b16 %v206
  %v526 = vunpack.c.h.b16 %v206
  %v527 = vunpack.c.l.b16 %v207
  %v528 = vunpack.c.h.b16 %v207
  %v529 = vunpack.c.l.b16 %v208
  %v530 = vunpack.c.h.b16 %v208
  %v531 = vunpack.c.l.b16 %v209
  %v532 = vunpack.c.h.b16 %v209
  %v533 = vunpack.c.l.b16 %v210
  %v534 = vunpack.c.h.b16 %v210
  %v535 = vunpack.c.l.b16 %v211
  %v536 = vunpack.c.h.b16 %v211
  %v537 = vunpack.c.l.b16 %v212
  %v538 = vunpack.c.h.b16 %v212
  %v539 = vunpack.c.l.b16 %v213
  %v540 = vunpack.c.h.b16 %v213
  %v541 = vunpack.c.l.b16 %v214
  %v542 = vunpack.c.h.b16 %v214
  %v543 = vunpack.c.l.b16 %v215
  %v544 = vunpack.c.h.b16 %v215
  %v545 = vunpack.c.l.b16 %v216
  %v546 = vunpack.c.h.b16 %v216
  %v547 = vunpack.c.l.b16 %v217
  %v548 = vunpack.c.h.b16 %v217
  %v549 = vunpack.c.l.b16 %v218
  %v550 = vunpack.c.h.b16 %v218
  %v551 = vunpack.c.l.b16 %v219
  %v552 = vunpack.c.h.b16 %v219
  %v553 = vpack.c.b16 %v427, %v425
  %v554 = vpack.c.b16 %v428, %v426
  %v555 = vpack.c.b16 %v431, %v429
  %v556 = vpack.c.b16 %v432, %v430
  %v557 = vpack.c.b16 %v435, %v433
  %v558 = vpack.c.b16 %v436, %v434
  %v559 = vpack.c.b16 %v439, %v437
  %v560 = vpack.c.b16 %v440, %v438
  %v561 = vpack.c.b16 %v443, %v441
  %v562 = vpack.c.b16 %v444, %v442
  %v563 = vpack.c.b16 %v447, %v445
  %v564 = vpack.c.b16 %v448, %v446
  %v565 = vpack.c.b16 %v451, %v449
  %v566 = vpack.c.b16 %v452, %v450
  %v567 = vpack.c.b16 %v455, %v453
  %v568 = vpack.c.b16 %v456, %v454
  %v569 = vpack.c.b16 %v459, %v457
  %v570 = vpack.c.b16 %v460, %v458
  %v571 = vpack.c.b16 %v463, %v461
  %v572 = vpack.c.b16 %v464, %v462
  %v573 = vpack.c.b16 %v467, %v465
  %v574 = vpack.c.b16 %v468, %v466
  %v575 = vpack.c.b16 %v471, %v469
  %v576 = vpack.c.b16 %v472, %v470
  %v577 = vpack.c.b16 %v475, %v473
  %v578 = vpack.c.b16 %v476, %v474
  %v579 = vpack.c.b16 %v479, %v477
  %v580 = vpack.c.b16 %v480, %v478
  %v581 = vpack.c.b16 %v483, %v481
  %v582 = vpack.c.b16 %v484, %v482
  %v583 = vpack.c.b16 %v487, %v485
  %v584 = vpack.c.b16 %v488, %v486
  %v585 = vpack.c.b16 %v491, %v489
  %v586 = vpack.c.b16 %v492, %v490
  %v587 = vpack.c.b16 %v495, %v493
  %v588 = vpack.c.b16 %v496, %v494
  %v589 = vpack.c.b16 %v499, %v497
  %v590 = vpack.c.b16 %v500, %v498
  %v591 = vpack.c.b16 %v503, %v501
  %v592 = vpack.c.b16 %v504, %v502
  %v593 = vpack.c.b16 %v507, %v505
  %v594 = vpack.c.b16 %v508, %v506
  %v595 = vpack.c.b16 %v511, %v509
  %v596 = vpack.c.b16 %v512, %v510
  %v597 = vpack.c.b16 %v515, %v513
  %v598 = vpack.c.b16 %v516, %v514
  %v599 = vpack.c.b16 %v519, %v517
  %v600 = vpack.c.b16 %v520, %v518
  %v601 = vpack.c.b16 %v523, %v521
  %v602 = vpack.c.b16 %v524, %v522
  %v603 = vpack.c.b16 %v527, %v525
  %v604 = vpack.c.b16 %v528, %v526
  %v605 = vpack.c.b16 %v531, %v529
  %v606 = vpack.c.b16 %v532, %v530
  %v607 = vpack.c.b16 %v535, %v533
  %v608 = vpack.c.b16 %v536, %v534
  %v609 = vpack.c.b16 %v539, %v537
  %v610 = vpack.c.b16 %v540, %v538
  %v611 = vpack.c.b16 %v543, %v541
  %v612 = vpack.c.b16 %v544, %v542
  %v613 = vpack.c.b16 %v547, %v545
  %v614 = vpack.c.b16 %v548, %v546
  %v615 = vpack.c.b16 %v551, %v549
  %v616 = vpack.c.b16 %v552, %v550
  %681 = vmatprep.subr.bf16.mxu0 %v554
  %682 = vmatpush1.bf16.msra.mxu0 %v553
  %683 = vmatprep.subr.bf16.mxu0 %v556
  %684 = vmatpush1.bf16.msra.mxu0 %v555
  %685 = vmatprep.subr.bf16.mxu0 %v558
  %686 = vmatpush1.bf16.msra.mxu0 %v557
  %687 = vmatprep.subr.bf16.mxu0 %v560
  %688 = vmatpush1.bf16.msra.mxu0 %v559
  %689 = vmatprep.subr.bf16.mxu0 %v562
  %690 = vmatpush1.bf16.msra.mxu0 %v561
  %691 = vmatprep.subr.bf16.mxu0 %v564
  %692 = vmatpush1.bf16.msra.mxu0 %v563
  %693 = vmatprep.subr.bf16.mxu0 %v566
  %694 = vmatpush1.bf16.msra.mxu0 %v565
  %695 = vmatprep.subr.bf16.mxu0 %v568
  %696 = vmatpush1.bf16.msra.mxu0 %v567
  %697 = vmatprep.subr.bf16.mxu0 %v570
  %698 = vmatpush1.bf16.msra.mxu0 %v569
  %699 = vmatprep.subr.bf16.mxu0 %v572
  %700 = vmatpush1.bf16.msra.mxu0 %v571
  %701 = vmatprep.subr.bf16.mxu0 %v574
  %702 = vmatpush1.bf16.msra.mxu0 %v573
  %703 = vmatprep.subr.bf16.mxu0 %v576
  %704 = vmatpush1.bf16.msra.mxu0 %v575
  %705 = vmatprep.subr.bf16.mxu0 %v578
  %706 = vmatpush1.bf16.msra.mxu0 %v577
  %707 = vmatprep.subr.bf16.mxu0 %v580
  %708 = vmatpush1.bf16.msra.mxu0 %v579
  %709 = vmatprep.subr.bf16.mxu0 %v582
  %710 = vmatpush1.bf16.msra.mxu0 %v581
  %711 = vmatprep.subr.bf16.mxu0 %v584
  %712 = vmatpush1.bf16.msra.mxu0 %v583
  %713 = vmatprep.mubr.bf16.mxu0 %v244
  %714 = vmatmul.mubr.bf16.gmra.mrb[0].mxu0 %v232
  %v715 = vpop.f32.mrb[0].mxu0
  %v716 = vadd.f32 0.0, %v715
  %v717 = vpop.f32.mrb[0].mxu0
  %v718 = vadd.f32 0.0, %v717
  %v719 = vpop.f32.mrb[0].mxu0
  %v720 = vadd.f32 0.0, %v719
  %v721 = vpop.f32.mrb[0].mxu0
  %v722 = vadd.f32 0.0, %v721
  %723 = vmatprep.mubr.bf16.mxu0 %v284
  %724 = vmatmul.mubr.bf16.gmra.mrb[0].mxu0 %v276
  %v725 = vpop.f32.mrb[0].mxu0
  %v726 = vadd.f32 0.0, %v725
  %v727 = vpop.f32.mrb[0].mxu0
  %v728 = vadd.f32 0.0, %v727
  %v729 = vpop.f32.mrb[0].mxu0
  %v730 = vadd.f32 0.0, %v729
  %v731 = vpop.f32.mrb[0].mxu0
  %v732 = vadd.f32 0.0, %v731
  %733 = vmatprep.mubr.bf16.mxu0 %v316
  %734 = vmatmul.mubr.bf16.gmra.mrb[0].mxu0 %v308
  %v735 = vpop.f32.mrb[0].mxu0
  %v736 = vadd.f32 0.0, %v735
  %v737 = vpop.f32.mrb[0].mxu0
  %v738 = vadd.f32 0.0, %v737
  %v739 = vpop.f32.mrb[0].mxu0
  %v740 = vadd.f32 0.0, %v739
  %v741 = vpop.f32.mrb[0].mxu0
  %v742 = vadd.f32 0.0, %v741
  %743 = vmatprep.mubr.bf16.mxu0 %v338
  %744 = vmatmul.mubr.bf16.gmra.mrb[0].mxu0 %v335
  %v745 = vpop.f32.mrb[0].mxu0
  %v746 = vadd.f32 0.0, %v745
  %v747 = vpop.f32.mrb[0].mxu0
  %v748 = vadd.f32 0.0, %v747
  %v749 = vpop.f32.mrb[0].mxu0
  %v750 = vpop.f32.mrb[0].mxu0
  %751 = vdwg.mxu0
  %752 = vmatprep.subr.bf16.mxu0 %v586
  %753 = vmatpush1.bf16.msra.mxu0 %v585
  %754 = vmatprep.subr.bf16.mxu0 %v588
  %755 = vmatpush1.bf16.msra.mxu0 %v587
  %756 = vmatprep.subr.bf16.mxu0 %v590
  %757 = vmatpush1.bf16.msra.mxu0 %v589
  %758 = vmatprep.subr.bf16.mxu0 %v592
  %759 = vmatpush1.bf16.msra.mxu0 %v591
  %760 = vmatprep.subr.bf16.mxu0 %v594
  %761 = vmatpush1.bf16.msra.mxu0 %v593
  %762 = vmatprep.subr.bf16.mxu0 %v596
  %763 = vmatpush1.bf16.msra.mxu0 %v595
  %764 = vmatprep.subr.bf16.mxu0 %v598
  %765 = vmatpush1.bf16.msra.mxu0 %v597
  %766 = vmatprep.subr.bf16.mxu0 %v600
  %767 = vmatpush1.bf16.msra.mxu0 %v599
  %768 = vmatprep.subr.bf16.mxu0 %v602
  %769 = vmatpush1.bf16.msra.mxu0 %v601
  %770 = vmatprep.subr.bf16.mxu0 %v604
  %771 = vmatpush1.bf16.msra.mxu0 %v603
  %772 = vmatprep.subr.bf16.mxu0 %v606
  %773 = vmatpush1.bf16.msra.mxu0 %v605
  %774 = vmatprep.subr.bf16.mxu0 %v608
  %775 = vmatpush1.bf16.msra.mxu0 %v607
  %776 = vmatprep.subr.bf16.mxu0 %v610
  %777 = vmatpush1.bf16.msra.mxu0 %v609
  %778 = vmatprep.subr.bf16.mxu0 %v612
  %779 = vmatpush1.bf16.msra.mxu0 %v611
  %780 = vmatprep.subr.bf16.mxu0 %v614
  %781 = vmatpush1.bf16.msra.mxu0 %v613
  %782 = vmatprep.subr.bf16.mxu0 %v616
  %783 = vmatpush1.bf16.msra.mxu0 %v615
  %784 = vmatprep.mubr.bf16.mxu0 %v268
  %785 = vmatmul.mubr.bf16.gmra.mrb[0].mxu0 %v256
  %v786 = vpop.f32.mrb[0].mxu0
  %v787 = vadd.f32 %v716, %v786
  %v788 = vpop.f32.mrb[0].mxu0
  %v789 = vadd.f32 %v718, %v788
  %v790 = vpop.f32.mrb[0].mxu0
  %v791 = vadd.f32 %v720, %v790
  %v792 = vpop.f32.mrb[0].mxu0
  %v793 = vadd.f32 %v722, %v792
  %794 = vmatprep.mubr.bf16.mxu0 %v300
  %795 = vmatmul.mubr.bf16.gmra.mrb[0].mxu0 %v292
  %v796 = vpop.f32.mrb[0].mxu0
  %v797 = vadd.f32 %v726, %v796
  %v798 = vpop.f32.mrb[0].mxu0
  %v799 = vadd.f32 %v728, %v798
  %v800 = vpop.f32.mrb[0].mxu0
  %v801 = vadd.f32 %v730, %v800
  %v802 = vpop.f32.mrb[0].mxu0
  %v803 = vadd.f32 %v732, %v802
  %804 = vmatprep.mubr.bf16.mxu0 %v332
  %805 = vmatmul.mubr.bf16.gmra.mrb[0].mxu0 %v324
  %v806 = vpop.f32.mrb[0].mxu0
  %v807 = vadd.f32 %v736, %v806
  %v808 = vpop.f32.mrb[0].mxu0
  %v809 = vadd.f32 %v738, %v808
  %v810 = vpop.f32.mrb[0].mxu0
  %v811 = vadd.f32 %v740, %v810
  %v812 = vpop.f32.mrb[0].mxu0
  %v813 = vadd.f32 %v742, %v812
  %814 = vmatprep.mubr.bf16.mxu0 %v344
  %815 = vmatmul.mubr.bf16.gmra.mrb[0].mxu0 %v341
  %v816 = vpop.f32.mrb[0].mxu0
  %v817 = vadd.f32 %v746, %v816
  %v818 = vpop.f32.mrb[0].mxu0
  %v819 = vadd.f32 %v748, %v818
  %v820 = vpop.f32.mrb[0].mxu0
  %v821 = vpop.f32.mrb[0].mxu0
  %822 = vdwg.mxu0
  %v887 = vunpack.c.l.b16 %v75
  %v888 = vunpack.c.h.b16 %v75
  %v889 = vunpack.c.l.b16 %v76
  %v890 = vunpack.c.h.b16 %v76
  %v891 = vunpack.c.l.b16 %v77
  %v892 = vunpack.c.h.b16 %v77
  %v893 = vunpack.c.l.b16 %v78
  %v894 = vunpack.c.h.b16 %v78
  %v895 = vunpack.c.l.b16 %v79
  %v896 = vunpack.c.h.b16 %v79
  %v897 = vunpack.c.l.b16 %v80
  %v898 = vunpack.c.h.b16 %v80
  %v899 = vunpack.c.l.b16 %v81
  %v900 = vunpack.c.h.b16 %v81
  %v901 = vunpack.c.l.b16 %v82
  %v902 = vunpack.c.h.b16 %v82
  %v903 = vunpack.c.l.b16 %v83
  %v904 = vunpack.c.h.b16 %v83
  %v905 = vunpack.c.l.b16 %v84
  %v906 = vunpack.c.h.b16 %v84
  %v907 = vunpack.c.l.b16 %v85
  %v908 = vunpack.c.h.b16 %v85
  %v909 = vunpack.c.l.b16 %v86
  %v910 = vunpack.c.h.b16 %v86
  %v911 = vunpack.c.l.b16 %v87
  %v912 = vunpack.c.h.b16 %v87
  %v913 = vunpack.c.l.b16 %v88
  %v914 = vunpack.c.h.b16 %v88
  %v915 = vunpack.c.l.b16 %v89
  %v916 = vunpack.c.h.b16 %v89
  %v917 = vunpack.c.l.b16 %v90
  %v918 = vunpack.c.h.b16 %v90
  %v919 = vunpack.c.l.b16 %v91
  %v920 = vunpack.c.h.b16 %v91
  %v921 = vunpack.c.l.b16 %v92
  %v922 = vunpack.c.h.b16 %v92
  %v923 = vunpack.c.l.b16 %v93
  %v924 = vunpack.c.h.b16 %v93
  %v925 = vunpack.c.l.b16 %v94
  %v926 = vunpack.c.h.b16 %v94
  %v927 = vunpack.c.l.b16 %v95
  %v928 = vunpack.c.h.b16 %v95
  %v929 = vunpack.c.l.b16 %v96
  %v930 = vunpack.c.h.b16 %v96
  %v931 = vunpack.c.l.b16 %v97
  %v932 = vunpack.c.h.b16 %v97
  %v933 = vunpack.c.l.b16 %v98
  %v934 = vunpack.c.h.b16 %v98
  %v935 = vunpack.c.l.b16 %v99
  %v936 = vunpack.c.h.b16 %v99
  %v937 = vunpack.c.l.b16 %v100
  %v938 = vunpack.c.h.b16 %v100
  %v939 = vunpack.c.l.b16 %v101
  %v940 = vunpack.c.h.b16 %v101
  %v941 = vunpack.c.l.b16 %v102
  %v942 = vunpack.c.h.b16 %v102
  %v943 = vunpack.c.l.b16 %v103
  %v944 = vunpack.c.h.b16 %v103
  %v945 = vunpack.c.l.b16 %v104
  %v946 = vunpack.c.h.b16 %v104
  %v947 = vunpack.c.l.b16 %v105
  %v948 = vunpack.c.h.b16 %v105
  %v949 = vunpack.c.l.b16 %v106
  %v950 = vunpack.c.h.b16 %v106
  %v951 = vunpack.c.l.b16 %v107
  %v952 = vunpack.c.h.b16 %v107
  %v953 = vunpack.c.l.b16 %v108
  %v954 = vunpack.c.h.b16 %v108
  %v955 = vunpack.c.l.b16 %v109
  %v956 = vunpack.c.h.b16 %v109
  %v957 = vunpack.c.l.b16 %v110
  %v958 = vunpack.c.h.b16 %v110
  %v959 = vunpack.c.l.b16 %v111
  %v960 = vunpack.c.h.b16 %v111
  %v961 = vunpack.c.l.b16 %v112
  %v962 = vunpack.c.h.b16 %v112
  %v963 = vunpack.c.l.b16 %v113
  %v964 = vunpack.c.h.b16 %v113
  %v965 = vunpack.c.l.b16 %v114
  %v966 = vunpack.c.h.b16 %v114
  %v967 = vunpack.c.l.b16 %v115
  %v968 = vunpack.c.h.b16 %v115
  %v969 = vunpack.c.l.b16 %v116
  %v970 = vunpack.c.h.b16 %v116
  %v971 = vunpack.c.l.b16 %v117
  %v972 = vunpack.c.h.b16 %v117
  %v973 = vunpack.c.l.b16 %v118
  %v974 = vunpack.c.h.b16 %v118
  %v975 = vunpack.c.l.b16 %v119
  %v976 = vunpack.c.h.b16 %v119
  %v977 = vunpack.c.l.b16 %v120
  %v978 = vunpack.c.h.b16 %v120
  %v979 = vunpack.c.l.b16 %v121
  %v980 = vunpack.c.h.b16 %v121
  %v981 = vunpack.c.l.b16 %v122
  %v982 = vunpack.c.h.b16 %v122
  %v983 = vunpack.c.l.b16 %v123
  %v984 = vunpack.c.h.b16 %v123
  %v985 = vunpack.c.l.b16 %v124
  %v986 = vunpack.c.h.b16 %v124
  %v987 = vunpack.c.l.b16 %v125
  %v988 = vunpack.c.h.b16 %v125
  %v989 = vunpack.c.l.b16 %v126
  %v990 = vunpack.c.h.b16 %v126
  %v991 = vunpack.c.l.b16 %v127
  %v992 = vunpack.c.h.b16 %v127
  %v993 = vunpack.c.l.b16 %v128
  %v994 = vunpack.c.h.b16 %v128
  %v995 = vunpack.c.l.b16 %v129
  %v996 = vunpack.c.h.b16 %v129
  %v997 = vunpack.c.l.b16 %v130
  %v998 = vunpack.c.h.b16 %v130
  %v999 = vunpack.c.l.b16 %v131
  %v1000 = vunpack.c.h.b16 %v131
  %v1001 = vunpack.c.l.b16 %v132
  %v1002 = vunpack.c.h.b16 %v132
  %v1003 = vunpack.c.l.b16 %v133
  %v1004 = vunpack.c.h.b16 %v133
  %v1005 = vunpack.c.l.b16 %v134
  %v1006 = vunpack.c.h.b16 %v134
  %v1007 = vunpack.c.l.b16 %v135
  %v1008 = vunpack.c.h.b16 %v135
  %v1009 = vunpack.c.l.b16 %v136
  %v1010 = vunpack.c.h.b16 %v136
  %v1011 = vunpack.c.l.b16 %v137
  %v1012 = vunpack.c.h.b16 %v137
  %v1013 = vunpack.c.l.b16 %v138
  %v1014 = vunpack.c.h.b16 %v138
  %v1015 = vpack.c.b16 %v889, %v887
  %v1016 = vpack.c.b16 %v890, %v888
  %v1017 = vpack.c.b16 %v893, %v891
  %v1018 = vpack.c.b16 %v894, %v892
  %v1019 = vpack.c.b16 %v897, %v895
  %v1020 = vpack.c.b16 %v898, %v896
  %v1021 = vpack.c.b16 %v901, %v899
  %v1022 = vpack.c.b16 %v902, %v900
  %v1023 = vpack.c.b16 %v905, %v903
  %v1024 = vpack.c.b16 %v906, %v904
  %v1025 = vpack.c.b16 %v909, %v907
  %v1026 = vpack.c.b16 %v910, %v908
  %v1027 = vpack.c.b16 %v913, %v911
  %v1028 = vpack.c.b16 %v914, %v912
  %v1029 = vpack.c.b16 %v917, %v915
  %v1030 = vpack.c.b16 %v918, %v916
  %v1031 = vpack.c.b16 %v921, %v919
  %v1032 = vpack.c.b16 %v922, %v920
  %v1033 = vpack.c.b16 %v925, %v923
  %v1034 = vpack.c.b16 %v926, %v924
  %v1035 = vpack.c.b16 %v929, %v927
  %v1036 = vpack.c.b16 %v930, %v928
  %v1037 = vpack.c.b16 %v933, %v931
  %v1038 = vpack.c.b16 %v934, %v932
  %v1039 = vpack.c.b16 %v937, %v935
  %v1040 = vpack.c.b16 %v938, %v936
  %v1041 = vpack.c.b16 %v941, %v939
  %v1042 = vpack.c.b16 %v942, %v940
  %v1043 = vpack.c.b16 %v945, %v943
  %v1044 = vpack.c.b16 %v946, %v944
  %v1045 = vpack.c.b16 %v949, %v947
  %v1046 = vpack.c.b16 %v950, %v948
  %v1047 = vpack.c.b16 %v953, %v951
  %v1048 = vpack.c.b16 %v954, %v952
  %v1049 = vpack.c.b16 %v957, %v955
  %v1050 = vpack.c.b16 %v958, %v956
  %v1051 = vpack.c.b16 %v961, %v959
  %v1052 = vpack.c.b16 %v962, %v960
  %v1053 = vpack.c.b16 %v965, %v963
  %v1054 = vpack.c.b16 %v966, %v964
  %v1055 = vpack.c.b16 %v969, %v967
  %v1056 = vpack.c.b16 %v970, %v968
  %v1057 = vpack.c.b16 %v973, %v971
  %v1058 = vpack.c.b16 %v974, %v972
  %v1059 = vpack.c.b16 %v977, %v975
  %v1060 = vpack.c.b16 %v978, %v976
  %v1061 = vpack.c.b16 %v981, %v979
  %v1062 = vpack.c.b16 %v982, %v980
  %v1063 = vpack.c.b16 %v985, %v983
  %v1064 = vpack.c.b16 %v986, %v984
  %v1065 = vpack.c.b16 %v989, %v987
  %v1066 = vpack.c.b16 %v990, %v988
  %v1067 = vpack.c.b16 %v993, %v991
  %v1068 = vpack.c.b16 %v994, %v992
  %v1069 = vpack.c.b16 %v997, %v995
  %v1070 = vpack.c.b16 %v998, %v996
  %v1071 = vpack.c.b16 %v1001, %v999
  %v1072 = vpack.c.b16 %v1002, %v1000
  %v1073 = vpack.c.b16 %v1005, %v1003
  %v1074 = vpack.c.b16 %v1006, %v1004
  %v1075 = vpack.c.b16 %v1009, %v1007
  %v1076 = vpack.c.b16 %v1010, %v1008
  %v1077 = vpack.c.b16 %v1013, %v1011
  %v1078 = vpack.c.b16 %v1014, %v1012
  %1143 = vmatprep.subr.bf16.mxu0 %v1016
  %1144 = vmatpush1.bf16.msra.mxu0 %v1015
  %1145 = vmatprep.subr.bf16.mxu0 %v1018
  %1146 = vmatpush1.bf16.msra.mxu0 %v1017
  %1147 = vmatprep.subr.bf16.mxu0 %v1020
  %1148 = vmatpush1.bf16.msra.mxu0 %v1019
  %1149 = vmatprep.subr.bf16.mxu0 %v1022
  %1150 = vmatpush1.bf16.msra.mxu0 %v1021
  %1151 = vmatprep.subr.bf16.mxu0 %v1024
  %1152 = vmatpush1.bf16.msra.mxu0 %v1023
  %1153 = vmatprep.subr.bf16.mxu0 %v1026
  %1154 = vmatpush1.bf16.msra.mxu0 %v1025
  %1155 = vmatprep.subr.bf16.mxu0 %v1028
  %1156 = vmatpush1.bf16.msra.mxu0 %v1027
  %1157 = vmatprep.subr.bf16.mxu0 %v1030
  %1158 = vmatpush1.bf16.msra.mxu0 %v1029
  %1159 = vmatprep.subr.bf16.mxu0 %v1032
  %1160 = vmatpush1.bf16.msra.mxu0 %v1031
  %1161 = vmatprep.subr.bf16.mxu0 %v1034
  %1162 = vmatpush1.bf16.msra.mxu0 %v1033
  %1163 = vmatprep.subr.bf16.mxu0 %v1036
  %1164 = vmatpush1.bf16.msra.mxu0 %v1035
  %1165 = vmatprep.subr.bf16.mxu0 %v1038
  %1166 = vmatpush1.bf16.msra.mxu0 %v1037
  %1167 = vmatprep.subr.bf16.mxu0 %v1040
  %1168 = vmatpush1.bf16.msra.mxu0 %v1039
  %1169 = vmatprep.subr.bf16.mxu0 %v1042
  %1170 = vmatpush1.bf16.msra.mxu0 %v1041
  %1171 = vmatprep.subr.bf16.mxu0 %v1044
  %1172 = vmatpush1.bf16.msra.mxu0 %v1043
  %1173 = vmatprep.subr.bf16.mxu0 %v1046
  %1174 = vmatpush1.bf16.msra.mxu0 %v1045
  %1175 = vmatprep.mubr.bf16.mxu0 %v60
  %1176 = vmatmul.mubr.bf16.gmra.mrb[0].mxu0 %v59
  %v1177 = vpop.f32.mrb[0].mxu0
  %v1178 = vadd.f32 %v787, %v1177
  %v1179 = vpop.f32.mrb[0].mxu0
  %v1180 = vadd.f32 %v789, %v1179
  %v1181 = vpop.f32.mrb[0].mxu0
  %v1182 = vadd.f32 %v791, %v1181
  %v1183 = vpop.f32.mrb[0].mxu0
  %v1184 = vadd.f32 %v793, %v1183
  %1185 = vmatprep.mubr.bf16.mxu0 %v64
  %1186 = vmatmul.mubr.bf16.gmra.mrb[0].mxu0 %v63
  %v1187 = vpop.f32.mrb[0].mxu0
  %v1188 = vadd.f32 %v797, %v1187
  %v1189 = vpop.f32.mrb[0].mxu0
  %v1190 = vadd.f32 %v799, %v1189
  %v1191 = vpop.f32.mrb[0].mxu0
  %v1192 = vadd.f32 %v801, %v1191
  %v1193 = vpop.f32.mrb[0].mxu0
  %v1194 = vadd.f32 %v803, %v1193
  %1195 = vmatprep.mubr.bf16.mxu0 %v68
  %1196 = vmatmul.mubr.bf16.gmra.mrb[0].mxu0 %v67
  %v1197 = vpop.f32.mrb[0].mxu0
  %v1198 = vadd.f32 %v807, %v1197
  %v1199 = vpop.f32.mrb[0].mxu0
  %v1200 = vadd.f32 %v809, %v1199
  %v1201 = vpop.f32.mrb[0].mxu0
  %v1202 = vadd.f32 %v811, %v1201
  %v1203 = vpop.f32.mrb[0].mxu0
  %v1204 = vadd.f32 %v813, %v1203
  %1205 = vmatprep.mubr.bf16.mxu0 %v72
  %1206 = vmatmul.mubr.bf16.gmra.mrb[0].mxu0 %v71
  %v1207 = vpop.f32.mrb[0].mxu0
  %v1208 = vadd.f32 %v817, %v1207
  %v1209 = vpop.f32.mrb[0].mxu0
  %v1210 = vadd.f32 %v819, %v1209
  %v1211 = vpop.f32.mrb[0].mxu0
  %v1212 = vpop.f32.mrb[0].mxu0
  %1213 = vdwg.mxu0
  %1214 = vmatprep.subr.bf16.mxu0 %v1048
  %1215 = vmatpush1.bf16.msra.mxu0 %v1047
  %1216 = vmatprep.subr.bf16.mxu0 %v1050
  %1217 = vmatpush1.bf16.msra.mxu0 %v1049
  %1218 = vmatprep.subr.bf16.mxu0 %v1052
  %1219 = vmatpush1.bf16.msra.mxu0 %v1051
  %1220 = vmatprep.subr.bf16.mxu0 %v1054
  %1221 = vmatpush1.bf16.msra.mxu0 %v1053
  %1222 = vmatprep.subr.bf16.mxu0 %v1056
  %1223 = vmatpush1.bf16.msra.mxu0 %v1055
  %1224 = vmatprep.subr.bf16.mxu0 %v1058
  %1225 = vmatpush1.bf16.msra.mxu0 %v1057
  %1226 = vmatprep.subr.bf16.mxu0 %v1060
  %1227 = vmatpush1.bf16.msra.mxu0 %v1059
  %1228 = vmatprep.subr.bf16.mxu0 %v1062
  %1229 = vmatpush1.bf16.msra.mxu0 %v1061
  %1230 = vmatprep.subr.bf16.mxu0 %v1064
  %1231 = vmatpush1.bf16.msra.mxu0 %v1063
  %1232 = vmatprep.subr.bf16.mxu0 %v1066
  %1233 = vmatpush1.bf16.msra.mxu0 %v1065
  %1234 = vmatprep.subr.bf16.mxu0 %v1068
  %1235 = vmatpush1.bf16.msra.mxu0 %v1067
  %1236 = vmatprep.subr.bf16.mxu0 %v1070
  %1237 = vmatpush1.bf16.msra.mxu0 %v1069
  %1238 = vmatprep.subr.bf16.mxu0 %v1072
  %1239 = vmatpush1.bf16.msra.mxu0 %v1071
  %1240 = vmatprep.subr.bf16.mxu0 %v1074
  %1241 = vmatpush1.bf16.msra.mxu0 %v1073
  %1242 = vmatprep.subr.bf16.mxu0 %v1076
  %1243 = vmatpush1.bf16.msra.mxu0 %v1075
  %1244 = vmatprep.subr.bf16.mxu0 %v1078
  %1245 = vmatpush1.bf16.msra.mxu0 %v1077
  %1246 = vmatprep.mubr.bf16.mxu0 %v62
  %1247 = vmatmul.mubr.bf16.gmra.mrb[0].mxu0 %v61
  %v1248 = vpop.f32.mrb[0].mxu0
  %v1249 = vadd.f32 %v1178, %v1248
  %v1250 = vpop.f32.mrb[0].mxu0
  %v1251 = vadd.f32 %v1180, %v1250
  %v1252 = vpop.f32.mrb[0].mxu0
  %v1253 = vadd.f32 %v1182, %v1252
  %v1254 = vpop.f32.mrb[0].mxu0
  %v1255 = vadd.f32 %v1184, %v1254
  %1256 = vmatprep.mubr.bf16.mxu0 %v66
  %1257 = vmatmul.mubr.bf16.gmra.mrb[0].mxu0 %v65
  %v1258 = vpop.f32.mrb[0].mxu0
  %v1259 = vadd.f32 %v1188, %v1258
  %v1260 = vpop.f32.mrb[0].mxu0
  %v1261 = vadd.f32 %v1190, %v1260
  %v1262 = vpop.f32.mrb[0].mxu0
  %v1263 = vadd.f32 %v1192, %v1262
  %v1264 = vpop.f32.mrb[0].mxu0
  %v1265 = vadd.f32 %v1194, %v1264
  %1266 = vmatprep.mubr.bf16.mxu0 %v70
  %1267 = vmatmul.mubr.bf16.gmra.mrb[0].mxu0 %v69
  %v1268 = vpop.f32.mrb[0].mxu0
  %v1269 = vadd.f32 %v1198, %v1268
  %v1270 = vpop.f32.mrb[0].mxu0
  %v1271 = vadd.f32 %v1200, %v1270
  %v1272 = vpop.f32.mrb[0].mxu0
  %v1273 = vadd.f32 %v1202, %v1272
  %v1274 = vpop.f32.mrb[0].mxu0
  %v1275 = vadd.f32 %v1204, %v1274
  %1276 = vmatprep.mubr.bf16.mxu0 %v74
  %1277 = vmatmul.mubr.bf16.gmra.mrb[0].mxu0 %v73
  %v1278 = vpop.f32.mrb[0].mxu0
  %v1279 = vadd.f32 %v1208, %v1278
  %v1280 = vpop.f32.mrb[0].mxu0
  %v1281 = vadd.f32 %v1210, %v1280
  %v1282 = vpop.f32.mrb[0].mxu0
  %v1283 = vpop.f32.mrb[0].mxu0
  %1284 = vdwg.mxu0
  %v1285 = vld [vmem:[%s0] sm:$0xe0]
  %v1286 = vld [vmem:[%s0 + $0x8] sm:$0xe0]
  %v1287 = vld [vmem:[%s0 + $0x10] sm:$0xe0]
  %v1288 = vld [vmem:[%s0 + $0x18] sm:$0xe0]
  %v1289 = vld [vmem:[%s0 + $0xc0] sm:$0x7f]
  %v1290 = vld [vmem:[%s0 + $0xc8] sm:$0x7f]
  %v1291 = vld [vmem:[%s0 + $0xd0] sm:$0x7f]
  %v1292 = vld [vmem:[%s0 + $0xd8] sm:$0x7f]
  %v1293 = vpack.c.bf16 %v35, %v1285
  %v1294 = vpack.c.bf16 %v36, %v1286
  %v1295 = vpack.c.bf16 %v37, %v1287
  %v1296 = vpack.c.bf16 %v38, %v1288
  %v1297 = vpack.c.bf16 %v1289, %v1289
  %v1298 = vpack.c.bf16 %v1290, %v1290
  %v1299 = vpack.c.bf16 %v1291, %v1291
  %v1300 = vpack.c.bf16 %v1292, %v1292
  %s1301 = scalar_lea.vmem %s1, 1024
  %v1302 = vld [vmem:[%s1301] sm:$0xff]
  %v1303 = vld [vmem:[%s1301 + $0x8] sm:$0xff]
  %v1304 = vld [vmem:[%s1301 + $0x10] sm:$0xff]
  %v1305 = vld [vmem:[%s1301 + $0x18] sm:$0xff]
  %v1306 = vld [vmem:[%s1301 + $0x20] sm:$0xff]
  %v1307 = vld [vmem:[%s1301 + $0x28] sm:$0xff]
  %v1308 = vld [vmem:[%s1301 + $0x30] sm:$0xff]
  %v1309 = vld [vmem:[%s1301 + $0x38] sm:$0xff]
  %v1310 = vld [vmem:[%s1301 + $0x40] sm:$0xff]
  %v1311 = vld [vmem:[%s1301 + $0x48] sm:$0xff]
  %v1312 = vld [vmem:[%s1301 + $0x50] sm:$0xff]
  %v1313 = vld [vmem:[%s1301 + $0x58] sm:$0xff]
  %v1314 = vld [vmem:[%s1301 + $0x60] sm:$0xff]
  %v1315 = vld [vmem:[%s1301 + $0x68] sm:$0xff]
  %v1316 = vld [vmem:[%s1301 + $0x70] sm:$0xff]
  %v1317 = vld [vmem:[%s1301 + $0x78] sm:$0xff]
  %v1318 = vld [vmem:[%s1301 + $0x80] sm:$0xff]
  %v1319 = vld [vmem:[%s1301 + $0x88] sm:$0xff]
  %v1320 = vld [vmem:[%s1301 + $0x90] sm:$0xff]
  %v1321 = vld [vmem:[%s1301 + $0x98] sm:$0xff]
  %v1322 = vld [vmem:[%s1301 + $0xa0] sm:$0xff]
  %v1323 = vld [vmem:[%s1301 + $0xa8] sm:$0xff]
  %v1324 = vld [vmem:[%s1301 + $0xb0] sm:$0xff]
  %v1325 = vld [vmem:[%s1301 + $0xb8] sm:$0xff]
  %v1326 = vld [vmem:[%s1301 + $0xc0] sm:$0xff]
  %v1327 = vld [vmem:[%s1301 + $0xc8] sm:$0xff]
  %v1328 = vld [vmem:[%s1301 + $0xd0] sm:$0xff]
  %v1329 = vld [vmem:[%s1301 + $0xd8] sm:$0xff]
  %v1330 = vld [vmem:[%s1301 + $0xe0] sm:$0xff]
  %v1331 = vld [vmem:[%s1301 + $0xe8] sm:$0xff]
  %v1332 = vld [vmem:[%s1301 + $0xf0] sm:$0xff]
  %v1333 = vld [vmem:[%s1301 + $0xf8] sm:$0xff]
  %v1334 = vld [vmem:[%s1301 + $0x100] sm:$0xff]
  %v1335 = vld [vmem:[%s1301 + $0x108] sm:$0xff]
  %v1336 = vld [vmem:[%s1301 + $0x110] sm:$0xff]
  %v1337 = vld [vmem:[%s1301 + $0x118] sm:$0xff]
  %v1338 = vld [vmem:[%s1301 + $0x120] sm:$0xff]
  %v1339 = vld [vmem:[%s1301 + $0x128] sm:$0xff]
  %v1340 = vld [vmem:[%s1301 + $0x130] sm:$0xff]
  %v1341 = vld [vmem:[%s1301 + $0x138] sm:$0xff]
  %v1342 = vld [vmem:[%s1301 + $0x140] sm:$0xff]
  %v1343 = vld [vmem:[%s1301 + $0x148] sm:$0xff]
  %v1344 = vld [vmem:[%s1301 + $0x150] sm:$0xff]
  %v1345 = vld [vmem:[%s1301 + $0x158] sm:$0xff]
  %v1346 = vld [vmem:[%s1301 + $0x160] sm:$0xff]
  %v1347 = vld [vmem:[%s1301 + $0x168] sm:$0xff]
  %v1348 = vld [vmem:[%s1301 + $0x170] sm:$0xff]
  %v1349 = vld [vmem:[%s1301 + $0x178] sm:$0xff]
  %v1350 = vld [vmem:[%s1301 + $0x180] sm:$0xff]
  %v1351 = vld [vmem:[%s1301 + $0x188] sm:$0xff]
  %v1352 = vld [vmem:[%s1301 + $0x190] sm:$0xff]
  %v1353 = vld [vmem:[%s1301 + $0x198] sm:$0xff]
  %v1354 = vld [vmem:[%s1301 + $0x1a0] sm:$0xff]
  %v1355 = vld [vmem:[%s1301 + $0x1a8] sm:$0xff]
  %v1356 = vld [vmem:[%s1301 + $0x1b0] sm:$0xff]
  %v1357 = vld [vmem:[%s1301 + $0x1b8] sm:$0xff]
  %v1358 = vld [vmem:[%s1301 + $0x1c0] sm:$0xff]
  %v1359 = vld [vmem:[%s1301 + $0x1c8] sm:$0xff]
  %v1360 = vld [vmem:[%s1301 + $0x1d0] sm:$0xff]
  %v1361 = vld [vmem:[%s1301 + $0x1d8] sm:$0xff]
  %v1362 = vld [vmem:[%s1301 + $0x1e0] sm:$0xff]
  %v1363 = vld [vmem:[%s1301 + $0x1e8] sm:$0xff]
  %v1364 = vld [vmem:[%s1301 + $0x1f0] sm:$0xff]
  %v1365 = vld [vmem:[%s1301 + $0x1f8] sm:$0xff]
  %vm1366 = vsmask.f32 5376
  %v1368 = vshrl.u32 %v1293, 16
  %v1370 = vrot.slane %v1368, 2
  %v1371 = vshll.u32 %v1293, 16
  %v1373 = vrot.slane %v1371, 3
  %v1374 = vor.u32 %v1370, %v1373
  %v1375 = vrot.slane %v269, 2
  %v1376 = vrot.slane %v229, 3
  %v1377 = vor.u32 %v1375, %v1376
  %v1378 = vsel %vm1366, %v1374, %v1377
  %v1380 = vshrl.u32 %v1294, 16
  %v1382 = vrot.slane %v1380, 2
  %v1383 = vshll.u32 %v1294, 16
  %v1385 = vrot.slane %v1383, 3
  %v1386 = vor.u32 %v1382, %v1385
  %v1387 = vrot.slane %v277, 2
  %v1388 = vrot.slane %v241, 3
  %v1389 = vor.u32 %v1387, %v1388
  %v1390 = vsel %vm1366, %v1386, %v1389
  %v1392 = vshrl.u32 %v1295, 16
  %v1394 = vrot.slane %v1392, 2
  %v1395 = vshll.u32 %v1295, 16
  %v1397 = vrot.slane %v1395, 3
  %v1398 = vor.u32 %v1394, %v1397
  %v1399 = vrot.slane %v285, 2
  %v1400 = vrot.slane %v253, 3
  %v1401 = vor.u32 %v1399, %v1400
  %v1402 = vsel %vm1366, %v1398, %v1401
  %v1404 = vshrl.u32 %v1296, 16
  %v1406 = vrot.slane %v1404, 2
  %v1407 = vshll.u32 %v1296, 16
  %v1409 = vrot.slane %v1407, 3
  %v1410 = vor.u32 %v1406, %v1409
  %v1411 = vrot.slane %v293, 2
  %v1412 = vrot.slane %v265, 3
  %v1413 = vor.u32 %v1411, %v1412
  %v1414 = vsel %vm1366, %v1410, %v1413
  %v1415 = vrot.slane %v301, 2
  %v1416 = vrot.slane %v273, 3
  %v1417 = vor.u32 %v1415, %v1416
  %v1418 = vsel %vm1366, %v1377, %v1417
  %v1419 = vrot.slane %v309, 2
  %v1420 = vrot.slane %v281, 3
  %v1421 = vor.u32 %v1419, %v1420
  %v1422 = vsel %vm1366, %v1389, %v1421
  %v1423 = vrot.slane %v317, 2
  %v1424 = vrot.slane %v289, 3
  %v1425 = vor.u32 %v1423, %v1424
  %v1426 = vsel %vm1366, %v1401, %v1425
  %v1427 = vrot.slane %v325, 2
  %v1428 = vrot.slane %v297, 3
  %v1429 = vor.u32 %v1427, %v1428
  %v1430 = vsel %vm1366, %v1413, %v1429
  %v1432 = vshrl.u32 %v1297, 16
  %v1434 = vrot.slane %v1432, 2
  %v1435 = vshll.u32 %v1297, 16
  %v1437 = vrot.slane %v1435, 3
  %v1438 = vor.u32 %v1434, %v1437
  %v1439 = vsel %vm1366, %v1417, %v1438
  %v1441 = vshrl.u32 %v1298, 16
  %v1443 = vrot.slane %v1441, 2
  %v1444 = vshll.u32 %v1298, 16
  %v1446 = vrot.slane %v1444, 3
  %v1447 = vor.u32 %v1443, %v1446
  %v1448 = vsel %vm1366, %v1421, %v1447
  %v1450 = vshrl.u32 %v1299, 16
  %v1452 = vrot.slane %v1450, 2
  %v1453 = vshll.u32 %v1299, 16
  %v1455 = vrot.slane %v1453, 3
  %v1456 = vor.u32 %v1452, %v1455
  %v1457 = vsel %vm1366, %v1425, %v1456
  %v1459 = vshrl.u32 %v1300, 16
  %v1461 = vrot.slane %v1459, 2
  %v1462 = vshll.u32 %v1300, 16
  %v1464 = vrot.slane %v1462, 3
  %v1465 = vor.u32 %v1461, %v1464
  %v1466 = vsel %vm1366, %v1429, %v1465
  %v1547 = vunpack.c.l.b16 %v1302
  %v1548 = vunpack.c.h.b16 %v1302
  %v1549 = vunpack.c.l.b16 %v1303
  %v1550 = vunpack.c.h.b16 %v1303
  %v1551 = vunpack.c.l.b16 %v1304
  %v1552 = vunpack.c.h.b16 %v1304
  %v1553 = vunpack.c.l.b16 %v1305
  %v1554 = vunpack.c.h.b16 %v1305
  %v1555 = vunpack.c.l.b16 %v1306
  %v1556 = vunpack.c.h.b16 %v1306
  %v1557 = vunpack.c.l.b16 %v1307
  %v1558 = vunpack.c.h.b16 %v1307
  %v1559 = vunpack.c.l.b16 %v1308
  %v1560 = vunpack.c.h.b16 %v1308
  %v1561 = vunpack.c.l.b16 %v1309
  %v1562 = vunpack.c.h.b16 %v1309
  %v1563 = vunpack.c.l.b16 %v1310
  %v1564 = vunpack.c.h.b16 %v1310
  %v1565 = vunpack.c.l.b16 %v1311
  %v1566 = vunpack.c.h.b16 %v1311
  %v1567 = vunpack.c.l.b16 %v1312
  %v1568 = vunpack.c.h.b16 %v1312
  %v1569 = vunpack.c.l.b16 %v1313
  %v1570 = vunpack.c.h.b16 %v1313
  %v1571 = vunpack.c.l.b16 %v1314
  %v1572 = vunpack.c.h.b16 %v1314
  %v1573 = vunpack.c.l.b16 %v1315
  %v1574 = vunpack.c.h.b16 %v1315
  %v1575 = vunpack.c.l.b16 %v1316
  %v1576 = vunpack.c.h.b16 %v1316
  %v1577 = vunpack.c.l.b16 %v1317
  %v1578 = vunpack.c.h.b16 %v1317
  %v1579 = vunpack.c.l.b16 %v1318
  %v1580 = vunpack.c.h.b16 %v1318
  %v1581 = vunpack.c.l.b16 %v1319
  %v1582 = vunpack.c.h.b16 %v1319
  %v1583 = vunpack.c.l.b16 %v1320
  %v1584 = vunpack.c.h.b16 %v1320
  %v1585 = vunpack.c.l.b16 %v1321
  %v1586 = vunpack.c.h.b16 %v1321
  %v1587 = vunpack.c.l.b16 %v1322
  %v1588 = vunpack.c.h.b16 %v1322
  %v1589 = vunpack.c.l.b16 %v1323
  %v1590 = vunpack.c.h.b16 %v1323
  %v1591 = vunpack.c.l.b16 %v1324
  %v1592 = vunpack.c.h.b16 %v1324
  %v1593 = vunpack.c.l.b16 %v1325
  %v1594 = vunpack.c.h.b16 %v1325
  %v1595 = vunpack.c.l.b16 %v1326
  %v1596 = vunpack.c.h.b16 %v1326
  %v1597 = vunpack.c.l.b16 %v1327
  %v1598 = vunpack.c.h.b16 %v1327
  %v1599 = vunpack.c.l.b16 %v1328
  %v1600 = vunpack.c.h.b16 %v1328
  %v1601 = vunpack.c.l.b16 %v1329
  %v1602 = vunpack.c.h.b16 %v1329
  %v1603 = vunpack.c.l.b16 %v1330
  %v1604 = vunpack.c.h.b16 %v1330
  %v1605 = vunpack.c.l.b16 %v1331
  %v1606 = vunpack.c.h.b16 %v1331
  %v1607 = vunpack.c.l.b16 %v1332
  %v1608 = vunpack.c.h.b16 %v1332
  %v1609 = vunpack.c.l.b16 %v1333
  %v1610 = vunpack.c.h.b16 %v1333
  %v1611 = vunpack.c.l.b16 %v1334
  %v1612 = vunpack.c.h.b16 %v1334
  %v1613 = vunpack.c.l.b16 %v1335
  %v1614 = vunpack.c.h.b16 %v1335
  %v1615 = vunpack.c.l.b16 %v1336
  %v1616 = vunpack.c.h.b16 %v1336
  %v1617 = vunpack.c.l.b16 %v1337
  %v1618 = vunpack.c.h.b16 %v1337
  %v1619 = vunpack.c.l.b16 %v1338
  %v1620 = vunpack.c.h.b16 %v1338
  %v1621 = vunpack.c.l.b16 %v1339
  %v1622 = vunpack.c.h.b16 %v1339
  %v1623 = vunpack.c.l.b16 %v1340
  %v1624 = vunpack.c.h.b16 %v1340
  %v1625 = vunpack.c.l.b16 %v1341
  %v1626 = vunpack.c.h.b16 %v1341
  %v1627 = vunpack.c.l.b16 %v1342
  %v1628 = vunpack.c.h.b16 %v1342
  %v1629 = vunpack.c.l.b16 %v1343
  %v1630 = vunpack.c.h.b16 %v1343
  %v1631 = vunpack.c.l.b16 %v1344
  %v1632 = vunpack.c.h.b16 %v1344
  %v1633 = vunpack.c.l.b16 %v1345
  %v1634 = vunpack.c.h.b16 %v1345
  %v1635 = vunpack.c.l.b16 %v1346
  %v1636 = vunpack.c.h.b16 %v1346
  %v1637 = vunpack.c.l.b16 %v1347
  %v1638 = vunpack.c.h.b16 %v1347
  %v1639 = vunpack.c.l.b16 %v1348
  %v1640 = vunpack.c.h.b16 %v1348
  %v1641 = vunpack.c.l.b16 %v1349
  %v1642 = vunpack.c.h.b16 %v1349
  %v1643 = vunpack.c.l.b16 %v1350
  %v1644 = vunpack.c.h.b16 %v1350
  %v1645 = vunpack.c.l.b16 %v1351
  %v1646 = vunpack.c.h.b16 %v1351
  %v1647 = vunpack.c.l.b16 %v1352
  %v1648 = vunpack.c.h.b16 %v1352
  %v1649 = vunpack.c.l.b16 %v1353
  %v1650 = vunpack.c.h.b16 %v1353
  %v1651 = vunpack.c.l.b16 %v1354
  %v1652 = vunpack.c.h.b16 %v1354
  %v1653 = vunpack.c.l.b16 %v1355
  %v1654 = vunpack.c.h.b16 %v1355
  %v1655 = vunpack.c.l.b16 %v1356
  %v1656 = vunpack.c.h.b16 %v1356
  %v1657 = vunpack.c.l.b16 %v1357
  %v1658 = vunpack.c.h.b16 %v1357
  %v1659 = vunpack.c.l.b16 %v1358
  %v1660 = vunpack.c.h.b16 %v1358
  %v1661 = vunpack.c.l.b16 %v1359
  %v1662 = vunpack.c.h.b16 %v1359
  %v1663 = vunpack.c.l.b16 %v1360
  %v1664 = vunpack.c.h.b16 %v1360
  %v1665 = vunpack.c.l.b16 %v1361
  %v1666 = vunpack.c.h.b16 %v1361
  %v1667 = vunpack.c.l.b16 %v1362
  %v1668 = vunpack.c.h.b16 %v1362
  %v1669 = vunpack.c.l.b16 %v1363
  %v1670 = vunpack.c.h.b16 %v1363
  %v1671 = vunpack.c.l.b16 %v1364
  %v1672 = vunpack.c.h.b16 %v1364
  %v1673 = vunpack.c.l.b16 %v1365
  %v1674 = vunpack.c.h.b16 %v1365
  %v1675 = vpack.c.b16 %v1549, %v1547
  %v1676 = vpack.c.b16 %v1550, %v1548
  %v1677 = vpack.c.b16 %v1553, %v1551
  %v1678 = vpack.c.b16 %v1554, %v1552
  %v1679 = vpack.c.b16 %v1557, %v1555
  %v1680 = vpack.c.b16 %v1558, %v1556
  %v1681 = vpack.c.b16 %v1561, %v1559
  %v1682 = vpack.c.b16 %v1562, %v1560
  %v1683 = vpack.c.b16 %v1565, %v1563
  %v1684 = vpack.c.b16 %v1566, %v1564
  %v1685 = vpack.c.b16 %v1569, %v1567
  %v1686 = vpack.c.b16 %v1570, %v1568
  %v1687 = vpack.c.b16 %v1573, %v1571
  %v1688 = vpack.c.b16 %v1574, %v1572
  %v1689 = vpack.c.b16 %v1577, %v1575
  %v1690 = vpack.c.b16 %v1578, %v1576
  %v1691 = vpack.c.b16 %v1581, %v1579
  %v1692 = vpack.c.b16 %v1582, %v1580
  %v1693 = vpack.c.b16 %v1585, %v1583
  %v1694 = vpack.c.b16 %v1586, %v1584
  %v1695 = vpack.c.b16 %v1589, %v1587
  %v1696 = vpack.c.b16 %v1590, %v1588
  %v1697 = vpack.c.b16 %v1593, %v1591
  %v1698 = vpack.c.b16 %v1594, %v1592
  %v1699 = vpack.c.b16 %v1597, %v1595
  %v1700 = vpack.c.b16 %v1598, %v1596
  %v1701 = vpack.c.b16 %v1601, %v1599
  %v1702 = vpack.c.b16 %v1602, %v1600
  %v1703 = vpack.c.b16 %v1605, %v1603
  %v1704 = vpack.c.b16 %v1606, %v1604
  %v1705 = vpack.c.b16 %v1609, %v1607
  %v1706 = vpack.c.b16 %v1610, %v1608
  %v1707 = vpack.c.b16 %v1613, %v1611
  %v1708 = vpack.c.b16 %v1614, %v1612
  %v1709 = vpack.c.b16 %v1617, %v1615
  %v1710 = vpack.c.b16 %v1618, %v1616
  %v1711 = vpack.c.b16 %v1621, %v1619
  %v1712 = vpack.c.b16 %v1622, %v1620
  %v1713 = vpack.c.b16 %v1625, %v1623
  %v1714 = vpack.c.b16 %v1626, %v1624
  %v1715 = vpack.c.b16 %v1629, %v1627
  %v1716 = vpack.c.b16 %v1630, %v1628
  %v1717 = vpack.c.b16 %v1633, %v1631
  %v1718 = vpack.c.b16 %v1634, %v1632
  %v1719 = vpack.c.b16 %v1637, %v1635
  %v1720 = vpack.c.b16 %v1638, %v1636
  %v1721 = vpack.c.b16 %v1641, %v1639
  %v1722 = vpack.c.b16 %v1642, %v1640
  %v1723 = vpack.c.b16 %v1645, %v1643
  %v1724 = vpack.c.b16 %v1646, %v1644
  %v1725 = vpack.c.b16 %v1649, %v1647
  %v1726 = vpack.c.b16 %v1650, %v1648
  %v1727 = vpack.c.b16 %v1653, %v1651
  %v1728 = vpack.c.b16 %v1654, %v1652
  %v1729 = vpack.c.b16 %v1657, %v1655
  %v1730 = vpack.c.b16 %v1658, %v1656
  %v1731 = vpack.c.b16 %v1661, %v1659
  %v1732 = vpack.c.b16 %v1662, %v1660
  %v1733 = vpack.c.b16 %v1665, %v1663
  %v1734 = vpack.c.b16 %v1666, %v1664
  %v1735 = vpack.c.b16 %v1669, %v1667
  %v1736 = vpack.c.b16 %v1670, %v1668
  %v1737 = vpack.c.b16 %v1673, %v1671
  %v1738 = vpack.c.b16 %v1674, %v1672
  %1803 = vmatprep.subr.bf16.mxu0 %v1676
  %1804 = vmatpush1.bf16.msra.mxu0 %v1675
  %1805 = vmatprep.subr.bf16.mxu0 %v1678
  %1806 = vmatpush1.bf16.msra.mxu0 %v1677
  %1807 = vmatprep.subr.bf16.mxu0 %v1680
  %1808 = vmatpush1.bf16.msra.mxu0 %v1679
  %1809 = vmatprep.subr.bf16.mxu0 %v1682
  %1810 = vmatpush1.bf16.msra.mxu0 %v1681
  %1811 = vmatprep.subr.bf16.mxu0 %v1684
  %1812 = vmatpush1.bf16.msra.mxu0 %v1683
  %1813 = vmatprep.subr.bf16.mxu0 %v1686
  %1814 = vmatpush1.bf16.msra.mxu0 %v1685
  %1815 = vmatprep.subr.bf16.mxu0 %v1688
  %1816 = vmatpush1.bf16.msra.mxu0 %v1687
  %1817 = vmatprep.subr.bf16.mxu0 %v1690
  %1818 = vmatpush1.bf16.msra.mxu0 %v1689
  %1819 = vmatprep.subr.bf16.mxu0 %v1692
  %1820 = vmatpush1.bf16.msra.mxu0 %v1691
  %1821 = vmatprep.subr.bf16.mxu0 %v1694
  %1822 = vmatpush1.bf16.msra.mxu0 %v1693
  %1823 = vmatprep.subr.bf16.mxu0 %v1696
  %1824 = vmatpush1.bf16.msra.mxu0 %v1695
  %1825 = vmatprep.subr.bf16.mxu0 %v1698
  %1826 = vmatpush1.bf16.msra.mxu0 %v1697
  %1827 = vmatprep.subr.bf16.mxu0 %v1700
  %1828 = vmatpush1.bf16.msra.mxu0 %v1699
  %1829 = vmatprep.subr.bf16.mxu0 %v1702
  %1830 = vmatpush1.bf16.msra.mxu0 %v1701
  %1831 = vmatprep.subr.bf16.mxu0 %v1704
  %1832 = vmatpush1.bf16.msra.mxu0 %v1703
  %1833 = vmatprep.subr.bf16.mxu0 %v1706
  %1834 = vmatpush1.bf16.msra.mxu0 %v1705
  %1835 = vmatprep.mubr.bf16.mxu0 %v1390
  %1836 = vmatmul.mubr.bf16.gmra.mrb[0].mxu0 %v1378
  %v1837 = vpop.f32.mrb[0].mxu0
  %v1838 = vadd.f32 0.0, %v1837
  %v1839 = vpop.f32.mrb[0].mxu0
  %v1840 = vadd.f32 0.0, %v1839
  %v1841 = vpop.f32.mrb[0].mxu0
  %v1842 = vadd.f32 0.0, %v1841
  %v1843 = vpop.f32.mrb[0].mxu0
  %v1844 = vadd.f32 0.0, %v1843
  %1845 = vmatprep.mubr.bf16.mxu0 %v1422
  %1846 = vmatmul.mubr.bf16.gmra.mrb[0].mxu0 %v1418
  %v1847 = vpop.f32.mrb[0].mxu0
  %v1848 = vadd.f32 0.0, %v1847
  %v1849 = vpop.f32.mrb[0].mxu0
  %v1850 = vadd.f32 0.0, %v1849
  %v1851 = vpop.f32.mrb[0].mxu0
  %v1852 = vadd.f32 0.0, %v1851
  %v1853 = vpop.f32.mrb[0].mxu0
  %v1854 = vadd.f32 0.0, %v1853
  %1855 = vmatprep.mubr.bf16.mxu0 %v1448
  %1856 = vmatmul.mubr.bf16.gmra.mrb[0].mxu0 %v1439
  %v1857 = vpop.f32.mrb[0].mxu0
  %v1858 = vadd.f32 0.0, %v1857
  %v1859 = vpop.f32.mrb[0].mxu0
  %v1860 = vadd.f32 0.0, %v1859
  %v1861 = vpop.f32.mrb[0].mxu0
  %v1862 = vadd.f32 0.0, %v1861
  %v1863 = vpop.f32.mrb[0].mxu0
  %v1864 = vadd.f32 0.0, %v1863
  %1865 = vmatprep.mubr.bf16.mxu0 %v1447
  %1866 = vmatmul.mubr.bf16.gmra.mrb[0].mxu0 %v1438
  %v1867 = vpop.f32.mrb[0].mxu0
  %v1868 = vadd.f32 0.0, %v1867
  %v1869 = vpop.f32.mrb[0].mxu0
  %v1870 = vadd.f32 0.0, %v1869
  %v1871 = vpop.f32.mrb[0].mxu0
  %v1872 = vpop.f32.mrb[0].mxu0
  %1873 = vdwg.mxu0
  %1874 = vmatprep.subr.bf16.mxu0 %v1708
  %1875 = vmatpush1.bf16.msra.mxu0 %v1707
  %1876 = vmatprep.subr.bf16.mxu0 %v1710
  %1877 = vmatpush1.bf16.msra.mxu0 %v1709
  %1878 = vmatprep.subr.bf16.mxu0 %v1712
  %1879 = vmatpush1.bf16.msra.mxu0 %v1711
  %1880 = vmatprep.subr.bf16.mxu0 %v1714
  %1881 = vmatpush1.bf16.msra.mxu0 %v1713
  %1882 = vmatprep.subr.bf16.mxu0 %v1716
  %1883 = vmatpush1.bf16.msra.mxu0 %v1715
  %1884 = vmatprep.subr.bf16.mxu0 %v1718
  %1885 = vmatpush1.bf16.msra.mxu0 %v1717
  %1886 = vmatprep.subr.bf16.mxu0 %v1720
  %1887 = vmatpush1.bf16.msra.mxu0 %v1719
  %1888 = vmatprep.subr.bf16.mxu0 %v1722
  %1889 = vmatpush1.bf16.msra.mxu0 %v1721
  %1890 = vmatprep.subr.bf16.mxu0 %v1724
  %1891 = vmatpush1.bf16.msra.mxu0 %v1723
  %1892 = vmatprep.subr.bf16.mxu0 %v1726
  %1893 = vmatpush1.bf16.msra.mxu0 %v1725
  %1894 = vmatprep.subr.bf16.mxu0 %v1728
  %1895 = vmatpush1.bf16.msra.mxu0 %v1727
  %1896 = vmatprep.subr.bf16.mxu0 %v1730
  %1897 = vmatpush1.bf16.msra.mxu0 %v1729
  %1898 = vmatprep.subr.bf16.mxu0 %v1732
  %1899 = vmatpush1.bf16.msra.mxu0 %v1731
  %1900 = vmatprep.subr.bf16.mxu0 %v1734
  %1901 = vmatpush1.bf16.msra.mxu0 %v1733
  %1902 = vmatprep.subr.bf16.mxu0 %v1736
  %1903 = vmatpush1.bf16.msra.mxu0 %v1735
  %1904 = vmatprep.subr.bf16.mxu0 %v1738
  %1905 = vmatpush1.bf16.msra.mxu0 %v1737
  %1906 = vmatprep.mubr.bf16.mxu0 %v1414
  %1907 = vmatmul.mubr.bf16.gmra.mrb[0].mxu0 %v1402
  %v1908 = vpop.f32.mrb[0].mxu0
  %v1909 = vadd.f32 %v1838, %v1908
  %v1910 = vpop.f32.mrb[0].mxu0
  %v1911 = vadd.f32 %v1840, %v1910
  %v1912 = vpop.f32.mrb[0].mxu0
  %v1913 = vadd.f32 %v1842, %v1912
  %v1914 = vpop.f32.mrb[0].mxu0
  %v1915 = vadd.f32 %v1844, %v1914
  %1916 = vmatprep.mubr.bf16.mxu0 %v1430
  %1917 = vmatmul.mubr.bf16.gmra.mrb[0].mxu0 %v1426
  %v1918 = vpop.f32.mrb[0].mxu0
  %v1919 = vadd.f32 %v1848, %v1918
  %v1920 = vpop.f32.mrb[0].mxu0
  %v1921 = vadd.f32 %v1850, %v1920
  %v1922 = vpop.f32.mrb[0].mxu0
  %v1923 = vadd.f32 %v1852, %v1922
  %v1924 = vpop.f32.mrb[0].mxu0
  %v1925 = vadd.f32 %v1854, %v1924
  %1926 = vmatprep.mubr.bf16.mxu0 %v1466
  %1927 = vmatmul.mubr.bf16.gmra.mrb[0].mxu0 %v1457
  %v1928 = vpop.f32.mrb[0].mxu0
  %v1929 = vadd.f32 %v1858, %v1928
  %v1930 = vpop.f32.mrb[0].mxu0
  %v1931 = vadd.f32 %v1860, %v1930
  %v1932 = vpop.f32.mrb[0].mxu0
  %v1933 = vadd.f32 %v1862, %v1932
  %v1934 = vpop.f32.mrb[0].mxu0
  %v1935 = vadd.f32 %v1864, %v1934
  %1936 = vmatprep.mubr.bf16.mxu0 %v1465
  %1937 = vmatmul.mubr.bf16.gmra.mrb[0].mxu0 %v1456
  %v1938 = vpop.f32.mrb[0].mxu0
  %v1939 = vadd.f32 %v1868, %v1938
  %v1940 = vpop.f32.mrb[0].mxu0
  %v1941 = vadd.f32 %v1870, %v1940
  %v1942 = vpop.f32.mrb[0].mxu0
  %v1943 = vpop.f32.mrb[0].mxu0
  %1944 = vdwg.mxu0
  %v1945 = vadd.f32 %v1249, %v1909
  %v1946 = vadd.f32 %v1251, %v1911
  %v1947 = vadd.f32 %v1253, %v1913
  %v1948 = vadd.f32 %v1255, %v1915
  %v1949 = vadd.f32 %v1259, %v1919
  %v1950 = vadd.f32 %v1261, %v1921
  %v1951 = vadd.f32 %v1263, %v1923
  %v1952 = vadd.f32 %v1265, %v1925
  %v1953 = vadd.f32 %v1269, %v1929
  %v1954 = vadd.f32 %v1271, %v1931
  %v1955 = vadd.f32 %v1273, %v1933
  %v1956 = vadd.f32 %v1275, %v1935
  %v1957 = vadd.f32 %v1279, %v1939
  %v1958 = vadd.f32 %v1281, %v1941
  %v1959 = vld [vmem:[%s0] sm:$0xc0]
  %v1960 = vld [vmem:[%s0 + $0x8] sm:$0xc0]
  %v1961 = vld [vmem:[%s0 + $0x10] sm:$0xc0]
  %v1962 = vld [vmem:[%s0 + $0x18] sm:$0xc0]
  %v1963 = vld [vmem:[%s0 + $0xc0] sm:$0xff]
  %v1964 = vld [vmem:[%s0 + $0xc8] sm:$0xff]
  %v1965 = vld [vmem:[%s0 + $0xd0] sm:$0xff]
  %v1966 = vld [vmem:[%s0 + $0xd8] sm:$0xff]
  %v1967 = vpack.c.bf16 %v35, %v1959
  %v1968 = vpack.c.bf16 %v36, %v1960
  %v1969 = vpack.c.bf16 %v37, %v1961
  %v1970 = vpack.c.bf16 %v38, %v1962
  %v1971 = vpack.c.bf16 %v1963, %v1963
  %v1972 = vpack.c.bf16 %v1964, %v1964
  %v1973 = vpack.c.bf16 %v1965, %v1965
  %v1974 = vpack.c.bf16 %v1966, %v1966
  %s1975 = scalar_lea.vmem %s1, 1536
  %v1976 = vld [vmem:[%s1975] sm:$0xff]
  %v1977 = vld [vmem:[%s1975 + $0x8] sm:$0xff]
  %v1978 = vld [vmem:[%s1975 + $0x10] sm:$0xff]
  %v1979 = vld [vmem:[%s1975 + $0x18] sm:$0xff]
  %v1980 = vld [vmem:[%s1975 + $0x20] sm:$0xff]
  %v1981 = vld [vmem:[%s1975 + $0x28] sm:$0xff]
  %v1982 = vld [vmem:[%s1975 + $0x30] sm:$0xff]
  %v1983 = vld [vmem:[%s1975 + $0x38] sm:$0xff]
  %v1984 = vld [vmem:[%s1975 + $0x40] sm:$0xff]
  %v1985 = vld [vmem:[%s1975 + $0x48] sm:$0xff]
  %v1986 = vld [vmem:[%s1975 + $0x50] sm:$0xff]
  %v1987 = vld [vmem:[%s1975 + $0x58] sm:$0xff]
  %v1988 = vld [vmem:[%s1975 + $0x60] sm:$0xff]
  %v1989 = vld [vmem:[%s1975 + $0x68] sm:$0xff]
  %v1990 = vld [vmem:[%s1975 + $0x70] sm:$0xff]
  %v1991 = vld [vmem:[%s1975 + $0x78] sm:$0xff]
  %v1992 = vld [vmem:[%s1975 + $0x80] sm:$0xff]
  %v1993 = vld [vmem:[%s1975 + $0x88] sm:$0xff]
  %v1994 = vld [vmem:[%s1975 + $0x90] sm:$0xff]
  %v1995 = vld [vmem:[%s1975 + $0x98] sm:$0xff]
  %v1996 = vld [vmem:[%s1975 + $0xa0] sm:$0xff]
  %v1997 = vld [vmem:[%s1975 + $0xa8] sm:$0xff]
  %v1998 = vld [vmem:[%s1975 + $0xb0] sm:$0xff]
  %v1999 = vld [vmem:[%s1975 + $0xb8] sm:$0xff]
  %v2000 = vld [vmem:[%s1975 + $0xc0] sm:$0xff]
  %v2001 = vld [vmem:[%s1975 + $0xc8] sm:$0xff]
  %v2002 = vld [vmem:[%s1975 + $0xd0] sm:$0xff]
  %v2003 = vld [vmem:[%s1975 + $0xd8] sm:$0xff]
  %v2004 = vld [vmem:[%s1975 + $0xe0] sm:$0xff]
  %v2005 = vld [vmem:[%s1975 + $0xe8] sm:$0xff]
  %v2006 = vld [vmem:[%s1975 + $0xf0] sm:$0xff]
  %v2007 = vld [vmem:[%s1975 + $0xf8] sm:$0xff]
  %v2008 = vld [vmem:[%s1975 + $0x100] sm:$0xff]
  %v2009 = vld [vmem:[%s1975 + $0x108] sm:$0xff]
  %v2010 = vld [vmem:[%s1975 + $0x110] sm:$0xff]
  %v2011 = vld [vmem:[%s1975 + $0x118] sm:$0xff]
  %v2012 = vld [vmem:[%s1975 + $0x120] sm:$0xff]
  %v2013 = vld [vmem:[%s1975 + $0x128] sm:$0xff]
  %v2014 = vld [vmem:[%s1975 + $0x130] sm:$0xff]
  %v2015 = vld [vmem:[%s1975 + $0x138] sm:$0xff]
  %v2016 = vld [vmem:[%s1975 + $0x140] sm:$0xff]
  %v2017 = vld [vmem:[%s1975 + $0x148] sm:$0xff]
  %v2018 = vld [vmem:[%s1975 + $0x150] sm:$0xff]
  %v2019 = vld [vmem:[%s1975 + $0x158] sm:$0xff]
  %v2020 = vld [vmem:[%s1975 + $0x160] sm:$0xff]
  %v2021 = vld [vmem:[%s1975 + $0x168] sm:$0xff]
  %v2022 = vld [vmem:[%s1975 + $0x170] sm:$0xff]
  %v2023 = vld [vmem:[%s1975 + $0x178] sm:$0xff]
  %v2024 = vld [vmem:[%s1975 + $0x180] sm:$0xff]
  %v2025 = vld [vmem:[%s1975 + $0x188] sm:$0xff]
  %v2026 = vld [vmem:[%s1975 + $0x190] sm:$0xff]
  %v2027 = vld [vmem:[%s1975 + $0x198] sm:$0xff]
  %v2028 = vld [vmem:[%s1975 + $0x1a0] sm:$0xff]
  %v2029 = vld [vmem:[%s1975 + $0x1a8] sm:$0xff]
  %v2030 = vld [vmem:[%s1975 + $0x1b0] sm:$0xff]
  %v2031 = vld [vmem:[%s1975 + $0x1b8] sm:$0xff]
  %v2032 = vld [vmem:[%s1975 + $0x1c0] sm:$0xff]
  %v2033 = vld [vmem:[%s1975 + $0x1c8] sm:$0xff]
  %v2034 = vld [vmem:[%s1975 + $0x1d0] sm:$0xff]
  %v2035 = vld [vmem:[%s1975 + $0x1d8] sm:$0xff]
  %v2036 = vld [vmem:[%s1975 + $0x1e0] sm:$0xff]
  %v2037 = vld [vmem:[%s1975 + $0x1e8] sm:$0xff]
  %v2038 = vld [vmem:[%s1975 + $0x1f0] sm:$0xff]
  %v2039 = vld [vmem:[%s1975 + $0x1f8] sm:$0xff]
  %vm2056 = vcmask 1044480
  %v2057 = vrot.slane %v1967, 3
  %v2058 = vrot.slane %v63, 3
  %v2059 = vsel %vm2056, %v2057, %v2058
  %v2060 = vrot.slane %v1968, 3
  %v2061 = vrot.slane %v64, 3
  %v2062 = vsel %vm2056, %v2060, %v2061
  %v2063 = vrot.slane %v1969, 3
  %v2064 = vrot.slane %v65, 3
  %v2065 = vsel %vm2056, %v2063, %v2064
  %v2066 = vrot.slane %v1970, 3
  %v2067 = vrot.slane %v66, 3
  %v2068 = vsel %vm2056, %v2066, %v2067
  %v2069 = vrot.slane %v67, 3
  %v2070 = vsel %vm2056, %v2058, %v2069
  %v2071 = vrot.slane %v68, 3
  %v2072 = vsel %vm2056, %v2061, %v2071
  %v2073 = vrot.slane %v69, 3
  %v2074 = vsel %vm2056, %v2064, %v2073
  %v2075 = vrot.slane %v70, 3
  %v2076 = vsel %vm2056, %v2067, %v2075
  %v2077 = vrot.slane %v1971, 3
  %v2078 = vsel %vm2056, %v2069, %v2077
  %v2079 = vrot.slane %v1972, 3
  %v2080 = vsel %vm2056, %v2071, %v2079
  %v2081 = vrot.slane %v1973, 3
  %v2082 = vsel %vm2056, %v2073, %v2081
  %v2083 = vrot.slane %v1974, 3
  %v2084 = vsel %vm2056, %v2075, %v2083
  %v2165 = vunpack.c.l.b16 %v1976
  %v2166 = vunpack.c.h.b16 %v1976
  %v2167 = vunpack.c.l.b16 %v1977
  %v2168 = vunpack.c.h.b16 %v1977
  %v2169 = vunpack.c.l.b16 %v1978
  %v2170 = vunpack.c.h.b16 %v1978
  %v2171 = vunpack.c.l.b16 %v1979
  %v2172 = vunpack.c.h.b16 %v1979
  %v2173 = vunpack.c.l.b16 %v1980
  %v2174 = vunpack.c.h.b16 %v1980
  %v2175 = vunpack.c.l.b16 %v1981
  %v2176 = vunpack.c.h.b16 %v1981
  %v2177 = vunpack.c.l.b16 %v1982
  %v2178 = vunpack.c.h.b16 %v1982
  %v2179 = vunpack.c.l.b16 %v1983
  %v2180 = vunpack.c.h.b16 %v1983
  %v2181 = vunpack.c.l.b16 %v1984
  %v2182 = vunpack.c.h.b16 %v1984
  %v2183 = vunpack.c.l.b16 %v1985
  %v2184 = vunpack.c.h.b16 %v1985
  %v2185 = vunpack.c.l.b16 %v1986
  %v2186 = vunpack.c.h.b16 %v1986
  %v2187 = vunpack.c.l.b16 %v1987
  %v2188 = vunpack.c.h.b16 %v1987
  %v2189 = vunpack.c.l.b16 %v1988
  %v2190 = vunpack.c.h.b16 %v1988
  %v2191 = vunpack.c.l.b16 %v1989
  %v2192 = vunpack.c.h.b16 %v1989
  %v2193 = vunpack.c.l.b16 %v1990
  %v2194 = vunpack.c.h.b16 %v1990
  %v2195 = vunpack.c.l.b16 %v1991
  %v2196 = vunpack.c.h.b16 %v1991
  %v2197 = vunpack.c.l.b16 %v1992
  %v2198 = vunpack.c.h.b16 %v1992
  %v2199 = vunpack.c.l.b16 %v1993
  %v2200 = vunpack.c.h.b16 %v1993
  %v2201 = vunpack.c.l.b16 %v1994
  %v2202 = vunpack.c.h.b16 %v1994
  %v2203 = vunpack.c.l.b16 %v1995
  %v2204 = vunpack.c.h.b16 %v1995
  %v2205 = vunpack.c.l.b16 %v1996
  %v2206 = vunpack.c.h.b16 %v1996
  %v2207 = vunpack.c.l.b16 %v1997
  %v2208 = vunpack.c.h.b16 %v1997
  %v2209 = vunpack.c.l.b16 %v1998
  %v2210 = vunpack.c.h.b16 %v1998
  %v2211 = vunpack.c.l.b16 %v1999
  %v2212 = vunpack.c.h.b16 %v1999
  %v2213 = vunpack.c.l.b16 %v2000
  %v2214 = vunpack.c.h.b16 %v2000
  %v2215 = vunpack.c.l.b16 %v2001
  %v2216 = vunpack.c.h.b16 %v2001
  %v2217 = vunpack.c.l.b16 %v2002
  %v2218 = vunpack.c.h.b16 %v2002
  %v2219 = vunpack.c.l.b16 %v2003
  %v2220 = vunpack.c.h.b16 %v2003
  %v2221 = vunpack.c.l.b16 %v2004
  %v2222 = vunpack.c.h.b16 %v2004
  %v2223 = vunpack.c.l.b16 %v2005
  %v2224 = vunpack.c.h.b16 %v2005
  %v2225 = vunpack.c.l.b16 %v2006
  %v2226 = vunpack.c.h.b16 %v2006
  %v2227 = vunpack.c.l.b16 %v2007
  %v2228 = vunpack.c.h.b16 %v2007
  %v2229 = vunpack.c.l.b16 %v2008
  %v2230 = vunpack.c.h.b16 %v2008
  %v2231 = vunpack.c.l.b16 %v2009
  %v2232 = vunpack.c.h.b16 %v2009
  %v2233 = vunpack.c.l.b16 %v2010
  %v2234 = vunpack.c.h.b16 %v2010
  %v2235 = vunpack.c.l.b16 %v2011
  %v2236 = vunpack.c.h.b16 %v2011
  %v2237 = vunpack.c.l.b16 %v2012
  %v2238 = vunpack.c.h.b16 %v2012
  %v2239 = vunpack.c.l.b16 %v2013
  %v2240 = vunpack.c.h.b16 %v2013
  %v2241 = vunpack.c.l.b16 %v2014
  %v2242 = vunpack.c.h.b16 %v2014
  %v2243 = vunpack.c.l.b16 %v2015
  %v2244 = vunpack.c.h.b16 %v2015
  %v2245 = vunpack.c.l.b16 %v2016
  %v2246 = vunpack.c.h.b16 %v2016
  %v2247 = vunpack.c.l.b16 %v2017
  %v2248 = vunpack.c.h.b16 %v2017
  %v2249 = vunpack.c.l.b16 %v2018
  %v2250 = vunpack.c.h.b16 %v2018
  %v2251 = vunpack.c.l.b16 %v2019
  %v2252 = vunpack.c.h.b16 %v2019
  %v2253 = vunpack.c.l.b16 %v2020
  %v2254 = vunpack.c.h.b16 %v2020
  %v2255 = vunpack.c.l.b16 %v2021
  %v2256 = vunpack.c.h.b16 %v2021
  %v2257 = vunpack.c.l.b16 %v2022
  %v2258 = vunpack.c.h.b16 %v2022
  %v2259 = vunpack.c.l.b16 %v2023
  %v2260 = vunpack.c.h.b16 %v2023
  %v2261 = vunpack.c.l.b16 %v2024
  %v2262 = vunpack.c.h.b16 %v2024
  %v2263 = vunpack.c.l.b16 %v2025
  %v2264 = vunpack.c.h.b16 %v2025
  %v2265 = vunpack.c.l.b16 %v2026
  %v2266 = vunpack.c.h.b16 %v2026
  %v2267 = vunpack.c.l.b16 %v2027
  %v2268 = vunpack.c.h.b16 %v2027
  %v2269 = vunpack.c.l.b16 %v2028
  %v2270 = vunpack.c.h.b16 %v2028
  %v2271 = vunpack.c.l.b16 %v2029
  %v2272 = vunpack.c.h.b16 %v2029
  %v2273 = vunpack.c.l.b16 %v2030
  %v2274 = vunpack.c.h.b16 %v2030
  %v2275 = vunpack.c.l.b16 %v2031
  %v2276 = vunpack.c.h.b16 %v2031
  %v2277 = vunpack.c.l.b16 %v2032
  %v2278 = vunpack.c.h.b16 %v2032
  %v2279 = vunpack.c.l.b16 %v2033
  %v2280 = vunpack.c.h.b16 %v2033
  %v2281 = vunpack.c.l.b16 %v2034
  %v2282 = vunpack.c.h.b16 %v2034
  %v2283 = vunpack.c.l.b16 %v2035
  %v2284 = vunpack.c.h.b16 %v2035
  %v2285 = vunpack.c.l.b16 %v2036
  %v2286 = vunpack.c.h.b16 %v2036
  %v2287 = vunpack.c.l.b16 %v2037
  %v2288 = vunpack.c.h.b16 %v2037
  %v2289 = vunpack.c.l.b16 %v2038
  %v2290 = vunpack.c.h.b16 %v2038
  %v2291 = vunpack.c.l.b16 %v2039
  %v2292 = vunpack.c.h.b16 %v2039
  %v2293 = vpack.c.b16 %v2167, %v2165
  %v2294 = vpack.c.b16 %v2168, %v2166
  %v2295 = vpack.c.b16 %v2171, %v2169
  %v2296 = vpack.c.b16 %v2172, %v2170
  %v2297 = vpack.c.b16 %v2175, %v2173
  %v2298 = vpack.c.b16 %v2176, %v2174
  %v2299 = vpack.c.b16 %v2179, %v2177
  %v2300 = vpack.c.b16 %v2180, %v2178
  %v2301 = vpack.c.b16 %v2183, %v2181
  %v2302 = vpack.c.b16 %v2184, %v2182
  %v2303 = vpack.c.b16 %v2187, %v2185
  %v2304 = vpack.c.b16 %v2188, %v2186
  %v2305 = vpack.c.b16 %v2191, %v2189
  %v2306 = vpack.c.b16 %v2192, %v2190
  %v2307 = vpack.c.b16 %v2195, %v2193
  %v2308 = vpack.c.b16 %v2196, %v2194
  %v2309 = vpack.c.b16 %v2199, %v2197
  %v2310 = vpack.c.b16 %v2200, %v2198
  %v2311 = vpack.c.b16 %v2203, %v2201
  %v2312 = vpack.c.b16 %v2204, %v2202
  %v2313 = vpack.c.b16 %v2207, %v2205
  %v2314 = vpack.c.b16 %v2208, %v2206
  %v2315 = vpack.c.b16 %v2211, %v2209
  %v2316 = vpack.c.b16 %v2212, %v2210
  %v2317 = vpack.c.b16 %v2215, %v2213
  %v2318 = vpack.c.b16 %v2216, %v2214
  %v2319 = vpack.c.b16 %v2219, %v2217
  %v2320 = vpack.c.b16 %v2220, %v2218
  %v2321 = vpack.c.b16 %v2223, %v2221
  %v2322 = vpack.c.b16 %v2224, %v2222
  %v2323 = vpack.c.b16 %v2227, %v2225
  %v2324 = vpack.c.b16 %v2228, %v2226
  %v2325 = vpack.c.b16 %v2231, %v2229
  %v2326 = vpack.c.b16 %v2232, %v2230
  %v2327 = vpack.c.b16 %v2235, %v2233
  %v2328 = vpack.c.b16 %v2236, %v2234
  %v2329 = vpack.c.b16 %v2239, %v2237
  %v2330 = vpack.c.b16 %v2240, %v2238
  %v2331 = vpack.c.b16 %v2243, %v2241
  %v2332 = vpack.c.b16 %v2244, %v2242
  %v2333 = vpack.c.b16 %v2247, %v2245
  %v2334 = vpack.c.b16 %v2248, %v2246
  %v2335 = vpack.c.b16 %v2251, %v2249
  %v2336 = vpack.c.b16 %v2252, %v2250
  %v2337 = vpack.c.b16 %v2255, %v2253
  %v2338 = vpack.c.b16 %v2256, %v2254
  %v2339 = vpack.c.b16 %v2259, %v2257
  %v2340 = vpack.c.b16 %v2260, %v2258
  %v2341 = vpack.c.b16 %v2263, %v2261
  %v2342 = vpack.c.b16 %v2264, %v2262
  %v2343 = vpack.c.b16 %v2267, %v2265
  %v2344 = vpack.c.b16 %v2268, %v2266
  %v2345 = vpack.c.b16 %v2271, %v2269
  %v2346 = vpack.c.b16 %v2272, %v2270
  %v2347 = vpack.c.b16 %v2275, %v2273
  %v2348 = vpack.c.b16 %v2276, %v2274
  %v2349 = vpack.c.b16 %v2279, %v2277
  %v2350 = vpack.c.b16 %v2280, %v2278
  %v2351 = vpack.c.b16 %v2283, %v2281
  %v2352 = vpack.c.b16 %v2284, %v2282
  %v2353 = vpack.c.b16 %v2287, %v2285
  %v2354 = vpack.c.b16 %v2288, %v2286
  %v2355 = vpack.c.b16 %v2291, %v2289
  %v2356 = vpack.c.b16 %v2292, %v2290
  %2421 = vmatprep.subr.bf16.mxu0 %v2294
  %2422 = vmatpush1.bf16.msra.mxu0 %v2293
  %2423 = vmatprep.subr.bf16.mxu0 %v2296
  %2424 = vmatpush1.bf16.msra.mxu0 %v2295
  %2425 = vmatprep.subr.bf16.mxu0 %v2298
  %2426 = vmatpush1.bf16.msra.mxu0 %v2297
  %2427 = vmatprep.subr.bf16.mxu0 %v2300
  %2428 = vmatpush1.bf16.msra.mxu0 %v2299
  %2429 = vmatprep.subr.bf16.mxu0 %v2302
  %2430 = vmatpush1.bf16.msra.mxu0 %v2301
  %2431 = vmatprep.subr.bf16.mxu0 %v2304
  %2432 = vmatpush1.bf16.msra.mxu0 %v2303
  %2433 = vmatprep.subr.bf16.mxu0 %v2306
  %2434 = vmatpush1.bf16.msra.mxu0 %v2305
  %2435 = vmatprep.subr.bf16.mxu0 %v2308
  %2436 = vmatpush1.bf16.msra.mxu0 %v2307
  %2437 = vmatprep.subr.bf16.mxu0 %v2310
  %2438 = vmatpush1.bf16.msra.mxu0 %v2309
  %2439 = vmatprep.subr.bf16.mxu0 %v2312
  %2440 = vmatpush1.bf16.msra.mxu0 %v2311
  %2441 = vmatprep.subr.bf16.mxu0 %v2314
  %2442 = vmatpush1.bf16.msra.mxu0 %v2313
  %2443 = vmatprep.subr.bf16.mxu0 %v2316
  %2444 = vmatpush1.bf16.msra.mxu0 %v2315
  %2445 = vmatprep.subr.bf16.mxu0 %v2318
  %2446 = vmatpush1.bf16.msra.mxu0 %v2317
  %2447 = vmatprep.subr.bf16.mxu0 %v2320
  %2448 = vmatpush1.bf16.msra.mxu0 %v2319
  %2449 = vmatprep.subr.bf16.mxu0 %v2322
  %2450 = vmatpush1.bf16.msra.mxu0 %v2321
  %2451 = vmatprep.subr.bf16.mxu0 %v2324
  %2452 = vmatpush1.bf16.msra.mxu0 %v2323
  %2453 = vmatprep.mubr.bf16.mxu0 %v2062
  %2454 = vmatmul.mubr.bf16.gmra.mrb[0].mxu0 %v2059
  %v2455 = vpop.f32.mrb[0].mxu0
  %v2456 = vadd.f32 0.0, %v2455
  %v2457 = vpop.f32.mrb[0].mxu0
  %v2458 = vadd.f32 0.0, %v2457
  %v2459 = vpop.f32.mrb[0].mxu0
  %v2460 = vadd.f32 0.0, %v2459
  %v2461 = vpop.f32.mrb[0].mxu0
  %v2462 = vadd.f32 0.0, %v2461
  %2463 = vmatprep.mubr.bf16.mxu0 %v2072
  %2464 = vmatmul.mubr.bf16.gmra.mrb[0].mxu0 %v2070
  %v2465 = vpop.f32.mrb[0].mxu0
  %v2466 = vadd.f32 0.0, %v2465
  %v2467 = vpop.f32.mrb[0].mxu0
  %v2468 = vadd.f32 0.0, %v2467
  %v2469 = vpop.f32.mrb[0].mxu0
  %v2470 = vadd.f32 0.0, %v2469
  %v2471 = vpop.f32.mrb[0].mxu0
  %v2472 = vadd.f32 0.0, %v2471
  %2473 = vmatprep.mubr.bf16.mxu0 %v2080
  %2474 = vmatmul.mubr.bf16.gmra.mrb[0].mxu0 %v2078
  %v2475 = vpop.f32.mrb[0].mxu0
  %v2476 = vadd.f32 0.0, %v2475
  %v2477 = vpop.f32.mrb[0].mxu0
  %v2478 = vadd.f32 0.0, %v2477
  %v2479 = vpop.f32.mrb[0].mxu0
  %v2480 = vadd.f32 0.0, %v2479
  %v2481 = vpop.f32.mrb[0].mxu0
  %v2482 = vadd.f32 0.0, %v2481
  %2483 = vmatprep.mubr.bf16.mxu0 %v2079
  %2484 = vmatmul.mubr.bf16.gmra.mrb[0].mxu0 %v2077
  %v2485 = vpop.f32.mrb[0].mxu0
  %v2486 = vadd.f32 0.0, %v2485
  %v2487 = vpop.f32.mrb[0].mxu0
  %v2488 = vadd.f32 0.0, %v2487
  %v2489 = vpop.f32.mrb[0].mxu0
  %v2490 = vpop.f32.mrb[0].mxu0
  %2491 = vdwg.mxu0
  %2492 = vmatprep.subr.bf16.mxu0 %v2326
  %2493 = vmatpush1.bf16.msra.mxu0 %v2325
  %2494 = vmatprep.subr.bf16.mxu0 %v2328
  %2495 = vmatpush1.bf16.msra.mxu0 %v2327
  %2496 = vmatprep.subr.bf16.mxu0 %v2330
  %2497 = vmatpush1.bf16.msra.mxu0 %v2329
  %2498 = vmatprep.subr.bf16.mxu0 %v2332
  %2499 = vmatpush1.bf16.msra.mxu0 %v2331
  %2500 = vmatprep.subr.bf16.mxu0 %v2334
  %2501 = vmatpush1.bf16.msra.mxu0 %v2333
  %2502 = vmatprep.subr.bf16.mxu0 %v2336
  %2503 = vmatpush1.bf16.msra.mxu0 %v2335
  %2504 = vmatprep.subr.bf16.mxu0 %v2338
  %2505 = vmatpush1.bf16.msra.mxu0 %v2337
  %2506 = vmatprep.subr.bf16.mxu0 %v2340
  %2507 = vmatpush1.bf16.msra.mxu0 %v2339
  %2508 = vmatprep.subr.bf16.mxu0 %v2342
  %2509 = vmatpush1.bf16.msra.mxu0 %v2341
  %2510 = vmatprep.subr.bf16.mxu0 %v2344
  %2511 = vmatpush1.bf16.msra.mxu0 %v2343
  %2512 = vmatprep.subr.bf16.mxu0 %v2346
  %2513 = vmatpush1.bf16.msra.mxu0 %v2345
  %2514 = vmatprep.subr.bf16.mxu0 %v2348
  %2515 = vmatpush1.bf16.msra.mxu0 %v2347
  %2516 = vmatprep.subr.bf16.mxu0 %v2350
  %2517 = vmatpush1.bf16.msra.mxu0 %v2349
  %2518 = vmatprep.subr.bf16.mxu0 %v2352
  %2519 = vmatpush1.bf16.msra.mxu0 %v2351
  %2520 = vmatprep.subr.bf16.mxu0 %v2354
  %2521 = vmatpush1.bf16.msra.mxu0 %v2353
  %2522 = vmatprep.subr.bf16.mxu0 %v2356
  %2523 = vmatpush1.bf16.msra.mxu0 %v2355
  %2524 = vmatprep.mubr.bf16.mxu0 %v2068
  %2525 = vmatmul.mubr.bf16.gmra.mrb[0].mxu0 %v2065
  %v2526 = vpop.f32.mrb[0].mxu0
  %v2527 = vadd.f32 %v2456, %v2526
  %v2528 = vpop.f32.mrb[0].mxu0
  %v2529 = vadd.f32 %v2458, %v2528
  %v2530 = vpop.f32.mrb[0].mxu0
  %v2531 = vadd.f32 %v2460, %v2530
  %v2532 = vpop.f32.mrb[0].mxu0
  %v2533 = vadd.f32 %v2462, %v2532
  %2534 = vmatprep.mubr.bf16.mxu0 %v2076
  %2535 = vmatmul.mubr.bf16.gmra.mrb[0].mxu0 %v2074
  %v2536 = vpop.f32.mrb[0].mxu0
  %v2537 = vadd.f32 %v2466, %v2536
  %v2538 = vpop.f32.mrb[0].mxu0
  %v2539 = vadd.f32 %v2468, %v2538
  %v2540 = vpop.f32.mrb[0].mxu0
  %v2541 = vadd.f32 %v2470, %v2540
  %v2542 = vpop.f32.mrb[0].mxu0
  %v2543 = vadd.f32 %v2472, %v2542
  %2544 = vmatprep.mubr.bf16.mxu0 %v2084
  %2545 = vmatmul.mubr.bf16.gmra.mrb[0].mxu0 %v2082
  %v2546 = vpop.f32.mrb[0].mxu0
  %v2547 = vadd.f32 %v2476, %v2546
  %v2548 = vpop.f32.mrb[0].mxu0
  %v2549 = vadd.f32 %v2478, %v2548
  %v2550 = vpop.f32.mrb[0].mxu0
  %v2551 = vadd.f32 %v2480, %v2550
  %v2552 = vpop.f32.mrb[0].mxu0
  %v2553 = vadd.f32 %v2482, %v2552
  %2554 = vmatprep.mubr.bf16.mxu0 %v2083
  %2555 = vmatmul.mubr.bf16.gmra.mrb[0].mxu0 %v2081
  %v2556 = vpop.f32.mrb[0].mxu0
  %v2557 = vadd.f32 %v2486, %v2556
  %v2558 = vpop.f32.mrb[0].mxu0
  %v2559 = vadd.f32 %v2488, %v2558
  %v2560 = vpop.f32.mrb[0].mxu0
  %v2561 = vpop.f32.mrb[0].mxu0
  %2562 = vdwg.mxu0
  %v2563 = vadd.f32 %v1945, %v2527
  %v2564 = vadd.f32 %v1946, %v2529
  %v2565 = vadd.f32 %v1947, %v2531
  %v2566 = vadd.f32 %v1948, %v2533
  %v2567 = vadd.f32 %v1949, %v2537
  %v2568 = vadd.f32 %v1950, %v2539
  %v2569 = vadd.f32 %v1951, %v2541
  %v2570 = vadd.f32 %v1952, %v2543
  %v2571 = vadd.f32 %v1953, %v2547
  %v2572 = vadd.f32 %v1954, %v2549
  %v2573 = vadd.f32 %v1955, %v2551
  %v2574 = vadd.f32 %v1956, %v2553
  %v2575 = vadd.f32 %v1957, %v2557
  %v2576 = vadd.f32 %v1958, %v2559
  %v2577 = vld [vmem:[%s2] sm:$0xff]
  %v2578 = vld [vmem:[%s2 + $0x8] sm:$0xff]
  %v2579 = vld [vmem:[%s2 + $0x10] sm:$0xff]
  %v2580 = vld [vmem:[%s2 + $0x18] sm:$0xff]
  %v2581 = vld [vmem:[%s2 + $0x20] sm:$0xff]
  %v2582 = vld [vmem:[%s2 + $0x28] sm:$0xff]
  %v2583 = vld [vmem:[%s2 + $0x30] sm:$0x3]
  %v2584 = vld [vmem:[%s3] sm:$0x3]
  %v2585 = vld [vmem:[%s4] sm:$0x3]
  %2587 = vset.pattern.permute.xlu0 0
  %2588 = vperm.xlu0 %2587, %v2577
  %v2589 = vpop.permute.xlu0 %2588
  %2592 = vset.pattern.permute.xlu0 0
  %2593 = vperm.xlu0 %2592, %v2578
  %v2594 = vpop.permute.xlu0 %2593
  %2597 = vset.pattern.permute.xlu0 0
  %2598 = vperm.xlu0 %2597, %v2579
  %v2599 = vpop.permute.xlu0 %2598
  %2602 = vset.pattern.permute.xlu0 0
  %2603 = vperm.xlu0 %2602, %v2580
  %v2604 = vpop.permute.xlu0 %2603
  %2607 = vset.pattern.permute.xlu0 0
  %2608 = vperm.xlu0 %2607, %v2581
  %v2609 = vpop.permute.xlu0 %2608
  %2612 = vset.pattern.permute.xlu0 0
  %2613 = vperm.xlu0 %2612, %v2582
  %v2614 = vpop.permute.xlu0 %2613
  %2617 = vset.pattern.permute.xlu0 0
  %2618 = vperm.xlu0 %2617, %v2583
  %v2619 = vpop.permute.xlu0 %2618
  %v2621 = vmul.f32 %v2563, %v2589
  %v2622 = vmul.f32 %v2564, %v2589
  %v2623 = vmul.f32 %v2565, %v2594
  %v2624 = vmul.f32 %v2566, %v2594
  %v2625 = vmul.f32 %v2567, %v2599
  %v2626 = vmul.f32 %v2568, %v2599
  %v2627 = vmul.f32 %v2569, %v2604
  %v2628 = vmul.f32 %v2570, %v2604
  %v2629 = vmul.f32 %v2571, %v2609
  %v2630 = vmul.f32 %v2572, %v2609
  %v2631 = vmul.f32 %v2573, %v2614
  %v2632 = vmul.f32 %v2574, %v2614
  %v2633 = vmul.f32 %v2575, %v2619
  %v2634 = vmul.f32 %v2576, %v2619
  %v2635 = vadd.f32 %v2621, %v2623
  %v2636 = vadd.f32 %v2635, %v2625
  %v2637 = vadd.f32 %v2636, %v2627
  %v2638 = vadd.f32 %v2637, %v2629
  %v2639 = vadd.f32 %v2638, %v2631
  %vm2640 = vcmask 1041408
  %v2641 = vsel %vm2640, %v2633, 0.0
  %v2642 = vadd.f32 %v2639, %v2641
  %v2643 = vrot.slane %v2642, 4
  %v2644 = vadd.f32 %v2642, %v2643
  %v2645 = vrot.slane %v2644, 2
  %v2646 = vadd.f32 %v2644, %v2645
  %v2647 = vrot.slane %v2646, 1
  %v2648 = vadd.f32 %v2646, %v2647
  %v2649 = vadd.f32 %v2622, %v2624
  %v2650 = vadd.f32 %v2649, %v2626
  %v2651 = vadd.f32 %v2650, %v2628
  %v2652 = vadd.f32 %v2651, %v2630
  %v2653 = vadd.f32 %v2652, %v2632
  %v2654 = vsel %vm2640, %v2634, 0.0
  %v2655 = vadd.f32 %v2653, %v2654
  %v2656 = vrot.slane %v2655, 4
  %v2657 = vadd.f32 %v2655, %v2656
  %v2658 = vrot.slane %v2657, 2
  %v2659 = vadd.f32 %v2657, %v2658
  %v2660 = vrot.slane %v2659, 1
  %v2661 = vadd.f32 %v2659, %v2660
  %v2662 = vmul.f32 %v2621, %v2563
  %v2663 = vmul.f32 %v2622, %v2564
  %v2664 = vmul.f32 %v2623, %v2565
  %v2665 = vmul.f32 %v2624, %v2566
  %v2666 = vmul.f32 %v2625, %v2567
  %v2667 = vmul.f32 %v2626, %v2568
  %v2668 = vmul.f32 %v2627, %v2569
  %v2669 = vmul.f32 %v2628, %v2570
  %v2670 = vmul.f32 %v2629, %v2571
  %v2671 = vmul.f32 %v2630, %v2572
  %v2672 = vmul.f32 %v2631, %v2573
  %v2673 = vmul.f32 %v2632, %v2574
  %v2674 = vmul.f32 %v2633, %v2575
  %v2675 = vmul.f32 %v2634, %v2576
  %v2676 = vadd.f32 %v2662, %v2664
  %v2677 = vadd.f32 %v2676, %v2666
  %v2678 = vadd.f32 %v2677, %v2668
  %v2679 = vadd.f32 %v2678, %v2670
  %v2680 = vadd.f32 %v2679, %v2672
  %v2681 = vsel %vm2640, %v2674, 0.0
  %v2682 = vadd.f32 %v2680, %v2681
  %v2683 = vrot.slane %v2682, 4
  %v2684 = vadd.f32 %v2682, %v2683
  %v2685 = vrot.slane %v2684, 2
  %v2686 = vadd.f32 %v2684, %v2685
  %v2687 = vrot.slane %v2686, 1
  %v2688 = vadd.f32 %v2686, %v2687
  %v2689 = vadd.f32 %v2663, %v2665
  %v2690 = vadd.f32 %v2689, %v2667
  %v2691 = vadd.f32 %v2690, %v2669
  %v2692 = vadd.f32 %v2691, %v2671
  %v2693 = vadd.f32 %v2692, %v2673
  %v2694 = vsel %vm2640, %v2675, 0.0
  %v2695 = vadd.f32 %v2693, %v2694
  %v2696 = vrot.slane %v2695, 4
  %v2697 = vadd.f32 %v2695, %v2696
  %v2698 = vrot.slane %v2697, 2
  %v2699 = vadd.f32 %v2697, %v2698
  %v2700 = vrot.slane %v2699, 1
  %v2701 = vadd.f32 %v2699, %v2700
  %v2702 = vmul.f32 %v2648, 0.03125
  %v2703 = vmul.f32 %v2661, 0.03125
  %v2704 = vmul.f32 %v2688, 0.03125
  %v2705 = vmul.f32 %v2701, 0.03125
  %v2706 = vmul.f32 %v2702, %v2702
  %v2707 = vmul.f32 %v2703, %v2703
  %v2708 = vsub.f32 %v2704, %v2706
  %v2709 = vsub.f32 %v2705, %v2707
  %v2710 = vsub.f32 %v2563, %v2702
  %v2711 = vsub.f32 %v2564, %v2703
  %v2712 = vsub.f32 %v2565, %v2702
  %v2713 = vsub.f32 %v2566, %v2703
  %v2714 = vsub.f32 %v2567, %v2702
  %v2715 = vsub.f32 %v2568, %v2703
  %v2716 = vsub.f32 %v2569, %v2702
  %v2717 = vsub.f32 %v2570, %v2703
  %v2718 = vsub.f32 %v2571, %v2702
  %v2719 = vsub.f32 %v2572, %v2703
  %v2720 = vsub.f32 %v2573, %v2702
  %v2721 = vsub.f32 %v2574, %v2703
  %v2722 = vsub.f32 %v2575, %v2702
  %v2723 = vsub.f32 %v2576, %v2703
  %v2724 = vadd.f32 %v2708, 1e-05
  %v2725 = vadd.f32 %v2709, 1e-05
  %v2726 = vrsqrt.pop %v2724
  %v2727 = vrsqrt.pop %v2725
  %v2728 = vmul.f32 %v2710, %v2726
  %v2729 = vmul.f32 %v2711, %v2727
  %v2730 = vmul.f32 %v2712, %v2726
  %v2731 = vmul.f32 %v2713, %v2727
  %v2732 = vmul.f32 %v2714, %v2726
  %v2733 = vmul.f32 %v2715, %v2727
  %v2734 = vmul.f32 %v2716, %v2726
  %v2735 = vmul.f32 %v2717, %v2727
  %v2736 = vmul.f32 %v2718, %v2726
  %v2737 = vmul.f32 %v2719, %v2727
  %v2738 = vmul.f32 %v2720, %v2726
  %v2739 = vmul.f32 %v2721, %v2727
  %v2740 = vmul.f32 %v2722, %v2726
  %v2741 = vmul.f32 %v2723, %v2727
  %v2743 = vlaneseq
  %v2744 = vshrl.u32 %v2743, 7
  %v2745 = vsub.s32 0, %v2744
  %v2746 = vrot.slane %v2584, %v2745
  %v2747 = vlaneseq
  %v2748 = vshrl.u32 %v2747, 7
  %v2749 = vsub.s32 1, %v2748
  %v2750 = vrot.slane %v2584, %v2749
  %v2753 = vmul.f32 %v2728, %v2746
  %v2754 = vmul.f32 %v2729, %v2750
  %v2755 = vmul.f32 %v2730, %v2746
  %v2756 = vmul.f32 %v2731, %v2750
  %v2757 = vmul.f32 %v2732, %v2746
  %v2758 = vmul.f32 %v2733, %v2750
  %v2759 = vmul.f32 %v2734, %v2746
  %v2760 = vmul.f32 %v2735, %v2750
  %v2761 = vmul.f32 %v2736, %v2746
  %v2762 = vmul.f32 %v2737, %v2750
  %v2763 = vmul.f32 %v2738, %v2746
  %v2764 = vmul.f32 %v2739, %v2750
  %v2765 = vmul.f32 %v2740, %v2746
  %v2766 = vmul.f32 %v2741, %v2750
  %v2768 = vlaneseq
  %v2769 = vshrl.u32 %v2768, 7
  %v2770 = vsub.s32 0, %v2769
  %v2771 = vrot.slane %v2585, %v2770
  %v2772 = vlaneseq
  %v2773 = vshrl.u32 %v2772, 7
  %v2774 = vsub.s32 1, %v2773
  %v2775 = vrot.slane %v2585, %v2774
  %v2778 = vadd.f32 %v2753, %v2771
  %v2779 = vadd.f32 %v2754, %v2775
  %v2780 = vadd.f32 %v2755, %v2771
  %v2781 = vadd.f32 %v2756, %v2775
  %v2782 = vadd.f32 %v2757, %v2771
  %v2783 = vadd.f32 %v2758, %v2775
  %v2784 = vadd.f32 %v2759, %v2771
  %v2785 = vadd.f32 %v2760, %v2775
  %v2786 = vadd.f32 %v2761, %v2771
  %v2787 = vadd.f32 %v2762, %v2775
  %v2788 = vadd.f32 %v2763, %v2771
  %v2789 = vadd.f32 %v2764, %v2775
  %v2790 = vadd.f32 %v2765, %v2771
  %v2791 = vadd.f32 %v2766, %v2775
  %v2792 = vmul.f32 %v2778, 0.2
  %v2793 = vmul.f32 %v2779, 0.2
  %v2794 = vmul.f32 %v2780, 0.2
  %v2795 = vmul.f32 %v2781, 0.2
  %v2796 = vmul.f32 %v2782, 0.2
  %v2797 = vmul.f32 %v2783, 0.2
  %v2798 = vmul.f32 %v2784, 0.2
  %v2799 = vmul.f32 %v2785, 0.2
  %v2800 = vmul.f32 %v2786, 0.2
  %v2801 = vmul.f32 %v2787, 0.2
  %v2802 = vmul.f32 %v2788, 0.2
  %v2803 = vmul.f32 %v2789, 0.2
  %v2804 = vmul.f32 %v2790, 0.2
  %v2805 = vmul.f32 %v2791, 0.2
  %v2806 = vmax.f32 %v2778, %v2792
  %v2807 = vmax.f32 %v2779, %v2793
  %v2808 = vmax.f32 %v2780, %v2794
  %v2809 = vmax.f32 %v2781, %v2795
  %v2810 = vmax.f32 %v2782, %v2796
  %v2811 = vmax.f32 %v2783, %v2797
  %v2812 = vmax.f32 %v2784, %v2798
  %v2813 = vmax.f32 %v2785, %v2799
  %v2814 = vmax.f32 %v2786, %v2800
  %v2815 = vmax.f32 %v2787, %v2801
  %v2816 = vmax.f32 %v2788, %v2802
  %v2817 = vmax.f32 %v2789, %v2803
  %v2818 = vmax.f32 %v2790, %v2804
  %v2819 = vmax.f32 %v2791, %v2805
  %v2820 = vld [vmem:[%s5] sm:$0xff]
  %v2821 = vld [vmem:[%s5 + $0x8] sm:$0xff]
  %v2822 = vld [vmem:[%s5 + $0x10] sm:$0xff]
  %v2823 = vld [vmem:[%s5 + $0x18] sm:$0xff]
  %v2824 = vld [vmem:[%s5 + $0x20] sm:$0xff]
  %v2825 = vld [vmem:[%s5 + $0x28] sm:$0xff]
  %v2826 = vld [vmem:[%s5 + $0x30] sm:$0xff]
  %v2827 = vld [vmem:[%s5 + $0x38] sm:$0xff]
  %v2828 = vld [vmem:[%s5 + $0x40] sm:$0xff]
  %v2829 = vld [vmem:[%s5 + $0x48] sm:$0xff]
  %v2830 = vld [vmem:[%s5 + $0x50] sm:$0xff]
  %v2831 = vld [vmem:[%s5 + $0x58] sm:$0xff]
  %v2832 = vld [vmem:[%s5 + $0x60] sm:$0x3]
  %v2833 = vld [vmem:[%s5 + $0x68] sm:$0x3]
  %v2834 = vmul.f32 %v2806, %v2820
  %v2835 = vmul.f32 %v2807, %v2821
  %v2836 = vmul.f32 %v2808, %v2822
  %v2837 = vmul.f32 %v2809, %v2823
  %v2838 = vmul.f32 %v2810, %v2824
  %v2839 = vmul.f32 %v2811, %v2825
  %v2840 = vmul.f32 %v2812, %v2826
  %v2841 = vmul.f32 %v2813, %v2827
  %v2842 = vmul.f32 %v2814, %v2828
  %v2843 = vmul.f32 %v2815, %v2829
  %v2844 = vmul.f32 %v2816, %v2830
  %v2845 = vmul.f32 %v2817, %v2831
  %v2846 = vmul.f32 %v2818, %v2832
  %v2847 = vmul.f32 %v2819, %v2833
  %v2848 = vld [vmem:[%s6] sm:$0x3]
  %vm2849 = vcmask 408576
  %v2851 = vsel %vm2849, %v2848, 0
  %v2854 = vsel %vm2640, %v2846, 0
  %v2857 = vsel %vm2640, %v2847, 0
  %2859 = vmatprep.subr.mxu0 %v2835
  %2860 = vmatpush1.msra.mxu0 %v2834
  %2861 = vmatprep.subr.mxu0 %v2837
  %2862 = vmatpush1.msra.mxu0 %v2836
  %2863 = vmatprep.subr.mxu0 %v2839
  %2864 = vmatpush1.msra.mxu0 %v2838
  %2865 = vmatprep.subr.mxu0 %v2841
  %2866 = vmatpush1.msra.mxu0 %v2840
  %2867 = vmatprep.subr.mxu0 %v2843
  %2868 = vmatpush1.msra.mxu0 %v2842
  %2869 = vmatprep.subr.mxu0 %v2845
  %2870 = vmatpush1.msra.mxu0 %v2844
  %2871 = vmatprep.subr.mxu0 %v2857
  %2872 = vmatpush1.msra.mxu0 %v2854
  %2873 = vmatprep.subr.mxu0 0.0
  %2874 = vmatpush1.msra.mxu0 0.0
  %2875 = vmatprep.subr.mxu0 0.0
  %2876 = vmatpush1.msra.mxu0 0.0
  %2877 = vmatprep.subr.mxu0 0.0
  %2878 = vmatpush1.msra.mxu0 0.0
  %2879 = vmatprep.subr.mxu0 0.0
  %2880 = vmatpush1.msra.mxu0 0.0
  %2881 = vmatprep.subr.mxu0 0.0
  %2882 = vmatpush1.msra.mxu0 0.0
  %2883 = vmatprep.subr.mxu0 0.0
  %2884 = vmatpush1.msra.mxu0 0.0
  %2885 = vmatprep.subr.mxu0 0.0
  %2886 = vmatpush1.msra.mxu0 0.0
  %2887 = vmatprep.subr.mxu0 0.0
  %2888 = vmatpush1.msra.mxu0 0.0
  %2889 = vmatprep.subr.mxu0 0.0
  %2890 = vmatpush1.msra.mxu0 0.0
  %2891 = vmatprep.subr.mxu0 0.0
  %2892 = vmatpush1.msra.mxu0 0.0
  %2893 = vmatprep.subr.mxu0 0.0
  %2894 = vmatpush1.msra.mxu0 0.0
  %2895 = vmatprep.subr.mxu0 0.0
  %2896 = vmatpush1.msra.mxu0 0.0
  %2897 = vmatprep.subr.mxu0 0.0
  %2898 = vmatpush1.msra.mxu0 0.0
  %2899 = vmatprep.subr.mxu0 0.0
  %2900 = vmatpush1.msra.mxu0 0.0
  %2901 = vmatprep.subr.mxu0 0.0
  %2902 = vmatpush1.msra.mxu0 0.0
  %2903 = vmatprep.subr.mxu0 0.0
  %2904 = vmatpush1.msra.mxu0 0.0
  %2905 = vmatprep.subr.mxu0 0.0
  %2906 = vmatpush1.msra.mxu0 0.0
  %2907 = vmatprep.subr.mxu0 0.0
  %2908 = vmatpush1.msra.mxu0 0.0
  %2909 = vmatprep.subr.mxu0 0.0
  %2910 = vmatpush1.msra.mxu0 0.0
  %2911 = vmatprep.subr.mxu0 0.0
  %2912 = vmatpush1.msra.mxu0 0.0
  %2913 = vmatprep.subr.mxu0 0.0
  %2914 = vmatpush1.msra.mxu0 0.0
  %2915 = vmatprep.subr.mxu0 0.0
  %2916 = vmatpush1.msra.mxu0 0.0
  %2917 = vmatprep.subr.mxu0 0.0
  %2918 = vmatpush1.msra.mxu0 0.0
  %2919 = vmatprep.subr.mxu0 0.0
  %2920 = vmatpush1.msra.mxu0 0.0
  %2921 = vmatprep.subr.mxu0 0.0
  %2922 = vmatpush1.msra.mxu0 0.0
  %2923 = vmatprep.mubr.f32.mxu0 0.0
  %2924 = vmatmul.mubr.f32.gmra.mrb[0].mxu0 %v2851
  %v2925 = vpop.f32.mrb[0].mxu0
  %v2926 = vadd.f32 0.0, %v2925
  %v2927 = vpop.f32.mrb[0].mxu0
  %v2928 = vadd.f32 0.0, %v2927
  %2929 = vdwg.mxu0
  %v2930 = vsel %vm2640, %v2926, 0.0
  %v2931 = vsel %vm2640, %v2928, 0.0
  %v2932 = vadd.f32 %v2930, %v2931
  %2933 = vadd.xlane.f32.xlu0 %v2932
  %v2934 = vpop.xlane.xlu0 %2933
  %v2935 = vld [vmem:[#allocation2] sm:$0x1]
  %v2937 = vlaneseq
  %v2938 = vshrl.u32 %v2937, 7
  %v2939 = vsub.s32 0, %v2938
  %v2940 = vrot.slane %v2935, %v2939
  %v2942 = vadd.f32 %v2934, %v2940
  %2944 = vset.pattern.permute.xlu0 0
  %2945 = vperm.xlu0 %2944, %v2942
  %v2946 = vpop.permute.xlu0 %2945
  %2948 = vst [vmem:[%s8] sm:$0x3] %v2946
  // Predicated region
  $region34: #{discriminator32_forward.5} parent=0 // pred_check
    _
  $region35: #{discriminator32_forward.5} parent=0 // pred_check_branch
    %2950 = sbr.rel (0) target = $region37
  $region36: #{discriminator32_forward.5} parent=0 // pred_region
    _
  $region37: #{discriminator32_forward.5} parent=0 // pred_fallthru
    _
  // Predicated region
  $region38: #{discriminator32_forward.5} parent=0 // pred_check
    _
  $region39: #{discriminator32_forward.5} parent=0 // pred_check_branch
    %2952 = sbr.rel (0) target = $region41
  $region40: #{discriminator32_forward.5} parent=0 // pred_region
    _
  $region41: #{discriminator32_forward.5} parent=0 // pred_fallthru
    _

</llo_original>
